<compile_context>
chip_gen: v7x
topology: tpu7x:2x2x1
jax: 0.10.0
libtpu: 0.0.40
codegen_flags: <defaults>
</compile_context>

<pallas_src>
import functools

import jax
import jax.numpy as jnp
from jax.experimental import pallas as pl
from jax.experimental.pallas import tpu as pltpu


# ----------------------------------------------------------------------------
# Fused kernel: whole ProjectionInput forward for one batch element.
# ----------------------------------------------------------------------------
def _fused_kernel(
    cost_ref, dpatch_ref, ctx_ref,
    wc1_ref, bc1_ref,            # convc1 1x1
    wc2_ref, bc2_ref,            # convc2 3x3
    wd1_ref, bd1_ref,            # convd1 7x7 (input pre-im2col'd in wrapper)
    wd2_ref, bd2_ref,            # convd2 3x3
    wd_ref, bd_ref,              # convd 3x3 over cat(cor, dfm) -> one deep dot
    wca_ref, wcb_ref, bc_ref,    # convc 1x1, split into cor_dfm / context halves
    o_ref,
    pad_ref, patch_ref,
    *, H, W, hid,
):
    HW = H * W
    P9 = 9 * hid

    def mm(a, b):
        return jnp.dot(a, b, preferred_element_type=jnp.float32)

    # Zero-halo buffer: only its 1-px border must stay zero (the interior is
    # fully rewritten before every read below).  41 KB memset per step is
    # negligible and stays correct regardless of how the grid is core-sharded.
    pad_ref[...] = jnp.zeros_like(pad_ref)

    def build_patches(act_2d, col0):
        """Write the 9 'same'-conv taps of a (HW, hid) activation into
        patch_ref[:, col0 : col0 + 9*hid] in (dy, dx, cin) column order."""
        pad_ref[1:H + 1, 1:W + 1, :] = act_2d.reshape(H, W, hid)
        t = 0
        for dy in range(3):                    # static unroll: 9 taps
            for dx in range(3):
                patch_ref[:, col0 + t * hid:col0 + (t + 1) * hid] = (
                    pad_ref[dy:dy + H, dx:dx + W, :].reshape(HW, hid))
                t += 1

    # ---- dfm branch first: its final taps land in columns [9h : 18h] -------
    # dfm = relu(convd1(disp)) : 7x7 patches built in the wrapper -> one dot.
    dfm = jnp.maximum(mm(dpatch_ref[0], wd1_ref[...]) + bd1_ref[...], 0.0)
    build_patches(dfm, 0)                                    # dfm_pre taps
    # dfm = relu(convd2(dfm))
    dfm = jnp.maximum(mm(patch_ref[:, :P9], wd2_ref[...]) + bd2_ref[...], 0.0)
    build_patches(dfm, P9)                                   # final dfm taps

    # ---- cor branch: its final taps land in columns [0 : 9h] ---------------
    # cor = relu(convc1(cost))  (1x1 conv == channel matmul)
    cor = jnp.maximum(mm(cost_ref[0], wc1_ref[...]) + bc1_ref[...], 0.0)
    build_patches(cor, 0)                                    # cor_pre taps
    # cor = relu(convc2(cor))
    cor = jnp.maximum(mm(patch_ref[:, :P9], wc2_ref[...]) + bc2_ref[...], 0.0)
    build_patches(cor, 0)                                    # final cor taps

    # ---- convd over concat(cor, dfm): ONE deep-contraction MXU dot ---------
    # (HW, 18*hid) @ (18*hid, mid); the concat is never materialised.  No relu.
    cor_dfm = mm(patch_ref[...], wd_ref[...]) + bd_ref[...]

    # ---- relu(convc(concat(cor_dfm, context))) == split-weight matmul sum --
    out = (mm(cor_dfm, wca_ref[...]) + mm(ctx_ref[0], wcb_ref[...])
           + bc_ref[...])
    out = jnp.maximum(out, 0.0)

    o_ref[...] = out.reshape(1, HW, hid).astype(o_ref.dtype)


# ----------------------------------------------------------------------------
# Wrapper: weight flattening / splitting, 7x7 im2col of the raw input, call.
# ----------------------------------------------------------------------------
def _im2col_nhwc(x, K):
    """(N,H,W,C) -> (N, H*W, K*K*C) patches of a 'same' KxK conv (odd K)."""
    N, H, W, C = x.shape
    p = (K - 1) // 2
    xp = jnp.pad(x, ((0, 0), (p, p), (p, p), (0, 0)))
    cols = [xp[:, dy:dy + H, dx:dx + W, :]
            for dy in range(K) for dx in range(K)]
    return jnp.concatenate(cols, axis=-1).reshape(N, H * W, K * K * C)


def projection_input_forward(params, disp, cost, context):
    """All tensors NHWC. Returns NHWC output with hidden_dim channels."""
    N, H, W, depth = disp.shape
    cost_dim = cost.shape[-1]
    ctx_dim = context.shape[-1]
    HW = H * W

    wc1, bc1 = params["convc1"]
    wc2, bc2 = params["convc2"]
    wd1, bd1 = params["convd1"]
    wd2, bd2 = params["convd2"]
    wd, bd = params["convd"]
    wcc, bcc = params["convc"]
    hid = wc1.shape[-1]
    mid = hid - ctx_dim                         # convd output channels

    # Flatten weights to (K*K*Cin, Cout) matching the (dy, dx, cin) patch
    # column order; stack / split the concat-consuming convs per input half.
    wc1f = wc1.reshape(cost_dim, hid)
    wc2f = wc2.reshape(9 * hid, hid)
    wd1f = wd1.reshape(49 * depth, hid)
    wd2f = wd2.reshape(9 * hid, hid)
    # convd: rows ordered [cor taps | dfm taps] to match the kernel's patch
    # buffer column order -> a single (18*hid, mid) deep-contraction dot.
    wdf = jnp.concatenate(
        [wd[:, :, :hid, :].reshape(9 * hid, mid),
         wd[:, :, hid:, :].reshape(9 * hid, mid)], axis=0)
    wccf = wcc.reshape(hid, hid)
    wcaf = wccf[:mid, :]                               # consumes cor_dfm
    wcbf = wccf[mid:, :]                               # consumes context
    row = lambda b: b.reshape(1, -1)

    dpatch = _im2col_nhwc(disp, 7)                     # (N, H*W, 49*depth)
    cost2 = cost.reshape(N, HW, cost_dim)              # free row-major reshape
    ctx2 = context.reshape(N, HW, ctx_dim)

    def const_spec(shape):
        nd = len(shape)
        return pl.BlockSpec(shape, lambda n: (0,) * nd)

    kernel = functools.partial(_fused_kernel, H=H, W=W, hid=hid)
    out2d = pl.pallas_call(
        kernel,
        out_shape=jax.ShapeDtypeStruct((N, HW, hid), jnp.float32),
        grid=(N,),
        in_specs=[
            pl.BlockSpec((1, HW, cost_dim), lambda n: (n, 0, 0)),
            pl.BlockSpec((1, HW, 49 * depth), lambda n: (n, 0, 0)),
            pl.BlockSpec((1, HW, ctx_dim), lambda n: (n, 0, 0)),
            const_spec((cost_dim, hid)), const_spec((1, hid)),
            const_spec((9 * hid, hid)), const_spec((1, hid)),
            const_spec((49 * depth, hid)), const_spec((1, hid)),
            const_spec((9 * hid, hid)), const_spec((1, hid)),
            const_spec((18 * hid, mid)), const_spec((1, mid)),
            const_spec((mid, hid)), const_spec((ctx_dim, hid)),
            const_spec((1, hid)),
        ],
        out_specs=pl.BlockSpec((1, HW, hid), lambda n: (n, 0, 0)),
        scratch_shapes=[
            pltpu.VMEM((H + 2, W + 2, hid), jnp.float32),   # zero-halo pad
            pltpu.VMEM((HW, 18 * hid), jnp.float32),        # [cor|dfm] taps
        ],
        compiler_params=pltpu.CompilerParams(
            dimension_semantics=("parallel",),
        ),
    )(
        cost2, dpatch, ctx2,
        wc1f, row(bc1), wc2f, row(bc2),
        wd1f, row(bd1), wd2f, row(bd2),
        wdf, row(bd),
        wcaf, wcbf, row(bcc),
    )
    # (N, H*W, C) row-major == (N, H, W, C) row-major: free reshape.
    # TODO(synk): Dropout2d(p=0.1) applies only when training; eval skips it.
    return out2d.reshape(N, H, W, hid)


# ----------------------------------------------------------------------------
# Deterministic parameter init + pure-JAX reference for a correctness check.
# ----------------------------------------------------------------------------
def init_params(key, cost_dim, hidden_dim, context_dim, depth_num):
    def conv_p(k, kh, cin, cout):
        kw_, kb_ = jax.random.split(k)
        w = jax.random.normal(kw_, (kh, kh, cin, cout), jnp.float32) * 0.05
        b = jax.random.normal(kb_, (cout,), jnp.float32) * 0.05
        return (w, b)

    ks = jax.random.split(key, 6)
    return {
        "convc1": conv_p(ks[0], 1, cost_dim, hidden_dim),
        "convc2": conv_p(ks[1], 3, hidden_dim, hidden_dim),
        "convd1": conv_p(ks[2], 7, depth_num, hidden_dim),
        "convd2": conv_p(ks[3], 3, hidden_dim, hidden_dim),
        "convd": conv_p(ks[4], 3, 2 * hidden_dim, hidden_dim - context_dim),
        "convc": conv_p(ks[5], 1, hidden_dim, hidden_dim),
    }


def _conv_ref(x, w, b, relu):
    y = jax.lax.conv_general_dilated(
        x, w, window_strides=(1, 1), padding="SAME",
        dimension_numbers=("NHWC", "HWIO", "NHWC"),
    ) + b.reshape(1, 1, 1, -1)
    return jnp.maximum(y, 0.0) if relu else y


def projection_input_ref(params, disp, cost, context):
    cor = _conv_ref(cost, *params["convc1"], True)
    cor = _conv_ref(cor, *params["convc2"], True)
    dfm = _conv_ref(disp, *params["convd1"], True)
    dfm = _conv_ref(dfm, *params["convd2"], True)
    cor_dfm = jnp.concatenate([cor, dfm], axis=-1)
    cor_dfm = _conv_ref(cor_dfm, *params["convd"], False)
    cat = jnp.concatenate([cor_dfm, context], axis=-1)
    return _conv_ref(cat, *params["convc"], True)


if __name__ == "__main__":
    # Small shapes consistent with the module's forward.
    N, H, W = 2, 16, 16
    cost_dim, hidden_dim, context_dim, depth_num = 4, 32, 8, 1

    key = jax.random.PRNGKey(0)
    kp, kd, kc, kx = jax.random.split(key, 4)
    params = init_params(kp, cost_dim, hidden_dim, context_dim, depth_num)

    # PyTorch inputs would be NCHW; we build NHWC directly (layout choice).
    disp = jax.random.normal(kd, (N, H, W, depth_num), jnp.float32)
    cost = jax.random.normal(kc, (N, H, W, cost_dim), jnp.float32)
    context = jax.random.normal(kx, (N, H, W, context_dim), jnp.float32)

    out = projection_input_forward(params, disp, cost, context)
    out = jax.block_until_ready(out)

    ref = projection_input_ref(params, disp, cost, context)
    assert out.shape == (N, H, W, hidden_dim)
    assert jnp.allclose(out, ref, atol=2e-3, rtol=2e-3)

    print("KERNEL_OK")
</pallas_src>

<mosaic_0001>
module attributes {stable_mosaic.version = 11 : i64} {
  func.func @_fused_kernel(%arg0: i32, %arg1: memref<1x256x4xf32, #tpu.memory_space<vmem>>, %arg2: memref<1x256x49xf32, #tpu.memory_space<vmem>>, %arg3: memref<1x256x8xf32, #tpu.memory_space<vmem>>, %arg4: memref<4x32xf32, #tpu.memory_space<vmem>>, %arg5: memref<1x32xf32, #tpu.memory_space<vmem>>, %arg6: memref<288x32xf32, #tpu.memory_space<vmem>>, %arg7: memref<1x32xf32, #tpu.memory_space<vmem>>, %arg8: memref<49x32xf32, #tpu.memory_space<vmem>>, %arg9: memref<1x32xf32, #tpu.memory_space<vmem>>, %arg10: memref<288x32xf32, #tpu.memory_space<vmem>>, %arg11: memref<1x32xf32, #tpu.memory_space<vmem>>, %arg12: memref<576x24xf32, #tpu.memory_space<vmem>>, %arg13: memref<1x24xf32, #tpu.memory_space<vmem>>, %arg14: memref<24x32xf32, #tpu.memory_space<vmem>>, %arg15: memref<8x32xf32, #tpu.memory_space<vmem>>, %arg16: memref<1x32xf32, #tpu.memory_space<vmem>>, %arg17: memref<1x256x32xf32, #tpu.memory_space<vmem>>, %arg18: memref<18x18x32xf32, #tpu.memory_space<vmem>>, %arg19: memref<256x576xf32, #tpu.memory_space<vmem>>) attributes {dimension_semantics = [#tpu.dimension_semantics<parallel>], iteration_bounds = array<i64: 2>, scalar_prefetch = 0 : i64, scratch_operands = 2 : i64, tpu.core_type = #tpu.core_type<tc>, window_params = [{transform_indices = @transform_0, window_bounds = array<i64: 1, 256, 4>}, {transform_indices = @transform_1, window_bounds = array<i64: 1, 256, 49>}, {transform_indices = @transform_2, window_bounds = array<i64: 1, 256, 8>}, {pipeline_mode = #tpu.pipeline_mode<synchronous>, transform_indices = @transform_3, window_bounds = array<i64: 4, 32>}, {pipeline_mode = #tpu.pipeline_mode<synchronous>, transform_indices = @transform_4, window_bounds = array<i64: 1, 32>}, {pipeline_mode = #tpu.pipeline_mode<synchronous>, transform_indices = @transform_5, window_bounds = array<i64: 288, 32>}, {pipeline_mode = #tpu.pipeline_mode<synchronous>, transform_indices = @transform_6, window_bounds = array<i64: 1, 32>}, {pipeline_mode = #tpu.pipeline_mode<synchronous>, transform_indices = @transform_7, window_bounds = array<i64: 49, 32>}, {pipeline_mode = #tpu.pipeline_mode<synchronous>, transform_indices = @transform_8, window_bounds = array<i64: 1, 32>}, {pipeline_mode = #tpu.pipeline_mode<synchronous>, transform_indices = @transform_9, window_bounds = array<i64: 288, 32>}, {pipeline_mode = #tpu.pipeline_mode<synchronous>, transform_indices = @transform_10, window_bounds = array<i64: 1, 32>}, {pipeline_mode = #tpu.pipeline_mode<synchronous>, transform_indices = @transform_11, window_bounds = array<i64: 576, 24>}, {pipeline_mode = #tpu.pipeline_mode<synchronous>, transform_indices = @transform_12, window_bounds = array<i64: 1, 24>}, {pipeline_mode = #tpu.pipeline_mode<synchronous>, transform_indices = @transform_13, window_bounds = array<i64: 24, 32>}, {pipeline_mode = #tpu.pipeline_mode<synchronous>, transform_indices = @transform_14, window_bounds = array<i64: 8, 32>}, {pipeline_mode = #tpu.pipeline_mode<synchronous>, transform_indices = @transform_15, window_bounds = array<i64: 1, 32>}, {transform_indices = @transform_16, window_bounds = array<i64: 1, 256, 32>}]} {
    %cst = arith.constant 0.000000e+00 : f32
    %0 = vector.broadcast %cst : f32 to vector<18x18x32xf32>
    %c0 = arith.constant 0 : index
    %c0_0 = arith.constant 0 : index
    %c0_1 = arith.constant 0 : index
    %1 = vector.load %arg18[%c0, %c0_0, %c0_1] : memref<18x18x32xf32, #tpu.memory_space<vmem>>, vector<18x18x32xf32>
    tpu.vector_store %arg18[%c0, %c0_0, %c0_1], %0 {strides = array<i32>} : memref<18x18x32xf32, #tpu.memory_space<vmem>>, vector<18x18x32xf32>,
    %c0_2 = arith.constant 0 : index
    %c0_3 = arith.constant 0 : index
    %c0_4 = arith.constant 0 : index
    %2 = vector.load %arg2[%c0_2, %c0_3, %c0_4] : memref<1x256x49xf32, #tpu.memory_space<vmem>>, vector<1x256x49xf32>
    %3 = vector.shape_cast %2 : vector<1x256x49xf32> to vector<256x49xf32>
    %c0_5 = arith.constant 0 : index
    %c0_6 = arith.constant 0 : index
    %4 = vector.load %arg8[%c0_5, %c0_6] : memref<49x32xf32, #tpu.memory_space<vmem>>, vector<49x32xf32>
    %cst_7 = arith.constant dense<0.000000e+00> : vector<256x32xf32>
    %5 = tpu.matmul %3, %4, %cst_7 {dimension_numbers = #tpu.dot_dimension_numbers<[1], [0], [0], [1], [0, 0, 1, 1], [], []>} : vector<256x49xf32>, vector<49x32xf32>, vector<256x32xf32> -> vector<256x32xf32>
    %c0_8 = arith.constant 0 : index
    %c0_9 = arith.constant 0 : index
    %6 = vector.load %arg9[%c0_8, %c0_9] : memref<1x32xf32, #tpu.memory_space<vmem>>, vector<1x32xf32>
    %7 = vector.broadcast %6 : vector<1x32xf32> to vector<256x32xf32>
    %8 = arith.addf %5, %7 : vector<256x32xf32>
    %cst_10 = arith.constant 0.000000e+00 : f32
    %9 = vector.broadcast %cst_10 : f32 to vector<256x32xf32>
    %10 = arith.maximumf %8, %9 : vector<256x32xf32>
    %11 = vector.shape_cast %10 : vector<256x32xf32> to vector<16x16x32xf32>
    %c1 = arith.constant 1 : index
    %c1_11 = arith.constant 1 : index
    %c0_12 = arith.constant 0 : index
    %12 = vector.load %arg18[%c1, %c1_11, %c0_12] : memref<18x18x32xf32, #tpu.memory_space<vmem>>, vector<16x16x32xf32>
    tpu.vector_store %arg18[%c1, %c1_11, %c0_12], %11 {strides = array<i32>} : memref<18x18x32xf32, #tpu.memory_space<vmem>>, vector<16x16x32xf32>,
    %c0_13 = arith.constant 0 : index
    %c0_14 = arith.constant 0 : index
    %c0_15 = arith.constant 0 : index
    %13 = vector.load %arg18[%c0_13, %c0_14, %c0_15] : memref<18x18x32xf32, #tpu.memory_space<vmem>>, vector<16x16x32xf32>
    %14 = vector.shape_cast %13 : vector<16x16x32xf32> to vector<256x32xf32>
    %c0_16 = arith.constant 0 : index
    %c0_17 = arith.constant 0 : index
    %15 = vector.load %arg19[%c0_16, %c0_17] : memref<256x576xf32, #tpu.memory_space<vmem>>, vector<256x32xf32>
    tpu.vector_store %arg19[%c0_16, %c0_17], %14 {strides = array<i32>} : memref<256x576xf32, #tpu.memory_space<vmem>>, vector<256x32xf32>,
    %c0_18 = arith.constant 0 : index
    %c1_19 = arith.constant 1 : index
    %c0_20 = arith.constant 0 : index
    %16 = vector.load %arg18[%c0_18, %c1_19, %c0_20] : memref<18x18x32xf32, #tpu.memory_space<vmem>>, vector<16x16x32xf32>
    %17 = vector.shape_cast %16 : vector<16x16x32xf32> to vector<256x32xf32>
    %c0_21 = arith.constant 0 : index
    %c32 = arith.constant 32 : index
    %18 = vector.load %arg19[%c0_21, %c32] : memref<256x576xf32, #tpu.memory_space<vmem>>, vector<256x32xf32>
    tpu.vector_store %arg19[%c0_21, %c32], %17 {strides = array<i32>} : memref<256x576xf32, #tpu.memory_space<vmem>>, vector<256x32xf32>,
    %c0_22 = arith.constant 0 : index
    %c2 = arith.constant 2 : index
    %c0_23 = arith.constant 0 : index
    %19 = vector.load %arg18[%c0_22, %c2, %c0_23] : memref<18x18x32xf32, #tpu.memory_space<vmem>>, vector<16x16x32xf32>
    %20 = vector.shape_cast %19 : vector<16x16x32xf32> to vector<256x32xf32>
    %c0_24 = arith.constant 0 : index
    %c64 = arith.constant 64 : index
    %21 = vector.load %arg19[%c0_24, %c64] : memref<256x576xf32, #tpu.memory_space<vmem>>, vector<256x32xf32>
    tpu.vector_store %arg19[%c0_24, %c64], %20 {strides = array<i32>} : memref<256x576xf32, #tpu.memory_space<vmem>>, vector<256x32xf32>,
    %c1_25 = arith.constant 1 : index
    %c0_26 = arith.constant 0 : index
    %c0_27 = arith.constant 0 : index
    %22 = vector.load %arg18[%c1_25, %c0_26, %c0_27] : memref<18x18x32xf32, #tpu.memory_space<vmem>>, vector<16x16x32xf32>
    %23 = vector.shape_cast %22 : vector<16x16x32xf32> to vector<256x32xf32>
    %c0_28 = arith.constant 0 : index
    %c96 = arith.constant 96 : index
    %24 = vector.load %arg19[%c0_28, %c96] : memref<256x576xf32, #tpu.memory_space<vmem>>, vector<256x32xf32>
    tpu.vector_store %arg19[%c0_28, %c96], %23 {strides = array<i32>} : memref<256x576xf32, #tpu.memory_space<vmem>>, vector<256x32xf32>,
    %c1_29 = arith.constant 1 : index
    %c1_30 = arith.constant 1 : index
    %c0_31 = arith.constant 0 : index
    %25 = vector.load %arg18[%c1_29, %c1_30, %c0_31] : memref<18x18x32xf32, #tpu.memory_space<vmem>>, vector<16x16x32xf32>
    %26 = vector.shape_cast %25 : vector<16x16x32xf32> to vector<256x32xf32>
    %c0_32 = arith.constant 0 : index
    %c128 = arith.constant 128 : index
    %27 = vector.load %arg19[%c0_32, %c128] : memref<256x576xf32, #tpu.memory_space<vmem>>, vector<256x32xf32>
    tpu.vector_store %arg19[%c0_32, %c128], %26 {strides = array<i32>} : memref<256x576xf32, #tpu.memory_space<vmem>>, vector<256x32xf32>,
    %c1_33 = arith.constant 1 : index
    %c2_34 = arith.constant 2 : index
    %c0_35 = arith.constant 0 : index
    %28 = vector.load %arg18[%c1_33, %c2_34, %c0_35] : memref<18x18x32xf32, #tpu.memory_space<vmem>>, vector<16x16x32xf32>
    %29 = vector.shape_cast %28 : vector<16x16x32xf32> to vector<256x32xf32>
    %c0_36 = arith.constant 0 : index
    %c160 = arith.constant 160 : index
    %30 = vector.load %arg19[%c0_36, %c160] : memref<256x576xf32, #tpu.memory_space<vmem>>, vector<256x32xf32>
    tpu.vector_store %arg19[%c0_36, %c160], %29 {strides = array<i32>} : memref<256x576xf32, #tpu.memory_space<vmem>>, vector<256x32xf32>,
    %c2_37 = arith.constant 2 : index
    %c0_38 = arith.constant 0 : index
    %c0_39 = arith.constant 0 : index
    %31 = vector.load %arg18[%c2_37, %c0_38, %c0_39] : memref<18x18x32xf32, #tpu.memory_space<vmem>>, vector<16x16x32xf32>
    %32 = vector.shape_cast %31 : vector<16x16x32xf32> to vector<256x32xf32>
    %c0_40 = arith.constant 0 : index
    %c192 = arith.constant 192 : index
    %33 = vector.load %arg19[%c0_40, %c192] : memref<256x576xf32, #tpu.memory_space<vmem>>, vector<256x32xf32>
    tpu.vector_store %arg19[%c0_40, %c192], %32 {strides = array<i32>} : memref<256x576xf32, #tpu.memory_space<vmem>>, vector<256x32xf32>,
    %c2_41 = arith.constant 2 : index
    %c1_42 = arith.constant 1 : index
    %c0_43 = arith.constant 0 : index
    %34 = vector.load %arg18[%c2_41, %c1_42, %c0_43] : memref<18x18x32xf32, #tpu.memory_space<vmem>>, vector<16x16x32xf32>
    %35 = vector.shape_cast %34 : vector<16x16x32xf32> to vector<256x32xf32>
    %c0_44 = arith.constant 0 : index
    %c224 = arith.constant 224 : index
    %36 = vector.load %arg19[%c0_44, %c224] : memref<256x576xf32, #tpu.memory_space<vmem>>, vector<256x32xf32>
    tpu.vector_store %arg19[%c0_44, %c224], %35 {strides = array<i32>} : memref<256x576xf32, #tpu.memory_space<vmem>>, vector<256x32xf32>,
    %c2_45 = arith.constant 2 : index
    %c2_46 = arith.constant 2 : index
    %c0_47 = arith.constant 0 : index
    %37 = vector.load %arg18[%c2_45, %c2_46, %c0_47] : memref<18x18x32xf32, #tpu.memory_space<vmem>>, vector<16x16x32xf32>
    %38 = vector.shape_cast %37 : vector<16x16x32xf32> to vector<256x32xf32>
    %c0_48 = arith.constant 0 : index
    %c256 = arith.constant 256 : index
    %39 = vector.load %arg19[%c0_48, %c256] : memref<256x576xf32, #tpu.memory_space<vmem>>, vector<256x32xf32>
    tpu.vector_store %arg19[%c0_48, %c256], %38 {strides = array<i32>} : memref<256x576xf32, #tpu.memory_space<vmem>>, vector<256x32xf32>,
    %c0_49 = arith.constant 0 : index
    %c0_50 = arith.constant 0 : index
    %40 = vector.load %arg19[%c0_49, %c0_50] : memref<256x576xf32, #tpu.memory_space<vmem>>, vector<256x288xf32>
    %c0_51 = arith.constant 0 : index
    %c0_52 = arith.constant 0 : index
    %41 = vector.load %arg10[%c0_51, %c0_52] : memref<288x32xf32, #tpu.memory_space<vmem>>, vector<288x32xf32>
    %cst_53 = arith.constant dense<0.000000e+00> : vector<256x32xf32>
    %42 = tpu.matmul %40, %41, %cst_53 {dimension_numbers = #tpu.dot_dimension_numbers<[1], [0], [0], [1], [0, 0, 1, 1], [], []>} : vector<256x288xf32>, vector<288x32xf32>, vector<256x32xf32> -> vector<256x32xf32>
    %c0_54 = arith.constant 0 : index
    %c0_55 = arith.constant 0 : index
    %43 = vector.load %arg11[%c0_54, %c0_55] : memref<1x32xf32, #tpu.memory_space<vmem>>, vector<1x32xf32>
    %44 = vector.broadcast %43 : vector<1x32xf32> to vector<256x32xf32>
    %45 = arith.addf %42, %44 : vector<256x32xf32>
    %cst_56 = arith.constant 0.000000e+00 : f32
    %46 = vector.broadcast %cst_56 : f32 to vector<256x32xf32>
    %47 = arith.maximumf %45, %46 : vector<256x32xf32>
    %48 = vector.shape_cast %47 : vector<256x32xf32> to vector<16x16x32xf32>
    %c1_57 = arith.constant 1 : index
    %c1_58 = arith.constant 1 : index
    %c0_59 = arith.constant 0 : index
    %49 = vector.load %arg18[%c1_57, %c1_58, %c0_59] : memref<18x18x32xf32, #tpu.memory_space<vmem>>, vector<16x16x32xf32>
    tpu.vector_store %arg18[%c1_57, %c1_58, %c0_59], %48 {strides = array<i32>} : memref<18x18x32xf32, #tpu.memory_space<vmem>>, vector<16x16x32xf32>,
    %c0_60 = arith.constant 0 : index
    %c0_61 = arith.constant 0 : index
    %c0_62 = arith.constant 0 : index
    %50 = vector.load %arg18[%c0_60, %c0_61, %c0_62] : memref<18x18x32xf32, #tpu.memory_space<vmem>>, vector<16x16x32xf32>
    %51 = vector.shape_cast %50 : vector<16x16x32xf32> to vector<256x32xf32>
    %c0_63 = arith.constant 0 : index
    %c288 = arith.constant 288 : index
    %52 = vector.load %arg19[%c0_63, %c288] : memref<256x576xf32, #tpu.memory_space<vmem>>, vector<256x32xf32>
    tpu.vector_store %arg19[%c0_63, %c288], %51 {strides = array<i32>} : memref<256x576xf32, #tpu.memory_space<vmem>>, vector<256x32xf32>,
    %c0_64 = arith.constant 0 : index
    %c1_65 = arith.constant 1 : index
    %c0_66 = arith.constant 0 : index
    %53 = vector.load %arg18[%c0_64, %c1_65, %c0_66] : memref<18x18x32xf32, #tpu.memory_space<vmem>>, vector<16x16x32xf32>
    %54 = vector.shape_cast %53 : vector<16x16x32xf32> to vector<256x32xf32>
    %c0_67 = arith.constant 0 : index
    %c320 = arith.constant 320 : index
    %55 = vector.load %arg19[%c0_67, %c320] : memref<256x576xf32, #tpu.memory_space<vmem>>, vector<256x32xf32>
    tpu.vector_store %arg19[%c0_67, %c320], %54 {strides = array<i32>} : memref<256x576xf32, #tpu.memory_space<vmem>>, vector<256x32xf32>,
    %c0_68 = arith.constant 0 : index
    %c2_69 = arith.constant 2 : index
    %c0_70 = arith.constant 0 : index
    %56 = vector.load %arg18[%c0_68, %c2_69, %c0_70] : memref<18x18x32xf32, #tpu.memory_space<vmem>>, vector<16x16x32xf32>
    %57 = vector.shape_cast %56 : vector<16x16x32xf32> to vector<256x32xf32>
    %c0_71 = arith.constant 0 : index
    %c352 = arith.constant 352 : index
    %58 = vector.load %arg19[%c0_71, %c352] : memref<256x576xf32, #tpu.memory_space<vmem>>, vector<256x32xf32>
    tpu.vector_store %arg19[%c0_71, %c352], %57 {strides = array<i32>} : memref<256x576xf32, #tpu.memory_space<vmem>>, vector<256x32xf32>,
    %c1_72 = arith.constant 1 : index
    %c0_73 = arith.constant 0 : index
    %c0_74 = arith.constant 0 : index
    %59 = vector.load %arg18[%c1_72, %c0_73, %c0_74] : memref<18x18x32xf32, #tpu.memory_space<vmem>>, vector<16x16x32xf32>
    %60 = vector.shape_cast %59 : vector<16x16x32xf32> to vector<256x32xf32>
    %c0_75 = arith.constant 0 : index
    %c384 = arith.constant 384 : index
    %61 = vector.load %arg19[%c0_75, %c384] : memref<256x576xf32, #tpu.memory_space<vmem>>, vector<256x32xf32>
    tpu.vector_store %arg19[%c0_75, %c384], %60 {strides = array<i32>} : memref<256x576xf32, #tpu.memory_space<vmem>>, vector<256x32xf32>,
    %c1_76 = arith.constant 1 : index
    %c1_77 = arith.constant 1 : index
    %c0_78 = arith.constant 0 : index
    %62 = vector.load %arg18[%c1_76, %c1_77, %c0_78] : memref<18x18x32xf32, #tpu.memory_space<vmem>>, vector<16x16x32xf32>
    %63 = vector.shape_cast %62 : vector<16x16x32xf32> to vector<256x32xf32>
    %c0_79 = arith.constant 0 : index
    %c416 = arith.constant 416 : index
    %64 = vector.load %arg19[%c0_79, %c416] : memref<256x576xf32, #tpu.memory_space<vmem>>, vector<256x32xf32>
    tpu.vector_store %arg19[%c0_79, %c416], %63 {strides = array<i32>} : memref<256x576xf32, #tpu.memory_space<vmem>>, vector<256x32xf32>,
    %c1_80 = arith.constant 1 : index
    %c2_81 = arith.constant 2 : index
    %c0_82 = arith.constant 0 : index
    %65 = vector.load %arg18[%c1_80, %c2_81, %c0_82] : memref<18x18x32xf32, #tpu.memory_space<vmem>>, vector<16x16x32xf32>
    %66 = vector.shape_cast %65 : vector<16x16x32xf32> to vector<256x32xf32>
    %c0_83 = arith.constant 0 : index
    %c448 = arith.constant 448 : index
    %67 = vector.load %arg19[%c0_83, %c448] : memref<256x576xf32, #tpu.memory_space<vmem>>, vector<256x32xf32>
    tpu.vector_store %arg19[%c0_83, %c448], %66 {strides = array<i32>} : memref<256x576xf32, #tpu.memory_space<vmem>>, vector<256x32xf32>,
    %c2_84 = arith.constant 2 : index
    %c0_85 = arith.constant 0 : index
    %c0_86 = arith.constant 0 : index
    %68 = vector.load %arg18[%c2_84, %c0_85, %c0_86] : memref<18x18x32xf32, #tpu.memory_space<vmem>>, vector<16x16x32xf32>
    %69 = vector.shape_cast %68 : vector<16x16x32xf32> to vector<256x32xf32>
    %c0_87 = arith.constant 0 : index
    %c480 = arith.constant 480 : index
    %70 = vector.load %arg19[%c0_87, %c480] : memref<256x576xf32, #tpu.memory_space<vmem>>, vector<256x32xf32>
    tpu.vector_store %arg19[%c0_87, %c480], %69 {strides = array<i32>} : memref<256x576xf32, #tpu.memory_space<vmem>>, vector<256x32xf32>,
    %c2_88 = arith.constant 2 : index
    %c1_89 = arith.constant 1 : index
    %c0_90 = arith.constant 0 : index
    %71 = vector.load %arg18[%c2_88, %c1_89, %c0_90] : memref<18x18x32xf32, #tpu.memory_space<vmem>>, vector<16x16x32xf32>
    %72 = vector.shape_cast %71 : vector<16x16x32xf32> to vector<256x32xf32>
    %c0_91 = arith.constant 0 : index
    %c512 = arith.constant 512 : index
    %73 = vector.load %arg19[%c0_91, %c512] : memref<256x576xf32, #tpu.memory_space<vmem>>, vector<256x32xf32>
    tpu.vector_store %arg19[%c0_91, %c512], %72 {strides = array<i32>} : memref<256x576xf32, #tpu.memory_space<vmem>>, vector<256x32xf32>,
    %c2_92 = arith.constant 2 : index
    %c2_93 = arith.constant 2 : index
    %c0_94 = arith.constant 0 : index
    %74 = vector.load %arg18[%c2_92, %c2_93, %c0_94] : memref<18x18x32xf32, #tpu.memory_space<vmem>>, vector<16x16x32xf32>
    %75 = vector.shape_cast %74 : vector<16x16x32xf32> to vector<256x32xf32>
    %c0_95 = arith.constant 0 : index
    %c544 = arith.constant 544 : index
    %76 = vector.load %arg19[%c0_95, %c544] : memref<256x576xf32, #tpu.memory_space<vmem>>, vector<256x32xf32>
    tpu.vector_store %arg19[%c0_95, %c544], %75 {strides = array<i32>} : memref<256x576xf32, #tpu.memory_space<vmem>>, vector<256x32xf32>,
    %c0_96 = arith.constant 0 : index
    %c0_97 = arith.constant 0 : index
    %c0_98 = arith.constant 0 : index
    %77 = vector.load %arg1[%c0_96, %c0_97, %c0_98] : memref<1x256x4xf32, #tpu.memory_space<vmem>>, vector<1x256x4xf32>
    %78 = vector.shape_cast %77 : vector<1x256x4xf32> to vector<256x4xf32>
    %c0_99 = arith.constant 0 : index
    %c0_100 = arith.constant 0 : index
    %79 = vector.load %arg4[%c0_99, %c0_100] : memref<4x32xf32, #tpu.memory_space<vmem>>, vector<4x32xf32>
    %cst_101 = arith.constant dense<0.000000e+00> : vector<256x32xf32>
    %80 = tpu.matmul %78, %79, %cst_101 {dimension_numbers = #tpu.dot_dimension_numbers<[1], [0], [0], [1], [0, 0, 1, 1], [], []>} : vector<256x4xf32>, vector<4x32xf32>, vector<256x32xf32> -> vector<256x32xf32>
    %c0_102 = arith.constant 0 : index
    %c0_103 = arith.constant 0 : index
    %81 = vector.load %arg5[%c0_102, %c0_103] : memref<1x32xf32, #tpu.memory_space<vmem>>, vector<1x32xf32>
    %82 = vector.broadcast %81 : vector<1x32xf32> to vector<256x32xf32>
    %83 = arith.addf %80, %82 : vector<256x32xf32>
    %cst_104 = arith.constant 0.000000e+00 : f32
    %84 = vector.broadcast %cst_104 : f32 to vector<256x32xf32>
    %85 = arith.maximumf %83, %84 : vector<256x32xf32>
    %86 = vector.shape_cast %85 : vector<256x32xf32> to vector<16x16x32xf32>
    %c1_105 = arith.constant 1 : index
    %c1_106 = arith.constant 1 : index
    %c0_107 = arith.constant 0 : index
    %87 = vector.load %arg18[%c1_105, %c1_106, %c0_107] : memref<18x18x32xf32, #tpu.memory_space<vmem>>, vector<16x16x32xf32>
    tpu.vector_store %arg18[%c1_105, %c1_106, %c0_107], %86 {strides = array<i32>} : memref<18x18x32xf32, #tpu.memory_space<vmem>>, vector<16x16x32xf32>,
    %c0_108 = arith.constant 0 : index
    %c0_109 = arith.constant 0 : index
    %c0_110 = arith.constant 0 : index
    %88 = vector.load %arg18[%c0_108, %c0_109, %c0_110] : memref<18x18x32xf32, #tpu.memory_space<vmem>>, vector<16x16x32xf32>
    %89 = vector.shape_cast %88 : vector<16x16x32xf32> to vector<256x32xf32>
    %c0_111 = arith.constant 0 : index
    %c0_112 = arith.constant 0 : index
    %90 = vector.load %arg19[%c0_111, %c0_112] : memref<256x576xf32, #tpu.memory_space<vmem>>, vector<256x32xf32>
    tpu.vector_store %arg19[%c0_111, %c0_112], %89 {strides = array<i32>} : memref<256x576xf32, #tpu.memory_space<vmem>>, vector<256x32xf32>,
    %c0_113 = arith.constant 0 : index
    %c1_114 = arith.constant 1 : index
    %c0_115 = arith.constant 0 : index
    %91 = vector.load %arg18[%c0_113, %c1_114, %c0_115] : memref<18x18x32xf32, #tpu.memory_space<vmem>>, vector<16x16x32xf32>
    %92 = vector.shape_cast %91 : vector<16x16x32xf32> to vector<256x32xf32>
    %c0_116 = arith.constant 0 : index
    %c32_117 = arith.constant 32 : index
    %93 = vector.load %arg19[%c0_116, %c32_117] : memref<256x576xf32, #tpu.memory_space<vmem>>, vector<256x32xf32>
    tpu.vector_store %arg19[%c0_116, %c32_117], %92 {strides = array<i32>} : memref<256x576xf32, #tpu.memory_space<vmem>>, vector<256x32xf32>,
    %c0_118 = arith.constant 0 : index
    %c2_119 = arith.constant 2 : index
    %c0_120 = arith.constant 0 : index
    %94 = vector.load %arg18[%c0_118, %c2_119, %c0_120] : memref<18x18x32xf32, #tpu.memory_space<vmem>>, vector<16x16x32xf32>
    %95 = vector.shape_cast %94 : vector<16x16x32xf32> to vector<256x32xf32>
    %c0_121 = arith.constant 0 : index
    %c64_122 = arith.constant 64 : index
    %96 = vector.load %arg19[%c0_121, %c64_122] : memref<256x576xf32, #tpu.memory_space<vmem>>, vector<256x32xf32>
    tpu.vector_store %arg19[%c0_121, %c64_122], %95 {strides = array<i32>} : memref<256x576xf32, #tpu.memory_space<vmem>>, vector<256x32xf32>,
    %c1_123 = arith.constant 1 : index
    %c0_124 = arith.constant 0 : index
    %c0_125 = arith.constant 0 : index
    %97 = vector.load %arg18[%c1_123, %c0_124, %c0_125] : memref<18x18x32xf32, #tpu.memory_space<vmem>>, vector<16x16x32xf32>
    %98 = vector.shape_cast %97 : vector<16x16x32xf32> to vector<256x32xf32>
    %c0_126 = arith.constant 0 : index
    %c96_127 = arith.constant 96 : index
    %99 = vector.load %arg19[%c0_126, %c96_127] : memref<256x576xf32, #tpu.memory_space<vmem>>, vector<256x32xf32>
    tpu.vector_store %arg19[%c0_126, %c96_127], %98 {strides = array<i32>} : memref<256x576xf32, #tpu.memory_space<vmem>>, vector<256x32xf32>,
    %c1_128 = arith.constant 1 : index
    %c1_129 = arith.constant 1 : index
    %c0_130 = arith.constant 0 : index
    %100 = vector.load %arg18[%c1_128, %c1_129, %c0_130] : memref<18x18x32xf32, #tpu.memory_space<vmem>>, vector<16x16x32xf32>
    %101 = vector.shape_cast %100 : vector<16x16x32xf32> to vector<256x32xf32>
    %c0_131 = arith.constant 0 : index
    %c128_132 = arith.constant 128 : index
    %102 = vector.load %arg19[%c0_131, %c128_132] : memref<256x576xf32, #tpu.memory_space<vmem>>, vector<256x32xf32>
    tpu.vector_store %arg19[%c0_131, %c128_132], %101 {strides = array<i32>} : memref<256x576xf32, #tpu.memory_space<vmem>>, vector<256x32xf32>,
    %c1_133 = arith.constant 1 : index
    %c2_134 = arith.constant 2 : index
    %c0_135 = arith.constant 0 : index
    %103 = vector.load %arg18[%c1_133, %c2_134, %c0_135] : memref<18x18x32xf32, #tpu.memory_space<vmem>>, vector<16x16x32xf32>
    %104 = vector.shape_cast %103 : vector<16x16x32xf32> to vector<256x32xf32>
    %c0_136 = arith.constant 0 : index
    %c160_137 = arith.constant 160 : index
    %105 = vector.load %arg19[%c0_136, %c160_137] : memref<256x576xf32, #tpu.memory_space<vmem>>, vector<256x32xf32>
    tpu.vector_store %arg19[%c0_136, %c160_137], %104 {strides = array<i32>} : memref<256x576xf32, #tpu.memory_space<vmem>>, vector<256x32xf32>,
    %c2_138 = arith.constant 2 : index
    %c0_139 = arith.constant 0 : index
    %c0_140 = arith.constant 0 : index
    %106 = vector.load %arg18[%c2_138, %c0_139, %c0_140] : memref<18x18x32xf32, #tpu.memory_space<vmem>>, vector<16x16x32xf32>
    %107 = vector.shape_cast %106 : vector<16x16x32xf32> to vector<256x32xf32>
    %c0_141 = arith.constant 0 : index
    %c192_142 = arith.constant 192 : index
    %108 = vector.load %arg19[%c0_141, %c192_142] : memref<256x576xf32, #tpu.memory_space<vmem>>, vector<256x32xf32>
    tpu.vector_store %arg19[%c0_141, %c192_142], %107 {strides = array<i32>} : memref<256x576xf32, #tpu.memory_space<vmem>>, vector<256x32xf32>,
    %c2_143 = arith.constant 2 : index
    %c1_144 = arith.constant 1 : index
    %c0_145 = arith.constant 0 : index
    %109 = vector.load %arg18[%c2_143, %c1_144, %c0_145] : memref<18x18x32xf32, #tpu.memory_space<vmem>>, vector<16x16x32xf32>
    %110 = vector.shape_cast %109 : vector<16x16x32xf32> to vector<256x32xf32>
    %c0_146 = arith.constant 0 : index
    %c224_147 = arith.constant 224 : index
    %111 = vector.load %arg19[%c0_146, %c224_147] : memref<256x576xf32, #tpu.memory_space<vmem>>, vector<256x32xf32>
    tpu.vector_store %arg19[%c0_146, %c224_147], %110 {strides = array<i32>} : memref<256x576xf32, #tpu.memory_space<vmem>>, vector<256x32xf32>,
    %c2_148 = arith.constant 2 : index
    %c2_149 = arith.constant 2 : index
    %c0_150 = arith.constant 0 : index
    %112 = vector.load %arg18[%c2_148, %c2_149, %c0_150] : memref<18x18x32xf32, #tpu.memory_space<vmem>>, vector<16x16x32xf32>
    %113 = vector.shape_cast %112 : vector<16x16x32xf32> to vector<256x32xf32>
    %c0_151 = arith.constant 0 : index
    %c256_152 = arith.constant 256 : index
    %114 = vector.load %arg19[%c0_151, %c256_152] : memref<256x576xf32, #tpu.memory_space<vmem>>, vector<256x32xf32>
    tpu.vector_store %arg19[%c0_151, %c256_152], %113 {strides = array<i32>} : memref<256x576xf32, #tpu.memory_space<vmem>>, vector<256x32xf32>,
    %c0_153 = arith.constant 0 : index
    %c0_154 = arith.constant 0 : index
    %115 = vector.load %arg19[%c0_153, %c0_154] : memref<256x576xf32, #tpu.memory_space<vmem>>, vector<256x288xf32>
    %c0_155 = arith.constant 0 : index
    %c0_156 = arith.constant 0 : index
    %116 = vector.load %arg6[%c0_155, %c0_156] : memref<288x32xf32, #tpu.memory_space<vmem>>, vector<288x32xf32>
    %cst_157 = arith.constant dense<0.000000e+00> : vector<256x32xf32>
    %117 = tpu.matmul %115, %116, %cst_157 {dimension_numbers = #tpu.dot_dimension_numbers<[1], [0], [0], [1], [0, 0, 1, 1], [], []>} : vector<256x288xf32>, vector<288x32xf32>, vector<256x32xf32> -> vector<256x32xf32>
    %c0_158 = arith.constant 0 : index
    %c0_159 = arith.constant 0 : index
    %118 = vector.load %arg7[%c0_158, %c0_159] : memref<1x32xf32, #tpu.memory_space<vmem>>, vector<1x32xf32>
    %119 = vector.broadcast %118 : vector<1x32xf32> to vector<256x32xf32>
    %120 = arith.addf %117, %119 : vector<256x32xf32>
    %cst_160 = arith.constant 0.000000e+00 : f32
    %121 = vector.broadcast %cst_160 : f32 to vector<256x32xf32>
    %122 = arith.maximumf %120, %121 : vector<256x32xf32>
    %123 = vector.shape_cast %122 : vector<256x32xf32> to vector<16x16x32xf32>
    %c1_161 = arith.constant 1 : index
    %c1_162 = arith.constant 1 : index
    %c0_163 = arith.constant 0 : index
    %124 = vector.load %arg18[%c1_161, %c1_162, %c0_163] : memref<18x18x32xf32, #tpu.memory_space<vmem>>, vector<16x16x32xf32>
    tpu.vector_store %arg18[%c1_161, %c1_162, %c0_163], %123 {strides = array<i32>} : memref<18x18x32xf32, #tpu.memory_space<vmem>>, vector<16x16x32xf32>,
    %c0_164 = arith.constant 0 : index
    %c0_165 = arith.constant 0 : index
    %c0_166 = arith.constant 0 : index
    %125 = vector.load %arg18[%c0_164, %c0_165, %c0_166] : memref<18x18x32xf32, #tpu.memory_space<vmem>>, vector<16x16x32xf32>
    %126 = vector.shape_cast %125 : vector<16x16x32xf32> to vector<256x32xf32>
    %c0_167 = arith.constant 0 : index
    %c0_168 = arith.constant 0 : index
    %127 = vector.load %arg19[%c0_167, %c0_168] : memref<256x576xf32, #tpu.memory_space<vmem>>, vector<256x32xf32>
    tpu.vector_store %arg19[%c0_167, %c0_168], %126 {strides = array<i32>} : memref<256x576xf32, #tpu.memory_space<vmem>>, vector<256x32xf32>,
    %c0_169 = arith.constant 0 : index
    %c1_170 = arith.constant 1 : index
    %c0_171 = arith.constant 0 : index
    %128 = vector.load %arg18[%c0_169, %c1_170, %c0_171] : memref<18x18x32xf32, #tpu.memory_space<vmem>>, vector<16x16x32xf32>
    %129 = vector.shape_cast %128 : vector<16x16x32xf32> to vector<256x32xf32>
    %c0_172 = arith.constant 0 : index
    %c32_173 = arith.constant 32 : index
    %130 = vector.load %arg19[%c0_172, %c32_173] : memref<256x576xf32, #tpu.memory_space<vmem>>, vector<256x32xf32>
    tpu.vector_store %arg19[%c0_172, %c32_173], %129 {strides = array<i32>} : memref<256x576xf32, #tpu.memory_space<vmem>>, vector<256x32xf32>,
    %c0_174 = arith.constant 0 : index
    %c2_175 = arith.constant 2 : index
    %c0_176 = arith.constant 0 : index
    %131 = vector.load %arg18[%c0_174, %c2_175, %c0_176] : memref<18x18x32xf32, #tpu.memory_space<vmem>>, vector<16x16x32xf32>
    %132 = vector.shape_cast %131 : vector<16x16x32xf32> to vector<256x32xf32>
    %c0_177 = arith.constant 0 : index
    %c64_178 = arith.constant 64 : index
    %133 = vector.load %arg19[%c0_177, %c64_178] : memref<256x576xf32, #tpu.memory_space<vmem>>, vector<256x32xf32>
    tpu.vector_store %arg19[%c0_177, %c64_178], %132 {strides = array<i32>} : memref<256x576xf32, #tpu.memory_space<vmem>>, vector<256x32xf32>,
    %c1_179 = arith.constant 1 : index
    %c0_180 = arith.constant 0 : index
    %c0_181 = arith.constant 0 : index
    %134 = vector.load %arg18[%c1_179, %c0_180, %c0_181] : memref<18x18x32xf32, #tpu.memory_space<vmem>>, vector<16x16x32xf32>
    %135 = vector.shape_cast %134 : vector<16x16x32xf32> to vector<256x32xf32>
    %c0_182 = arith.constant 0 : index
    %c96_183 = arith.constant 96 : index
    %136 = vector.load %arg19[%c0_182, %c96_183] : memref<256x576xf32, #tpu.memory_space<vmem>>, vector<256x32xf32>
    tpu.vector_store %arg19[%c0_182, %c96_183], %135 {strides = array<i32>} : memref<256x576xf32, #tpu.memory_space<vmem>>, vector<256x32xf32>,
    %c1_184 = arith.constant 1 : index
    %c1_185 = arith.constant 1 : index
    %c0_186 = arith.constant 0 : index
    %137 = vector.load %arg18[%c1_184, %c1_185, %c0_186] : memref<18x18x32xf32, #tpu.memory_space<vmem>>, vector<16x16x32xf32>
    %138 = vector.shape_cast %137 : vector<16x16x32xf32> to vector<256x32xf32>
    %c0_187 = arith.constant 0 : index
    %c128_188 = arith.constant 128 : index
    %139 = vector.load %arg19[%c0_187, %c128_188] : memref<256x576xf32, #tpu.memory_space<vmem>>, vector<256x32xf32>
    tpu.vector_store %arg19[%c0_187, %c128_188], %138 {strides = array<i32>} : memref<256x576xf32, #tpu.memory_space<vmem>>, vector<256x32xf32>,
    %c1_189 = arith.constant 1 : index
    %c2_190 = arith.constant 2 : index
    %c0_191 = arith.constant 0 : index
    %140 = vector.load %arg18[%c1_189, %c2_190, %c0_191] : memref<18x18x32xf32, #tpu.memory_space<vmem>>, vector<16x16x32xf32>
    %141 = vector.shape_cast %140 : vector<16x16x32xf32> to vector<256x32xf32>
    %c0_192 = arith.constant 0 : index
    %c160_193 = arith.constant 160 : index
    %142 = vector.load %arg19[%c0_192, %c160_193] : memref<256x576xf32, #tpu.memory_space<vmem>>, vector<256x32xf32>
    tpu.vector_store %arg19[%c0_192, %c160_193], %141 {strides = array<i32>} : memref<256x576xf32, #tpu.memory_space<vmem>>, vector<256x32xf32>,
    %c2_194 = arith.constant 2 : index
    %c0_195 = arith.constant 0 : index
    %c0_196 = arith.constant 0 : index
    %143 = vector.load %arg18[%c2_194, %c0_195, %c0_196] : memref<18x18x32xf32, #tpu.memory_space<vmem>>, vector<16x16x32xf32>
    %144 = vector.shape_cast %143 : vector<16x16x32xf32> to vector<256x32xf32>
    %c0_197 = arith.constant 0 : index
    %c192_198 = arith.constant 192 : index
    %145 = vector.load %arg19[%c0_197, %c192_198] : memref<256x576xf32, #tpu.memory_space<vmem>>, vector<256x32xf32>
    tpu.vector_store %arg19[%c0_197, %c192_198], %144 {strides = array<i32>} : memref<256x576xf32, #tpu.memory_space<vmem>>, vector<256x32xf32>,
    %c2_199 = arith.constant 2 : index
    %c1_200 = arith.constant 1 : index
    %c0_201 = arith.constant 0 : index
    %146 = vector.load %arg18[%c2_199, %c1_200, %c0_201] : memref<18x18x32xf32, #tpu.memory_space<vmem>>, vector<16x16x32xf32>
    %147 = vector.shape_cast %146 : vector<16x16x32xf32> to vector<256x32xf32>
    %c0_202 = arith.constant 0 : index
    %c224_203 = arith.constant 224 : index
    %148 = vector.load %arg19[%c0_202, %c224_203] : memref<256x576xf32, #tpu.memory_space<vmem>>, vector<256x32xf32>
    tpu.vector_store %arg19[%c0_202, %c224_203], %147 {strides = array<i32>} : memref<256x576xf32, #tpu.memory_space<vmem>>, vector<256x32xf32>,
    %c2_204 = arith.constant 2 : index
    %c2_205 = arith.constant 2 : index
    %c0_206 = arith.constant 0 : index
    %149 = vector.load %arg18[%c2_204, %c2_205, %c0_206] : memref<18x18x32xf32, #tpu.memory_space<vmem>>, vector<16x16x32xf32>
    %150 = vector.shape_cast %149 : vector<16x16x32xf32> to vector<256x32xf32>
    %c0_207 = arith.constant 0 : index
    %c256_208 = arith.constant 256 : index
    %151 = vector.load %arg19[%c0_207, %c256_208] : memref<256x576xf32, #tpu.memory_space<vmem>>, vector<256x32xf32>
    tpu.vector_store %arg19[%c0_207, %c256_208], %150 {strides = array<i32>} : memref<256x576xf32, #tpu.memory_space<vmem>>, vector<256x32xf32>,
    %c0_209 = arith.constant 0 : index
    %c0_210 = arith.constant 0 : index
    %152 = vector.load %arg19[%c0_209, %c0_210] : memref<256x576xf32, #tpu.memory_space<vmem>>, vector<256x576xf32>
    %c0_211 = arith.constant 0 : index
    %c0_212 = arith.constant 0 : index
    %153 = vector.load %arg12[%c0_211, %c0_212] : memref<576x24xf32, #tpu.memory_space<vmem>>, vector<576x24xf32>
    %cst_213 = arith.constant dense<0.000000e+00> : vector<256x24xf32>
    %154 = tpu.matmul %152, %153, %cst_213 {dimension_numbers = #tpu.dot_dimension_numbers<[1], [0], [0], [1], [0, 0, 1, 1], [], []>} : vector<256x576xf32>, vector<576x24xf32>, vector<256x24xf32> -> vector<256x24xf32>
    %c0_214 = arith.constant 0 : index
    %c0_215 = arith.constant 0 : index
    %155 = vector.load %arg13[%c0_214, %c0_215] : memref<1x24xf32, #tpu.memory_space<vmem>>, vector<1x24xf32>
    %156 = vector.broadcast %155 : vector<1x24xf32> to vector<256x24xf32>
    %157 = arith.addf %154, %156 : vector<256x24xf32>
    %c0_216 = arith.constant 0 : index
    %c0_217 = arith.constant 0 : index
    %158 = vector.load %arg14[%c0_216, %c0_217] : memref<24x32xf32, #tpu.memory_space<vmem>>, vector<24x32xf32>
    %cst_218 = arith.constant dense<0.000000e+00> : vector<256x32xf32>
    %159 = tpu.matmul %157, %158, %cst_218 {dimension_numbers = #tpu.dot_dimension_numbers<[1], [0], [0], [1], [0, 0, 1, 1], [], []>} : vector<256x24xf32>, vector<24x32xf32>, vector<256x32xf32> -> vector<256x32xf32>
    %c0_219 = arith.constant 0 : index
    %c0_220 = arith.constant 0 : index
    %c0_221 = arith.constant 0 : index
    %160 = vector.load %arg3[%c0_219, %c0_220, %c0_221] : memref<1x256x8xf32, #tpu.memory_space<vmem>>, vector<1x256x8xf32>
    %161 = vector.shape_cast %160 : vector<1x256x8xf32> to vector<256x8xf32>
    %c0_222 = arith.constant 0 : index
    %c0_223 = arith.constant 0 : index
    %162 = vector.load %arg15[%c0_222, %c0_223] : memref<8x32xf32, #tpu.memory_space<vmem>>, vector<8x32xf32>
    %cst_224 = arith.constant dense<0.000000e+00> : vector<256x32xf32>
    %163 = tpu.matmul %161, %162, %cst_224 {dimension_numbers = #tpu.dot_dimension_numbers<[1], [0], [0], [1], [0, 0, 1, 1], [], []>} : vector<256x8xf32>, vector<8x32xf32>, vector<256x32xf32> -> vector<256x32xf32>
    %164 = arith.addf %159, %163 : vector<256x32xf32>
    %c0_225 = arith.constant 0 : index
    %c0_226 = arith.constant 0 : index
    %165 = vector.load %arg16[%c0_225, %c0_226] : memref<1x32xf32, #tpu.memory_space<vmem>>, vector<1x32xf32>
    %166 = vector.broadcast %165 : vector<1x32xf32> to vector<256x32xf32>
    %167 = arith.addf %164, %166 : vector<256x32xf32>
    %cst_227 = arith.constant 0.000000e+00 : f32
    %168 = vector.broadcast %cst_227 : f32 to vector<256x32xf32>
    %169 = arith.maximumf %167, %168 : vector<256x32xf32>
    %170 = vector.shape_cast %169 : vector<256x32xf32> to vector<1x256x32xf32>
    %c0_228 = arith.constant 0 : index
    %c0_229 = arith.constant 0 : index
    %c0_230 = arith.constant 0 : index
    %171 = vector.load %arg17[%c0_228, %c0_229, %c0_230] : memref<1x256x32xf32, #tpu.memory_space<vmem>>, vector<1x256x32xf32>
    tpu.vector_store %arg17[%c0_228, %c0_229, %c0_230], %170 {strides = array<i32>} : memref<1x256x32xf32, #tpu.memory_space<vmem>>, vector<1x256x32xf32>,
    return
  }
  func.func @transform_0(%arg0: i32) -> (i32, i32, i32) {
    %c0_i32 = arith.constant 0 : i32
    %c0_i32_0 = arith.constant 0 : i32
    %c0_i32_1 = arith.constant 0 : i32
    return %arg0, %c0_i32, %c0_i32_0 : i32, i32, i32
  }
  func.func @transform_1(%arg0: i32) -> (i32, i32, i32) {
    %c0_i32 = arith.constant 0 : i32
    %c0_i32_0 = arith.constant 0 : i32
    %c0_i32_1 = arith.constant 0 : i32
    return %arg0, %c0_i32, %c0_i32_0 : i32, i32, i32
  }
  func.func @transform_2(%arg0: i32) -> (i32, i32, i32) {
    %c0_i32 = arith.constant 0 : i32
    %c0_i32_0 = arith.constant 0 : i32
    %c0_i32_1 = arith.constant 0 : i32
    return %arg0, %c0_i32, %c0_i32_0 : i32, i32, i32
  }
  func.func @transform_3(%arg0: i32) -> (i32, i32) {
    %c0_i32 = arith.constant 0 : i32
    %c0_i32_0 = arith.constant 0 : i32
    %c0_i32_1 = arith.constant 0 : i32
    return %c0_i32, %c0_i32_0 : i32, i32
  }
  func.func @transform_4(%arg0: i32) -> (i32, i32) {
    %c0_i32 = arith.constant 0 : i32
    %c0_i32_0 = arith.constant 0 : i32
    %c0_i32_1 = arith.constant 0 : i32
    return %c0_i32, %c0_i32_0 : i32, i32
  }
  func.func @transform_5(%arg0: i32) -> (i32, i32) {
    %c0_i32 = arith.constant 0 : i32
    %c0_i32_0 = arith.constant 0 : i32
    %c0_i32_1 = arith.constant 0 : i32
    return %c0_i32, %c0_i32_0 : i32, i32
  }
  func.func @transform_6(%arg0: i32) -> (i32, i32) {
    %c0_i32 = arith.constant 0 : i32
    %c0_i32_0 = arith.constant 0 : i32
    %c0_i32_1 = arith.constant 0 : i32
    return %c0_i32, %c0_i32_0 : i32, i32
  }
  func.func @transform_7(%arg0: i32) -> (i32, i32) {
    %c0_i32 = arith.constant 0 : i32
    %c0_i32_0 = arith.constant 0 : i32
    %c0_i32_1 = arith.constant 0 : i32
    return %c0_i32, %c0_i32_0 : i32, i32
  }
  func.func @transform_8(%arg0: i32) -> (i32, i32) {
    %c0_i32 = arith.constant 0 : i32
    %c0_i32_0 = arith.constant 0 : i32
    %c0_i32_1 = arith.constant 0 : i32
    return %c0_i32, %c0_i32_0 : i32, i32
  }
  func.func @transform_9(%arg0: i32) -> (i32, i32) {
    %c0_i32 = arith.constant 0 : i32
    %c0_i32_0 = arith.constant 0 : i32
    %c0_i32_1 = arith.constant 0 : i32
    return %c0_i32, %c0_i32_0 : i32, i32
  }
  func.func @transform_10(%arg0: i32) -> (i32, i32) {
    %c0_i32 = arith.constant 0 : i32
    %c0_i32_0 = arith.constant 0 : i32
    %c0_i32_1 = arith.constant 0 : i32
    return %c0_i32, %c0_i32_0 : i32, i32
  }
  func.func @transform_11(%arg0: i32) -> (i32, i32) {
    %c0_i32 = arith.constant 0 : i32
    %c0_i32_0 = arith.constant 0 : i32
    %c0_i32_1 = arith.constant 0 : i32
    return %c0_i32, %c0_i32_0 : i32, i32
  }
  func.func @transform_12(%arg0: i32) -> (i32, i32) {
    %c0_i32 = arith.constant 0 : i32
    %c0_i32_0 = arith.constant 0 : i32
    %c0_i32_1 = arith.constant 0 : i32
    return %c0_i32, %c0_i32_0 : i32, i32
  }
  func.func @transform_13(%arg0: i32) -> (i32, i32) {
    %c0_i32 = arith.constant 0 : i32
    %c0_i32_0 = arith.constant 0 : i32
    %c0_i32_1 = arith.constant 0 : i32
    return %c0_i32, %c0_i32_0 : i32, i32
  }
  func.func @transform_14(%arg0: i32) -> (i32, i32) {
    %c0_i32 = arith.constant 0 : i32
    %c0_i32_0 = arith.constant 0 : i32
    %c0_i32_1 = arith.constant 0 : i32
    return %c0_i32, %c0_i32_0 : i32, i32
  }
  func.func @transform_15(%arg0: i32) -> (i32, i32) {
    %c0_i32 = arith.constant 0 : i32
    %c0_i32_0 = arith.constant 0 : i32
    %c0_i32_1 = arith.constant 0 : i32
    return %c0_i32, %c0_i32_0 : i32, i32
  }
  func.func @transform_16(%arg0: i32) -> (i32, i32, i32) {
    %c0_i32 = arith.constant 0 : i32
    %c0_i32_0 = arith.constant 0 : i32
    %c0_i32_1 = arith.constant 0 : i32
    return %arg0, %c0_i32, %c0_i32_0 : i32, i32, i32
  }
}

</mosaic_0001>

<llo_original>
// kernel: tpu_custom_call.1
$region0: #{tpu_custom_call.1}
  #allocation0 [shape = 'u32[]', space=smem, size = 0x4, offset = 0x4, fixed_abs, tag = 'smem constant byte address 0x4 - core index']
  #allocation1 [shape = 'u32[144,128]{1,0:T(1,128)}', space=vmem, size = 0x12000, scoped, tag = 'internal scratch']
  #allocation2 [shape = 'f32[18,18,32]{2,1,0:T(8,128)}', space=vmem, size = 0x36000, scoped, tag = 'scratch operand']
  #allocation3 [shape = 'f32[256,576]{1,0:T(8,128)}', space=vmem, size = 0xa0000, scoped, tag = 'scratch operand']
  %s0 = inlined_call_operand.vmem [shape: f32[2,256,4], index: 0, kind: input, shape index: {}]
  %s1 = inlined_call_operand.vmem [shape: f32[2,256,49], index: 1, kind: input, shape index: {}]
  %s2 = inlined_call_operand.vmem [shape: f32[2,256,8], index: 2, kind: input, shape index: {}]
  %s3 = inlined_call_operand.vmem [shape: f32[4,32], index: 3, kind: input, shape index: {}]
  %s4 = inlined_call_operand.vmem [shape: f32[1,32], index: 4, kind: input, shape index: {}]
  %s5 = inlined_call_operand.vmem [shape: f32[288,32], index: 5, kind: input, shape index: {}]
  %s6 = inlined_call_operand.vmem [shape: f32[1,32], index: 6, kind: input, shape index: {}]
  %s7 = inlined_call_operand.vmem [shape: f32[49,32], index: 7, kind: input, shape index: {}]
  %s8 = inlined_call_operand.vmem [shape: f32[1,32], index: 8, kind: input, shape index: {}]
  %s9 = inlined_call_operand.vmem [shape: f32[288,32], index: 9, kind: input, shape index: {}]
  %s10 = inlined_call_operand.vmem [shape: f32[1,32], index: 10, kind: input, shape index: {}]
  %s11 = inlined_call_operand.vmem [shape: f32[576,24], index: 11, kind: input, shape index: {}]
  %s12 = inlined_call_operand.vmem [shape: f32[1,24], index: 12, kind: input, shape index: {}]
  %s13 = inlined_call_operand.vmem [shape: f32[24,32], index: 13, kind: input, shape index: {}]
  %s14 = inlined_call_operand.vmem [shape: f32[8,32], index: 14, kind: input, shape index: {}]
  %s15 = inlined_call_operand.vmem [shape: f32[1,32], index: 15, kind: input, shape index: {}]
  %s16 = inlined_call_operand.vmem [shape: f32[2,256,32], index: 16, kind: output, shape index: {}]
  %s17 = sld [smem:[#allocation0]]
  $region97: #{tpu_custom_call.1} parent=0
    _
  %s19 = ssub.s32 1, %s17
  %s20 = scalar_select 0, %s19, %s17
  loop: start=0, step=1, limit=4
  $region2: #{tpu_custom_call.1} parent=0 // loop_pre_header
    _
  $region3: #{tpu_custom_call.1} parent=0 // loop_header
    %s22 = sphi 0, %s26
    %p23 = scmp.ge.s32.totalorder %s22, 4
    %s32 = sphi 0, %s34
    %s35 = sphi 0, %s32
    %s36 = sphi 0, %s35
    %s52 = sphi 0, %s36
    %s58 = sphi 0, %s60
    %s61 = sphi 0, %s58
    %s62 = sphi 0, %s61
    %s78 = sphi 0, %s62
    %s84 = sphi 0, %s86
    %s87 = sphi 0, %s84
    %s88 = sphi 0, %s87
    %s104 = sphi 0, %s88
    %s108 = sphi 0, %s108
    %s110 = sphi 0, %s108
    %s111 = sphi 0, %s110
    %s125 = sphi 0, %s111
    %s129 = sphi 0, %s129
    %s131 = sphi 0, %s129
    %s132 = sphi 0, %s131
    %s146 = sphi 0, %s132
    %s150 = sphi 0, %s150
    %s152 = sphi 0, %s150
    %s153 = sphi 0, %s152
    %s167 = sphi 0, %s153
    %s171 = sphi 0, %s171
    %s173 = sphi 0, %s171
    %s174 = sphi 0, %s173
    %s188 = sphi 0, %s174
    %s192 = sphi 0, %s192
    %s194 = sphi 0, %s192
    %s195 = sphi 0, %s194
    %s209 = sphi 0, %s195
    %s213 = sphi 0, %s213
    %s215 = sphi 0, %s213
    %s216 = sphi 0, %s215
    %s230 = sphi 0, %s216
    %s234 = sphi 0, %s234
    %s236 = sphi 0, %s234
    %s237 = sphi 0, %s236
    %s251 = sphi 0, %s237
    %s255 = sphi 0, %s255
    %s257 = sphi 0, %s255
    %s258 = sphi 0, %s257
    %s272 = sphi 0, %s258
    %s276 = sphi 0, %s276
    %s278 = sphi 0, %s276
    %s279 = sphi 0, %s278
    %s293 = sphi 0, %s279
    %s297 = sphi 0, %s297
    %s299 = sphi 0, %s297
    %s300 = sphi 0, %s299
    %s314 = sphi 0, %s300
    %s318 = sphi 0, %s318
    %s320 = sphi 0, %s318
    %s321 = sphi 0, %s320
    %s335 = sphi 0, %s321
    %s339 = sphi 0, %s339
    %s341 = sphi 0, %s339
    %s342 = sphi 0, %s341
    %s356 = sphi 0, %s342
    %s360 = sphi 0, %s360
    %s362 = sphi 0, %s360
    %s363 = sphi 0, %s362
    %s377 = sphi 0, %s363
    %s383 = sphi 0, %s385
    %s386 = sphi 0, %s383
    %s387 = sphi 0, %s386
    %s403 = sphi 0, %s387
  $region4: #{tpu_custom_call.1} parent=0 // loop_header_branch
    %25 = sbr.rel (%p23) target = $region8
  $region5: #{tpu_custom_call.1} parent=0 // loop_body
    %s27 = ssub.s32 %s22, 1
    %s28 = ssub.s32 %s22, 2
    %s29 = sadd.s32 %s22, 1
    %s30 = ssub.s32 %s22, %s29
    %p31 = scmp.eq.s32.totalorder %s30, 0
    %s33 = sadd.s32 %s32, 1
    %s34 = scalar_select %p31, %s32, %s33
    %p37 = pneg %p31
    %p38 = scmp.eq.s32.totalorder %s22, 1
    %p39 = por %p37, %p38
    %p40 = scmp.ne.s32.totalorder %s32, %s35
    %p41 = scmp.eq.s32.totalorder %s22, 0
    %p42 = por %p40, %p41
    %p43 = scmp.ne.s32.totalorder %s32, %s35
    %p44 = scmp.eq.s32.totalorder %s27, 1
    %p45 = por %p43, %p44
    %p46 = scmp.ne.s32.totalorder %s35, %s36
    %p47 = scmp.eq.s32.totalorder %s27, 0
    %p48 = por %p46, %p47
    %p49 = scmp.ne.s32.totalorder %s35, %s36
    %p50 = scmp.eq.s32.totalorder %s28, 1
    %p51 = por %p49, %p50
    %p53 = scmp.ne.s32.totalorder %s36, %s52
    %p54 = scmp.eq.s32.totalorder %s28, 0
    %p55 = por %p53, %p54
    %s56 = ssub.s32 %s22, %s29
    %p57 = scmp.eq.s32.totalorder %s56, 0
    %s59 = sadd.s32 %s58, 1
    %s60 = scalar_select %p57, %s58, %s59
    %p63 = pneg %p57
    %p64 = scmp.eq.s32.totalorder %s22, 1
    %p65 = por %p63, %p64
    %p66 = scmp.ne.s32.totalorder %s58, %s61
    %p67 = scmp.eq.s32.totalorder %s22, 0
    %p68 = por %p66, %p67
    %p69 = scmp.ne.s32.totalorder %s58, %s61
    %p70 = scmp.eq.s32.totalorder %s27, 1
    %p71 = por %p69, %p70
    %p72 = scmp.ne.s32.totalorder %s61, %s62
    %p73 = scmp.eq.s32.totalorder %s27, 0
    %p74 = por %p72, %p73
    %p75 = scmp.ne.s32.totalorder %s61, %s62
    %p76 = scmp.eq.s32.totalorder %s28, 1
    %p77 = por %p75, %p76
    %p79 = scmp.ne.s32.totalorder %s62, %s78
    %p80 = scmp.eq.s32.totalorder %s28, 0
    %p81 = por %p79, %p80
    %s82 = ssub.s32 %s22, %s29
    %p83 = scmp.eq.s32.totalorder %s82, 0
    %s85 = sadd.s32 %s84, 1
    %s86 = scalar_select %p83, %s84, %s85
    %p89 = pneg %p83
    %p90 = scmp.eq.s32.totalorder %s22, 1
    %p91 = por %p89, %p90
    %p92 = scmp.ne.s32.totalorder %s84, %s87
    %p93 = scmp.eq.s32.totalorder %s22, 0
    %p94 = por %p92, %p93
    %p95 = scmp.ne.s32.totalorder %s84, %s87
    %p96 = scmp.eq.s32.totalorder %s27, 1
    %p97 = por %p95, %p96
    %p98 = scmp.ne.s32.totalorder %s87, %s88
    %p99 = scmp.eq.s32.totalorder %s27, 0
    %p100 = por %p98, %p99
    %p101 = scmp.ne.s32.totalorder %s87, %s88
    %p102 = scmp.eq.s32.totalorder %s28, 1
    %p103 = por %p101, %p102
    %p105 = scmp.ne.s32.totalorder %s88, %s104
    %p106 = scmp.eq.s32.totalorder %s28, 0
    %p107 = por %p105, %p106
    %s109 = sadd.s32 %s108, 1
    %p112 = scmp.eq.s32.totalorder %s22, 1
    %p113 = scmp.ne.s32.totalorder %s108, %s110
    %p114 = scmp.eq.s32.totalorder %s22, 0
    %p115 = por %p113, %p114
    %p116 = scmp.ne.s32.totalorder %s108, %s110
    %p117 = scmp.eq.s32.totalorder %s27, 1
    %p118 = por %p116, %p117
    %p119 = scmp.ne.s32.totalorder %s110, %s111
    %p120 = scmp.eq.s32.totalorder %s27, 0
    %p121 = por %p119, %p120
    %p122 = scmp.ne.s32.totalorder %s110, %s111
    %p123 = scmp.eq.s32.totalorder %s28, 1
    %p124 = por %p122, %p123
    %p126 = scmp.ne.s32.totalorder %s111, %s125
    %p127 = scmp.eq.s32.totalorder %s28, 0
    %p128 = por %p126, %p127
    %s130 = sadd.s32 %s129, 1
    %p133 = scmp.eq.s32.totalorder %s22, 1
    %p134 = scmp.ne.s32.totalorder %s129, %s131
    %p135 = scmp.eq.s32.totalorder %s22, 0
    %p136 = por %p134, %p135
    %p137 = scmp.ne.s32.totalorder %s129, %s131
    %p138 = scmp.eq.s32.totalorder %s27, 1
    %p139 = por %p137, %p138
    %p140 = scmp.ne.s32.totalorder %s131, %s132
    %p141 = scmp.eq.s32.totalorder %s27, 0
    %p142 = por %p140, %p141
    %p143 = scmp.ne.s32.totalorder %s131, %s132
    %p144 = scmp.eq.s32.totalorder %s28, 1
    %p145 = por %p143, %p144
    %p147 = scmp.ne.s32.totalorder %s132, %s146
    %p148 = scmp.eq.s32.totalorder %s28, 0
    %p149 = por %p147, %p148
    %s151 = sadd.s32 %s150, 1
    %p154 = scmp.eq.s32.totalorder %s22, 1
    %p155 = scmp.ne.s32.totalorder %s150, %s152
    %p156 = scmp.eq.s32.totalorder %s22, 0
    %p157 = por %p155, %p156
    %p158 = scmp.ne.s32.totalorder %s150, %s152
    %p159 = scmp.eq.s32.totalorder %s27, 1
    %p160 = por %p158, %p159
    %p161 = scmp.ne.s32.totalorder %s152, %s153
    %p162 = scmp.eq.s32.totalorder %s27, 0
    %p163 = por %p161, %p162
    %p164 = scmp.ne.s32.totalorder %s152, %s153
    %p165 = scmp.eq.s32.totalorder %s28, 1
    %p166 = por %p164, %p165
    %p168 = scmp.ne.s32.totalorder %s153, %s167
    %p169 = scmp.eq.s32.totalorder %s28, 0
    %p170 = por %p168, %p169
    %s172 = sadd.s32 %s171, 1
    %p175 = scmp.eq.s32.totalorder %s22, 1
    %p176 = scmp.ne.s32.totalorder %s171, %s173
    %p177 = scmp.eq.s32.totalorder %s22, 0
    %p178 = por %p176, %p177
    %p179 = scmp.ne.s32.totalorder %s171, %s173
    %p180 = scmp.eq.s32.totalorder %s27, 1
    %p181 = por %p179, %p180
    %p182 = scmp.ne.s32.totalorder %s173, %s174
    %p183 = scmp.eq.s32.totalorder %s27, 0
    %p184 = por %p182, %p183
    %p185 = scmp.ne.s32.totalorder %s173, %s174
    %p186 = scmp.eq.s32.totalorder %s28, 1
    %p187 = por %p185, %p186
    %p189 = scmp.ne.s32.totalorder %s174, %s188
    %p190 = scmp.eq.s32.totalorder %s28, 0
    %p191 = por %p189, %p190
    %s193 = sadd.s32 %s192, 1
    %p196 = scmp.eq.s32.totalorder %s22, 1
    %p197 = scmp.ne.s32.totalorder %s192, %s194
    %p198 = scmp.eq.s32.totalorder %s22, 0
    %p199 = por %p197, %p198
    %p200 = scmp.ne.s32.totalorder %s192, %s194
    %p201 = scmp.eq.s32.totalorder %s27, 1
    %p202 = por %p200, %p201
    %p203 = scmp.ne.s32.totalorder %s194, %s195
    %p204 = scmp.eq.s32.totalorder %s27, 0
    %p205 = por %p203, %p204
    %p206 = scmp.ne.s32.totalorder %s194, %s195
    %p207 = scmp.eq.s32.totalorder %s28, 1
    %p208 = por %p206, %p207
    %p210 = scmp.ne.s32.totalorder %s195, %s209
    %p211 = scmp.eq.s32.totalorder %s28, 0
    %p212 = por %p210, %p211
    %s214 = sadd.s32 %s213, 1
    %p217 = scmp.eq.s32.totalorder %s22, 1
    %p218 = scmp.ne.s32.totalorder %s213, %s215
    %p219 = scmp.eq.s32.totalorder %s22, 0
    %p220 = por %p218, %p219
    %p221 = scmp.ne.s32.totalorder %s213, %s215
    %p222 = scmp.eq.s32.totalorder %s27, 1
    %p223 = por %p221, %p222
    %p224 = scmp.ne.s32.totalorder %s215, %s216
    %p225 = scmp.eq.s32.totalorder %s27, 0
    %p226 = por %p224, %p225
    %p227 = scmp.ne.s32.totalorder %s215, %s216
    %p228 = scmp.eq.s32.totalorder %s28, 1
    %p229 = por %p227, %p228
    %p231 = scmp.ne.s32.totalorder %s216, %s230
    %p232 = scmp.eq.s32.totalorder %s28, 0
    %p233 = por %p231, %p232
    %s235 = sadd.s32 %s234, 1
    %p238 = scmp.eq.s32.totalorder %s22, 1
    %p239 = scmp.ne.s32.totalorder %s234, %s236
    %p240 = scmp.eq.s32.totalorder %s22, 0
    %p241 = por %p239, %p240
    %p242 = scmp.ne.s32.totalorder %s234, %s236
    %p243 = scmp.eq.s32.totalorder %s27, 1
    %p244 = por %p242, %p243
    %p245 = scmp.ne.s32.totalorder %s236, %s237
    %p246 = scmp.eq.s32.totalorder %s27, 0
    %p247 = por %p245, %p246
    %p248 = scmp.ne.s32.totalorder %s236, %s237
    %p249 = scmp.eq.s32.totalorder %s28, 1
    %p250 = por %p248, %p249
    %p252 = scmp.ne.s32.totalorder %s237, %s251
    %p253 = scmp.eq.s32.totalorder %s28, 0
    %p254 = por %p252, %p253
    %s256 = sadd.s32 %s255, 1
    %p259 = scmp.eq.s32.totalorder %s22, 1
    %p260 = scmp.ne.s32.totalorder %s255, %s257
    %p261 = scmp.eq.s32.totalorder %s22, 0
    %p262 = por %p260, %p261
    %p263 = scmp.ne.s32.totalorder %s255, %s257
    %p264 = scmp.eq.s32.totalorder %s27, 1
    %p265 = por %p263, %p264
    %p266 = scmp.ne.s32.totalorder %s257, %s258
    %p267 = scmp.eq.s32.totalorder %s27, 0
    %p268 = por %p266, %p267
    %p269 = scmp.ne.s32.totalorder %s257, %s258
    %p270 = scmp.eq.s32.totalorder %s28, 1
    %p271 = por %p269, %p270
    %p273 = scmp.ne.s32.totalorder %s258, %s272
    %p274 = scmp.eq.s32.totalorder %s28, 0
    %p275 = por %p273, %p274
    %s277 = sadd.s32 %s276, 1
    %p280 = scmp.eq.s32.totalorder %s22, 1
    %p281 = scmp.ne.s32.totalorder %s276, %s278
    %p282 = scmp.eq.s32.totalorder %s22, 0
    %p283 = por %p281, %p282
    %p284 = scmp.ne.s32.totalorder %s276, %s278
    %p285 = scmp.eq.s32.totalorder %s27, 1
    %p286 = por %p284, %p285
    %p287 = scmp.ne.s32.totalorder %s278, %s279
    %p288 = scmp.eq.s32.totalorder %s27, 0
    %p289 = por %p287, %p288
    %p290 = scmp.ne.s32.totalorder %s278, %s279
    %p291 = scmp.eq.s32.totalorder %s28, 1
    %p292 = por %p290, %p291
    %p294 = scmp.ne.s32.totalorder %s279, %s293
    %p295 = scmp.eq.s32.totalorder %s28, 0
    %p296 = por %p294, %p295
    %s298 = sadd.s32 %s297, 1
    %p301 = scmp.eq.s32.totalorder %s22, 1
    %p302 = scmp.ne.s32.totalorder %s297, %s299
    %p303 = scmp.eq.s32.totalorder %s22, 0
    %p304 = por %p302, %p303
    %p305 = scmp.ne.s32.totalorder %s297, %s299
    %p306 = scmp.eq.s32.totalorder %s27, 1
    %p307 = por %p305, %p306
    %p308 = scmp.ne.s32.totalorder %s299, %s300
    %p309 = scmp.eq.s32.totalorder %s27, 0
    %p310 = por %p308, %p309
    %p311 = scmp.ne.s32.totalorder %s299, %s300
    %p312 = scmp.eq.s32.totalorder %s28, 1
    %p313 = por %p311, %p312
    %p315 = scmp.ne.s32.totalorder %s300, %s314
    %p316 = scmp.eq.s32.totalorder %s28, 0
    %p317 = por %p315, %p316
    %s319 = sadd.s32 %s318, 1
    %p322 = scmp.eq.s32.totalorder %s22, 1
    %p323 = scmp.ne.s32.totalorder %s318, %s320
    %p324 = scmp.eq.s32.totalorder %s22, 0
    %p325 = por %p323, %p324
    %p326 = scmp.ne.s32.totalorder %s318, %s320
    %p327 = scmp.eq.s32.totalorder %s27, 1
    %p328 = por %p326, %p327
    %p329 = scmp.ne.s32.totalorder %s320, %s321
    %p330 = scmp.eq.s32.totalorder %s27, 0
    %p331 = por %p329, %p330
    %p332 = scmp.ne.s32.totalorder %s320, %s321
    %p333 = scmp.eq.s32.totalorder %s28, 1
    %p334 = por %p332, %p333
    %p336 = scmp.ne.s32.totalorder %s321, %s335
    %p337 = scmp.eq.s32.totalorder %s28, 0
    %p338 = por %p336, %p337
    %s340 = sadd.s32 %s339, 1
    %p343 = scmp.eq.s32.totalorder %s22, 1
    %p344 = scmp.ne.s32.totalorder %s339, %s341
    %p345 = scmp.eq.s32.totalorder %s22, 0
    %p346 = por %p344, %p345
    %p347 = scmp.ne.s32.totalorder %s339, %s341
    %p348 = scmp.eq.s32.totalorder %s27, 1
    %p349 = por %p347, %p348
    %p350 = scmp.ne.s32.totalorder %s341, %s342
    %p351 = scmp.eq.s32.totalorder %s27, 0
    %p352 = por %p350, %p351
    %p353 = scmp.ne.s32.totalorder %s341, %s342
    %p354 = scmp.eq.s32.totalorder %s28, 1
    %p355 = por %p353, %p354
    %p357 = scmp.ne.s32.totalorder %s342, %s356
    %p358 = scmp.eq.s32.totalorder %s28, 0
    %p359 = por %p357, %p358
    %s361 = sadd.s32 %s360, 1
    %p364 = scmp.eq.s32.totalorder %s22, 1
    %p365 = scmp.ne.s32.totalorder %s360, %s362
    %p366 = scmp.eq.s32.totalorder %s22, 0
    %p367 = por %p365, %p366
    %p368 = scmp.ne.s32.totalorder %s360, %s362
    %p369 = scmp.eq.s32.totalorder %s27, 1
    %p370 = por %p368, %p369
    %p371 = scmp.ne.s32.totalorder %s362, %s363
    %p372 = scmp.eq.s32.totalorder %s27, 0
    %p373 = por %p371, %p372
    %p374 = scmp.ne.s32.totalorder %s362, %s363
    %p375 = scmp.eq.s32.totalorder %s28, 1
    %p376 = por %p374, %p375
    %p378 = scmp.ne.s32.totalorder %s363, %s377
    %p379 = scmp.eq.s32.totalorder %s28, 0
    %p380 = por %p378, %p379
    %s381 = ssub.s32 %s22, %s29
    %p382 = scmp.eq.s32.totalorder %s381, 0
    %s384 = sadd.s32 %s383, 1
    %s385 = scalar_select %p382, %s383, %s384
    %p388 = pneg %p382
    %p389 = scmp.eq.s32.totalorder %s22, 1
    %p390 = por %p388, %p389
    %p391 = scmp.ne.s32.totalorder %s383, %s386
    %p392 = scmp.eq.s32.totalorder %s22, 0
    %p393 = por %p391, %p392
    %p394 = scmp.ne.s32.totalorder %s383, %s386
    %p395 = scmp.eq.s32.totalorder %s27, 1
    %p396 = por %p394, %p395
    %p397 = scmp.ne.s32.totalorder %s386, %s387
    %p398 = scmp.eq.s32.totalorder %s27, 0
    %p399 = por %p397, %p398
    %p400 = scmp.ne.s32.totalorder %s386, %s387
    %p401 = scmp.eq.s32.totalorder %s28, 1
    %p402 = por %p400, %p401
    %p404 = scmp.ne.s32.totalorder %s387, %s403
    %p405 = scmp.eq.s32.totalorder %s28, 0
    %p406 = por %p404, %p405
    %p407 = scmp.le.s32.totalorder 1, %s22
    %p408 = scmp.lt.s32.totalorder %s22, 3
    %p409 = pnand %p407, %p408
    %p410 = pneg %p409
    // Predicated region
    $region9: #{tpu_custom_call.1} parent=5 // pred_check
      _
    $region10: #{tpu_custom_call.1} parent=5 // pred_check_branch
      %412 = sbr.rel (%p409) target = $region12
    $region11: #{tpu_custom_call.1} parent=5 // pred_region
      %s413 = ssub.s32 %s22, 1
      // Predicated region
      $region13: #{tpu_custom_call.1} parent=11 // pred_check
        %p414 = pneg %p121
      $region14: #{tpu_custom_call.1} parent=11 // pred_check_branch
        %416 = sbr.rel (%p414) target = $region16
      $region15: #{tpu_custom_call.1} parent=11 // pred_region
        _
      $region16: #{tpu_custom_call.1} parent=11 // pred_fallthru
        _
      // Predicated region
      $region17: #{tpu_custom_call.1} parent=11 // pred_check
        %p417 = pneg %p142
      $region18: #{tpu_custom_call.1} parent=11 // pred_check_branch
        %419 = sbr.rel (%p417) target = $region20
      $region19: #{tpu_custom_call.1} parent=11 // pred_region
        _
      $region20: #{tpu_custom_call.1} parent=11 // pred_fallthru
        _
      // Predicated region
      $region21: #{tpu_custom_call.1} parent=11 // pred_check
        %p420 = pneg %p163
      $region22: #{tpu_custom_call.1} parent=11 // pred_check_branch
        %422 = sbr.rel (%p420) target = $region24
      $region23: #{tpu_custom_call.1} parent=11 // pred_region
        _
      $region24: #{tpu_custom_call.1} parent=11 // pred_fallthru
        _
      // Predicated region
      $region25: #{tpu_custom_call.1} parent=11 // pred_check
        %p423 = pneg %p184
      $region26: #{tpu_custom_call.1} parent=11 // pred_check_branch
        %425 = sbr.rel (%p423) target = $region28
      $region27: #{tpu_custom_call.1} parent=11 // pred_region
        _
      $region28: #{tpu_custom_call.1} parent=11 // pred_fallthru
        _
      // Predicated region
      $region29: #{tpu_custom_call.1} parent=11 // pred_check
        %p426 = pneg %p205
      $region30: #{tpu_custom_call.1} parent=11 // pred_check_branch
        %428 = sbr.rel (%p426) target = $region32
      $region31: #{tpu_custom_call.1} parent=11 // pred_region
        _
      $region32: #{tpu_custom_call.1} parent=11 // pred_fallthru
        _
      // Predicated region
      $region33: #{tpu_custom_call.1} parent=11 // pred_check
        %p429 = pneg %p226
      $region34: #{tpu_custom_call.1} parent=11 // pred_check_branch
        %431 = sbr.rel (%p429) target = $region36
      $region35: #{tpu_custom_call.1} parent=11 // pred_region
        _
      $region36: #{tpu_custom_call.1} parent=11 // pred_fallthru
        _
      // Predicated region
      $region37: #{tpu_custom_call.1} parent=11 // pred_check
        %p432 = pneg %p247
      $region38: #{tpu_custom_call.1} parent=11 // pred_check_branch
        %434 = sbr.rel (%p432) target = $region40
      $region39: #{tpu_custom_call.1} parent=11 // pred_region
        _
      $region40: #{tpu_custom_call.1} parent=11 // pred_fallthru
        _
      // Predicated region
      $region41: #{tpu_custom_call.1} parent=11 // pred_check
        %p435 = pneg %p268
      $region42: #{tpu_custom_call.1} parent=11 // pred_check_branch
        %437 = sbr.rel (%p435) target = $region44
      $region43: #{tpu_custom_call.1} parent=11 // pred_region
        _
      $region44: #{tpu_custom_call.1} parent=11 // pred_fallthru
        _
      // Predicated region
      $region45: #{tpu_custom_call.1} parent=11 // pred_check
        %p438 = pneg %p289
      $region46: #{tpu_custom_call.1} parent=11 // pred_check_branch
        %440 = sbr.rel (%p438) target = $region48
      $region47: #{tpu_custom_call.1} parent=11 // pred_region
        _
      $region48: #{tpu_custom_call.1} parent=11 // pred_fallthru
        _
      // Predicated region
      $region49: #{tpu_custom_call.1} parent=11 // pred_check
        %p441 = pneg %p310
      $region50: #{tpu_custom_call.1} parent=11 // pred_check_branch
        %443 = sbr.rel (%p441) target = $region52
      $region51: #{tpu_custom_call.1} parent=11 // pred_region
        _
      $region52: #{tpu_custom_call.1} parent=11 // pred_fallthru
        _
      // Predicated region
      $region53: #{tpu_custom_call.1} parent=11 // pred_check
        %p444 = pneg %p331
      $region54: #{tpu_custom_call.1} parent=11 // pred_check_branch
        %446 = sbr.rel (%p444) target = $region56
      $region55: #{tpu_custom_call.1} parent=11 // pred_region
        _
      $region56: #{tpu_custom_call.1} parent=11 // pred_fallthru
        _
      // Predicated region
      $region57: #{tpu_custom_call.1} parent=11 // pred_check
        %p447 = pneg %p352
      $region58: #{tpu_custom_call.1} parent=11 // pred_check_branch
        %449 = sbr.rel (%p447) target = $region60
      $region59: #{tpu_custom_call.1} parent=11 // pred_region
        _
      $region60: #{tpu_custom_call.1} parent=11 // pred_fallthru
        _
      // Predicated region
      $region61: #{tpu_custom_call.1} parent=11 // pred_check
        %p450 = pneg %p373
      $region62: #{tpu_custom_call.1} parent=11 // pred_check_branch
        %452 = sbr.rel (%p450) target = $region64
      $region63: #{tpu_custom_call.1} parent=11 // pred_region
        _
      $region64: #{tpu_custom_call.1} parent=11 // pred_fallthru
        _
    $region12: #{tpu_custom_call.1} parent=5 // pred_fallthru
      _
    %p453 = scmp.lt.s32.totalorder %s22, 2
    // Predicated region
    $region65: #{tpu_custom_call.1} parent=5 // pred_check
      %p454 = pneg %p453
    $region66: #{tpu_custom_call.1} parent=5 // pred_check_branch
      %456 = sbr.rel (%p454) target = $region68
    $region67: #{tpu_custom_call.1} parent=5 // pred_region
      // Predicated region
      $region69: #{tpu_custom_call.1} parent=67 // pred_check
        %p457 = pneg %p42
      $region70: #{tpu_custom_call.1} parent=67 // pred_check_branch
        %459 = sbr.rel (%p457) target = $region72
      $region71: #{tpu_custom_call.1} parent=67 // pred_region
        %p460 = scmp.lt.s32.totalorder %s22, 1
        %s461 = scalar_select %p460, %s22, 1
        %s462 = smul.addr %s461, 32
        %s463 = smul.addr %s462, 8
        %s464 = scalar_lea.vmem %s0, %s463
      $region72: #{tpu_custom_call.1} parent=67 // pred_fallthru
        _
      // Predicated region
      $region73: #{tpu_custom_call.1} parent=67 // pred_check
        %p465 = pneg %p68
      $region74: #{tpu_custom_call.1} parent=67 // pred_check_branch
        %467 = sbr.rel (%p465) target = $region76
      $region75: #{tpu_custom_call.1} parent=67 // pred_region
        %p468 = scmp.lt.s32.totalorder %s22, 1
        %s469 = scalar_select %p468, %s22, 1
        %s470 = smul.addr %s469, 32
        %s471 = smul.addr %s470, 8
        %s472 = scalar_lea.vmem %s1, %s471
      $region76: #{tpu_custom_call.1} parent=67 // pred_fallthru
        _
      // Predicated region
      $region77: #{tpu_custom_call.1} parent=67 // pred_check
        %p473 = pneg %p94
      $region78: #{tpu_custom_call.1} parent=67 // pred_check_branch
        %475 = sbr.rel (%p473) target = $region80
      $region79: #{tpu_custom_call.1} parent=67 // pred_region
        %p476 = scmp.lt.s32.totalorder %s22, 1
        %s477 = scalar_select %p476, %s22, 1
        %s478 = smul.addr %s477, 32
        %s479 = smul.addr %s478, 8
        %s480 = scalar_lea.vmem %s2, %s479
      $region80: #{tpu_custom_call.1} parent=67 // pred_fallthru
        _
    $region68: #{tpu_custom_call.1} parent=5 // pred_fallthru
      _
    %p481 = scmp.le.s32.totalorder 1, %s22
    %p482 = scmp.lt.s32.totalorder %s22, 3
    %p483 = pnand %p481, %p482
    %p484 = pneg %p483
    // Predicated region
    $region81: #{tpu_custom_call.1} parent=5 // pred_check
      _
    $region82: #{tpu_custom_call.1} parent=5 // pred_check_branch
      %486 = sbr.rel (%p483) target = $region84
    $region83: #{tpu_custom_call.1} parent=5 // pred_region
      %s487 = ssub.s32 %s22, 1
      %p488 = scmp.lt.s32.totalorder %s27, 1
      %s489 = scalar_select %p488, %s27, 1
      %s490 = smul.addr %s489, 32
      %s491 = smul.addr %s490, 8
      %s492 = scalar_lea.vmem %s0, %s491
      %p493 = pneg %p48
      %p494 = pneg %p45
      %p495 = scmp.lt.s32.totalorder %s27, 1
      %s496 = scalar_select %p495, %s27, 1
      %s497 = smul.addr %s496, 32
      %s498 = smul.addr %s497, 8
      %s499 = scalar_lea.vmem %s1, %s498
      %p500 = pneg %p74
      %p501 = pneg %p71
      %p502 = scmp.lt.s32.totalorder %s27, 1
      %s503 = scalar_select %p502, %s27, 1
      %s504 = smul.addr %s503, 32
      %s505 = smul.addr %s504, 8
      %s506 = scalar_lea.vmem %s2, %s505
      %p507 = pneg %p100
      %p508 = pneg %p97
      %p509 = pneg %p121
      %p510 = pneg %p118
      %p511 = pneg %p142
      %p512 = pneg %p139
      %p513 = pneg %p163
      %p514 = pneg %p160
      %p515 = pneg %p184
      %p516 = pneg %p181
      %p517 = pneg %p205
      %p518 = pneg %p202
      %p519 = pneg %p226
      %p520 = pneg %p223
      %p521 = pneg %p247
      %p522 = pneg %p244
      %p523 = pneg %p268
      %p524 = pneg %p265
      %p525 = pneg %p289
      %p526 = pneg %p286
      %p527 = pneg %p310
      %p528 = pneg %p307
      %p529 = pneg %p331
      %p530 = pneg %p328
      %p531 = pneg %p352
      %p532 = pneg %p349
      %p533 = pneg %p373
      %p534 = pneg %p370
      %p535 = pneg %p399
      %p536 = pneg %p396
      %p537 = scmp.lt.s32.totalorder %s27, 1
      %s538 = scalar_select %p537, %s27, 1
      %s539 = smul.addr %s538, 32
      %s540 = smul.addr %s539, 8
      %s541 = scalar_lea.vmem %s16, %s540
      %p542 = scmp.lt.s32.totalorder %s27, 1
      %s543 = scalar_select %p542, %s27, 1
      %s544 = smul.addr %s543, 32
      %s545 = smul.addr %s544, 8
      %s546 = scalar_lea.vmem %s0, %s545
      %p547 = scmp.lt.s32.totalorder %s27, 1
      %s548 = scalar_select %p547, %s27, 1
      %s549 = smul.addr %s548, 32
      %s550 = smul.addr %s549, 8
      %s551 = scalar_lea.vmem %s1, %s550
      %p552 = scmp.lt.s32.totalorder %s27, 1
      %s553 = scalar_select %p552, %s27, 1
      %s554 = smul.addr %s553, 32
      %s555 = smul.addr %s554, 8
      %s556 = scalar_lea.vmem %s2, %s555
      %p557 = scmp.lt.s32.totalorder %s27, 1
      %s558 = scalar_select %p557, %s27, 1
      %s559 = smul.addr %s558, 32
      %s560 = smul.addr %s559, 8
      %s561 = scalar_lea.vmem %s16, %s560
      %vm562 = vcmask 261120
      %563 = vst.msk [vmem:[#allocation2] sm:$0xff] %vm562, 0.0
      %564 = vst.msk [vmem:[#allocation2 + $0x8] sm:$0xff] %vm562, 0.0
      %vm565 = vcmask 254976
      %566 = vst.msk [vmem:[#allocation2 + $0x10] sm:$0x3] %vm565, 0.0
      %567 = vst.msk [vmem:[#allocation2 + $0x18] sm:$0xff] %vm562, 0.0
      %568 = vst.msk [vmem:[#allocation2 + $0x20] sm:$0xff] %vm562, 0.0
      %569 = vst.msk [vmem:[#allocation2 + $0x28] sm:$0x3] %vm565, 0.0
      %570 = vst.msk [vmem:[#allocation2 + $0x30] sm:$0xff] %vm562, 0.0
      %571 = vst.msk [vmem:[#allocation2 + $0x38] sm:$0xff] %vm562, 0.0
      %572 = vst.msk [vmem:[#allocation2 + $0x40] sm:$0x3] %vm565, 0.0
      %573 = vst.msk [vmem:[#allocation2 + $0x48] sm:$0xff] %vm562, 0.0
      %574 = vst.msk [vmem:[#allocation2 + $0x50] sm:$0xff] %vm562, 0.0
      %575 = vst.msk [vmem:[#allocation2 + $0x58] sm:$0x3] %vm565, 0.0
      %576 = vst.msk [vmem:[#allocation2 + $0x60] sm:$0xff] %vm562, 0.0
      %577 = vst.msk [vmem:[#allocation2 + $0x68] sm:$0xff] %vm562, 0.0
      %578 = vst.msk [vmem:[#allocation2 + $0x70] sm:$0x3] %vm565, 0.0
      %579 = vst.msk [vmem:[#allocation2 + $0x78] sm:$0xff] %vm562, 0.0
      %580 = vst.msk [vmem:[#allocation2 + $0x80] sm:$0xff] %vm562, 0.0
      %581 = vst.msk [vmem:[#allocation2 + $0x88] sm:$0x3] %vm565, 0.0
      %582 = vst.msk [vmem:[#allocation2 + $0x90] sm:$0xff] %vm562, 0.0
      %583 = vst.msk [vmem:[#allocation2 + $0x98] sm:$0xff] %vm562, 0.0
      %584 = vst.msk [vmem:[#allocation2 + $0xa0] sm:$0x3] %vm565, 0.0
      %585 = vst.msk [vmem:[#allocation2 + $0xa8] sm:$0xff] %vm562, 0.0
      %586 = vst.msk [vmem:[#allocation2 + $0xb0] sm:$0xff] %vm562, 0.0
      %587 = vst.msk [vmem:[#allocation2 + $0xb8] sm:$0x3] %vm565, 0.0
      %588 = vst.msk [vmem:[#allocation2 + $0xc0] sm:$0xff] %vm562, 0.0
      %589 = vst.msk [vmem:[#allocation2 + $0xc8] sm:$0xff] %vm562, 0.0
      %590 = vst.msk [vmem:[#allocation2 + $0xd0] sm:$0x3] %vm565, 0.0
      %591 = vst.msk [vmem:[#allocation2 + $0xd8] sm:$0xff] %vm562, 0.0
      %592 = vst.msk [vmem:[#allocation2 + $0xe0] sm:$0xff] %vm562, 0.0
      %593 = vst.msk [vmem:[#allocation2 + $0xe8] sm:$0x3] %vm565, 0.0
      %594 = vst.msk [vmem:[#allocation2 + $0xf0] sm:$0xff] %vm562, 0.0
      %595 = vst.msk [vmem:[#allocation2 + $0xf8] sm:$0xff] %vm562, 0.0
      %596 = vst.msk [vmem:[#allocation2 + $0x100] sm:$0x3] %vm565, 0.0
      %597 = vst.msk [vmem:[#allocation2 + $0x108] sm:$0xff] %vm562, 0.0
      %598 = vst.msk [vmem:[#allocation2 + $0x110] sm:$0xff] %vm562, 0.0
      %599 = vst.msk [vmem:[#allocation2 + $0x118] sm:$0x3] %vm565, 0.0
      %600 = vst.msk [vmem:[#allocation2 + $0x120] sm:$0xff] %vm562, 0.0
      %601 = vst.msk [vmem:[#allocation2 + $0x128] sm:$0xff] %vm562, 0.0
      %602 = vst.msk [vmem:[#allocation2 + $0x130] sm:$0x3] %vm565, 0.0
      %603 = vst.msk [vmem:[#allocation2 + $0x138] sm:$0xff] %vm562, 0.0
      %604 = vst.msk [vmem:[#allocation2 + $0x140] sm:$0xff] %vm562, 0.0
      %605 = vst.msk [vmem:[#allocation2 + $0x148] sm:$0x3] %vm565, 0.0
      %606 = vst.msk [vmem:[#allocation2 + $0x150] sm:$0xff] %vm562, 0.0
      %607 = vst.msk [vmem:[#allocation2 + $0x158] sm:$0xff] %vm562, 0.0
      %608 = vst.msk [vmem:[#allocation2 + $0x160] sm:$0x3] %vm565, 0.0
      %609 = vst.msk [vmem:[#allocation2 + $0x168] sm:$0xff] %vm562, 0.0
      %610 = vst.msk [vmem:[#allocation2 + $0x170] sm:$0xff] %vm562, 0.0
      %611 = vst.msk [vmem:[#allocation2 + $0x178] sm:$0x3] %vm565, 0.0
      %612 = vst.msk [vmem:[#allocation2 + $0x180] sm:$0xff] %vm562, 0.0
      %613 = vst.msk [vmem:[#allocation2 + $0x188] sm:$0xff] %vm562, 0.0
      %614 = vst.msk [vmem:[#allocation2 + $0x190] sm:$0x3] %vm565, 0.0
      %615 = vst.msk [vmem:[#allocation2 + $0x198] sm:$0xff] %vm562, 0.0
      %616 = vst.msk [vmem:[#allocation2 + $0x1a0] sm:$0xff] %vm562, 0.0
      %617 = vst.msk [vmem:[#allocation2 + $0x1a8] sm:$0x3] %vm565, 0.0
      %v618 = vld [vmem:[%s551] sm:$0xff]
      %v619 = vld [vmem:[%s551 + $0x8] sm:$0xff]
      %v620 = vld [vmem:[%s551 + $0x10] sm:$0xff]
      %v621 = vld [vmem:[%s551 + $0x18] sm:$0xff]
      %v622 = vld [vmem:[%s551 + $0x20] sm:$0xff]
      %v623 = vld [vmem:[%s551 + $0x28] sm:$0xff]
      %v624 = vld [vmem:[%s551 + $0x30] sm:$0xff]
      %v625 = vld [vmem:[%s551 + $0x38] sm:$0xff]
      %v626 = vld [vmem:[%s551 + $0x40] sm:$0xff]
      %v627 = vld [vmem:[%s551 + $0x48] sm:$0xff]
      %v628 = vld [vmem:[%s551 + $0x50] sm:$0xff]
      %v629 = vld [vmem:[%s551 + $0x58] sm:$0xff]
      %v630 = vld [vmem:[%s551 + $0x60] sm:$0xff]
      %v631 = vld [vmem:[%s551 + $0x68] sm:$0xff]
      %v632 = vld [vmem:[%s551 + $0x70] sm:$0xff]
      %v633 = vld [vmem:[%s551 + $0x78] sm:$0xff]
      %v634 = vld [vmem:[%s551 + $0x80] sm:$0xff]
      %v635 = vld [vmem:[%s551 + $0x88] sm:$0xff]
      %v636 = vld [vmem:[%s551 + $0x90] sm:$0xff]
      %v637 = vld [vmem:[%s551 + $0x98] sm:$0xff]
      %v638 = vld [vmem:[%s551 + $0xa0] sm:$0xff]
      %v639 = vld [vmem:[%s551 + $0xa8] sm:$0xff]
      %v640 = vld [vmem:[%s551 + $0xb0] sm:$0xff]
      %v641 = vld [vmem:[%s551 + $0xb8] sm:$0xff]
      %v642 = vld [vmem:[%s551 + $0xc0] sm:$0xff]
      %v643 = vld [vmem:[%s551 + $0xc8] sm:$0xff]
      %v644 = vld [vmem:[%s551 + $0xd0] sm:$0xff]
      %v645 = vld [vmem:[%s551 + $0xd8] sm:$0xff]
      %v646 = vld [vmem:[%s551 + $0xe0] sm:$0xff]
      %v647 = vld [vmem:[%s551 + $0xe8] sm:$0xff]
      %v648 = vld [vmem:[%s551 + $0xf0] sm:$0xff]
      %v649 = vld [vmem:[%s551 + $0xf8] sm:$0xff]
      %v650 = vld [vmem:[%s7] sm:$0xff]
      %v651 = vld [vmem:[%s7 + $0x8] sm:$0xff]
      %v652 = vld [vmem:[%s7 + $0x10] sm:$0xff]
      %v653 = vld [vmem:[%s7 + $0x18] sm:$0xff]
      %v654 = vld [vmem:[%s7 + $0x20] sm:$0xff]
      %v655 = vld [vmem:[%s7 + $0x28] sm:$0xff]
      %v656 = vld [vmem:[%s7 + $0x30] sm:$0x1]
      %v657 = vld [vmem:[%s8] sm:$0x1]
      %v659 = vlaneseq
      %v660 = vshrl.u32 %v659, 7
      %v661 = vsub.s32 0, %v660
      %v662 = vrot.slane %v657, %v661
      %vm664 = vcmask 400384
      %v666 = vsel %vm664, %v618, 0
      %v669 = vsel %vm664, %v619, 0
      %v672 = vsel %vm664, %v620, 0
      %v675 = vsel %vm664, %v621, 0
      %v678 = vsel %vm664, %v622, 0
      %v681 = vsel %vm664, %v623, 0
      %v684 = vsel %vm664, %v624, 0
      %v687 = vsel %vm664, %v625, 0
      %v690 = vsel %vm664, %v626, 0
      %v693 = vsel %vm664, %v627, 0
      %v696 = vsel %vm664, %v628, 0
      %v699 = vsel %vm664, %v629, 0
      %v702 = vsel %vm664, %v630, 0
      %v705 = vsel %vm664, %v631, 0
      %v708 = vsel %vm664, %v632, 0
      %v711 = vsel %vm664, %v633, 0
      %v714 = vsel %vm664, %v634, 0
      %v717 = vsel %vm664, %v635, 0
      %v720 = vsel %vm664, %v636, 0
      %v723 = vsel %vm664, %v637, 0
      %v726 = vsel %vm664, %v638, 0
      %v729 = vsel %vm664, %v639, 0
      %v732 = vsel %vm664, %v640, 0
      %v735 = vsel %vm664, %v641, 0
      %v738 = vsel %vm664, %v642, 0
      %v741 = vsel %vm664, %v643, 0
      %v744 = vsel %vm664, %v644, 0
      %v747 = vsel %vm664, %v645, 0
      %v750 = vsel %vm664, %v646, 0
      %v753 = vsel %vm664, %v647, 0
      %v756 = vsel %vm664, %v648, 0
      %v759 = vsel %vm664, %v649, 0
      %vm761 = vcmask 1040384
      %v763 = vsel %vm761, %v656, 0
      %765 = vmatprep.subr.mxu0 0.0
      %766 = vmatpush1.msra.mxu0 %v650
      %767 = vmatprep.subr.mxu0 0.0
      %768 = vmatpush1.msra.mxu0 %v651
      %769 = vmatprep.subr.mxu0 0.0
      %770 = vmatpush1.msra.mxu0 %v652
      %771 = vmatprep.subr.mxu0 0.0
      %772 = vmatpush1.msra.mxu0 %v653
      %773 = vmatprep.subr.mxu0 0.0
      %774 = vmatpush1.msra.mxu0 %v654
      %775 = vmatprep.subr.mxu0 0.0
      %776 = vmatpush1.msra.mxu0 %v655
      %777 = vmatprep.subr.mxu0 0.0
      %778 = vmatpush1.msra.mxu0 %v763
      %779 = vmatprep.subr.mxu0 0.0
      %780 = vmatpush1.msra.mxu0 0.0
      %781 = vmatprep.subr.mxu0 0.0
      %782 = vmatpush1.msra.mxu0 0.0
      %783 = vmatprep.subr.mxu0 0.0
      %784 = vmatpush1.msra.mxu0 0.0
      %785 = vmatprep.subr.mxu0 0.0
      %786 = vmatpush1.msra.mxu0 0.0
      %787 = vmatprep.subr.mxu0 0.0
      %788 = vmatpush1.msra.mxu0 0.0
      %789 = vmatprep.subr.mxu0 0.0
      %790 = vmatpush1.msra.mxu0 0.0
      %791 = vmatprep.subr.mxu0 0.0
      %792 = vmatpush1.msra.mxu0 0.0
      %793 = vmatprep.subr.mxu0 0.0
      %794 = vmatpush1.msra.mxu0 0.0
      %795 = vmatprep.subr.mxu0 0.0
      %796 = vmatpush1.msra.mxu0 0.0
      %797 = vmatprep.subr.mxu0 0.0
      %798 = vmatpush1.msra.mxu0 0.0
      %799 = vmatprep.subr.mxu0 0.0
      %800 = vmatpush1.msra.mxu0 0.0
      %801 = vmatprep.subr.mxu0 0.0
      %802 = vmatpush1.msra.mxu0 0.0
      %803 = vmatprep.subr.mxu0 0.0
      %804 = vmatpush1.msra.mxu0 0.0
      %805 = vmatprep.subr.mxu0 0.0
      %806 = vmatpush1.msra.mxu0 0.0
      %807 = vmatprep.subr.mxu0 0.0
      %808 = vmatpush1.msra.mxu0 0.0
      %809 = vmatprep.subr.mxu0 0.0
      %810 = vmatpush1.msra.mxu0 0.0
      %811 = vmatprep.subr.mxu0 0.0
      %812 = vmatpush1.msra.mxu0 0.0
      %813 = vmatprep.subr.mxu0 0.0
      %814 = vmatpush1.msra.mxu0 0.0
      %815 = vmatprep.subr.mxu0 0.0
      %816 = vmatpush1.msra.mxu0 0.0
      %817 = vmatprep.subr.mxu0 0.0
      %818 = vmatpush1.msra.mxu0 0.0
      %819 = vmatprep.subr.mxu0 0.0
      %820 = vmatpush1.msra.mxu0 0.0
      %821 = vmatprep.subr.mxu0 0.0
      %822 = vmatpush1.msra.mxu0 0.0
      %823 = vmatprep.subr.mxu0 0.0
      %824 = vmatpush1.msra.mxu0 0.0
      %825 = vmatprep.subr.mxu0 0.0
      %826 = vmatpush1.msra.mxu0 0.0
      %827 = vmatprep.subr.mxu0 0.0
      %828 = vmatpush1.msra.mxu0 0.0
      %829 = vmatprep.mubr.f32.mxu0 0.0
      %830 = vmatmul.mubr.f32.gmra.mrb[0].mxu0 %v666
      %v831 = vpop.f32.mrb[0].mxu0
      %v832 = vadd.f32 %v662, %v831
      %v833 = vpop.f32.mrb[0].mxu0
      %834 = vmatprep.mubr.f32.mxu0 0.0
      %835 = vmatmul.mubr.f32.gmra.mrb[0].mxu0 %v669
      %v836 = vpop.f32.mrb[0].mxu0
      %v837 = vadd.f32 %v662, %v836
      %v838 = vpop.f32.mrb[0].mxu0
      %839 = vmatprep.mubr.f32.mxu0 0.0
      %840 = vmatmul.mubr.f32.gmra.mrb[0].mxu0 %v672
      %v841 = vpop.f32.mrb[0].mxu0
      %v842 = vadd.f32 %v662, %v841
      %v843 = vpop.f32.mrb[0].mxu0
      %844 = vmatprep.mubr.f32.mxu0 0.0
      %845 = vmatmul.mubr.f32.gmra.mrb[0].mxu0 %v675
      %v846 = vpop.f32.mrb[0].mxu0
      %v847 = vadd.f32 %v662, %v846
      %v848 = vpop.f32.mrb[0].mxu0
      %849 = vmatprep.mubr.f32.mxu0 0.0
      %850 = vmatmul.mubr.f32.gmra.mrb[0].mxu0 %v678
      %v851 = vpop.f32.mrb[0].mxu0
      %v852 = vadd.f32 %v662, %v851
      %v853 = vpop.f32.mrb[0].mxu0
      %854 = vmatprep.mubr.f32.mxu0 0.0
      %855 = vmatmul.mubr.f32.gmra.mrb[0].mxu0 %v681
      %v856 = vpop.f32.mrb[0].mxu0
      %v857 = vadd.f32 %v662, %v856
      %v858 = vpop.f32.mrb[0].mxu0
      %859 = vmatprep.mubr.f32.mxu0 0.0
      %860 = vmatmul.mubr.f32.gmra.mrb[0].mxu0 %v684
      %v861 = vpop.f32.mrb[0].mxu0
      %v862 = vadd.f32 %v662, %v861
      %v863 = vpop.f32.mrb[0].mxu0
      %864 = vmatprep.mubr.f32.mxu0 0.0
      %865 = vmatmul.mubr.f32.gmra.mrb[0].mxu0 %v687
      %v866 = vpop.f32.mrb[0].mxu0
      %v867 = vadd.f32 %v662, %v866
      %v868 = vpop.f32.mrb[0].mxu0
      %869 = vmatprep.mubr.f32.mxu0 0.0
      %870 = vmatmul.mubr.f32.gmra.mrb[0].mxu0 %v690
      %v871 = vpop.f32.mrb[0].mxu0
      %v872 = vadd.f32 %v662, %v871
      %v873 = vpop.f32.mrb[0].mxu0
      %874 = vmatprep.mubr.f32.mxu0 0.0
      %875 = vmatmul.mubr.f32.gmra.mrb[0].mxu0 %v693
      %v876 = vpop.f32.mrb[0].mxu0
      %v877 = vadd.f32 %v662, %v876
      %v878 = vpop.f32.mrb[0].mxu0
      %879 = vmatprep.mubr.f32.mxu0 0.0
      %880 = vmatmul.mubr.f32.gmra.mrb[0].mxu0 %v696
      %v881 = vpop.f32.mrb[0].mxu0
      %v882 = vadd.f32 %v662, %v881
      %v883 = vpop.f32.mrb[0].mxu0
      %884 = vmatprep.mubr.f32.mxu0 0.0
      %885 = vmatmul.mubr.f32.gmra.mrb[0].mxu0 %v699
      %v886 = vpop.f32.mrb[0].mxu0
      %v887 = vadd.f32 %v662, %v886
      %v888 = vpop.f32.mrb[0].mxu0
      %889 = vmatprep.mubr.f32.mxu0 0.0
      %890 = vmatmul.mubr.f32.gmra.mrb[0].mxu0 %v702
      %v891 = vpop.f32.mrb[0].mxu0
      %v892 = vadd.f32 %v662, %v891
      %v893 = vpop.f32.mrb[0].mxu0
      %894 = vmatprep.mubr.f32.mxu0 0.0
      %895 = vmatmul.mubr.f32.gmra.mrb[0].mxu0 %v705
      %v896 = vpop.f32.mrb[0].mxu0
      %v897 = vadd.f32 %v662, %v896
      %v898 = vpop.f32.mrb[0].mxu0
      %899 = vmatprep.mubr.f32.mxu0 0.0
      %900 = vmatmul.mubr.f32.gmra.mrb[0].mxu0 %v708
      %v901 = vpop.f32.mrb[0].mxu0
      %v902 = vadd.f32 %v662, %v901
      %v903 = vpop.f32.mrb[0].mxu0
      %904 = vmatprep.mubr.f32.mxu0 0.0
      %905 = vmatmul.mubr.f32.gmra.mrb[0].mxu0 %v711
      %v906 = vpop.f32.mrb[0].mxu0
      %v907 = vadd.f32 %v662, %v906
      %v908 = vpop.f32.mrb[0].mxu0
      %909 = vmatprep.mubr.f32.mxu0 0.0
      %910 = vmatmul.mubr.f32.gmra.mrb[0].mxu0 %v714
      %v911 = vpop.f32.mrb[0].mxu0
      %v912 = vadd.f32 %v662, %v911
      %v913 = vpop.f32.mrb[0].mxu0
      %914 = vmatprep.mubr.f32.mxu0 0.0
      %915 = vmatmul.mubr.f32.gmra.mrb[0].mxu0 %v717
      %v916 = vpop.f32.mrb[0].mxu0
      %v917 = vadd.f32 %v662, %v916
      %v918 = vpop.f32.mrb[0].mxu0
      %919 = vmatprep.mubr.f32.mxu0 0.0
      %920 = vmatmul.mubr.f32.gmra.mrb[0].mxu0 %v720
      %v921 = vpop.f32.mrb[0].mxu0
      %v922 = vadd.f32 %v662, %v921
      %v923 = vpop.f32.mrb[0].mxu0
      %924 = vmatprep.mubr.f32.mxu0 0.0
      %925 = vmatmul.mubr.f32.gmra.mrb[0].mxu0 %v723
      %v926 = vpop.f32.mrb[0].mxu0
      %v927 = vadd.f32 %v662, %v926
      %v928 = vpop.f32.mrb[0].mxu0
      %929 = vmatprep.mubr.f32.mxu0 0.0
      %930 = vmatmul.mubr.f32.gmra.mrb[0].mxu0 %v726
      %v931 = vpop.f32.mrb[0].mxu0
      %v932 = vadd.f32 %v662, %v931
      %v933 = vpop.f32.mrb[0].mxu0
      %934 = vmatprep.mubr.f32.mxu0 0.0
      %935 = vmatmul.mubr.f32.gmra.mrb[0].mxu0 %v729
      %v936 = vpop.f32.mrb[0].mxu0
      %v937 = vadd.f32 %v662, %v936
      %v938 = vpop.f32.mrb[0].mxu0
      %939 = vmatprep.mubr.f32.mxu0 0.0
      %940 = vmatmul.mubr.f32.gmra.mrb[0].mxu0 %v732
      %v941 = vpop.f32.mrb[0].mxu0
      %v942 = vadd.f32 %v662, %v941
      %v943 = vpop.f32.mrb[0].mxu0
      %944 = vmatprep.mubr.f32.mxu0 0.0
      %945 = vmatmul.mubr.f32.gmra.mrb[0].mxu0 %v735
      %v946 = vpop.f32.mrb[0].mxu0
      %v947 = vadd.f32 %v662, %v946
      %v948 = vpop.f32.mrb[0].mxu0
      %949 = vmatprep.mubr.f32.mxu0 0.0
      %950 = vmatmul.mubr.f32.gmra.mrb[0].mxu0 %v738
      %v951 = vpop.f32.mrb[0].mxu0
      %v952 = vadd.f32 %v662, %v951
      %v953 = vpop.f32.mrb[0].mxu0
      %954 = vmatprep.mubr.f32.mxu0 0.0
      %955 = vmatmul.mubr.f32.gmra.mrb[0].mxu0 %v741
      %v956 = vpop.f32.mrb[0].mxu0
      %v957 = vadd.f32 %v662, %v956
      %v958 = vpop.f32.mrb[0].mxu0
      %959 = vmatprep.mubr.f32.mxu0 0.0
      %960 = vmatmul.mubr.f32.gmra.mrb[0].mxu0 %v744
      %v961 = vpop.f32.mrb[0].mxu0
      %v962 = vadd.f32 %v662, %v961
      %v963 = vpop.f32.mrb[0].mxu0
      %964 = vmatprep.mubr.f32.mxu0 0.0
      %965 = vmatmul.mubr.f32.gmra.mrb[0].mxu0 %v747
      %v966 = vpop.f32.mrb[0].mxu0
      %v967 = vadd.f32 %v662, %v966
      %v968 = vpop.f32.mrb[0].mxu0
      %969 = vmatprep.mubr.f32.mxu0 0.0
      %970 = vmatmul.mubr.f32.gmra.mrb[0].mxu0 %v750
      %v971 = vpop.f32.mrb[0].mxu0
      %v972 = vadd.f32 %v662, %v971
      %v973 = vpop.f32.mrb[0].mxu0
      %974 = vmatprep.mubr.f32.mxu0 0.0
      %975 = vmatmul.mubr.f32.gmra.mrb[0].mxu0 %v753
      %v976 = vpop.f32.mrb[0].mxu0
      %v977 = vadd.f32 %v662, %v976
      %v978 = vpop.f32.mrb[0].mxu0
      %979 = vmatprep.mubr.f32.mxu0 0.0
      %980 = vmatmul.mubr.f32.gmra.mrb[0].mxu0 %v756
      %v981 = vpop.f32.mrb[0].mxu0
      %v982 = vadd.f32 %v662, %v981
      %v983 = vpop.f32.mrb[0].mxu0
      %984 = vmatprep.mubr.f32.mxu0 0.0
      %985 = vmatmul.mubr.f32.gmra.mrb[0].mxu0 %v759
      %v986 = vpop.f32.mrb[0].mxu0
      %v987 = vadd.f32 %v662, %v986
      %v988 = vpop.f32.mrb[0].mxu0
      %989 = vdwg.mxu0
      %v990 = vmax.f32 %v832, 0.0
      %v991 = vmax.f32 %v837, 0.0
      %v992 = vmax.f32 %v842, 0.0
      %v993 = vmax.f32 %v847, 0.0
      %v994 = vmax.f32 %v852, 0.0
      %v995 = vmax.f32 %v857, 0.0
      %v996 = vmax.f32 %v862, 0.0
      %v997 = vmax.f32 %v867, 0.0
      %v998 = vmax.f32 %v872, 0.0
      %v999 = vmax.f32 %v877, 0.0
      %v1000 = vmax.f32 %v882, 0.0
      %v1001 = vmax.f32 %v887, 0.0
      %v1002 = vmax.f32 %v892, 0.0
      %v1003 = vmax.f32 %v897, 0.0
      %v1004 = vmax.f32 %v902, 0.0
      %v1005 = vmax.f32 %v907, 0.0
      %v1006 = vmax.f32 %v912, 0.0
      %v1007 = vmax.f32 %v917, 0.0
      %v1008 = vmax.f32 %v922, 0.0
      %v1009 = vmax.f32 %v927, 0.0
      %v1010 = vmax.f32 %v932, 0.0
      %v1011 = vmax.f32 %v937, 0.0
      %v1012 = vmax.f32 %v942, 0.0
      %v1013 = vmax.f32 %v947, 0.0
      %v1014 = vmax.f32 %v952, 0.0
      %v1015 = vmax.f32 %v957, 0.0
      %v1016 = vmax.f32 %v962, 0.0
      %v1017 = vmax.f32 %v967, 0.0
      %v1018 = vmax.f32 %v972, 0.0
      %v1019 = vmax.f32 %v977, 0.0
      %v1020 = vmax.f32 %v982, 0.0
      %v1021 = vmax.f32 %v987, 0.0
      %s1022 = scalar_lea.vmem [#allocation2], 24
      %1023 = vst.msk [vmem:[%s1022 + $0x1] sm:$0xff] %vm562, %v990
      %1024 = vst.msk [vmem:[%s1022 + $0x9] sm:$0xff] %vm562, %v991
      %1025 = vst.msk [vmem:[%s1022 + $0x19] sm:$0xff] %vm562, %v992
      %1026 = vst.msk [vmem:[%s1022 + $0x21] sm:$0xff] %vm562, %v993
      %1027 = vst.msk [vmem:[%s1022 + $0x31] sm:$0xff] %vm562, %v994
      %1028 = vst.msk [vmem:[%s1022 + $0x39] sm:$0xff] %vm562, %v995
      %1029 = vst.msk [vmem:[%s1022 + $0x49] sm:$0xff] %vm562, %v996
      %1030 = vst.msk [vmem:[%s1022 + $0x51] sm:$0xff] %vm562, %v997
      %1031 = vst.msk [vmem:[%s1022 + $0x61] sm:$0xff] %vm562, %v998
      %1032 = vst.msk [vmem:[%s1022 + $0x69] sm:$0xff] %vm562, %v999
      %1033 = vst.msk [vmem:[%s1022 + $0x79] sm:$0xff] %vm562, %v1000
      %1034 = vst.msk [vmem:[%s1022 + $0x81] sm:$0xff] %vm562, %v1001
      %1035 = vst.msk [vmem:[%s1022 + $0x91] sm:$0xff] %vm562, %v1002
      %1036 = vst.msk [vmem:[%s1022 + $0x99] sm:$0xff] %vm562, %v1003
      %1037 = vst.msk [vmem:[%s1022 + $0xa9] sm:$0xff] %vm562, %v1004
      %1038 = vst.msk [vmem:[%s1022 + $0xb1] sm:$0xff] %vm562, %v1005
      %1039 = vst.msk [vmem:[%s1022 + $0xc1] sm:$0xff] %vm562, %v1006
      %1040 = vst.msk [vmem:[%s1022 + $0xc9] sm:$0xff] %vm562, %v1007
      %1041 = vst.msk [vmem:[%s1022 + $0xd9] sm:$0xff] %vm562, %v1008
      %1042 = vst.msk [vmem:[%s1022 + $0xe1] sm:$0xff] %vm562, %v1009
      %1043 = vst.msk [vmem:[%s1022 + $0xf1] sm:$0xff] %vm562, %v1010
      %1044 = vst.msk [vmem:[%s1022 + $0xf9] sm:$0xff] %vm562, %v1011
      %1045 = vst.msk [vmem:[%s1022 + $0x109] sm:$0xff] %vm562, %v1012
      %1046 = vst.msk [vmem:[%s1022 + $0x111] sm:$0xff] %vm562, %v1013
      %1047 = vst.msk [vmem:[%s1022 + $0x121] sm:$0xff] %vm562, %v1014
      %1048 = vst.msk [vmem:[%s1022 + $0x129] sm:$0xff] %vm562, %v1015
      %1049 = vst.msk [vmem:[%s1022 + $0x139] sm:$0xff] %vm562, %v1016
      %1050 = vst.msk [vmem:[%s1022 + $0x141] sm:$0xff] %vm562, %v1017
      %1051 = vst.msk [vmem:[%s1022 + $0x151] sm:$0xff] %vm562, %v1018
      %1052 = vst.msk [vmem:[%s1022 + $0x159] sm:$0xff] %vm562, %v1019
      %1053 = vst.msk [vmem:[%s1022 + $0x169] sm:$0xff] %vm562, %v1020
      %1054 = vst.msk [vmem:[%s1022 + $0x171] sm:$0xff] %vm562, %v1021
      %v1055 = vld [vmem:[#allocation2] sm:$0xff]
      %v1056 = vld [vmem:[#allocation2 + $0x8] sm:$0xff]
      %v1057 = vld [vmem:[#allocation2 + $0x18] sm:$0xff]
      %v1058 = vld [vmem:[#allocation2 + $0x20] sm:$0xff]
      %v1059 = vld [vmem:[#allocation2 + $0x30] sm:$0xff]
      %v1060 = vld [vmem:[#allocation2 + $0x38] sm:$0xff]
      %v1061 = vld [vmem:[#allocation2 + $0x48] sm:$0xff]
      %v1062 = vld [vmem:[#allocation2 + $0x50] sm:$0xff]
      %v1063 = vld [vmem:[#allocation2 + $0x60] sm:$0xff]
      %v1064 = vld [vmem:[#allocation2 + $0x68] sm:$0xff]
      %v1065 = vld [vmem:[#allocation2 + $0x78] sm:$0xff]
      %v1066 = vld [vmem:[#allocation2 + $0x80] sm:$0xff]
      %v1067 = vld [vmem:[#allocation2 + $0x90] sm:$0xff]
      %v1068 = vld [vmem:[#allocation2 + $0x98] sm:$0xff]
      %v1069 = vld [vmem:[#allocation2 + $0xa8] sm:$0xff]
      %v1070 = vld [vmem:[#allocation2 + $0xb0] sm:$0xff]
      %v1071 = vld [vmem:[#allocation2 + $0xc0] sm:$0xff]
      %v1072 = vld [vmem:[#allocation2 + $0xc8] sm:$0xff]
      %v1073 = vld [vmem:[#allocation2 + $0xd8] sm:$0xff]
      %v1074 = vld [vmem:[#allocation2 + $0xe0] sm:$0xff]
      %v1075 = vld [vmem:[#allocation2 + $0xf0] sm:$0xff]
      %v1076 = vld [vmem:[#allocation2 + $0xf8] sm:$0xff]
      %v1077 = vld [vmem:[#allocation2 + $0x108] sm:$0xff]
      %v1078 = vld [vmem:[#allocation2 + $0x110] sm:$0xff]
      %v1079 = vld [vmem:[#allocation2 + $0x120] sm:$0xff]
      %v1080 = vld [vmem:[#allocation2 + $0x128] sm:$0xff]
      %v1081 = vld [vmem:[#allocation2 + $0x138] sm:$0xff]
      %v1082 = vld [vmem:[#allocation2 + $0x140] sm:$0xff]
      %v1083 = vld [vmem:[#allocation2 + $0x150] sm:$0xff]
      %v1084 = vld [vmem:[#allocation2 + $0x158] sm:$0xff]
      %v1085 = vld [vmem:[#allocation2 + $0x168] sm:$0xff]
      %v1086 = vld [vmem:[#allocation2 + $0x170] sm:$0xff]
      %1087 = vst.msk [vmem:[#allocation3] sm:$0xff] %vm562, %v1055
      %1088 = vst.msk [vmem:[#allocation3 + $0x28] sm:$0xff] %vm562, %v1056
      %1089 = vst.msk [vmem:[#allocation3 + $0x50] sm:$0xff] %vm562, %v1057
      %1090 = vst.msk [vmem:[#allocation3 + $0x78] sm:$0xff] %vm562, %v1058
      %1091 = vst.msk [vmem:[#allocation3 + $0xa0] sm:$0xff] %vm562, %v1059
      %1092 = vst.msk [vmem:[#allocation3 + $0xc8] sm:$0xff] %vm562, %v1060
      %1093 = vst.msk [vmem:[#allocation3 + $0xf0] sm:$0xff] %vm562, %v1061
      %1094 = vst.msk [vmem:[#allocation3 + $0x118] sm:$0xff] %vm562, %v1062
      %1095 = vst.msk [vmem:[#allocation3 + $0x140] sm:$0xff] %vm562, %v1063
      %1096 = vst.msk [vmem:[#allocation3 + $0x168] sm:$0xff] %vm562, %v1064
      %1097 = vst.msk [vmem:[#allocation3 + $0x190] sm:$0xff] %vm562, %v1065
      %1098 = vst.msk [vmem:[#allocation3 + $0x1b8] sm:$0xff] %vm562, %v1066
      %1099 = vst.msk [vmem:[#allocation3 + $0x1e0] sm:$0xff] %vm562, %v1067
      %1100 = vst.msk [vmem:[#allocation3 + $0x208] sm:$0xff] %vm562, %v1068
      %1101 = vst.msk [vmem:[#allocation3 + $0x230] sm:$0xff] %vm562, %v1069
      %1102 = vst.msk [vmem:[#allocation3 + $0x258] sm:$0xff] %vm562, %v1070
      %1103 = vst.msk [vmem:[#allocation3 + $0x280] sm:$0xff] %vm562, %v1071
      %1104 = vst.msk [vmem:[#allocation3 + $0x2a8] sm:$0xff] %vm562, %v1072
      %1105 = vst.msk [vmem:[#allocation3 + $0x2d0] sm:$0xff] %vm562, %v1073
      %1106 = vst.msk [vmem:[#allocation3 + $0x2f8] sm:$0xff] %vm562, %v1074
      %1107 = vst.msk [vmem:[#allocation3 + $0x320] sm:$0xff] %vm562, %v1075
      %1108 = vst.msk [vmem:[#allocation3 + $0x348] sm:$0xff] %vm562, %v1076
      %1109 = vst.msk [vmem:[#allocation3 + $0x370] sm:$0xff] %vm562, %v1077
      %1110 = vst.msk [vmem:[#allocation3 + $0x398] sm:$0xff] %vm562, %v1078
      %1111 = vst.msk [vmem:[#allocation3 + $0x3c0] sm:$0xff] %vm562, %v1079
      %1112 = vst.msk [vmem:[#allocation3 + $0x3e8] sm:$0xff] %vm562, %v1080
      %1113 = vst.msk [vmem:[#allocation3 + $0x410] sm:$0xff] %vm562, %v1081
      %1114 = vst.msk [vmem:[#allocation3 + $0x438] sm:$0xff] %vm562, %v1082
      %1115 = vst.msk [vmem:[#allocation3 + $0x460] sm:$0xff] %vm562, %v1083
      %1116 = vst.msk [vmem:[#allocation3 + $0x488] sm:$0xff] %vm562, %v1084
      %1117 = vst.msk [vmem:[#allocation3 + $0x4b0] sm:$0xff] %vm562, %v1085
      %1118 = vst.msk [vmem:[#allocation3 + $0x4d8] sm:$0xff] %vm562, %v1086
      %v1119 = vld [vmem:[#allocation2 + $0x1] sm:$0xff]
      %v1120 = vld [vmem:[#allocation2 + $0x9] sm:$0xff]
      %v1121 = vld [vmem:[#allocation2 + $0x19] sm:$0xff]
      %v1122 = vld [vmem:[#allocation2 + $0x21] sm:$0xff]
      %v1123 = vld [vmem:[#allocation2 + $0x31] sm:$0xff]
      %v1124 = vld [vmem:[#allocation2 + $0x39] sm:$0xff]
      %v1125 = vld [vmem:[#allocation2 + $0x49] sm:$0xff]
      %v1126 = vld [vmem:[#allocation2 + $0x51] sm:$0xff]
      %v1127 = vld [vmem:[#allocation2 + $0x61] sm:$0xff]
      %v1128 = vld [vmem:[#allocation2 + $0x69] sm:$0xff]
      %v1129 = vld [vmem:[#allocation2 + $0x79] sm:$0xff]
      %v1130 = vld [vmem:[#allocation2 + $0x81] sm:$0xff]
      %v1131 = vld [vmem:[#allocation2 + $0x91] sm:$0xff]
      %v1132 = vld [vmem:[#allocation2 + $0x99] sm:$0xff]
      %v1133 = vld [vmem:[#allocation2 + $0xa9] sm:$0xff]
      %v1134 = vld [vmem:[#allocation2 + $0xb1] sm:$0xff]
      %v1135 = vld [vmem:[#allocation2 + $0xc1] sm:$0xff]
      %v1136 = vld [vmem:[#allocation2 + $0xc9] sm:$0xff]
      %v1137 = vld [vmem:[#allocation2 + $0xd9] sm:$0xff]
      %v1138 = vld [vmem:[#allocation2 + $0xe1] sm:$0xff]
      %v1139 = vld [vmem:[#allocation2 + $0xf1] sm:$0xff]
      %v1140 = vld [vmem:[#allocation2 + $0xf9] sm:$0xff]
      %v1141 = vld [vmem:[#allocation2 + $0x109] sm:$0xff]
      %v1142 = vld [vmem:[#allocation2 + $0x111] sm:$0xff]
      %v1143 = vld [vmem:[#allocation2 + $0x121] sm:$0xff]
      %v1144 = vld [vmem:[#allocation2 + $0x129] sm:$0xff]
      %v1145 = vld [vmem:[#allocation2 + $0x139] sm:$0xff]
      %v1146 = vld [vmem:[#allocation2 + $0x141] sm:$0xff]
      %v1147 = vld [vmem:[#allocation2 + $0x151] sm:$0xff]
      %v1148 = vld [vmem:[#allocation2 + $0x159] sm:$0xff]
      %v1149 = vld [vmem:[#allocation2 + $0x169] sm:$0xff]
      %v1150 = vld [vmem:[#allocation2 + $0x171] sm:$0xff]
      %1183 = vrot.lane.b32.xlu0 %v1119, 32
      %v1184 = vpop.permute.xlu0 %1183
      %1185 = vrot.lane.b32.xlu0 %v1120, 32
      %v1186 = vpop.permute.xlu0 %1185
      %1187 = vrot.lane.b32.xlu0 %v1121, 32
      %v1188 = vpop.permute.xlu0 %1187
      %1189 = vrot.lane.b32.xlu0 %v1122, 32
      %v1190 = vpop.permute.xlu0 %1189
      %1191 = vrot.lane.b32.xlu0 %v1123, 32
      %v1192 = vpop.permute.xlu0 %1191
      %1193 = vrot.lane.b32.xlu0 %v1124, 32
      %v1194 = vpop.permute.xlu0 %1193
      %1195 = vrot.lane.b32.xlu0 %v1125, 32
      %v1196 = vpop.permute.xlu0 %1195
      %1197 = vrot.lane.b32.xlu0 %v1126, 32
      %v1198 = vpop.permute.xlu0 %1197
      %1199 = vrot.lane.b32.xlu0 %v1127, 32
      %v1200 = vpop.permute.xlu0 %1199
      %1201 = vrot.lane.b32.xlu0 %v1128, 32
      %v1202 = vpop.permute.xlu0 %1201
      %1203 = vrot.lane.b32.xlu0 %v1129, 32
      %v1204 = vpop.permute.xlu0 %1203
      %1205 = vrot.lane.b32.xlu0 %v1130, 32
      %v1206 = vpop.permute.xlu0 %1205
      %1207 = vrot.lane.b32.xlu0 %v1131, 32
      %v1208 = vpop.permute.xlu0 %1207
      %1209 = vrot.lane.b32.xlu0 %v1132, 32
      %v1210 = vpop.permute.xlu0 %1209
      %1211 = vrot.lane.b32.xlu0 %v1133, 32
      %v1212 = vpop.permute.xlu0 %1211
      %1213 = vrot.lane.b32.xlu0 %v1134, 32
      %v1214 = vpop.permute.xlu0 %1213
      %1215 = vrot.lane.b32.xlu0 %v1135, 32
      %v1216 = vpop.permute.xlu0 %1215
      %1217 = vrot.lane.b32.xlu0 %v1136, 32
      %v1218 = vpop.permute.xlu0 %1217
      %1219 = vrot.lane.b32.xlu0 %v1137, 32
      %v1220 = vpop.permute.xlu0 %1219
      %1221 = vrot.lane.b32.xlu0 %v1138, 32
      %v1222 = vpop.permute.xlu0 %1221
      %1223 = vrot.lane.b32.xlu0 %v1139, 32
      %v1224 = vpop.permute.xlu0 %1223
      %1225 = vrot.lane.b32.xlu0 %v1140, 32
      %v1226 = vpop.permute.xlu0 %1225
      %1227 = vrot.lane.b32.xlu0 %v1141, 32
      %v1228 = vpop.permute.xlu0 %1227
      %1229 = vrot.lane.b32.xlu0 %v1142, 32
      %v1230 = vpop.permute.xlu0 %1229
      %1231 = vrot.lane.b32.xlu0 %v1143, 32
      %v1232 = vpop.permute.xlu0 %1231
      %1233 = vrot.lane.b32.xlu0 %v1144, 32
      %v1234 = vpop.permute.xlu0 %1233
      %1235 = vrot.lane.b32.xlu0 %v1145, 32
      %v1236 = vpop.permute.xlu0 %1235
      %1237 = vrot.lane.b32.xlu0 %v1146, 32
      %v1238 = vpop.permute.xlu0 %1237
      %1239 = vrot.lane.b32.xlu0 %v1147, 32
      %v1240 = vpop.permute.xlu0 %1239
      %1241 = vrot.lane.b32.xlu0 %v1148, 32
      %v1242 = vpop.permute.xlu0 %1241
      %1243 = vrot.lane.b32.xlu0 %v1149, 32
      %v1244 = vpop.permute.xlu0 %1243
      %1245 = vrot.lane.b32.xlu0 %v1150, 32
      %v1246 = vpop.permute.xlu0 %1245
      %vm1279 = vcmask 523520
      %1280 = vst.msk [vmem:[#allocation3] sm:$0xff] %vm1279, %v1184
      %1281 = vst.msk [vmem:[#allocation3 + $0x28] sm:$0xff] %vm1279, %v1186
      %1282 = vst.msk [vmem:[#allocation3 + $0x50] sm:$0xff] %vm1279, %v1188
      %1283 = vst.msk [vmem:[#allocation3 + $0x78] sm:$0xff] %vm1279, %v1190
      %1284 = vst.msk [vmem:[#allocation3 + $0xa0] sm:$0xff] %vm1279, %v1192
      %1285 = vst.msk [vmem:[#allocation3 + $0xc8] sm:$0xff] %vm1279, %v1194
      %1286 = vst.msk [vmem:[#allocation3 + $0xf0] sm:$0xff] %vm1279, %v1196
      %1287 = vst.msk [vmem:[#allocation3 + $0x118] sm:$0xff] %vm1279, %v1198
      %1288 = vst.msk [vmem:[#allocation3 + $0x140] sm:$0xff] %vm1279, %v1200
      %1289 = vst.msk [vmem:[#allocation3 + $0x168] sm:$0xff] %vm1279, %v1202
      %1290 = vst.msk [vmem:[#allocation3 + $0x190] sm:$0xff] %vm1279, %v1204
      %1291 = vst.msk [vmem:[#allocation3 + $0x1b8] sm:$0xff] %vm1279, %v1206
      %1292 = vst.msk [vmem:[#allocation3 + $0x1e0] sm:$0xff] %vm1279, %v1208
      %1293 = vst.msk [vmem:[#allocation3 + $0x208] sm:$0xff] %vm1279, %v1210
      %1294 = vst.msk [vmem:[#allocation3 + $0x230] sm:$0xff] %vm1279, %v1212
      %1295 = vst.msk [vmem:[#allocation3 + $0x258] sm:$0xff] %vm1279, %v1214
      %1296 = vst.msk [vmem:[#allocation3 + $0x280] sm:$0xff] %vm1279, %v1216
      %1297 = vst.msk [vmem:[#allocation3 + $0x2a8] sm:$0xff] %vm1279, %v1218
      %1298 = vst.msk [vmem:[#allocation3 + $0x2d0] sm:$0xff] %vm1279, %v1220
      %1299 = vst.msk [vmem:[#allocation3 + $0x2f8] sm:$0xff] %vm1279, %v1222
      %1300 = vst.msk [vmem:[#allocation3 + $0x320] sm:$0xff] %vm1279, %v1224
      %1301 = vst.msk [vmem:[#allocation3 + $0x348] sm:$0xff] %vm1279, %v1226
      %1302 = vst.msk [vmem:[#allocation3 + $0x370] sm:$0xff] %vm1279, %v1228
      %1303 = vst.msk [vmem:[#allocation3 + $0x398] sm:$0xff] %vm1279, %v1230
      %1304 = vst.msk [vmem:[#allocation3 + $0x3c0] sm:$0xff] %vm1279, %v1232
      %1305 = vst.msk [vmem:[#allocation3 + $0x3e8] sm:$0xff] %vm1279, %v1234
      %1306 = vst.msk [vmem:[#allocation3 + $0x410] sm:$0xff] %vm1279, %v1236
      %1307 = vst.msk [vmem:[#allocation3 + $0x438] sm:$0xff] %vm1279, %v1238
      %1308 = vst.msk [vmem:[#allocation3 + $0x460] sm:$0xff] %vm1279, %v1240
      %1309 = vst.msk [vmem:[#allocation3 + $0x488] sm:$0xff] %vm1279, %v1242
      %1310 = vst.msk [vmem:[#allocation3 + $0x4b0] sm:$0xff] %vm1279, %v1244
      %1311 = vst.msk [vmem:[#allocation3 + $0x4d8] sm:$0xff] %vm1279, %v1246
      %v1312 = vld [vmem:[#allocation2 + $0x2] sm:$0xff]
      %v1313 = vld [vmem:[#allocation2 + $0xa] sm:$0xff]
      %v1314 = vld [vmem:[#allocation2 + $0x1a] sm:$0xff]
      %v1315 = vld [vmem:[#allocation2 + $0x22] sm:$0xff]
      %v1316 = vld [vmem:[#allocation2 + $0x32] sm:$0xff]
      %v1317 = vld [vmem:[#allocation2 + $0x3a] sm:$0xff]
      %v1318 = vld [vmem:[#allocation2 + $0x4a] sm:$0xff]
      %v1319 = vld [vmem:[#allocation2 + $0x52] sm:$0xff]
      %v1320 = vld [vmem:[#allocation2 + $0x62] sm:$0xff]
      %v1321 = vld [vmem:[#allocation2 + $0x6a] sm:$0xff]
      %v1322 = vld [vmem:[#allocation2 + $0x7a] sm:$0xff]
      %v1323 = vld [vmem:[#allocation2 + $0x82] sm:$0xff]
      %v1324 = vld [vmem:[#allocation2 + $0x92] sm:$0xff]
      %v1325 = vld [vmem:[#allocation2 + $0x9a] sm:$0xff]
      %v1326 = vld [vmem:[#allocation2 + $0xaa] sm:$0xff]
      %v1327 = vld [vmem:[#allocation2 + $0xb2] sm:$0xff]
      %v1328 = vld [vmem:[#allocation2 + $0xc2] sm:$0xff]
      %v1329 = vld [vmem:[#allocation2 + $0xca] sm:$0xff]
      %v1330 = vld [vmem:[#allocation2 + $0xda] sm:$0xff]
      %v1331 = vld [vmem:[#allocation2 + $0xe2] sm:$0xff]
      %v1332 = vld [vmem:[#allocation2 + $0xf2] sm:$0xff]
      %v1333 = vld [vmem:[#allocation2 + $0xfa] sm:$0xff]
      %v1334 = vld [vmem:[#allocation2 + $0x10a] sm:$0xff]
      %v1335 = vld [vmem:[#allocation2 + $0x112] sm:$0xff]
      %v1336 = vld [vmem:[#allocation2 + $0x122] sm:$0xff]
      %v1337 = vld [vmem:[#allocation2 + $0x12a] sm:$0xff]
      %v1338 = vld [vmem:[#allocation2 + $0x13a] sm:$0xff]
      %v1339 = vld [vmem:[#allocation2 + $0x142] sm:$0xff]
      %v1340 = vld [vmem:[#allocation2 + $0x152] sm:$0xff]
      %v1341 = vld [vmem:[#allocation2 + $0x15a] sm:$0xff]
      %v1342 = vld [vmem:[#allocation2 + $0x16a] sm:$0xff]
      %v1343 = vld [vmem:[#allocation2 + $0x172] sm:$0xff]
      %1376 = vrot.lane.b32.xlu0 %v1312, 64
      %v1377 = vpop.permute.xlu0 %1376
      %1378 = vrot.lane.b32.xlu0 %v1313, 64
      %v1379 = vpop.permute.xlu0 %1378
      %1380 = vrot.lane.b32.xlu0 %v1314, 64
      %v1381 = vpop.permute.xlu0 %1380
      %1382 = vrot.lane.b32.xlu0 %v1315, 64
      %v1383 = vpop.permute.xlu0 %1382
      %1384 = vrot.lane.b32.xlu0 %v1316, 64
      %v1385 = vpop.permute.xlu0 %1384
      %1386 = vrot.lane.b32.xlu0 %v1317, 64
      %v1387 = vpop.permute.xlu0 %1386
      %1388 = vrot.lane.b32.xlu0 %v1318, 64
      %v1389 = vpop.permute.xlu0 %1388
      %1390 = vrot.lane.b32.xlu0 %v1319, 64
      %v1391 = vpop.permute.xlu0 %1390
      %1392 = vrot.lane.b32.xlu0 %v1320, 64
      %v1393 = vpop.permute.xlu0 %1392
      %1394 = vrot.lane.b32.xlu0 %v1321, 64
      %v1395 = vpop.permute.xlu0 %1394
      %1396 = vrot.lane.b32.xlu0 %v1322, 64
      %v1397 = vpop.permute.xlu0 %1396
      %1398 = vrot.lane.b32.xlu0 %v1323, 64
      %v1399 = vpop.permute.xlu0 %1398
      %1400 = vrot.lane.b32.xlu0 %v1324, 64
      %v1401 = vpop.permute.xlu0 %1400
      %1402 = vrot.lane.b32.xlu0 %v1325, 64
      %v1403 = vpop.permute.xlu0 %1402
      %1404 = vrot.lane.b32.xlu0 %v1326, 64
      %v1405 = vpop.permute.xlu0 %1404
      %1406 = vrot.lane.b32.xlu0 %v1327, 64
      %v1407 = vpop.permute.xlu0 %1406
      %1408 = vrot.lane.b32.xlu0 %v1328, 64
      %v1409 = vpop.permute.xlu0 %1408
      %1410 = vrot.lane.b32.xlu0 %v1329, 64
      %v1411 = vpop.permute.xlu0 %1410
      %1412 = vrot.lane.b32.xlu0 %v1330, 64
      %v1413 = vpop.permute.xlu0 %1412
      %1414 = vrot.lane.b32.xlu0 %v1331, 64
      %v1415 = vpop.permute.xlu0 %1414
      %1416 = vrot.lane.b32.xlu0 %v1332, 64
      %v1417 = vpop.permute.xlu0 %1416
      %1418 = vrot.lane.b32.xlu0 %v1333, 64
      %v1419 = vpop.permute.xlu0 %1418
      %1420 = vrot.lane.b32.xlu0 %v1334, 64
      %v1421 = vpop.permute.xlu0 %1420
      %1422 = vrot.lane.b32.xlu0 %v1335, 64
      %v1423 = vpop.permute.xlu0 %1422
      %1424 = vrot.lane.b32.xlu0 %v1336, 64
      %v1425 = vpop.permute.xlu0 %1424
      %1426 = vrot.lane.b32.xlu0 %v1337, 64
      %v1427 = vpop.permute.xlu0 %1426
      %1428 = vrot.lane.b32.xlu0 %v1338, 64
      %v1429 = vpop.permute.xlu0 %1428
      %1430 = vrot.lane.b32.xlu0 %v1339, 64
      %v1431 = vpop.permute.xlu0 %1430
      %1432 = vrot.lane.b32.xlu0 %v1340, 64
      %v1433 = vpop.permute.xlu0 %1432
      %1434 = vrot.lane.b32.xlu0 %v1341, 64
      %v1435 = vpop.permute.xlu0 %1434
      %1436 = vrot.lane.b32.xlu0 %v1342, 64
      %v1437 = vpop.permute.xlu0 %1436
      %1438 = vrot.lane.b32.xlu0 %v1343, 64
      %v1439 = vpop.permute.xlu0 %1438
      %vm1472 = vcmask 785920
      %1473 = vst.msk [vmem:[#allocation3] sm:$0xff] %vm1472, %v1377
      %1474 = vst.msk [vmem:[#allocation3 + $0x28] sm:$0xff] %vm1472, %v1379
      %1475 = vst.msk [vmem:[#allocation3 + $0x50] sm:$0xff] %vm1472, %v1381
      %1476 = vst.msk [vmem:[#allocation3 + $0x78] sm:$0xff] %vm1472, %v1383
      %1477 = vst.msk [vmem:[#allocation3 + $0xa0] sm:$0xff] %vm1472, %v1385
      %1478 = vst.msk [vmem:[#allocation3 + $0xc8] sm:$0xff] %vm1472, %v1387
      %1479 = vst.msk [vmem:[#allocation3 + $0xf0] sm:$0xff] %vm1472, %v1389
      %1480 = vst.msk [vmem:[#allocation3 + $0x118] sm:$0xff] %vm1472, %v1391
      %1481 = vst.msk [vmem:[#allocation3 + $0x140] sm:$0xff] %vm1472, %v1393
      %1482 = vst.msk [vmem:[#allocation3 + $0x168] sm:$0xff] %vm1472, %v1395
      %1483 = vst.msk [vmem:[#allocation3 + $0x190] sm:$0xff] %vm1472, %v1397
      %1484 = vst.msk [vmem:[#allocation3 + $0x1b8] sm:$0xff] %vm1472, %v1399
      %1485 = vst.msk [vmem:[#allocation3 + $0x1e0] sm:$0xff] %vm1472, %v1401
      %1486 = vst.msk [vmem:[#allocation3 + $0x208] sm:$0xff] %vm1472, %v1403
      %1487 = vst.msk [vmem:[#allocation3 + $0x230] sm:$0xff] %vm1472, %v1405
      %1488 = vst.msk [vmem:[#allocation3 + $0x258] sm:$0xff] %vm1472, %v1407
      %1489 = vst.msk [vmem:[#allocation3 + $0x280] sm:$0xff] %vm1472, %v1409
      %1490 = vst.msk [vmem:[#allocation3 + $0x2a8] sm:$0xff] %vm1472, %v1411
      %1491 = vst.msk [vmem:[#allocation3 + $0x2d0] sm:$0xff] %vm1472, %v1413
      %1492 = vst.msk [vmem:[#allocation3 + $0x2f8] sm:$0xff] %vm1472, %v1415
      %1493 = vst.msk [vmem:[#allocation3 + $0x320] sm:$0xff] %vm1472, %v1417
      %1494 = vst.msk [vmem:[#allocation3 + $0x348] sm:$0xff] %vm1472, %v1419
      %1495 = vst.msk [vmem:[#allocation3 + $0x370] sm:$0xff] %vm1472, %v1421
      %1496 = vst.msk [vmem:[#allocation3 + $0x398] sm:$0xff] %vm1472, %v1423
      %1497 = vst.msk [vmem:[#allocation3 + $0x3c0] sm:$0xff] %vm1472, %v1425
      %1498 = vst.msk [vmem:[#allocation3 + $0x3e8] sm:$0xff] %vm1472, %v1427
      %1499 = vst.msk [vmem:[#allocation3 + $0x410] sm:$0xff] %vm1472, %v1429
      %1500 = vst.msk [vmem:[#allocation3 + $0x438] sm:$0xff] %vm1472, %v1431
      %1501 = vst.msk [vmem:[#allocation3 + $0x460] sm:$0xff] %vm1472, %v1433
      %1502 = vst.msk [vmem:[#allocation3 + $0x488] sm:$0xff] %vm1472, %v1435
      %1503 = vst.msk [vmem:[#allocation3 + $0x4b0] sm:$0xff] %vm1472, %v1437
      %1504 = vst.msk [vmem:[#allocation3 + $0x4d8] sm:$0xff] %vm1472, %v1439
      %v1505 = vld [vmem:[%s1022] sm:$0xff]
      %v1506 = vld [vmem:[%s1022 + $0x8] sm:$0xff]
      %v1507 = vld [vmem:[%s1022 + $0x18] sm:$0xff]
      %v1508 = vld [vmem:[%s1022 + $0x20] sm:$0xff]
      %v1509 = vld [vmem:[%s1022 + $0x30] sm:$0xff]
      %v1510 = vld [vmem:[%s1022 + $0x38] sm:$0xff]
      %v1511 = vld [vmem:[%s1022 + $0x48] sm:$0xff]
      %v1512 = vld [vmem:[%s1022 + $0x50] sm:$0xff]
      %v1513 = vld [vmem:[%s1022 + $0x60] sm:$0xff]
      %v1514 = vld [vmem:[%s1022 + $0x68] sm:$0xff]
      %v1515 = vld [vmem:[%s1022 + $0x78] sm:$0xff]
      %v1516 = vld [vmem:[%s1022 + $0x80] sm:$0xff]
      %v1517 = vld [vmem:[%s1022 + $0x90] sm:$0xff]
      %v1518 = vld [vmem:[%s1022 + $0x98] sm:$0xff]
      %v1519 = vld [vmem:[%s1022 + $0xa8] sm:$0xff]
      %v1520 = vld [vmem:[%s1022 + $0xb0] sm:$0xff]
      %v1521 = vld [vmem:[%s1022 + $0xc0] sm:$0xff]
      %v1522 = vld [vmem:[%s1022 + $0xc8] sm:$0xff]
      %v1523 = vld [vmem:[%s1022 + $0xd8] sm:$0xff]
      %v1524 = vld [vmem:[%s1022 + $0xe0] sm:$0xff]
      %v1525 = vld [vmem:[%s1022 + $0xf0] sm:$0xff]
      %v1526 = vld [vmem:[%s1022 + $0xf8] sm:$0xff]
      %v1527 = vld [vmem:[%s1022 + $0x108] sm:$0xff]
      %v1528 = vld [vmem:[%s1022 + $0x110] sm:$0xff]
      %v1529 = vld [vmem:[%s1022 + $0x120] sm:$0xff]
      %v1530 = vld [vmem:[%s1022 + $0x128] sm:$0xff]
      %v1531 = vld [vmem:[%s1022 + $0x138] sm:$0xff]
      %v1532 = vld [vmem:[%s1022 + $0x140] sm:$0xff]
      %v1533 = vld [vmem:[%s1022 + $0x150] sm:$0xff]
      %v1534 = vld [vmem:[%s1022 + $0x158] sm:$0xff]
      %v1535 = vld [vmem:[%s1022 + $0x168] sm:$0xff]
      %v1536 = vld [vmem:[%s1022 + $0x170] sm:$0xff]
      %1569 = vrot.lane.b32.xlu0 %v1505, 96
      %v1570 = vpop.permute.xlu0 %1569
      %1571 = vrot.lane.b32.xlu0 %v1506, 96
      %v1572 = vpop.permute.xlu0 %1571
      %1573 = vrot.lane.b32.xlu0 %v1507, 96
      %v1574 = vpop.permute.xlu0 %1573
      %1575 = vrot.lane.b32.xlu0 %v1508, 96
      %v1576 = vpop.permute.xlu0 %1575
      %1577 = vrot.lane.b32.xlu0 %v1509, 96
      %v1578 = vpop.permute.xlu0 %1577
      %1579 = vrot.lane.b32.xlu0 %v1510, 96
      %v1580 = vpop.permute.xlu0 %1579
      %1581 = vrot.lane.b32.xlu0 %v1511, 96
      %v1582 = vpop.permute.xlu0 %1581
      %1583 = vrot.lane.b32.xlu0 %v1512, 96
      %v1584 = vpop.permute.xlu0 %1583
      %1585 = vrot.lane.b32.xlu0 %v1513, 96
      %v1586 = vpop.permute.xlu0 %1585
      %1587 = vrot.lane.b32.xlu0 %v1514, 96
      %v1588 = vpop.permute.xlu0 %1587
      %1589 = vrot.lane.b32.xlu0 %v1515, 96
      %v1590 = vpop.permute.xlu0 %1589
      %1591 = vrot.lane.b32.xlu0 %v1516, 96
      %v1592 = vpop.permute.xlu0 %1591
      %1593 = vrot.lane.b32.xlu0 %v1517, 96
      %v1594 = vpop.permute.xlu0 %1593
      %1595 = vrot.lane.b32.xlu0 %v1518, 96
      %v1596 = vpop.permute.xlu0 %1595
      %1597 = vrot.lane.b32.xlu0 %v1519, 96
      %v1598 = vpop.permute.xlu0 %1597
      %1599 = vrot.lane.b32.xlu0 %v1520, 96
      %v1600 = vpop.permute.xlu0 %1599
      %1601 = vrot.lane.b32.xlu0 %v1521, 96
      %v1602 = vpop.permute.xlu0 %1601
      %1603 = vrot.lane.b32.xlu0 %v1522, 96
      %v1604 = vpop.permute.xlu0 %1603
      %1605 = vrot.lane.b32.xlu0 %v1523, 96
      %v1606 = vpop.permute.xlu0 %1605
      %1607 = vrot.lane.b32.xlu0 %v1524, 96
      %v1608 = vpop.permute.xlu0 %1607
      %1609 = vrot.lane.b32.xlu0 %v1525, 96
      %v1610 = vpop.permute.xlu0 %1609
      %1611 = vrot.lane.b32.xlu0 %v1526, 96
      %v1612 = vpop.permute.xlu0 %1611
      %1613 = vrot.lane.b32.xlu0 %v1527, 96
      %v1614 = vpop.permute.xlu0 %1613
      %1615 = vrot.lane.b32.xlu0 %v1528, 96
      %v1616 = vpop.permute.xlu0 %1615
      %1617 = vrot.lane.b32.xlu0 %v1529, 96
      %v1618 = vpop.permute.xlu0 %1617
      %1619 = vrot.lane.b32.xlu0 %v1530, 96
      %v1620 = vpop.permute.xlu0 %1619
      %1621 = vrot.lane.b32.xlu0 %v1531, 96
      %v1622 = vpop.permute.xlu0 %1621
      %1623 = vrot.lane.b32.xlu0 %v1532, 96
      %v1624 = vpop.permute.xlu0 %1623
      %1625 = vrot.lane.b32.xlu0 %v1533, 96
      %v1626 = vpop.permute.xlu0 %1625
      %1627 = vrot.lane.b32.xlu0 %v1534, 96
      %v1628 = vpop.permute.xlu0 %1627
      %1629 = vrot.lane.b32.xlu0 %v1535, 96
      %v1630 = vpop.permute.xlu0 %1629
      %1631 = vrot.lane.b32.xlu0 %v1536, 96
      %v1632 = vpop.permute.xlu0 %1631
      %vm1665 = vcmask 1048320
      %1666 = vst.msk [vmem:[#allocation3] sm:$0xff] %vm1665, %v1570
      %1667 = vst.msk [vmem:[#allocation3 + $0x28] sm:$0xff] %vm1665, %v1572
      %1668 = vst.msk [vmem:[#allocation3 + $0x50] sm:$0xff] %vm1665, %v1574
      %1669 = vst.msk [vmem:[#allocation3 + $0x78] sm:$0xff] %vm1665, %v1576
      %1670 = vst.msk [vmem:[#allocation3 + $0xa0] sm:$0xff] %vm1665, %v1578
      %1671 = vst.msk [vmem:[#allocation3 + $0xc8] sm:$0xff] %vm1665, %v1580
      %1672 = vst.msk [vmem:[#allocation3 + $0xf0] sm:$0xff] %vm1665, %v1582
      %1673 = vst.msk [vmem:[#allocation3 + $0x118] sm:$0xff] %vm1665, %v1584
      %1674 = vst.msk [vmem:[#allocation3 + $0x140] sm:$0xff] %vm1665, %v1586
      %1675 = vst.msk [vmem:[#allocation3 + $0x168] sm:$0xff] %vm1665, %v1588
      %1676 = vst.msk [vmem:[#allocation3 + $0x190] sm:$0xff] %vm1665, %v1590
      %1677 = vst.msk [vmem:[#allocation3 + $0x1b8] sm:$0xff] %vm1665, %v1592
      %1678 = vst.msk [vmem:[#allocation3 + $0x1e0] sm:$0xff] %vm1665, %v1594
      %1679 = vst.msk [vmem:[#allocation3 + $0x208] sm:$0xff] %vm1665, %v1596
      %1680 = vst.msk [vmem:[#allocation3 + $0x230] sm:$0xff] %vm1665, %v1598
      %1681 = vst.msk [vmem:[#allocation3 + $0x258] sm:$0xff] %vm1665, %v1600
      %1682 = vst.msk [vmem:[#allocation3 + $0x280] sm:$0xff] %vm1665, %v1602
      %1683 = vst.msk [vmem:[#allocation3 + $0x2a8] sm:$0xff] %vm1665, %v1604
      %1684 = vst.msk [vmem:[#allocation3 + $0x2d0] sm:$0xff] %vm1665, %v1606
      %1685 = vst.msk [vmem:[#allocation3 + $0x2f8] sm:$0xff] %vm1665, %v1608
      %1686 = vst.msk [vmem:[#allocation3 + $0x320] sm:$0xff] %vm1665, %v1610
      %1687 = vst.msk [vmem:[#allocation3 + $0x348] sm:$0xff] %vm1665, %v1612
      %1688 = vst.msk [vmem:[#allocation3 + $0x370] sm:$0xff] %vm1665, %v1614
      %1689 = vst.msk [vmem:[#allocation3 + $0x398] sm:$0xff] %vm1665, %v1616
      %1690 = vst.msk [vmem:[#allocation3 + $0x3c0] sm:$0xff] %vm1665, %v1618
      %1691 = vst.msk [vmem:[#allocation3 + $0x3e8] sm:$0xff] %vm1665, %v1620
      %1692 = vst.msk [vmem:[#allocation3 + $0x410] sm:$0xff] %vm1665, %v1622
      %1693 = vst.msk [vmem:[#allocation3 + $0x438] sm:$0xff] %vm1665, %v1624
      %1694 = vst.msk [vmem:[#allocation3 + $0x460] sm:$0xff] %vm1665, %v1626
      %1695 = vst.msk [vmem:[#allocation3 + $0x488] sm:$0xff] %vm1665, %v1628
      %1696 = vst.msk [vmem:[#allocation3 + $0x4b0] sm:$0xff] %vm1665, %v1630
      %1697 = vst.msk [vmem:[#allocation3 + $0x4d8] sm:$0xff] %vm1665, %v1632
      %v1698 = vld [vmem:[%s1022 + $0x1] sm:$0xff]
      %v1699 = vld [vmem:[%s1022 + $0x9] sm:$0xff]
      %v1700 = vld [vmem:[%s1022 + $0x19] sm:$0xff]
      %v1701 = vld [vmem:[%s1022 + $0x21] sm:$0xff]
      %v1702 = vld [vmem:[%s1022 + $0x31] sm:$0xff]
      %v1703 = vld [vmem:[%s1022 + $0x39] sm:$0xff]
      %v1704 = vld [vmem:[%s1022 + $0x49] sm:$0xff]
      %v1705 = vld [vmem:[%s1022 + $0x51] sm:$0xff]
      %v1706 = vld [vmem:[%s1022 + $0x61] sm:$0xff]
      %v1707 = vld [vmem:[%s1022 + $0x69] sm:$0xff]
      %v1708 = vld [vmem:[%s1022 + $0x79] sm:$0xff]
      %v1709 = vld [vmem:[%s1022 + $0x81] sm:$0xff]
      %v1710 = vld [vmem:[%s1022 + $0x91] sm:$0xff]
      %v1711 = vld [vmem:[%s1022 + $0x99] sm:$0xff]
      %v1712 = vld [vmem:[%s1022 + $0xa9] sm:$0xff]
      %v1713 = vld [vmem:[%s1022 + $0xb1] sm:$0xff]
      %v1714 = vld [vmem:[%s1022 + $0xc1] sm:$0xff]
      %v1715 = vld [vmem:[%s1022 + $0xc9] sm:$0xff]
      %v1716 = vld [vmem:[%s1022 + $0xd9] sm:$0xff]
      %v1717 = vld [vmem:[%s1022 + $0xe1] sm:$0xff]
      %v1718 = vld [vmem:[%s1022 + $0xf1] sm:$0xff]
      %v1719 = vld [vmem:[%s1022 + $0xf9] sm:$0xff]
      %v1720 = vld [vmem:[%s1022 + $0x109] sm:$0xff]
      %v1721 = vld [vmem:[%s1022 + $0x111] sm:$0xff]
      %v1722 = vld [vmem:[%s1022 + $0x121] sm:$0xff]
      %v1723 = vld [vmem:[%s1022 + $0x129] sm:$0xff]
      %v1724 = vld [vmem:[%s1022 + $0x139] sm:$0xff]
      %v1725 = vld [vmem:[%s1022 + $0x141] sm:$0xff]
      %v1726 = vld [vmem:[%s1022 + $0x151] sm:$0xff]
      %v1727 = vld [vmem:[%s1022 + $0x159] sm:$0xff]
      %v1728 = vld [vmem:[%s1022 + $0x169] sm:$0xff]
      %v1729 = vld [vmem:[%s1022 + $0x171] sm:$0xff]
      %1730 = vst.msk [vmem:[#allocation3 + $0x8] sm:$0xff] %vm562, %v1698
      %1731 = vst.msk [vmem:[#allocation3 + $0x30] sm:$0xff] %vm562, %v1699
      %1732 = vst.msk [vmem:[#allocation3 + $0x58] sm:$0xff] %vm562, %v1700
      %1733 = vst.msk [vmem:[#allocation3 + $0x80] sm:$0xff] %vm562, %v1701
      %1734 = vst.msk [vmem:[#allocation3 + $0xa8] sm:$0xff] %vm562, %v1702
      %1735 = vst.msk [vmem:[#allocation3 + $0xd0] sm:$0xff] %vm562, %v1703
      %1736 = vst.msk [vmem:[#allocation3 + $0xf8] sm:$0xff] %vm562, %v1704
      %1737 = vst.msk [vmem:[#allocation3 + $0x120] sm:$0xff] %vm562, %v1705
      %1738 = vst.msk [vmem:[#allocation3 + $0x148] sm:$0xff] %vm562, %v1706
      %1739 = vst.msk [vmem:[#allocation3 + $0x170] sm:$0xff] %vm562, %v1707
      %1740 = vst.msk [vmem:[#allocation3 + $0x198] sm:$0xff] %vm562, %v1708
      %1741 = vst.msk [vmem:[#allocation3 + $0x1c0] sm:$0xff] %vm562, %v1709
      %1742 = vst.msk [vmem:[#allocation3 + $0x1e8] sm:$0xff] %vm562, %v1710
      %1743 = vst.msk [vmem:[#allocation3 + $0x210] sm:$0xff] %vm562, %v1711
      %1744 = vst.msk [vmem:[#allocation3 + $0x238] sm:$0xff] %vm562, %v1712
      %1745 = vst.msk [vmem:[#allocation3 + $0x260] sm:$0xff] %vm562, %v1713
      %1746 = vst.msk [vmem:[#allocation3 + $0x288] sm:$0xff] %vm562, %v1714
      %1747 = vst.msk [vmem:[#allocation3 + $0x2b0] sm:$0xff] %vm562, %v1715
      %1748 = vst.msk [vmem:[#allocation3 + $0x2d8] sm:$0xff] %vm562, %v1716
      %1749 = vst.msk [vmem:[#allocation3 + $0x300] sm:$0xff] %vm562, %v1717
      %1750 = vst.msk [vmem:[#allocation3 + $0x328] sm:$0xff] %vm562, %v1718
      %1751 = vst.msk [vmem:[#allocation3 + $0x350] sm:$0xff] %vm562, %v1719
      %1752 = vst.msk [vmem:[#allocation3 + $0x378] sm:$0xff] %vm562, %v1720
      %1753 = vst.msk [vmem:[#allocation3 + $0x3a0] sm:$0xff] %vm562, %v1721
      %1754 = vst.msk [vmem:[#allocation3 + $0x3c8] sm:$0xff] %vm562, %v1722
      %1755 = vst.msk [vmem:[#allocation3 + $0x3f0] sm:$0xff] %vm562, %v1723
      %1756 = vst.msk [vmem:[#allocation3 + $0x418] sm:$0xff] %vm562, %v1724
      %1757 = vst.msk [vmem:[#allocation3 + $0x440] sm:$0xff] %vm562, %v1725
      %1758 = vst.msk [vmem:[#allocation3 + $0x468] sm:$0xff] %vm562, %v1726
      %1759 = vst.msk [vmem:[#allocation3 + $0x490] sm:$0xff] %vm562, %v1727
      %1760 = vst.msk [vmem:[#allocation3 + $0x4b8] sm:$0xff] %vm562, %v1728
      %1761 = vst.msk [vmem:[#allocation3 + $0x4e0] sm:$0xff] %vm562, %v1729
      %v1762 = vld [vmem:[%s1022 + $0x2] sm:$0xff]
      %v1763 = vld [vmem:[%s1022 + $0xa] sm:$0xff]
      %v1764 = vld [vmem:[%s1022 + $0x1a] sm:$0xff]
      %v1765 = vld [vmem:[%s1022 + $0x22] sm:$0xff]
      %v1766 = vld [vmem:[%s1022 + $0x32] sm:$0xff]
      %v1767 = vld [vmem:[%s1022 + $0x3a] sm:$0xff]
      %v1768 = vld [vmem:[%s1022 + $0x4a] sm:$0xff]
      %v1769 = vld [vmem:[%s1022 + $0x52] sm:$0xff]
      %v1770 = vld [vmem:[%s1022 + $0x62] sm:$0xff]
      %v1771 = vld [vmem:[%s1022 + $0x6a] sm:$0xff]
      %v1772 = vld [vmem:[%s1022 + $0x7a] sm:$0xff]
      %v1773 = vld [vmem:[%s1022 + $0x82] sm:$0xff]
      %v1774 = vld [vmem:[%s1022 + $0x92] sm:$0xff]
      %v1775 = vld [vmem:[%s1022 + $0x9a] sm:$0xff]
      %v1776 = vld [vmem:[%s1022 + $0xaa] sm:$0xff]
      %v1777 = vld [vmem:[%s1022 + $0xb2] sm:$0xff]
      %v1778 = vld [vmem:[%s1022 + $0xc2] sm:$0xff]
      %v1779 = vld [vmem:[%s1022 + $0xca] sm:$0xff]
      %v1780 = vld [vmem:[%s1022 + $0xda] sm:$0xff]
      %v1781 = vld [vmem:[%s1022 + $0xe2] sm:$0xff]
      %v1782 = vld [vmem:[%s1022 + $0xf2] sm:$0xff]
      %v1783 = vld [vmem:[%s1022 + $0xfa] sm:$0xff]
      %v1784 = vld [vmem:[%s1022 + $0x10a] sm:$0xff]
      %v1785 = vld [vmem:[%s1022 + $0x112] sm:$0xff]
      %v1786 = vld [vmem:[%s1022 + $0x122] sm:$0xff]
      %v1787 = vld [vmem:[%s1022 + $0x12a] sm:$0xff]
      %v1788 = vld [vmem:[%s1022 + $0x13a] sm:$0xff]
      %v1789 = vld [vmem:[%s1022 + $0x142] sm:$0xff]
      %v1790 = vld [vmem:[%s1022 + $0x152] sm:$0xff]
      %v1791 = vld [vmem:[%s1022 + $0x15a] sm:$0xff]
      %v1792 = vld [vmem:[%s1022 + $0x16a] sm:$0xff]
      %v1793 = vld [vmem:[%s1022 + $0x172] sm:$0xff]
      %1826 = vrot.lane.b32.xlu0 %v1762, 32
      %v1827 = vpop.permute.xlu0 %1826
      %1828 = vrot.lane.b32.xlu0 %v1763, 32
      %v1829 = vpop.permute.xlu0 %1828
      %1830 = vrot.lane.b32.xlu0 %v1764, 32
      %v1831 = vpop.permute.xlu0 %1830
      %1832 = vrot.lane.b32.xlu0 %v1765, 32
      %v1833 = vpop.permute.xlu0 %1832
      %1834 = vrot.lane.b32.xlu0 %v1766, 32
      %v1835 = vpop.permute.xlu0 %1834
      %1836 = vrot.lane.b32.xlu0 %v1767, 32
      %v1837 = vpop.permute.xlu0 %1836
      %1838 = vrot.lane.b32.xlu0 %v1768, 32
      %v1839 = vpop.permute.xlu0 %1838
      %1840 = vrot.lane.b32.xlu0 %v1769, 32
      %v1841 = vpop.permute.xlu0 %1840
      %1842 = vrot.lane.b32.xlu0 %v1770, 32
      %v1843 = vpop.permute.xlu0 %1842
      %1844 = vrot.lane.b32.xlu0 %v1771, 32
      %v1845 = vpop.permute.xlu0 %1844
      %1846 = vrot.lane.b32.xlu0 %v1772, 32
      %v1847 = vpop.permute.xlu0 %1846
      %1848 = vrot.lane.b32.xlu0 %v1773, 32
      %v1849 = vpop.permute.xlu0 %1848
      %1850 = vrot.lane.b32.xlu0 %v1774, 32
      %v1851 = vpop.permute.xlu0 %1850
      %1852 = vrot.lane.b32.xlu0 %v1775, 32
      %v1853 = vpop.permute.xlu0 %1852
      %1854 = vrot.lane.b32.xlu0 %v1776, 32
      %v1855 = vpop.permute.xlu0 %1854
      %1856 = vrot.lane.b32.xlu0 %v1777, 32
      %v1857 = vpop.permute.xlu0 %1856
      %1858 = vrot.lane.b32.xlu0 %v1778, 32
      %v1859 = vpop.permute.xlu0 %1858
      %1860 = vrot.lane.b32.xlu0 %v1779, 32
      %v1861 = vpop.permute.xlu0 %1860
      %1862 = vrot.lane.b32.xlu0 %v1780, 32
      %v1863 = vpop.permute.xlu0 %1862
      %1864 = vrot.lane.b32.xlu0 %v1781, 32
      %v1865 = vpop.permute.xlu0 %1864
      %1866 = vrot.lane.b32.xlu0 %v1782, 32
      %v1867 = vpop.permute.xlu0 %1866
      %1868 = vrot.lane.b32.xlu0 %v1783, 32
      %v1869 = vpop.permute.xlu0 %1868
      %1870 = vrot.lane.b32.xlu0 %v1784, 32
      %v1871 = vpop.permute.xlu0 %1870
      %1872 = vrot.lane.b32.xlu0 %v1785, 32
      %v1873 = vpop.permute.xlu0 %1872
      %1874 = vrot.lane.b32.xlu0 %v1786, 32
      %v1875 = vpop.permute.xlu0 %1874
      %1876 = vrot.lane.b32.xlu0 %v1787, 32
      %v1877 = vpop.permute.xlu0 %1876
      %1878 = vrot.lane.b32.xlu0 %v1788, 32
      %v1879 = vpop.permute.xlu0 %1878
      %1880 = vrot.lane.b32.xlu0 %v1789, 32
      %v1881 = vpop.permute.xlu0 %1880
      %1882 = vrot.lane.b32.xlu0 %v1790, 32
      %v1883 = vpop.permute.xlu0 %1882
      %1884 = vrot.lane.b32.xlu0 %v1791, 32
      %v1885 = vpop.permute.xlu0 %1884
      %1886 = vrot.lane.b32.xlu0 %v1792, 32
      %v1887 = vpop.permute.xlu0 %1886
      %1888 = vrot.lane.b32.xlu0 %v1793, 32
      %v1889 = vpop.permute.xlu0 %1888
      %1922 = vst.msk [vmem:[#allocation3 + $0x8] sm:$0xff] %vm1279, %v1827
      %1923 = vst.msk [vmem:[#allocation3 + $0x30] sm:$0xff] %vm1279, %v1829
      %1924 = vst.msk [vmem:[#allocation3 + $0x58] sm:$0xff] %vm1279, %v1831
      %1925 = vst.msk [vmem:[#allocation3 + $0x80] sm:$0xff] %vm1279, %v1833
      %1926 = vst.msk [vmem:[#allocation3 + $0xa8] sm:$0xff] %vm1279, %v1835
      %1927 = vst.msk [vmem:[#allocation3 + $0xd0] sm:$0xff] %vm1279, %v1837
      %1928 = vst.msk [vmem:[#allocation3 + $0xf8] sm:$0xff] %vm1279, %v1839
      %1929 = vst.msk [vmem:[#allocation3 + $0x120] sm:$0xff] %vm1279, %v1841
      %1930 = vst.msk [vmem:[#allocation3 + $0x148] sm:$0xff] %vm1279, %v1843
      %1931 = vst.msk [vmem:[#allocation3 + $0x170] sm:$0xff] %vm1279, %v1845
      %1932 = vst.msk [vmem:[#allocation3 + $0x198] sm:$0xff] %vm1279, %v1847
      %1933 = vst.msk [vmem:[#allocation3 + $0x1c0] sm:$0xff] %vm1279, %v1849
      %1934 = vst.msk [vmem:[#allocation3 + $0x1e8] sm:$0xff] %vm1279, %v1851
      %1935 = vst.msk [vmem:[#allocation3 + $0x210] sm:$0xff] %vm1279, %v1853
      %1936 = vst.msk [vmem:[#allocation3 + $0x238] sm:$0xff] %vm1279, %v1855
      %1937 = vst.msk [vmem:[#allocation3 + $0x260] sm:$0xff] %vm1279, %v1857
      %1938 = vst.msk [vmem:[#allocation3 + $0x288] sm:$0xff] %vm1279, %v1859
      %1939 = vst.msk [vmem:[#allocation3 + $0x2b0] sm:$0xff] %vm1279, %v1861
      %1940 = vst.msk [vmem:[#allocation3 + $0x2d8] sm:$0xff] %vm1279, %v1863
      %1941 = vst.msk [vmem:[#allocation3 + $0x300] sm:$0xff] %vm1279, %v1865
      %1942 = vst.msk [vmem:[#allocation3 + $0x328] sm:$0xff] %vm1279, %v1867
      %1943 = vst.msk [vmem:[#allocation3 + $0x350] sm:$0xff] %vm1279, %v1869
      %1944 = vst.msk [vmem:[#allocation3 + $0x378] sm:$0xff] %vm1279, %v1871
      %1945 = vst.msk [vmem:[#allocation3 + $0x3a0] sm:$0xff] %vm1279, %v1873
      %1946 = vst.msk [vmem:[#allocation3 + $0x3c8] sm:$0xff] %vm1279, %v1875
      %1947 = vst.msk [vmem:[#allocation3 + $0x3f0] sm:$0xff] %vm1279, %v1877
      %1948 = vst.msk [vmem:[#allocation3 + $0x418] sm:$0xff] %vm1279, %v1879
      %1949 = vst.msk [vmem:[#allocation3 + $0x440] sm:$0xff] %vm1279, %v1881
      %1950 = vst.msk [vmem:[#allocation3 + $0x468] sm:$0xff] %vm1279, %v1883
      %1951 = vst.msk [vmem:[#allocation3 + $0x490] sm:$0xff] %vm1279, %v1885
      %1952 = vst.msk [vmem:[#allocation3 + $0x4b8] sm:$0xff] %vm1279, %v1887
      %1953 = vst.msk [vmem:[#allocation3 + $0x4e0] sm:$0xff] %vm1279, %v1889
      %s1954 = scalar_lea.vmem [#allocation2], 48
      %v1955 = vld [vmem:[%s1954] sm:$0xff]
      %v1956 = vld [vmem:[%s1954 + $0x8] sm:$0xff]
      %v1957 = vld [vmem:[%s1954 + $0x18] sm:$0xff]
      %v1958 = vld [vmem:[%s1954 + $0x20] sm:$0xff]
      %v1959 = vld [vmem:[%s1954 + $0x30] sm:$0xff]
      %v1960 = vld [vmem:[%s1954 + $0x38] sm:$0xff]
      %v1961 = vld [vmem:[%s1954 + $0x48] sm:$0xff]
      %v1962 = vld [vmem:[%s1954 + $0x50] sm:$0xff]
      %v1963 = vld [vmem:[%s1954 + $0x60] sm:$0xff]
      %v1964 = vld [vmem:[%s1954 + $0x68] sm:$0xff]
      %v1965 = vld [vmem:[%s1954 + $0x78] sm:$0xff]
      %v1966 = vld [vmem:[%s1954 + $0x80] sm:$0xff]
      %v1967 = vld [vmem:[%s1954 + $0x90] sm:$0xff]
      %v1968 = vld [vmem:[%s1954 + $0x98] sm:$0xff]
      %v1969 = vld [vmem:[%s1954 + $0xa8] sm:$0xff]
      %v1970 = vld [vmem:[%s1954 + $0xb0] sm:$0xff]
      %v1971 = vld [vmem:[%s1954 + $0xc0] sm:$0xff]
      %v1972 = vld [vmem:[%s1954 + $0xc8] sm:$0xff]
      %v1973 = vld [vmem:[%s1954 + $0xd8] sm:$0xff]
      %v1974 = vld [vmem:[%s1954 + $0xe0] sm:$0xff]
      %v1975 = vld [vmem:[%s1954 + $0xf0] sm:$0xff]
      %v1976 = vld [vmem:[%s1954 + $0xf8] sm:$0xff]
      %v1977 = vld [vmem:[%s1954 + $0x108] sm:$0xff]
      %v1978 = vld [vmem:[%s1954 + $0x110] sm:$0xff]
      %v1979 = vld [vmem:[%s1954 + $0x120] sm:$0xff]
      %v1980 = vld [vmem:[%s1954 + $0x128] sm:$0xff]
      %v1981 = vld [vmem:[%s1954 + $0x138] sm:$0xff]
      %v1982 = vld [vmem:[%s1954 + $0x140] sm:$0xff]
      %v1983 = vld [vmem:[%s1954 + $0x150] sm:$0xff]
      %v1984 = vld [vmem:[%s1954 + $0x158] sm:$0xff]
      %v1985 = vld [vmem:[%s1954 + $0x168] sm:$0xff]
      %v1986 = vld [vmem:[%s1954 + $0x170] sm:$0xff]
      %2019 = vrot.lane.b32.xlu0 %v1955, 64
      %v2020 = vpop.permute.xlu0 %2019
      %2021 = vrot.lane.b32.xlu0 %v1956, 64
      %v2022 = vpop.permute.xlu0 %2021
      %2023 = vrot.lane.b32.xlu0 %v1957, 64
      %v2024 = vpop.permute.xlu0 %2023
      %2025 = vrot.lane.b32.xlu0 %v1958, 64
      %v2026 = vpop.permute.xlu0 %2025
      %2027 = vrot.lane.b32.xlu0 %v1959, 64
      %v2028 = vpop.permute.xlu0 %2027
      %2029 = vrot.lane.b32.xlu0 %v1960, 64
      %v2030 = vpop.permute.xlu0 %2029
      %2031 = vrot.lane.b32.xlu0 %v1961, 64
      %v2032 = vpop.permute.xlu0 %2031
      %2033 = vrot.lane.b32.xlu0 %v1962, 64
      %v2034 = vpop.permute.xlu0 %2033
      %2035 = vrot.lane.b32.xlu0 %v1963, 64
      %v2036 = vpop.permute.xlu0 %2035
      %2037 = vrot.lane.b32.xlu0 %v1964, 64
      %v2038 = vpop.permute.xlu0 %2037
      %2039 = vrot.lane.b32.xlu0 %v1965, 64
      %v2040 = vpop.permute.xlu0 %2039
      %2041 = vrot.lane.b32.xlu0 %v1966, 64
      %v2042 = vpop.permute.xlu0 %2041
      %2043 = vrot.lane.b32.xlu0 %v1967, 64
      %v2044 = vpop.permute.xlu0 %2043
      %2045 = vrot.lane.b32.xlu0 %v1968, 64
      %v2046 = vpop.permute.xlu0 %2045
      %2047 = vrot.lane.b32.xlu0 %v1969, 64
      %v2048 = vpop.permute.xlu0 %2047
      %2049 = vrot.lane.b32.xlu0 %v1970, 64
      %v2050 = vpop.permute.xlu0 %2049
      %2051 = vrot.lane.b32.xlu0 %v1971, 64
      %v2052 = vpop.permute.xlu0 %2051
      %2053 = vrot.lane.b32.xlu0 %v1972, 64
      %v2054 = vpop.permute.xlu0 %2053
      %2055 = vrot.lane.b32.xlu0 %v1973, 64
      %v2056 = vpop.permute.xlu0 %2055
      %2057 = vrot.lane.b32.xlu0 %v1974, 64
      %v2058 = vpop.permute.xlu0 %2057
      %2059 = vrot.lane.b32.xlu0 %v1975, 64
      %v2060 = vpop.permute.xlu0 %2059
      %2061 = vrot.lane.b32.xlu0 %v1976, 64
      %v2062 = vpop.permute.xlu0 %2061
      %2063 = vrot.lane.b32.xlu0 %v1977, 64
      %v2064 = vpop.permute.xlu0 %2063
      %2065 = vrot.lane.b32.xlu0 %v1978, 64
      %v2066 = vpop.permute.xlu0 %2065
      %2067 = vrot.lane.b32.xlu0 %v1979, 64
      %v2068 = vpop.permute.xlu0 %2067
      %2069 = vrot.lane.b32.xlu0 %v1980, 64
      %v2070 = vpop.permute.xlu0 %2069
      %2071 = vrot.lane.b32.xlu0 %v1981, 64
      %v2072 = vpop.permute.xlu0 %2071
      %2073 = vrot.lane.b32.xlu0 %v1982, 64
      %v2074 = vpop.permute.xlu0 %2073
      %2075 = vrot.lane.b32.xlu0 %v1983, 64
      %v2076 = vpop.permute.xlu0 %2075
      %2077 = vrot.lane.b32.xlu0 %v1984, 64
      %v2078 = vpop.permute.xlu0 %2077
      %2079 = vrot.lane.b32.xlu0 %v1985, 64
      %v2080 = vpop.permute.xlu0 %2079
      %2081 = vrot.lane.b32.xlu0 %v1986, 64
      %v2082 = vpop.permute.xlu0 %2081
      %2115 = vst.msk [vmem:[#allocation3 + $0x8] sm:$0xff] %vm1472, %v2020
      %2116 = vst.msk [vmem:[#allocation3 + $0x30] sm:$0xff] %vm1472, %v2022
      %2117 = vst.msk [vmem:[#allocation3 + $0x58] sm:$0xff] %vm1472, %v2024
      %2118 = vst.msk [vmem:[#allocation3 + $0x80] sm:$0xff] %vm1472, %v2026
      %2119 = vst.msk [vmem:[#allocation3 + $0xa8] sm:$0xff] %vm1472, %v2028
      %2120 = vst.msk [vmem:[#allocation3 + $0xd0] sm:$0xff] %vm1472, %v2030
      %2121 = vst.msk [vmem:[#allocation3 + $0xf8] sm:$0xff] %vm1472, %v2032
      %2122 = vst.msk [vmem:[#allocation3 + $0x120] sm:$0xff] %vm1472, %v2034
      %2123 = vst.msk [vmem:[#allocation3 + $0x148] sm:$0xff] %vm1472, %v2036
      %2124 = vst.msk [vmem:[#allocation3 + $0x170] sm:$0xff] %vm1472, %v2038
      %2125 = vst.msk [vmem:[#allocation3 + $0x198] sm:$0xff] %vm1472, %v2040
      %2126 = vst.msk [vmem:[#allocation3 + $0x1c0] sm:$0xff] %vm1472, %v2042
      %2127 = vst.msk [vmem:[#allocation3 + $0x1e8] sm:$0xff] %vm1472, %v2044
      %2128 = vst.msk [vmem:[#allocation3 + $0x210] sm:$0xff] %vm1472, %v2046
      %2129 = vst.msk [vmem:[#allocation3 + $0x238] sm:$0xff] %vm1472, %v2048
      %2130 = vst.msk [vmem:[#allocation3 + $0x260] sm:$0xff] %vm1472, %v2050
      %2131 = vst.msk [vmem:[#allocation3 + $0x288] sm:$0xff] %vm1472, %v2052
      %2132 = vst.msk [vmem:[#allocation3 + $0x2b0] sm:$0xff] %vm1472, %v2054
      %2133 = vst.msk [vmem:[#allocation3 + $0x2d8] sm:$0xff] %vm1472, %v2056
      %2134 = vst.msk [vmem:[#allocation3 + $0x300] sm:$0xff] %vm1472, %v2058
      %2135 = vst.msk [vmem:[#allocation3 + $0x328] sm:$0xff] %vm1472, %v2060
      %2136 = vst.msk [vmem:[#allocation3 + $0x350] sm:$0xff] %vm1472, %v2062
      %2137 = vst.msk [vmem:[#allocation3 + $0x378] sm:$0xff] %vm1472, %v2064
      %2138 = vst.msk [vmem:[#allocation3 + $0x3a0] sm:$0xff] %vm1472, %v2066
      %2139 = vst.msk [vmem:[#allocation3 + $0x3c8] sm:$0xff] %vm1472, %v2068
      %2140 = vst.msk [vmem:[#allocation3 + $0x3f0] sm:$0xff] %vm1472, %v2070
      %2141 = vst.msk [vmem:[#allocation3 + $0x418] sm:$0xff] %vm1472, %v2072
      %2142 = vst.msk [vmem:[#allocation3 + $0x440] sm:$0xff] %vm1472, %v2074
      %2143 = vst.msk [vmem:[#allocation3 + $0x468] sm:$0xff] %vm1472, %v2076
      %2144 = vst.msk [vmem:[#allocation3 + $0x490] sm:$0xff] %vm1472, %v2078
      %2145 = vst.msk [vmem:[#allocation3 + $0x4b8] sm:$0xff] %vm1472, %v2080
      %2146 = vst.msk [vmem:[#allocation3 + $0x4e0] sm:$0xff] %vm1472, %v2082
      %v2147 = vld [vmem:[%s1954 + $0x1] sm:$0xff]
      %v2148 = vld [vmem:[%s1954 + $0x9] sm:$0xff]
      %v2149 = vld [vmem:[%s1954 + $0x19] sm:$0xff]
      %v2150 = vld [vmem:[%s1954 + $0x21] sm:$0xff]
      %v2151 = vld [vmem:[%s1954 + $0x31] sm:$0xff]
      %v2152 = vld [vmem:[%s1954 + $0x39] sm:$0xff]
      %v2153 = vld [vmem:[%s1954 + $0x49] sm:$0xff]
      %v2154 = vld [vmem:[%s1954 + $0x51] sm:$0xff]
      %v2155 = vld [vmem:[%s1954 + $0x61] sm:$0xff]
      %v2156 = vld [vmem:[%s1954 + $0x69] sm:$0xff]
      %v2157 = vld [vmem:[%s1954 + $0x79] sm:$0xff]
      %v2158 = vld [vmem:[%s1954 + $0x81] sm:$0xff]
      %v2159 = vld [vmem:[%s1954 + $0x91] sm:$0xff]
      %v2160 = vld [vmem:[%s1954 + $0x99] sm:$0xff]
      %v2161 = vld [vmem:[%s1954 + $0xa9] sm:$0xff]
      %v2162 = vld [vmem:[%s1954 + $0xb1] sm:$0xff]
      %v2163 = vld [vmem:[%s1954 + $0xc1] sm:$0xff]
      %v2164 = vld [vmem:[%s1954 + $0xc9] sm:$0xff]
      %v2165 = vld [vmem:[%s1954 + $0xd9] sm:$0xff]
      %v2166 = vld [vmem:[%s1954 + $0xe1] sm:$0xff]
      %v2167 = vld [vmem:[%s1954 + $0xf1] sm:$0xff]
      %v2168 = vld [vmem:[%s1954 + $0xf9] sm:$0xff]
      %v2169 = vld [vmem:[%s1954 + $0x109] sm:$0xff]
      %v2170 = vld [vmem:[%s1954 + $0x111] sm:$0xff]
      %v2171 = vld [vmem:[%s1954 + $0x121] sm:$0xff]
      %v2172 = vld [vmem:[%s1954 + $0x129] sm:$0xff]
      %v2173 = vld [vmem:[%s1954 + $0x139] sm:$0xff]
      %v2174 = vld [vmem:[%s1954 + $0x141] sm:$0xff]
      %v2175 = vld [vmem:[%s1954 + $0x151] sm:$0xff]
      %v2176 = vld [vmem:[%s1954 + $0x159] sm:$0xff]
      %v2177 = vld [vmem:[%s1954 + $0x169] sm:$0xff]
      %v2178 = vld [vmem:[%s1954 + $0x171] sm:$0xff]
      %2211 = vrot.lane.b32.xlu0 %v2147, 96
      %v2212 = vpop.permute.xlu0 %2211
      %2213 = vrot.lane.b32.xlu0 %v2148, 96
      %v2214 = vpop.permute.xlu0 %2213
      %2215 = vrot.lane.b32.xlu0 %v2149, 96
      %v2216 = vpop.permute.xlu0 %2215
      %2217 = vrot.lane.b32.xlu0 %v2150, 96
      %v2218 = vpop.permute.xlu0 %2217
      %2219 = vrot.lane.b32.xlu0 %v2151, 96
      %v2220 = vpop.permute.xlu0 %2219
      %2221 = vrot.lane.b32.xlu0 %v2152, 96
      %v2222 = vpop.permute.xlu0 %2221
      %2223 = vrot.lane.b32.xlu0 %v2153, 96
      %v2224 = vpop.permute.xlu0 %2223
      %2225 = vrot.lane.b32.xlu0 %v2154, 96
      %v2226 = vpop.permute.xlu0 %2225
      %2227 = vrot.lane.b32.xlu0 %v2155, 96
      %v2228 = vpop.permute.xlu0 %2227
      %2229 = vrot.lane.b32.xlu0 %v2156, 96
      %v2230 = vpop.permute.xlu0 %2229
      %2231 = vrot.lane.b32.xlu0 %v2157, 96
      %v2232 = vpop.permute.xlu0 %2231
      %2233 = vrot.lane.b32.xlu0 %v2158, 96
      %v2234 = vpop.permute.xlu0 %2233
      %2235 = vrot.lane.b32.xlu0 %v2159, 96
      %v2236 = vpop.permute.xlu0 %2235
      %2237 = vrot.lane.b32.xlu0 %v2160, 96
      %v2238 = vpop.permute.xlu0 %2237
      %2239 = vrot.lane.b32.xlu0 %v2161, 96
      %v2240 = vpop.permute.xlu0 %2239
      %2241 = vrot.lane.b32.xlu0 %v2162, 96
      %v2242 = vpop.permute.xlu0 %2241
      %2243 = vrot.lane.b32.xlu0 %v2163, 96
      %v2244 = vpop.permute.xlu0 %2243
      %2245 = vrot.lane.b32.xlu0 %v2164, 96
      %v2246 = vpop.permute.xlu0 %2245
      %2247 = vrot.lane.b32.xlu0 %v2165, 96
      %v2248 = vpop.permute.xlu0 %2247
      %2249 = vrot.lane.b32.xlu0 %v2166, 96
      %v2250 = vpop.permute.xlu0 %2249
      %2251 = vrot.lane.b32.xlu0 %v2167, 96
      %v2252 = vpop.permute.xlu0 %2251
      %2253 = vrot.lane.b32.xlu0 %v2168, 96
      %v2254 = vpop.permute.xlu0 %2253
      %2255 = vrot.lane.b32.xlu0 %v2169, 96
      %v2256 = vpop.permute.xlu0 %2255
      %2257 = vrot.lane.b32.xlu0 %v2170, 96
      %v2258 = vpop.permute.xlu0 %2257
      %2259 = vrot.lane.b32.xlu0 %v2171, 96
      %v2260 = vpop.permute.xlu0 %2259
      %2261 = vrot.lane.b32.xlu0 %v2172, 96
      %v2262 = vpop.permute.xlu0 %2261
      %2263 = vrot.lane.b32.xlu0 %v2173, 96
      %v2264 = vpop.permute.xlu0 %2263
      %2265 = vrot.lane.b32.xlu0 %v2174, 96
      %v2266 = vpop.permute.xlu0 %2265
      %2267 = vrot.lane.b32.xlu0 %v2175, 96
      %v2268 = vpop.permute.xlu0 %2267
      %2269 = vrot.lane.b32.xlu0 %v2176, 96
      %v2270 = vpop.permute.xlu0 %2269
      %2271 = vrot.lane.b32.xlu0 %v2177, 96
      %v2272 = vpop.permute.xlu0 %2271
      %2273 = vrot.lane.b32.xlu0 %v2178, 96
      %v2274 = vpop.permute.xlu0 %2273
      %2307 = vst.msk [vmem:[#allocation3 + $0x8] sm:$0xff] %vm1665, %v2212
      %2308 = vst.msk [vmem:[#allocation3 + $0x30] sm:$0xff] %vm1665, %v2214
      %2309 = vst.msk [vmem:[#allocation3 + $0x58] sm:$0xff] %vm1665, %v2216
      %2310 = vst.msk [vmem:[#allocation3 + $0x80] sm:$0xff] %vm1665, %v2218
      %2311 = vst.msk [vmem:[#allocation3 + $0xa8] sm:$0xff] %vm1665, %v2220
      %2312 = vst.msk [vmem:[#allocation3 + $0xd0] sm:$0xff] %vm1665, %v2222
      %2313 = vst.msk [vmem:[#allocation3 + $0xf8] sm:$0xff] %vm1665, %v2224
      %2314 = vst.msk [vmem:[#allocation3 + $0x120] sm:$0xff] %vm1665, %v2226
      %2315 = vst.msk [vmem:[#allocation3 + $0x148] sm:$0xff] %vm1665, %v2228
      %2316 = vst.msk [vmem:[#allocation3 + $0x170] sm:$0xff] %vm1665, %v2230
      %2317 = vst.msk [vmem:[#allocation3 + $0x198] sm:$0xff] %vm1665, %v2232
      %2318 = vst.msk [vmem:[#allocation3 + $0x1c0] sm:$0xff] %vm1665, %v2234
      %2319 = vst.msk [vmem:[#allocation3 + $0x1e8] sm:$0xff] %vm1665, %v2236
      %2320 = vst.msk [vmem:[#allocation3 + $0x210] sm:$0xff] %vm1665, %v2238
      %2321 = vst.msk [vmem:[#allocation3 + $0x238] sm:$0xff] %vm1665, %v2240
      %2322 = vst.msk [vmem:[#allocation3 + $0x260] sm:$0xff] %vm1665, %v2242
      %2323 = vst.msk [vmem:[#allocation3 + $0x288] sm:$0xff] %vm1665, %v2244
      %2324 = vst.msk [vmem:[#allocation3 + $0x2b0] sm:$0xff] %vm1665, %v2246
      %2325 = vst.msk [vmem:[#allocation3 + $0x2d8] sm:$0xff] %vm1665, %v2248
      %2326 = vst.msk [vmem:[#allocation3 + $0x300] sm:$0xff] %vm1665, %v2250
      %2327 = vst.msk [vmem:[#allocation3 + $0x328] sm:$0xff] %vm1665, %v2252
      %2328 = vst.msk [vmem:[#allocation3 + $0x350] sm:$0xff] %vm1665, %v2254
      %2329 = vst.msk [vmem:[#allocation3 + $0x378] sm:$0xff] %vm1665, %v2256
      %2330 = vst.msk [vmem:[#allocation3 + $0x3a0] sm:$0xff] %vm1665, %v2258
      %2331 = vst.msk [vmem:[#allocation3 + $0x3c8] sm:$0xff] %vm1665, %v2260
      %2332 = vst.msk [vmem:[#allocation3 + $0x3f0] sm:$0xff] %vm1665, %v2262
      %2333 = vst.msk [vmem:[#allocation3 + $0x418] sm:$0xff] %vm1665, %v2264
      %2334 = vst.msk [vmem:[#allocation3 + $0x440] sm:$0xff] %vm1665, %v2266
      %2335 = vst.msk [vmem:[#allocation3 + $0x468] sm:$0xff] %vm1665, %v2268
      %2336 = vst.msk [vmem:[#allocation3 + $0x490] sm:$0xff] %vm1665, %v2270
      %2337 = vst.msk [vmem:[#allocation3 + $0x4b8] sm:$0xff] %vm1665, %v2272
      %2338 = vst.msk [vmem:[#allocation3 + $0x4e0] sm:$0xff] %vm1665, %v2274
      %v2339 = vld [vmem:[%s1954 + $0x2] sm:$0xff]
      %v2340 = vld [vmem:[%s1954 + $0xa] sm:$0xff]
      %v2341 = vld [vmem:[%s1954 + $0x1a] sm:$0xff]
      %v2342 = vld [vmem:[%s1954 + $0x22] sm:$0xff]
      %v2343 = vld [vmem:[%s1954 + $0x32] sm:$0xff]
      %v2344 = vld [vmem:[%s1954 + $0x3a] sm:$0xff]
      %v2345 = vld [vmem:[%s1954 + $0x4a] sm:$0xff]
      %v2346 = vld [vmem:[%s1954 + $0x52] sm:$0xff]
      %v2347 = vld [vmem:[%s1954 + $0x62] sm:$0xff]
      %v2348 = vld [vmem:[%s1954 + $0x6a] sm:$0xff]
      %v2349 = vld [vmem:[%s1954 + $0x7a] sm:$0xff]
      %v2350 = vld [vmem:[%s1954 + $0x82] sm:$0xff]
      %v2351 = vld [vmem:[%s1954 + $0x92] sm:$0xff]
      %v2352 = vld [vmem:[%s1954 + $0x9a] sm:$0xff]
      %v2353 = vld [vmem:[%s1954 + $0xaa] sm:$0xff]
      %v2354 = vld [vmem:[%s1954 + $0xb2] sm:$0xff]
      %v2355 = vld [vmem:[%s1954 + $0xc2] sm:$0xff]
      %v2356 = vld [vmem:[%s1954 + $0xca] sm:$0xff]
      %v2357 = vld [vmem:[%s1954 + $0xda] sm:$0xff]
      %v2358 = vld [vmem:[%s1954 + $0xe2] sm:$0xff]
      %v2359 = vld [vmem:[%s1954 + $0xf2] sm:$0xff]
      %v2360 = vld [vmem:[%s1954 + $0xfa] sm:$0xff]
      %v2361 = vld [vmem:[%s1954 + $0x10a] sm:$0xff]
      %v2362 = vld [vmem:[%s1954 + $0x112] sm:$0xff]
      %v2363 = vld [vmem:[%s1954 + $0x122] sm:$0xff]
      %v2364 = vld [vmem:[%s1954 + $0x12a] sm:$0xff]
      %v2365 = vld [vmem:[%s1954 + $0x13a] sm:$0xff]
      %v2366 = vld [vmem:[%s1954 + $0x142] sm:$0xff]
      %v2367 = vld [vmem:[%s1954 + $0x152] sm:$0xff]
      %v2368 = vld [vmem:[%s1954 + $0x15a] sm:$0xff]
      %v2369 = vld [vmem:[%s1954 + $0x16a] sm:$0xff]
      %v2370 = vld [vmem:[%s1954 + $0x172] sm:$0xff]
      %2371 = vst.msk [vmem:[#allocation3 + $0x10] sm:$0xff] %vm562, %v2339
      %2372 = vst.msk [vmem:[#allocation3 + $0x38] sm:$0xff] %vm562, %v2340
      %2373 = vst.msk [vmem:[#allocation3 + $0x60] sm:$0xff] %vm562, %v2341
      %2374 = vst.msk [vmem:[#allocation3 + $0x88] sm:$0xff] %vm562, %v2342
      %2375 = vst.msk [vmem:[#allocation3 + $0xb0] sm:$0xff] %vm562, %v2343
      %2376 = vst.msk [vmem:[#allocation3 + $0xd8] sm:$0xff] %vm562, %v2344
      %2377 = vst.msk [vmem:[#allocation3 + $0x100] sm:$0xff] %vm562, %v2345
      %2378 = vst.msk [vmem:[#allocation3 + $0x128] sm:$0xff] %vm562, %v2346
      %2379 = vst.msk [vmem:[#allocation3 + $0x150] sm:$0xff] %vm562, %v2347
      %2380 = vst.msk [vmem:[#allocation3 + $0x178] sm:$0xff] %vm562, %v2348
      %2381 = vst.msk [vmem:[#allocation3 + $0x1a0] sm:$0xff] %vm562, %v2349
      %2382 = vst.msk [vmem:[#allocation3 + $0x1c8] sm:$0xff] %vm562, %v2350
      %2383 = vst.msk [vmem:[#allocation3 + $0x1f0] sm:$0xff] %vm562, %v2351
      %2384 = vst.msk [vmem:[#allocation3 + $0x218] sm:$0xff] %vm562, %v2352
      %2385 = vst.msk [vmem:[#allocation3 + $0x240] sm:$0xff] %vm562, %v2353
      %2386 = vst.msk [vmem:[#allocation3 + $0x268] sm:$0xff] %vm562, %v2354
      %2387 = vst.msk [vmem:[#allocation3 + $0x290] sm:$0xff] %vm562, %v2355
      %2388 = vst.msk [vmem:[#allocation3 + $0x2b8] sm:$0xff] %vm562, %v2356
      %2389 = vst.msk [vmem:[#allocation3 + $0x2e0] sm:$0xff] %vm562, %v2357
      %2390 = vst.msk [vmem:[#allocation3 + $0x308] sm:$0xff] %vm562, %v2358
      %2391 = vst.msk [vmem:[#allocation3 + $0x330] sm:$0xff] %vm562, %v2359
      %2392 = vst.msk [vmem:[#allocation3 + $0x358] sm:$0xff] %vm562, %v2360
      %2393 = vst.msk [vmem:[#allocation3 + $0x380] sm:$0xff] %vm562, %v2361
      %2394 = vst.msk [vmem:[#allocation3 + $0x3a8] sm:$0xff] %vm562, %v2362
      %2395 = vst.msk [vmem:[#allocation3 + $0x3d0] sm:$0xff] %vm562, %v2363
      %2396 = vst.msk [vmem:[#allocation3 + $0x3f8] sm:$0xff] %vm562, %v2364
      %2397 = vst.msk [vmem:[#allocation3 + $0x420] sm:$0xff] %vm562, %v2365
      %2398 = vst.msk [vmem:[#allocation3 + $0x448] sm:$0xff] %vm562, %v2366
      %2399 = vst.msk [vmem:[#allocation3 + $0x470] sm:$0xff] %vm562, %v2367
      %2400 = vst.msk [vmem:[#allocation3 + $0x498] sm:$0xff] %vm562, %v2368
      %2401 = vst.msk [vmem:[#allocation3 + $0x4c0] sm:$0xff] %vm562, %v2369
      %2402 = vst.msk [vmem:[#allocation3 + $0x4e8] sm:$0xff] %vm562, %v2370
      %v2403 = vld [vmem:[#allocation3] sm:$0xff]
      %v2404 = vld [vmem:[#allocation3 + $0x8] sm:$0xff]
      %v2405 = vld [vmem:[#allocation3 + $0x10] sm:$0xff]
      %v2406 = vld [vmem:[#allocation3 + $0x28] sm:$0xff]
      %v2407 = vld [vmem:[#allocation3 + $0x30] sm:$0xff]
      %v2408 = vld [vmem:[#allocation3 + $0x38] sm:$0xff]
      %v2409 = vld [vmem:[#allocation3 + $0x50] sm:$0xff]
      %v2410 = vld [vmem:[#allocation3 + $0x58] sm:$0xff]
      %v2411 = vld [vmem:[#allocation3 + $0x60] sm:$0xff]
      %v2412 = vld [vmem:[#allocation3 + $0x78] sm:$0xff]
      %v2413 = vld [vmem:[#allocation3 + $0x80] sm:$0xff]
      %v2414 = vld [vmem:[#allocation3 + $0x88] sm:$0xff]
      %v2415 = vld [vmem:[#allocation3 + $0xa0] sm:$0xff]
      %v2416 = vld [vmem:[#allocation3 + $0xa8] sm:$0xff]
      %v2417 = vld [vmem:[#allocation3 + $0xb0] sm:$0xff]
      %v2418 = vld [vmem:[#allocation3 + $0xc8] sm:$0xff]
      %v2419 = vld [vmem:[#allocation3 + $0xd0] sm:$0xff]
      %v2420 = vld [vmem:[#allocation3 + $0xd8] sm:$0xff]
      %v2421 = vld [vmem:[#allocation3 + $0xf0] sm:$0xff]
      %v2422 = vld [vmem:[#allocation3 + $0xf8] sm:$0xff]
      %v2423 = vld [vmem:[#allocation3 + $0x100] sm:$0xff]
      %v2424 = vld [vmem:[#allocation3 + $0x118] sm:$0xff]
      %v2425 = vld [vmem:[#allocation3 + $0x120] sm:$0xff]
      %v2426 = vld [vmem:[#allocation3 + $0x128] sm:$0xff]
      %v2427 = vld [vmem:[#allocation3 + $0x140] sm:$0xff]
      %v2428 = vld [vmem:[#allocation3 + $0x148] sm:$0xff]
      %v2429 = vld [vmem:[#allocation3 + $0x150] sm:$0xff]
      %v2430 = vld [vmem:[#allocation3 + $0x168] sm:$0xff]
      %v2431 = vld [vmem:[#allocation3 + $0x170] sm:$0xff]
      %v2432 = vld [vmem:[#allocation3 + $0x178] sm:$0xff]
      %v2433 = vld [vmem:[#allocation3 + $0x190] sm:$0xff]
      %v2434 = vld [vmem:[#allocation3 + $0x198] sm:$0xff]
      %v2435 = vld [vmem:[#allocation3 + $0x1a0] sm:$0xff]
      %v2436 = vld [vmem:[#allocation3 + $0x1b8] sm:$0xff]
      %v2437 = vld [vmem:[#allocation3 + $0x1c0] sm:$0xff]
      %v2438 = vld [vmem:[#allocation3 + $0x1c8] sm:$0xff]
      %v2439 = vld [vmem:[#allocation3 + $0x1e0] sm:$0xff]
      %v2440 = vld [vmem:[#allocation3 + $0x1e8] sm:$0xff]
      %v2441 = vld [vmem:[#allocation3 + $0x1f0] sm:$0xff]
      %v2442 = vld [vmem:[#allocation3 + $0x208] sm:$0xff]
      %v2443 = vld [vmem:[#allocation3 + $0x210] sm:$0xff]
      %v2444 = vld [vmem:[#allocation3 + $0x218] sm:$0xff]
      %v2445 = vld [vmem:[#allocation3 + $0x230] sm:$0xff]
      %v2446 = vld [vmem:[#allocation3 + $0x238] sm:$0xff]
      %v2447 = vld [vmem:[#allocation3 + $0x240] sm:$0xff]
      %v2448 = vld [vmem:[#allocation3 + $0x258] sm:$0xff]
      %v2449 = vld [vmem:[#allocation3 + $0x260] sm:$0xff]
      %v2450 = vld [vmem:[#allocation3 + $0x268] sm:$0xff]
      %v2451 = vld [vmem:[#allocation3 + $0x280] sm:$0xff]
      %v2452 = vld [vmem:[#allocation3 + $0x288] sm:$0xff]
      %v2453 = vld [vmem:[#allocation3 + $0x290] sm:$0xff]
      %v2454 = vld [vmem:[#allocation3 + $0x2a8] sm:$0xff]
      %v2455 = vld [vmem:[#allocation3 + $0x2b0] sm:$0xff]
      %v2456 = vld [vmem:[#allocation3 + $0x2b8] sm:$0xff]
      %v2457 = vld [vmem:[#allocation3 + $0x2d0] sm:$0xff]
      %v2458 = vld [vmem:[#allocation3 + $0x2d8] sm:$0xff]
      %v2459 = vld [vmem:[#allocation3 + $0x2e0] sm:$0xff]
      %v2460 = vld [vmem:[#allocation3 + $0x2f8] sm:$0xff]
      %v2461 = vld [vmem:[#allocation3 + $0x300] sm:$0xff]
      %v2462 = vld [vmem:[#allocation3 + $0x308] sm:$0xff]
      %v2463 = vld [vmem:[#allocation3 + $0x320] sm:$0xff]
      %v2464 = vld [vmem:[#allocation3 + $0x328] sm:$0xff]
      %v2465 = vld [vmem:[#allocation3 + $0x330] sm:$0xff]
      %v2466 = vld [vmem:[#allocation3 + $0x348] sm:$0xff]
      %v2467 = vld [vmem:[#allocation3 + $0x350] sm:$0xff]
      %v2468 = vld [vmem:[#allocation3 + $0x358] sm:$0xff]
      %v2469 = vld [vmem:[#allocation3 + $0x370] sm:$0xff]
      %v2470 = vld [vmem:[#allocation3 + $0x378] sm:$0xff]
      %v2471 = vld [vmem:[#allocation3 + $0x380] sm:$0xff]
      %v2472 = vld [vmem:[#allocation3 + $0x398] sm:$0xff]
      %v2473 = vld [vmem:[#allocation3 + $0x3a0] sm:$0xff]
      %v2474 = vld [vmem:[#allocation3 + $0x3a8] sm:$0xff]
      %v2475 = vld [vmem:[#allocation3 + $0x3c0] sm:$0xff]
      %v2476 = vld [vmem:[#allocation3 + $0x3c8] sm:$0xff]
      %v2477 = vld [vmem:[#allocation3 + $0x3d0] sm:$0xff]
      %v2478 = vld [vmem:[#allocation3 + $0x3e8] sm:$0xff]
      %v2479 = vld [vmem:[#allocation3 + $0x3f0] sm:$0xff]
      %v2480 = vld [vmem:[#allocation3 + $0x3f8] sm:$0xff]
      %v2481 = vld [vmem:[#allocation3 + $0x410] sm:$0xff]
      %v2482 = vld [vmem:[#allocation3 + $0x418] sm:$0xff]
      %v2483 = vld [vmem:[#allocation3 + $0x420] sm:$0xff]
      %v2484 = vld [vmem:[#allocation3 + $0x438] sm:$0xff]
      %v2485 = vld [vmem:[#allocation3 + $0x440] sm:$0xff]
      %v2486 = vld [vmem:[#allocation3 + $0x448] sm:$0xff]
      %v2487 = vld [vmem:[#allocation3 + $0x460] sm:$0xff]
      %v2488 = vld [vmem:[#allocation3 + $0x468] sm:$0xff]
      %v2489 = vld [vmem:[#allocation3 + $0x470] sm:$0xff]
      %v2490 = vld [vmem:[#allocation3 + $0x488] sm:$0xff]
      %v2491 = vld [vmem:[#allocation3 + $0x490] sm:$0xff]
      %v2492 = vld [vmem:[#allocation3 + $0x498] sm:$0xff]
      %v2493 = vld [vmem:[#allocation3 + $0x4b0] sm:$0xff]
      %v2494 = vld [vmem:[#allocation3 + $0x4b8] sm:$0xff]
      %v2495 = vld [vmem:[#allocation3 + $0x4c0] sm:$0xff]
      %v2496 = vld [vmem:[#allocation3 + $0x4d8] sm:$0xff]
      %v2497 = vld [vmem:[#allocation3 + $0x4e0] sm:$0xff]
      %v2498 = vld [vmem:[#allocation3 + $0x4e8] sm:$0xff]
      %v2499 = vld [vmem:[%s9] sm:$0xff]
      %v2500 = vld [vmem:[%s9 + $0x8] sm:$0xff]
      %v2501 = vld [vmem:[%s9 + $0x10] sm:$0xff]
      %v2502 = vld [vmem:[%s9 + $0x18] sm:$0xff]
      %v2503 = vld [vmem:[%s9 + $0x20] sm:$0xff]
      %v2504 = vld [vmem:[%s9 + $0x28] sm:$0xff]
      %v2505 = vld [vmem:[%s9 + $0x30] sm:$0xff]
      %v2506 = vld [vmem:[%s9 + $0x38] sm:$0xff]
      %v2507 = vld [vmem:[%s9 + $0x40] sm:$0xff]
      %v2508 = vld [vmem:[%s9 + $0x48] sm:$0xff]
      %v2509 = vld [vmem:[%s9 + $0x50] sm:$0xff]
      %v2510 = vld [vmem:[%s9 + $0x58] sm:$0xff]
      %v2511 = vld [vmem:[%s9 + $0x60] sm:$0xff]
      %v2512 = vld [vmem:[%s9 + $0x68] sm:$0xff]
      %v2513 = vld [vmem:[%s9 + $0x70] sm:$0xff]
      %v2514 = vld [vmem:[%s9 + $0x78] sm:$0xff]
      %v2515 = vld [vmem:[%s9 + $0x80] sm:$0xff]
      %v2516 = vld [vmem:[%s9 + $0x88] sm:$0xff]
      %v2517 = vld [vmem:[%s9 + $0x90] sm:$0xff]
      %v2518 = vld [vmem:[%s9 + $0x98] sm:$0xff]
      %v2519 = vld [vmem:[%s9 + $0xa0] sm:$0xff]
      %v2520 = vld [vmem:[%s9 + $0xa8] sm:$0xff]
      %v2521 = vld [vmem:[%s9 + $0xb0] sm:$0xff]
      %v2522 = vld [vmem:[%s9 + $0xb8] sm:$0xff]
      %v2523 = vld [vmem:[%s9 + $0xc0] sm:$0xff]
      %v2524 = vld [vmem:[%s9 + $0xc8] sm:$0xff]
      %v2525 = vld [vmem:[%s9 + $0xd0] sm:$0xff]
      %v2526 = vld [vmem:[%s9 + $0xd8] sm:$0xff]
      %v2527 = vld [vmem:[%s9 + $0xe0] sm:$0xff]
      %v2528 = vld [vmem:[%s9 + $0xe8] sm:$0xff]
      %v2529 = vld [vmem:[%s9 + $0xf0] sm:$0xff]
      %v2530 = vld [vmem:[%s9 + $0xf8] sm:$0xff]
      %v2531 = vld [vmem:[%s9 + $0x100] sm:$0xff]
      %v2532 = vld [vmem:[%s9 + $0x108] sm:$0xff]
      %v2533 = vld [vmem:[%s9 + $0x110] sm:$0xff]
      %v2534 = vld [vmem:[%s9 + $0x118] sm:$0xff]
      %v2535 = vld [vmem:[%s10] sm:$0x1]
      %v2537 = vlaneseq
      %v2538 = vshrl.u32 %v2537, 7
      %v2539 = vsub.s32 0, %v2538
      %v2540 = vrot.slane %v2535, %v2539
      %v2543 = vsel %vm562, %v2405, 0
      %v2546 = vsel %vm562, %v2408, 0
      %v2549 = vsel %vm562, %v2411, 0
      %v2552 = vsel %vm562, %v2414, 0
      %v2555 = vsel %vm562, %v2417, 0
      %v2558 = vsel %vm562, %v2420, 0
      %v2561 = vsel %vm562, %v2423, 0
      %v2564 = vsel %vm562, %v2426, 0
      %v2567 = vsel %vm562, %v2429, 0
      %v2570 = vsel %vm562, %v2432, 0
      %v2573 = vsel %vm562, %v2435, 0
      %v2576 = vsel %vm562, %v2438, 0
      %v2579 = vsel %vm562, %v2441, 0
      %v2582 = vsel %vm562, %v2444, 0
      %v2585 = vsel %vm562, %v2447, 0
      %v2588 = vsel %vm562, %v2450, 0
      %v2591 = vsel %vm562, %v2453, 0
      %v2594 = vsel %vm562, %v2456, 0
      %v2597 = vsel %vm562, %v2459, 0
      %v2600 = vsel %vm562, %v2462, 0
      %v2603 = vsel %vm562, %v2465, 0
      %v2606 = vsel %vm562, %v2468, 0
      %v2609 = vsel %vm562, %v2471, 0
      %v2612 = vsel %vm562, %v2474, 0
      %v2615 = vsel %vm562, %v2477, 0
      %v2618 = vsel %vm562, %v2480, 0
      %v2621 = vsel %vm562, %v2483, 0
      %v2624 = vsel %vm562, %v2486, 0
      %v2627 = vsel %vm562, %v2489, 0
      %v2630 = vsel %vm562, %v2492, 0
      %v2633 = vsel %vm562, %v2495, 0
      %v2636 = vsel %vm562, %v2498, 0
      %2638 = vmatprep.subr.mxu0 0.0
      %2639 = vmatpush1.msra.mxu0 %v2499
      %2640 = vmatprep.subr.mxu0 0.0
      %2641 = vmatpush1.msra.mxu0 %v2500
      %2642 = vmatprep.subr.mxu0 0.0
      %2643 = vmatpush1.msra.mxu0 %v2501
      %2644 = vmatprep.subr.mxu0 0.0
      %2645 = vmatpush1.msra.mxu0 %v2502
      %2646 = vmatprep.subr.mxu0 0.0
      %2647 = vmatpush1.msra.mxu0 %v2503
      %2648 = vmatprep.subr.mxu0 0.0
      %2649 = vmatpush1.msra.mxu0 %v2504
      %2650 = vmatprep.subr.mxu0 0.0
      %2651 = vmatpush1.msra.mxu0 %v2505
      %2652 = vmatprep.subr.mxu0 0.0
      %2653 = vmatpush1.msra.mxu0 %v2506
      %2654 = vmatprep.subr.mxu0 0.0
      %2655 = vmatpush1.msra.mxu0 %v2507
      %2656 = vmatprep.subr.mxu0 0.0
      %2657 = vmatpush1.msra.mxu0 %v2508
      %2658 = vmatprep.subr.mxu0 0.0
      %2659 = vmatpush1.msra.mxu0 %v2509
      %2660 = vmatprep.subr.mxu0 0.0
      %2661 = vmatpush1.msra.mxu0 %v2510
      %2662 = vmatprep.subr.mxu0 0.0
      %2663 = vmatpush1.msra.mxu0 %v2511
      %2664 = vmatprep.subr.mxu0 0.0
      %2665 = vmatpush1.msra.mxu0 %v2512
      %2666 = vmatprep.subr.mxu0 0.0
      %2667 = vmatpush1.msra.mxu0 %v2513
      %2668 = vmatprep.subr.mxu0 0.0
      %2669 = vmatpush1.msra.mxu0 %v2514
      %2670 = vmatprep.subr.mxu0 0.0
      %2671 = vmatpush1.msra.mxu0 %v2515
      %2672 = vmatprep.subr.mxu0 0.0
      %2673 = vmatpush1.msra.mxu0 %v2516
      %2674 = vmatprep.subr.mxu0 0.0
      %2675 = vmatpush1.msra.mxu0 %v2517
      %2676 = vmatprep.subr.mxu0 0.0
      %2677 = vmatpush1.msra.mxu0 %v2518
      %2678 = vmatprep.subr.mxu0 0.0
      %2679 = vmatpush1.msra.mxu0 %v2519
      %2680 = vmatprep.subr.mxu0 0.0
      %2681 = vmatpush1.msra.mxu0 %v2520
      %2682 = vmatprep.subr.mxu0 0.0
      %2683 = vmatpush1.msra.mxu0 %v2521
      %2684 = vmatprep.subr.mxu0 0.0
      %2685 = vmatpush1.msra.mxu0 %v2522
      %2686 = vmatprep.subr.mxu0 0.0
      %2687 = vmatpush1.msra.mxu0 %v2523
      %2688 = vmatprep.subr.mxu0 0.0
      %2689 = vmatpush1.msra.mxu0 %v2524
      %2690 = vmatprep.subr.mxu0 0.0
      %2691 = vmatpush1.msra.mxu0 %v2525
      %2692 = vmatprep.subr.mxu0 0.0
      %2693 = vmatpush1.msra.mxu0 %v2526
      %2694 = vmatprep.subr.mxu0 0.0
      %2695 = vmatpush1.msra.mxu0 %v2527
      %2696 = vmatprep.subr.mxu0 0.0
      %2697 = vmatpush1.msra.mxu0 %v2528
      %2698 = vmatprep.subr.mxu0 0.0
      %2699 = vmatpush1.msra.mxu0 %v2529
      %2700 = vmatprep.subr.mxu0 0.0
      %2701 = vmatpush1.msra.mxu0 %v2530
      %2702 = vmatprep.mubr.f32.mxu0 %v2404
      %2703 = vmatmul.mubr.f32.gmra.mrb[0].mxu0 %v2403
      %v2704 = vpop.f32.mrb[0].mxu0
      %v2705 = vadd.f32 %v2540, %v2704
      %v2706 = vpop.f32.mrb[0].mxu0
      %2707 = vmatprep.mubr.f32.mxu0 %v2407
      %2708 = vmatmul.mubr.f32.gmra.mrb[0].mxu0 %v2406
      %v2709 = vpop.f32.mrb[0].mxu0
      %v2710 = vadd.f32 %v2540, %v2709
      %v2711 = vpop.f32.mrb[0].mxu0
      %2712 = vmatprep.mubr.f32.mxu0 %v2410
      %2713 = vmatmul.mubr.f32.gmra.mrb[0].mxu0 %v2409
      %v2714 = vpop.f32.mrb[0].mxu0
      %v2715 = vadd.f32 %v2540, %v2714
      %v2716 = vpop.f32.mrb[0].mxu0
      %2717 = vmatprep.mubr.f32.mxu0 %v2413
      %2718 = vmatmul.mubr.f32.gmra.mrb[0].mxu0 %v2412
      %v2719 = vpop.f32.mrb[0].mxu0
      %v2720 = vadd.f32 %v2540, %v2719
      %v2721 = vpop.f32.mrb[0].mxu0
      %2722 = vmatprep.mubr.f32.mxu0 %v2416
      %2723 = vmatmul.mubr.f32.gmra.mrb[0].mxu0 %v2415
      %v2724 = vpop.f32.mrb[0].mxu0
      %v2725 = vadd.f32 %v2540, %v2724
      %v2726 = vpop.f32.mrb[0].mxu0
      %2727 = vmatprep.mubr.f32.mxu0 %v2419
      %2728 = vmatmul.mubr.f32.gmra.mrb[0].mxu0 %v2418
      %v2729 = vpop.f32.mrb[0].mxu0
      %v2730 = vadd.f32 %v2540, %v2729
      %v2731 = vpop.f32.mrb[0].mxu0
      %2732 = vmatprep.mubr.f32.mxu0 %v2422
      %2733 = vmatmul.mubr.f32.gmra.mrb[0].mxu0 %v2421
      %v2734 = vpop.f32.mrb[0].mxu0
      %v2735 = vadd.f32 %v2540, %v2734
      %v2736 = vpop.f32.mrb[0].mxu0
      %2737 = vmatprep.mubr.f32.mxu0 %v2425
      %2738 = vmatmul.mubr.f32.gmra.mrb[0].mxu0 %v2424
      %v2739 = vpop.f32.mrb[0].mxu0
      %v2740 = vadd.f32 %v2540, %v2739
      %v2741 = vpop.f32.mrb[0].mxu0
      %2742 = vmatprep.mubr.f32.mxu0 %v2428
      %2743 = vmatmul.mubr.f32.gmra.mrb[0].mxu0 %v2427
      %v2744 = vpop.f32.mrb[0].mxu0
      %v2745 = vadd.f32 %v2540, %v2744
      %v2746 = vpop.f32.mrb[0].mxu0
      %2747 = vmatprep.mubr.f32.mxu0 %v2431
      %2748 = vmatmul.mubr.f32.gmra.mrb[0].mxu0 %v2430
      %v2749 = vpop.f32.mrb[0].mxu0
      %v2750 = vadd.f32 %v2540, %v2749
      %v2751 = vpop.f32.mrb[0].mxu0
      %2752 = vmatprep.mubr.f32.mxu0 %v2434
      %2753 = vmatmul.mubr.f32.gmra.mrb[0].mxu0 %v2433
      %v2754 = vpop.f32.mrb[0].mxu0
      %v2755 = vadd.f32 %v2540, %v2754
      %v2756 = vpop.f32.mrb[0].mxu0
      %2757 = vmatprep.mubr.f32.mxu0 %v2437
      %2758 = vmatmul.mubr.f32.gmra.mrb[0].mxu0 %v2436
      %v2759 = vpop.f32.mrb[0].mxu0
      %v2760 = vadd.f32 %v2540, %v2759
      %v2761 = vpop.f32.mrb[0].mxu0
      %2762 = vmatprep.mubr.f32.mxu0 %v2440
      %2763 = vmatmul.mubr.f32.gmra.mrb[0].mxu0 %v2439
      %v2764 = vpop.f32.mrb[0].mxu0
      %v2765 = vadd.f32 %v2540, %v2764
      %v2766 = vpop.f32.mrb[0].mxu0
      %2767 = vmatprep.mubr.f32.mxu0 %v2443
      %2768 = vmatmul.mubr.f32.gmra.mrb[0].mxu0 %v2442
      %v2769 = vpop.f32.mrb[0].mxu0
      %v2770 = vadd.f32 %v2540, %v2769
      %v2771 = vpop.f32.mrb[0].mxu0
      %2772 = vmatprep.mubr.f32.mxu0 %v2446
      %2773 = vmatmul.mubr.f32.gmra.mrb[0].mxu0 %v2445
      %v2774 = vpop.f32.mrb[0].mxu0
      %v2775 = vadd.f32 %v2540, %v2774
      %v2776 = vpop.f32.mrb[0].mxu0
      %2777 = vmatprep.mubr.f32.mxu0 %v2449
      %2778 = vmatmul.mubr.f32.gmra.mrb[0].mxu0 %v2448
      %v2779 = vpop.f32.mrb[0].mxu0
      %v2780 = vadd.f32 %v2540, %v2779
      %v2781 = vpop.f32.mrb[0].mxu0
      %2782 = vmatprep.mubr.f32.mxu0 %v2452
      %2783 = vmatmul.mubr.f32.gmra.mrb[0].mxu0 %v2451
      %v2784 = vpop.f32.mrb[0].mxu0
      %v2785 = vadd.f32 %v2540, %v2784
      %v2786 = vpop.f32.mrb[0].mxu0
      %2787 = vmatprep.mubr.f32.mxu0 %v2455
      %2788 = vmatmul.mubr.f32.gmra.mrb[0].mxu0 %v2454
      %v2789 = vpop.f32.mrb[0].mxu0
      %v2790 = vadd.f32 %v2540, %v2789
      %v2791 = vpop.f32.mrb[0].mxu0
      %2792 = vmatprep.mubr.f32.mxu0 %v2458
      %2793 = vmatmul.mubr.f32.gmra.mrb[0].mxu0 %v2457
      %v2794 = vpop.f32.mrb[0].mxu0
      %v2795 = vadd.f32 %v2540, %v2794
      %v2796 = vpop.f32.mrb[0].mxu0
      %2797 = vmatprep.mubr.f32.mxu0 %v2461
      %2798 = vmatmul.mubr.f32.gmra.mrb[0].mxu0 %v2460
      %v2799 = vpop.f32.mrb[0].mxu0
      %v2800 = vadd.f32 %v2540, %v2799
      %v2801 = vpop.f32.mrb[0].mxu0
      %2802 = vmatprep.mubr.f32.mxu0 %v2464
      %2803 = vmatmul.mubr.f32.gmra.mrb[0].mxu0 %v2463
      %v2804 = vpop.f32.mrb[0].mxu0
      %v2805 = vadd.f32 %v2540, %v2804
      %v2806 = vpop.f32.mrb[0].mxu0
      %2807 = vmatprep.mubr.f32.mxu0 %v2467
      %2808 = vmatmul.mubr.f32.gmra.mrb[0].mxu0 %v2466
      %v2809 = vpop.f32.mrb[0].mxu0
      %v2810 = vadd.f32 %v2540, %v2809
      %v2811 = vpop.f32.mrb[0].mxu0
      %2812 = vmatprep.mubr.f32.mxu0 %v2470
      %2813 = vmatmul.mubr.f32.gmra.mrb[0].mxu0 %v2469
      %v2814 = vpop.f32.mrb[0].mxu0
      %v2815 = vadd.f32 %v2540, %v2814
      %v2816 = vpop.f32.mrb[0].mxu0
      %2817 = vmatprep.mubr.f32.mxu0 %v2473
      %2818 = vmatmul.mubr.f32.gmra.mrb[0].mxu0 %v2472
      %v2819 = vpop.f32.mrb[0].mxu0
      %v2820 = vadd.f32 %v2540, %v2819
      %v2821 = vpop.f32.mrb[0].mxu0
      %2822 = vmatprep.mubr.f32.mxu0 %v2476
      %2823 = vmatmul.mubr.f32.gmra.mrb[0].mxu0 %v2475
      %v2824 = vpop.f32.mrb[0].mxu0
      %v2825 = vadd.f32 %v2540, %v2824
      %v2826 = vpop.f32.mrb[0].mxu0
      %2827 = vmatprep.mubr.f32.mxu0 %v2479
      %2828 = vmatmul.mubr.f32.gmra.mrb[0].mxu0 %v2478
      %v2829 = vpop.f32.mrb[0].mxu0
      %v2830 = vadd.f32 %v2540, %v2829
      %v2831 = vpop.f32.mrb[0].mxu0
      %2832 = vmatprep.mubr.f32.mxu0 %v2482
      %2833 = vmatmul.mubr.f32.gmra.mrb[0].mxu0 %v2481
      %v2834 = vpop.f32.mrb[0].mxu0
      %v2835 = vadd.f32 %v2540, %v2834
      %v2836 = vpop.f32.mrb[0].mxu0
      %2837 = vmatprep.mubr.f32.mxu0 %v2485
      %2838 = vmatmul.mubr.f32.gmra.mrb[0].mxu0 %v2484
      %v2839 = vpop.f32.mrb[0].mxu0
      %v2840 = vadd.f32 %v2540, %v2839
      %v2841 = vpop.f32.mrb[0].mxu0
      %2842 = vmatprep.mubr.f32.mxu0 %v2488
      %2843 = vmatmul.mubr.f32.gmra.mrb[0].mxu0 %v2487
      %v2844 = vpop.f32.mrb[0].mxu0
      %v2845 = vadd.f32 %v2540, %v2844
      %v2846 = vpop.f32.mrb[0].mxu0
      %2847 = vmatprep.mubr.f32.mxu0 %v2491
      %2848 = vmatmul.mubr.f32.gmra.mrb[0].mxu0 %v2490
      %v2849 = vpop.f32.mrb[0].mxu0
      %v2850 = vadd.f32 %v2540, %v2849
      %v2851 = vpop.f32.mrb[0].mxu0
      %2852 = vmatprep.mubr.f32.mxu0 %v2494
      %2853 = vmatmul.mubr.f32.gmra.mrb[0].mxu0 %v2493
      %v2854 = vpop.f32.mrb[0].mxu0
      %v2855 = vadd.f32 %v2540, %v2854
      %v2856 = vpop.f32.mrb[0].mxu0
      %2857 = vmatprep.mubr.f32.mxu0 %v2497
      %2858 = vmatmul.mubr.f32.gmra.mrb[0].mxu0 %v2496
      %v2859 = vpop.f32.mrb[0].mxu0
      %v2860 = vadd.f32 %v2540, %v2859
      %v2861 = vpop.f32.mrb[0].mxu0
      %2862 = vdwg.mxu0
      %2863 = vmatprep.subr.mxu0 0.0
      %2864 = vmatpush1.msra.mxu0 %v2531
      %2865 = vmatprep.subr.mxu0 0.0
      %2866 = vmatpush1.msra.mxu0 %v2532
      %2867 = vmatprep.subr.mxu0 0.0
      %2868 = vmatpush1.msra.mxu0 %v2533
      %2869 = vmatprep.subr.mxu0 0.0
      %2870 = vmatpush1.msra.mxu0 %v2534
      %2871 = vmatprep.subr.mxu0 0.0
      %2872 = vmatpush1.msra.mxu0 0.0
      %2873 = vmatprep.subr.mxu0 0.0
      %2874 = vmatpush1.msra.mxu0 0.0
      %2875 = vmatprep.subr.mxu0 0.0
      %2876 = vmatpush1.msra.mxu0 0.0
      %2877 = vmatprep.subr.mxu0 0.0
      %2878 = vmatpush1.msra.mxu0 0.0
      %2879 = vmatprep.subr.mxu0 0.0
      %2880 = vmatpush1.msra.mxu0 0.0
      %2881 = vmatprep.subr.mxu0 0.0
      %2882 = vmatpush1.msra.mxu0 0.0
      %2883 = vmatprep.subr.mxu0 0.0
      %2884 = vmatpush1.msra.mxu0 0.0
      %2885 = vmatprep.subr.mxu0 0.0
      %2886 = vmatpush1.msra.mxu0 0.0
      %2887 = vmatprep.subr.mxu0 0.0
      %2888 = vmatpush1.msra.mxu0 0.0
      %2889 = vmatprep.subr.mxu0 0.0
      %2890 = vmatpush1.msra.mxu0 0.0
      %2891 = vmatprep.subr.mxu0 0.0
      %2892 = vmatpush1.msra.mxu0 0.0
      %2893 = vmatprep.subr.mxu0 0.0
      %2894 = vmatpush1.msra.mxu0 0.0
      %2895 = vmatprep.subr.mxu0 0.0
      %2896 = vmatpush1.msra.mxu0 0.0
      %2897 = vmatprep.subr.mxu0 0.0
      %2898 = vmatpush1.msra.mxu0 0.0
      %2899 = vmatprep.subr.mxu0 0.0
      %2900 = vmatpush1.msra.mxu0 0.0
      %2901 = vmatprep.subr.mxu0 0.0
      %2902 = vmatpush1.msra.mxu0 0.0
      %2903 = vmatprep.subr.mxu0 0.0
      %2904 = vmatpush1.msra.mxu0 0.0
      %2905 = vmatprep.subr.mxu0 0.0
      %2906 = vmatpush1.msra.mxu0 0.0
      %2907 = vmatprep.subr.mxu0 0.0
      %2908 = vmatpush1.msra.mxu0 0.0
      %2909 = vmatprep.subr.mxu0 0.0
      %2910 = vmatpush1.msra.mxu0 0.0
      %2911 = vmatprep.subr.mxu0 0.0
      %2912 = vmatpush1.msra.mxu0 0.0
      %2913 = vmatprep.subr.mxu0 0.0
      %2914 = vmatpush1.msra.mxu0 0.0
      %2915 = vmatprep.subr.mxu0 0.0
      %2916 = vmatpush1.msra.mxu0 0.0
      %2917 = vmatprep.subr.mxu0 0.0
      %2918 = vmatpush1.msra.mxu0 0.0
      %2919 = vmatprep.subr.mxu0 0.0
      %2920 = vmatpush1.msra.mxu0 0.0
      %2921 = vmatprep.subr.mxu0 0.0
      %2922 = vmatpush1.msra.mxu0 0.0
      %2923 = vmatprep.subr.mxu0 0.0
      %2924 = vmatpush1.msra.mxu0 0.0
      %2925 = vmatprep.subr.mxu0 0.0
      %2926 = vmatpush1.msra.mxu0 0.0
      %2927 = vmatprep.mubr.f32.mxu0 0.0
      %2928 = vmatmul.mubr.f32.gmra.mrb[0].mxu0 %v2543
      %v2929 = vpop.f32.mrb[0].mxu0
      %v2930 = vadd.f32 %v2705, %v2929
      %v2931 = vpop.f32.mrb[0].mxu0
      %2932 = vmatprep.mubr.f32.mxu0 0.0
      %2933 = vmatmul.mubr.f32.gmra.mrb[0].mxu0 %v2546
      %v2934 = vpop.f32.mrb[0].mxu0
      %v2935 = vadd.f32 %v2710, %v2934
      %v2936 = vpop.f32.mrb[0].mxu0
      %2937 = vmatprep.mubr.f32.mxu0 0.0
      %2938 = vmatmul.mubr.f32.gmra.mrb[0].mxu0 %v2549
      %v2939 = vpop.f32.mrb[0].mxu0
      %v2940 = vadd.f32 %v2715, %v2939
      %v2941 = vpop.f32.mrb[0].mxu0
      %2942 = vmatprep.mubr.f32.mxu0 0.0
      %2943 = vmatmul.mubr.f32.gmra.mrb[0].mxu0 %v2552
      %v2944 = vpop.f32.mrb[0].mxu0
      %v2945 = vadd.f32 %v2720, %v2944
      %v2946 = vpop.f32.mrb[0].mxu0
      %2947 = vmatprep.mubr.f32.mxu0 0.0
      %2948 = vmatmul.mubr.f32.gmra.mrb[0].mxu0 %v2555
      %v2949 = vpop.f32.mrb[0].mxu0
      %v2950 = vadd.f32 %v2725, %v2949
      %v2951 = vpop.f32.mrb[0].mxu0
      %2952 = vmatprep.mubr.f32.mxu0 0.0
      %2953 = vmatmul.mubr.f32.gmra.mrb[0].mxu0 %v2558
      %v2954 = vpop.f32.mrb[0].mxu0
      %v2955 = vadd.f32 %v2730, %v2954
      %v2956 = vpop.f32.mrb[0].mxu0
      %2957 = vmatprep.mubr.f32.mxu0 0.0
      %2958 = vmatmul.mubr.f32.gmra.mrb[0].mxu0 %v2561
      %v2959 = vpop.f32.mrb[0].mxu0
      %v2960 = vadd.f32 %v2735, %v2959
      %v2961 = vpop.f32.mrb[0].mxu0
      %2962 = vmatprep.mubr.f32.mxu0 0.0
      %2963 = vmatmul.mubr.f32.gmra.mrb[0].mxu0 %v2564
      %v2964 = vpop.f32.mrb[0].mxu0
      %v2965 = vadd.f32 %v2740, %v2964
      %v2966 = vpop.f32.mrb[0].mxu0
      %2967 = vmatprep.mubr.f32.mxu0 0.0
      %2968 = vmatmul.mubr.f32.gmra.mrb[0].mxu0 %v2567
      %v2969 = vpop.f32.mrb[0].mxu0
      %v2970 = vadd.f32 %v2745, %v2969
      %v2971 = vpop.f32.mrb[0].mxu0
      %2972 = vmatprep.mubr.f32.mxu0 0.0
      %2973 = vmatmul.mubr.f32.gmra.mrb[0].mxu0 %v2570
      %v2974 = vpop.f32.mrb[0].mxu0
      %v2975 = vadd.f32 %v2750, %v2974
      %v2976 = vpop.f32.mrb[0].mxu0
      %2977 = vmatprep.mubr.f32.mxu0 0.0
      %2978 = vmatmul.mubr.f32.gmra.mrb[0].mxu0 %v2573
      %v2979 = vpop.f32.mrb[0].mxu0
      %v2980 = vadd.f32 %v2755, %v2979
      %v2981 = vpop.f32.mrb[0].mxu0
      %2982 = vmatprep.mubr.f32.mxu0 0.0
      %2983 = vmatmul.mubr.f32.gmra.mrb[0].mxu0 %v2576
      %v2984 = vpop.f32.mrb[0].mxu0
      %v2985 = vadd.f32 %v2760, %v2984
      %v2986 = vpop.f32.mrb[0].mxu0
      %2987 = vmatprep.mubr.f32.mxu0 0.0
      %2988 = vmatmul.mubr.f32.gmra.mrb[0].mxu0 %v2579
      %v2989 = vpop.f32.mrb[0].mxu0
      %v2990 = vadd.f32 %v2765, %v2989
      %v2991 = vpop.f32.mrb[0].mxu0
      %2992 = vmatprep.mubr.f32.mxu0 0.0
      %2993 = vmatmul.mubr.f32.gmra.mrb[0].mxu0 %v2582
      %v2994 = vpop.f32.mrb[0].mxu0
      %v2995 = vadd.f32 %v2770, %v2994
      %v2996 = vpop.f32.mrb[0].mxu0
      %2997 = vmatprep.mubr.f32.mxu0 0.0
      %2998 = vmatmul.mubr.f32.gmra.mrb[0].mxu0 %v2585
      %v2999 = vpop.f32.mrb[0].mxu0
      %v3000 = vadd.f32 %v2775, %v2999
      %v3001 = vpop.f32.mrb[0].mxu0
      %3002 = vmatprep.mubr.f32.mxu0 0.0
      %3003 = vmatmul.mubr.f32.gmra.mrb[0].mxu0 %v2588
      %v3004 = vpop.f32.mrb[0].mxu0
      %v3005 = vadd.f32 %v2780, %v3004
      %v3006 = vpop.f32.mrb[0].mxu0
      %3007 = vmatprep.mubr.f32.mxu0 0.0
      %3008 = vmatmul.mubr.f32.gmra.mrb[0].mxu0 %v2591
      %v3009 = vpop.f32.mrb[0].mxu0
      %v3010 = vadd.f32 %v2785, %v3009
      %v3011 = vpop.f32.mrb[0].mxu0
      %3012 = vmatprep.mubr.f32.mxu0 0.0
      %3013 = vmatmul.mubr.f32.gmra.mrb[0].mxu0 %v2594
      %v3014 = vpop.f32.mrb[0].mxu0
      %v3015 = vadd.f32 %v2790, %v3014
      %v3016 = vpop.f32.mrb[0].mxu0
      %3017 = vmatprep.mubr.f32.mxu0 0.0
      %3018 = vmatmul.mubr.f32.gmra.mrb[0].mxu0 %v2597
      %v3019 = vpop.f32.mrb[0].mxu0
      %v3020 = vadd.f32 %v2795, %v3019
      %v3021 = vpop.f32.mrb[0].mxu0
      %3022 = vmatprep.mubr.f32.mxu0 0.0
      %3023 = vmatmul.mubr.f32.gmra.mrb[0].mxu0 %v2600
      %v3024 = vpop.f32.mrb[0].mxu0
      %v3025 = vadd.f32 %v2800, %v3024
      %v3026 = vpop.f32.mrb[0].mxu0
      %3027 = vmatprep.mubr.f32.mxu0 0.0
      %3028 = vmatmul.mubr.f32.gmra.mrb[0].mxu0 %v2603
      %v3029 = vpop.f32.mrb[0].mxu0
      %v3030 = vadd.f32 %v2805, %v3029
      %v3031 = vpop.f32.mrb[0].mxu0
      %3032 = vmatprep.mubr.f32.mxu0 0.0
      %3033 = vmatmul.mubr.f32.gmra.mrb[0].mxu0 %v2606
      %v3034 = vpop.f32.mrb[0].mxu0
      %v3035 = vadd.f32 %v2810, %v3034
      %v3036 = vpop.f32.mrb[0].mxu0
      %3037 = vmatprep.mubr.f32.mxu0 0.0
      %3038 = vmatmul.mubr.f32.gmra.mrb[0].mxu0 %v2609
      %v3039 = vpop.f32.mrb[0].mxu0
      %v3040 = vadd.f32 %v2815, %v3039
      %v3041 = vpop.f32.mrb[0].mxu0
      %3042 = vmatprep.mubr.f32.mxu0 0.0
      %3043 = vmatmul.mubr.f32.gmra.mrb[0].mxu0 %v2612
      %v3044 = vpop.f32.mrb[0].mxu0
      %v3045 = vadd.f32 %v2820, %v3044
      %v3046 = vpop.f32.mrb[0].mxu0
      %3047 = vmatprep.mubr.f32.mxu0 0.0
      %3048 = vmatmul.mubr.f32.gmra.mrb[0].mxu0 %v2615
      %v3049 = vpop.f32.mrb[0].mxu0
      %v3050 = vadd.f32 %v2825, %v3049
      %v3051 = vpop.f32.mrb[0].mxu0
      %3052 = vmatprep.mubr.f32.mxu0 0.0
      %3053 = vmatmul.mubr.f32.gmra.mrb[0].mxu0 %v2618
      %v3054 = vpop.f32.mrb[0].mxu0
      %v3055 = vadd.f32 %v2830, %v3054
      %v3056 = vpop.f32.mrb[0].mxu0
      %3057 = vmatprep.mubr.f32.mxu0 0.0
      %3058 = vmatmul.mubr.f32.gmra.mrb[0].mxu0 %v2621
      %v3059 = vpop.f32.mrb[0].mxu0
      %v3060 = vadd.f32 %v2835, %v3059
      %v3061 = vpop.f32.mrb[0].mxu0
      %3062 = vmatprep.mubr.f32.mxu0 0.0
      %3063 = vmatmul.mubr.f32.gmra.mrb[0].mxu0 %v2624
      %v3064 = vpop.f32.mrb[0].mxu0
      %v3065 = vadd.f32 %v2840, %v3064
      %v3066 = vpop.f32.mrb[0].mxu0
      %3067 = vmatprep.mubr.f32.mxu0 0.0
      %3068 = vmatmul.mubr.f32.gmra.mrb[0].mxu0 %v2627
      %v3069 = vpop.f32.mrb[0].mxu0
      %v3070 = vadd.f32 %v2845, %v3069
      %v3071 = vpop.f32.mrb[0].mxu0
      %3072 = vmatprep.mubr.f32.mxu0 0.0
      %3073 = vmatmul.mubr.f32.gmra.mrb[0].mxu0 %v2630
      %v3074 = vpop.f32.mrb[0].mxu0
      %v3075 = vadd.f32 %v2850, %v3074
      %v3076 = vpop.f32.mrb[0].mxu0
      %3077 = vmatprep.mubr.f32.mxu0 0.0
      %3078 = vmatmul.mubr.f32.gmra.mrb[0].mxu0 %v2633
      %v3079 = vpop.f32.mrb[0].mxu0
      %v3080 = vadd.f32 %v2855, %v3079
      %v3081 = vpop.f32.mrb[0].mxu0
      %3082 = vmatprep.mubr.f32.mxu0 0.0
      %3083 = vmatmul.mubr.f32.gmra.mrb[0].mxu0 %v2636
      %v3084 = vpop.f32.mrb[0].mxu0
      %v3085 = vadd.f32 %v2860, %v3084
      %v3086 = vpop.f32.mrb[0].mxu0
      %3087 = vdwg.mxu0
      %v3088 = vmax.f32 %v2930, 0.0
      %v3089 = vmax.f32 %v2935, 0.0
      %v3090 = vmax.f32 %v2940, 0.0
      %v3091 = vmax.f32 %v2945, 0.0
      %v3092 = vmax.f32 %v2950, 0.0
      %v3093 = vmax.f32 %v2955, 0.0
      %v3094 = vmax.f32 %v2960, 0.0
      %v3095 = vmax.f32 %v2965, 0.0
      %v3096 = vmax.f32 %v2970, 0.0
      %v3097 = vmax.f32 %v2975, 0.0
      %v3098 = vmax.f32 %v2980, 0.0
      %v3099 = vmax.f32 %v2985, 0.0
      %v3100 = vmax.f32 %v2990, 0.0
      %v3101 = vmax.f32 %v2995, 0.0
      %v3102 = vmax.f32 %v3000, 0.0
      %v3103 = vmax.f32 %v3005, 0.0
      %v3104 = vmax.f32 %v3010, 0.0
      %v3105 = vmax.f32 %v3015, 0.0
      %v3106 = vmax.f32 %v3020, 0.0
      %v3107 = vmax.f32 %v3025, 0.0
      %v3108 = vmax.f32 %v3030, 0.0
      %v3109 = vmax.f32 %v3035, 0.0
      %v3110 = vmax.f32 %v3040, 0.0
      %v3111 = vmax.f32 %v3045, 0.0
      %v3112 = vmax.f32 %v3050, 0.0
      %v3113 = vmax.f32 %v3055, 0.0
      %v3114 = vmax.f32 %v3060, 0.0
      %v3115 = vmax.f32 %v3065, 0.0
      %v3116 = vmax.f32 %v3070, 0.0
      %v3117 = vmax.f32 %v3075, 0.0
      %v3118 = vmax.f32 %v3080, 0.0
      %v3119 = vmax.f32 %v3085, 0.0
      %3120 = vst.msk [vmem:[%s1022 + $0x1] sm:$0xff] %vm562, %v3088
      %3121 = vst.msk [vmem:[%s1022 + $0x9] sm:$0xff] %vm562, %v3089
      %3122 = vst.msk [vmem:[%s1022 + $0x19] sm:$0xff] %vm562, %v3090
      %3123 = vst.msk [vmem:[%s1022 + $0x21] sm:$0xff] %vm562, %v3091
      %3124 = vst.msk [vmem:[%s1022 + $0x31] sm:$0xff] %vm562, %v3092
      %3125 = vst.msk [vmem:[%s1022 + $0x39] sm:$0xff] %vm562, %v3093
      %3126 = vst.msk [vmem:[%s1022 + $0x49] sm:$0xff] %vm562, %v3094
      %3127 = vst.msk [vmem:[%s1022 + $0x51] sm:$0xff] %vm562, %v3095
      %3128 = vst.msk [vmem:[%s1022 + $0x61] sm:$0xff] %vm562, %v3096
      %3129 = vst.msk [vmem:[%s1022 + $0x69] sm:$0xff] %vm562, %v3097
      %3130 = vst.msk [vmem:[%s1022 + $0x79] sm:$0xff] %vm562, %v3098
      %3131 = vst.msk [vmem:[%s1022 + $0x81] sm:$0xff] %vm562, %v3099
      %3132 = vst.msk [vmem:[%s1022 + $0x91] sm:$0xff] %vm562, %v3100
      %3133 = vst.msk [vmem:[%s1022 + $0x99] sm:$0xff] %vm562, %v3101
      %3134 = vst.msk [vmem:[%s1022 + $0xa9] sm:$0xff] %vm562, %v3102
      %3135 = vst.msk [vmem:[%s1022 + $0xb1] sm:$0xff] %vm562, %v3103
      %3136 = vst.msk [vmem:[%s1022 + $0xc1] sm:$0xff] %vm562, %v3104
      %3137 = vst.msk [vmem:[%s1022 + $0xc9] sm:$0xff] %vm562, %v3105
      %3138 = vst.msk [vmem:[%s1022 + $0xd9] sm:$0xff] %vm562, %v3106
      %3139 = vst.msk [vmem:[%s1022 + $0xe1] sm:$0xff] %vm562, %v3107
      %3140 = vst.msk [vmem:[%s1022 + $0xf1] sm:$0xff] %vm562, %v3108
      %3141 = vst.msk [vmem:[%s1022 + $0xf9] sm:$0xff] %vm562, %v3109
      %3142 = vst.msk [vmem:[%s1022 + $0x109] sm:$0xff] %vm562, %v3110
      %3143 = vst.msk [vmem:[%s1022 + $0x111] sm:$0xff] %vm562, %v3111
      %3144 = vst.msk [vmem:[%s1022 + $0x121] sm:$0xff] %vm562, %v3112
      %3145 = vst.msk [vmem:[%s1022 + $0x129] sm:$0xff] %vm562, %v3113
      %3146 = vst.msk [vmem:[%s1022 + $0x139] sm:$0xff] %vm562, %v3114
      %3147 = vst.msk [vmem:[%s1022 + $0x141] sm:$0xff] %vm562, %v3115
      %3148 = vst.msk [vmem:[%s1022 + $0x151] sm:$0xff] %vm562, %v3116
      %3149 = vst.msk [vmem:[%s1022 + $0x159] sm:$0xff] %vm562, %v3117
      %3150 = vst.msk [vmem:[%s1022 + $0x169] sm:$0xff] %vm562, %v3118
      %3151 = vst.msk [vmem:[%s1022 + $0x171] sm:$0xff] %vm562, %v3119
      %v3152 = vld [vmem:[#allocation2] sm:$0xff]
      %v3153 = vld [vmem:[#allocation2 + $0x8] sm:$0xff]
      %v3154 = vld [vmem:[#allocation2 + $0x18] sm:$0xff]
      %v3155 = vld [vmem:[#allocation2 + $0x20] sm:$0xff]
      %v3156 = vld [vmem:[#allocation2 + $0x30] sm:$0xff]
      %v3157 = vld [vmem:[#allocation2 + $0x38] sm:$0xff]
      %v3158 = vld [vmem:[#allocation2 + $0x48] sm:$0xff]
      %v3159 = vld [vmem:[#allocation2 + $0x50] sm:$0xff]
      %v3160 = vld [vmem:[#allocation2 + $0x60] sm:$0xff]
      %v3161 = vld [vmem:[#allocation2 + $0x68] sm:$0xff]
      %v3162 = vld [vmem:[#allocation2 + $0x78] sm:$0xff]
      %v3163 = vld [vmem:[#allocation2 + $0x80] sm:$0xff]
      %v3164 = vld [vmem:[#allocation2 + $0x90] sm:$0xff]
      %v3165 = vld [vmem:[#allocation2 + $0x98] sm:$0xff]
      %v3166 = vld [vmem:[#allocation2 + $0xa8] sm:$0xff]
      %v3167 = vld [vmem:[#allocation2 + $0xb0] sm:$0xff]
      %v3168 = vld [vmem:[#allocation2 + $0xc0] sm:$0xff]
      %v3169 = vld [vmem:[#allocation2 + $0xc8] sm:$0xff]
      %v3170 = vld [vmem:[#allocation2 + $0xd8] sm:$0xff]
      %v3171 = vld [vmem:[#allocation2 + $0xe0] sm:$0xff]
      %v3172 = vld [vmem:[#allocation2 + $0xf0] sm:$0xff]
      %v3173 = vld [vmem:[#allocation2 + $0xf8] sm:$0xff]
      %v3174 = vld [vmem:[#allocation2 + $0x108] sm:$0xff]
      %v3175 = vld [vmem:[#allocation2 + $0x110] sm:$0xff]
      %v3176 = vld [vmem:[#allocation2 + $0x120] sm:$0xff]
      %v3177 = vld [vmem:[#allocation2 + $0x128] sm:$0xff]
      %v3178 = vld [vmem:[#allocation2 + $0x138] sm:$0xff]
      %v3179 = vld [vmem:[#allocation2 + $0x140] sm:$0xff]
      %v3180 = vld [vmem:[#allocation2 + $0x150] sm:$0xff]
      %v3181 = vld [vmem:[#allocation2 + $0x158] sm:$0xff]
      %v3182 = vld [vmem:[#allocation2 + $0x168] sm:$0xff]
      %v3183 = vld [vmem:[#allocation2 + $0x170] sm:$0xff]
      %3216 = vrot.lane.b32.xlu0 %v3152, 32
      %v3217 = vpop.permute.xlu0 %3216
      %3218 = vrot.lane.b32.xlu0 %v3153, 32
      %v3219 = vpop.permute.xlu0 %3218
      %3220 = vrot.lane.b32.xlu0 %v3154, 32
      %v3221 = vpop.permute.xlu0 %3220
      %3222 = vrot.lane.b32.xlu0 %v3155, 32
      %v3223 = vpop.permute.xlu0 %3222
      %3224 = vrot.lane.b32.xlu0 %v3156, 32
      %v3225 = vpop.permute.xlu0 %3224
      %3226 = vrot.lane.b32.xlu0 %v3157, 32
      %v3227 = vpop.permute.xlu0 %3226
      %3228 = vrot.lane.b32.xlu0 %v3158, 32
      %v3229 = vpop.permute.xlu0 %3228
      %3230 = vrot.lane.b32.xlu0 %v3159, 32
      %v3231 = vpop.permute.xlu0 %3230
      %3232 = vrot.lane.b32.xlu0 %v3160, 32
      %v3233 = vpop.permute.xlu0 %3232
      %3234 = vrot.lane.b32.xlu0 %v3161, 32
      %v3235 = vpop.permute.xlu0 %3234
      %3236 = vrot.lane.b32.xlu0 %v3162, 32
      %v3237 = vpop.permute.xlu0 %3236
      %3238 = vrot.lane.b32.xlu0 %v3163, 32
      %v3239 = vpop.permute.xlu0 %3238
      %3240 = vrot.lane.b32.xlu0 %v3164, 32
      %v3241 = vpop.permute.xlu0 %3240
      %3242 = vrot.lane.b32.xlu0 %v3165, 32
      %v3243 = vpop.permute.xlu0 %3242
      %3244 = vrot.lane.b32.xlu0 %v3166, 32
      %v3245 = vpop.permute.xlu0 %3244
      %3246 = vrot.lane.b32.xlu0 %v3167, 32
      %v3247 = vpop.permute.xlu0 %3246
      %3248 = vrot.lane.b32.xlu0 %v3168, 32
      %v3249 = vpop.permute.xlu0 %3248
      %3250 = vrot.lane.b32.xlu0 %v3169, 32
      %v3251 = vpop.permute.xlu0 %3250
      %3252 = vrot.lane.b32.xlu0 %v3170, 32
      %v3253 = vpop.permute.xlu0 %3252
      %3254 = vrot.lane.b32.xlu0 %v3171, 32
      %v3255 = vpop.permute.xlu0 %3254
      %3256 = vrot.lane.b32.xlu0 %v3172, 32
      %v3257 = vpop.permute.xlu0 %3256
      %3258 = vrot.lane.b32.xlu0 %v3173, 32
      %v3259 = vpop.permute.xlu0 %3258
      %3260 = vrot.lane.b32.xlu0 %v3174, 32
      %v3261 = vpop.permute.xlu0 %3260
      %3262 = vrot.lane.b32.xlu0 %v3175, 32
      %v3263 = vpop.permute.xlu0 %3262
      %3264 = vrot.lane.b32.xlu0 %v3176, 32
      %v3265 = vpop.permute.xlu0 %3264
      %3266 = vrot.lane.b32.xlu0 %v3177, 32
      %v3267 = vpop.permute.xlu0 %3266
      %3268 = vrot.lane.b32.xlu0 %v3178, 32
      %v3269 = vpop.permute.xlu0 %3268
      %3270 = vrot.lane.b32.xlu0 %v3179, 32
      %v3271 = vpop.permute.xlu0 %3270
      %3272 = vrot.lane.b32.xlu0 %v3180, 32
      %v3273 = vpop.permute.xlu0 %3272
      %3274 = vrot.lane.b32.xlu0 %v3181, 32
      %v3275 = vpop.permute.xlu0 %3274
      %3276 = vrot.lane.b32.xlu0 %v3182, 32
      %v3277 = vpop.permute.xlu0 %3276
      %3278 = vrot.lane.b32.xlu0 %v3183, 32
      %v3279 = vpop.permute.xlu0 %3278
      %3312 = vst.msk [vmem:[#allocation3 + $0x10] sm:$0xff] %vm1279, %v3217
      %3313 = vst.msk [vmem:[#allocation3 + $0x38] sm:$0xff] %vm1279, %v3219
      %3314 = vst.msk [vmem:[#allocation3 + $0x60] sm:$0xff] %vm1279, %v3221
      %3315 = vst.msk [vmem:[#allocation3 + $0x88] sm:$0xff] %vm1279, %v3223
      %3316 = vst.msk [vmem:[#allocation3 + $0xb0] sm:$0xff] %vm1279, %v3225
      %3317 = vst.msk [vmem:[#allocation3 + $0xd8] sm:$0xff] %vm1279, %v3227
      %3318 = vst.msk [vmem:[#allocation3 + $0x100] sm:$0xff] %vm1279, %v3229
      %3319 = vst.msk [vmem:[#allocation3 + $0x128] sm:$0xff] %vm1279, %v3231
      %3320 = vst.msk [vmem:[#allocation3 + $0x150] sm:$0xff] %vm1279, %v3233
      %3321 = vst.msk [vmem:[#allocation3 + $0x178] sm:$0xff] %vm1279, %v3235
      %3322 = vst.msk [vmem:[#allocation3 + $0x1a0] sm:$0xff] %vm1279, %v3237
      %3323 = vst.msk [vmem:[#allocation3 + $0x1c8] sm:$0xff] %vm1279, %v3239
      %3324 = vst.msk [vmem:[#allocation3 + $0x1f0] sm:$0xff] %vm1279, %v3241
      %3325 = vst.msk [vmem:[#allocation3 + $0x218] sm:$0xff] %vm1279, %v3243
      %3326 = vst.msk [vmem:[#allocation3 + $0x240] sm:$0xff] %vm1279, %v3245
      %3327 = vst.msk [vmem:[#allocation3 + $0x268] sm:$0xff] %vm1279, %v3247
      %3328 = vst.msk [vmem:[#allocation3 + $0x290] sm:$0xff] %vm1279, %v3249
      %3329 = vst.msk [vmem:[#allocation3 + $0x2b8] sm:$0xff] %vm1279, %v3251
      %3330 = vst.msk [vmem:[#allocation3 + $0x2e0] sm:$0xff] %vm1279, %v3253
      %3331 = vst.msk [vmem:[#allocation3 + $0x308] sm:$0xff] %vm1279, %v3255
      %3332 = vst.msk [vmem:[#allocation3 + $0x330] sm:$0xff] %vm1279, %v3257
      %3333 = vst.msk [vmem:[#allocation3 + $0x358] sm:$0xff] %vm1279, %v3259
      %3334 = vst.msk [vmem:[#allocation3 + $0x380] sm:$0xff] %vm1279, %v3261
      %3335 = vst.msk [vmem:[#allocation3 + $0x3a8] sm:$0xff] %vm1279, %v3263
      %3336 = vst.msk [vmem:[#allocation3 + $0x3d0] sm:$0xff] %vm1279, %v3265
      %3337 = vst.msk [vmem:[#allocation3 + $0x3f8] sm:$0xff] %vm1279, %v3267
      %3338 = vst.msk [vmem:[#allocation3 + $0x420] sm:$0xff] %vm1279, %v3269
      %3339 = vst.msk [vmem:[#allocation3 + $0x448] sm:$0xff] %vm1279, %v3271
      %3340 = vst.msk [vmem:[#allocation3 + $0x470] sm:$0xff] %vm1279, %v3273
      %3341 = vst.msk [vmem:[#allocation3 + $0x498] sm:$0xff] %vm1279, %v3275
      %3342 = vst.msk [vmem:[#allocation3 + $0x4c0] sm:$0xff] %vm1279, %v3277
      %3343 = vst.msk [vmem:[#allocation3 + $0x4e8] sm:$0xff] %vm1279, %v3279
      %v3344 = vld [vmem:[#allocation2 + $0x1] sm:$0xff]
      %v3345 = vld [vmem:[#allocation2 + $0x9] sm:$0xff]
      %v3346 = vld [vmem:[#allocation2 + $0x19] sm:$0xff]
      %v3347 = vld [vmem:[#allocation2 + $0x21] sm:$0xff]
      %v3348 = vld [vmem:[#allocation2 + $0x31] sm:$0xff]
      %v3349 = vld [vmem:[#allocation2 + $0x39] sm:$0xff]
      %v3350 = vld [vmem:[#allocation2 + $0x49] sm:$0xff]
      %v3351 = vld [vmem:[#allocation2 + $0x51] sm:$0xff]
      %v3352 = vld [vmem:[#allocation2 + $0x61] sm:$0xff]
      %v3353 = vld [vmem:[#allocation2 + $0x69] sm:$0xff]
      %v3354 = vld [vmem:[#allocation2 + $0x79] sm:$0xff]
      %v3355 = vld [vmem:[#allocation2 + $0x81] sm:$0xff]
      %v3356 = vld [vmem:[#allocation2 + $0x91] sm:$0xff]
      %v3357 = vld [vmem:[#allocation2 + $0x99] sm:$0xff]
      %v3358 = vld [vmem:[#allocation2 + $0xa9] sm:$0xff]
      %v3359 = vld [vmem:[#allocation2 + $0xb1] sm:$0xff]
      %v3360 = vld [vmem:[#allocation2 + $0xc1] sm:$0xff]
      %v3361 = vld [vmem:[#allocation2 + $0xc9] sm:$0xff]
      %v3362 = vld [vmem:[#allocation2 + $0xd9] sm:$0xff]
      %v3363 = vld [vmem:[#allocation2 + $0xe1] sm:$0xff]
      %v3364 = vld [vmem:[#allocation2 + $0xf1] sm:$0xff]
      %v3365 = vld [vmem:[#allocation2 + $0xf9] sm:$0xff]
      %v3366 = vld [vmem:[#allocation2 + $0x109] sm:$0xff]
      %v3367 = vld [vmem:[#allocation2 + $0x111] sm:$0xff]
      %v3368 = vld [vmem:[#allocation2 + $0x121] sm:$0xff]
      %v3369 = vld [vmem:[#allocation2 + $0x129] sm:$0xff]
      %v3370 = vld [vmem:[#allocation2 + $0x139] sm:$0xff]
      %v3371 = vld [vmem:[#allocation2 + $0x141] sm:$0xff]
      %v3372 = vld [vmem:[#allocation2 + $0x151] sm:$0xff]
      %v3373 = vld [vmem:[#allocation2 + $0x159] sm:$0xff]
      %v3374 = vld [vmem:[#allocation2 + $0x169] sm:$0xff]
      %v3375 = vld [vmem:[#allocation2 + $0x171] sm:$0xff]
      %3408 = vrot.lane.b32.xlu0 %v3344, 64
      %v3409 = vpop.permute.xlu0 %3408
      %3410 = vrot.lane.b32.xlu0 %v3345, 64
      %v3411 = vpop.permute.xlu0 %3410
      %3412 = vrot.lane.b32.xlu0 %v3346, 64
      %v3413 = vpop.permute.xlu0 %3412
      %3414 = vrot.lane.b32.xlu0 %v3347, 64
      %v3415 = vpop.permute.xlu0 %3414
      %3416 = vrot.lane.b32.xlu0 %v3348, 64
      %v3417 = vpop.permute.xlu0 %3416
      %3418 = vrot.lane.b32.xlu0 %v3349, 64
      %v3419 = vpop.permute.xlu0 %3418
      %3420 = vrot.lane.b32.xlu0 %v3350, 64
      %v3421 = vpop.permute.xlu0 %3420
      %3422 = vrot.lane.b32.xlu0 %v3351, 64
      %v3423 = vpop.permute.xlu0 %3422
      %3424 = vrot.lane.b32.xlu0 %v3352, 64
      %v3425 = vpop.permute.xlu0 %3424
      %3426 = vrot.lane.b32.xlu0 %v3353, 64
      %v3427 = vpop.permute.xlu0 %3426
      %3428 = vrot.lane.b32.xlu0 %v3354, 64
      %v3429 = vpop.permute.xlu0 %3428
      %3430 = vrot.lane.b32.xlu0 %v3355, 64
      %v3431 = vpop.permute.xlu0 %3430
      %3432 = vrot.lane.b32.xlu0 %v3356, 64
      %v3433 = vpop.permute.xlu0 %3432
      %3434 = vrot.lane.b32.xlu0 %v3357, 64
      %v3435 = vpop.permute.xlu0 %3434
      %3436 = vrot.lane.b32.xlu0 %v3358, 64
      %v3437 = vpop.permute.xlu0 %3436
      %3438 = vrot.lane.b32.xlu0 %v3359, 64
      %v3439 = vpop.permute.xlu0 %3438
      %3440 = vrot.lane.b32.xlu0 %v3360, 64
      %v3441 = vpop.permute.xlu0 %3440
      %3442 = vrot.lane.b32.xlu0 %v3361, 64
      %v3443 = vpop.permute.xlu0 %3442
      %3444 = vrot.lane.b32.xlu0 %v3362, 64
      %v3445 = vpop.permute.xlu0 %3444
      %3446 = vrot.lane.b32.xlu0 %v3363, 64
      %v3447 = vpop.permute.xlu0 %3446
      %3448 = vrot.lane.b32.xlu0 %v3364, 64
      %v3449 = vpop.permute.xlu0 %3448
      %3450 = vrot.lane.b32.xlu0 %v3365, 64
      %v3451 = vpop.permute.xlu0 %3450
      %3452 = vrot.lane.b32.xlu0 %v3366, 64
      %v3453 = vpop.permute.xlu0 %3452
      %3454 = vrot.lane.b32.xlu0 %v3367, 64
      %v3455 = vpop.permute.xlu0 %3454
      %3456 = vrot.lane.b32.xlu0 %v3368, 64
      %v3457 = vpop.permute.xlu0 %3456
      %3458 = vrot.lane.b32.xlu0 %v3369, 64
      %v3459 = vpop.permute.xlu0 %3458
      %3460 = vrot.lane.b32.xlu0 %v3370, 64
      %v3461 = vpop.permute.xlu0 %3460
      %3462 = vrot.lane.b32.xlu0 %v3371, 64
      %v3463 = vpop.permute.xlu0 %3462
      %3464 = vrot.lane.b32.xlu0 %v3372, 64
      %v3465 = vpop.permute.xlu0 %3464
      %3466 = vrot.lane.b32.xlu0 %v3373, 64
      %v3467 = vpop.permute.xlu0 %3466
      %3468 = vrot.lane.b32.xlu0 %v3374, 64
      %v3469 = vpop.permute.xlu0 %3468
      %3470 = vrot.lane.b32.xlu0 %v3375, 64
      %v3471 = vpop.permute.xlu0 %3470
      %3504 = vst.msk [vmem:[#allocation3 + $0x10] sm:$0xff] %vm1472, %v3409
      %3505 = vst.msk [vmem:[#allocation3 + $0x38] sm:$0xff] %vm1472, %v3411
      %3506 = vst.msk [vmem:[#allocation3 + $0x60] sm:$0xff] %vm1472, %v3413
      %3507 = vst.msk [vmem:[#allocation3 + $0x88] sm:$0xff] %vm1472, %v3415
      %3508 = vst.msk [vmem:[#allocation3 + $0xb0] sm:$0xff] %vm1472, %v3417
      %3509 = vst.msk [vmem:[#allocation3 + $0xd8] sm:$0xff] %vm1472, %v3419
      %3510 = vst.msk [vmem:[#allocation3 + $0x100] sm:$0xff] %vm1472, %v3421
      %3511 = vst.msk [vmem:[#allocation3 + $0x128] sm:$0xff] %vm1472, %v3423
      %3512 = vst.msk [vmem:[#allocation3 + $0x150] sm:$0xff] %vm1472, %v3425
      %3513 = vst.msk [vmem:[#allocation3 + $0x178] sm:$0xff] %vm1472, %v3427
      %3514 = vst.msk [vmem:[#allocation3 + $0x1a0] sm:$0xff] %vm1472, %v3429
      %3515 = vst.msk [vmem:[#allocation3 + $0x1c8] sm:$0xff] %vm1472, %v3431
      %3516 = vst.msk [vmem:[#allocation3 + $0x1f0] sm:$0xff] %vm1472, %v3433
      %3517 = vst.msk [vmem:[#allocation3 + $0x218] sm:$0xff] %vm1472, %v3435
      %3518 = vst.msk [vmem:[#allocation3 + $0x240] sm:$0xff] %vm1472, %v3437
      %3519 = vst.msk [vmem:[#allocation3 + $0x268] sm:$0xff] %vm1472, %v3439
      %3520 = vst.msk [vmem:[#allocation3 + $0x290] sm:$0xff] %vm1472, %v3441
      %3521 = vst.msk [vmem:[#allocation3 + $0x2b8] sm:$0xff] %vm1472, %v3443
      %3522 = vst.msk [vmem:[#allocation3 + $0x2e0] sm:$0xff] %vm1472, %v3445
      %3523 = vst.msk [vmem:[#allocation3 + $0x308] sm:$0xff] %vm1472, %v3447
      %3524 = vst.msk [vmem:[#allocation3 + $0x330] sm:$0xff] %vm1472, %v3449
      %3525 = vst.msk [vmem:[#allocation3 + $0x358] sm:$0xff] %vm1472, %v3451
      %3526 = vst.msk [vmem:[#allocation3 + $0x380] sm:$0xff] %vm1472, %v3453
      %3527 = vst.msk [vmem:[#allocation3 + $0x3a8] sm:$0xff] %vm1472, %v3455
      %3528 = vst.msk [vmem:[#allocation3 + $0x3d0] sm:$0xff] %vm1472, %v3457
      %3529 = vst.msk [vmem:[#allocation3 + $0x3f8] sm:$0xff] %vm1472, %v3459
      %3530 = vst.msk [vmem:[#allocation3 + $0x420] sm:$0xff] %vm1472, %v3461
      %3531 = vst.msk [vmem:[#allocation3 + $0x448] sm:$0xff] %vm1472, %v3463
      %3532 = vst.msk [vmem:[#allocation3 + $0x470] sm:$0xff] %vm1472, %v3465
      %3533 = vst.msk [vmem:[#allocation3 + $0x498] sm:$0xff] %vm1472, %v3467
      %3534 = vst.msk [vmem:[#allocation3 + $0x4c0] sm:$0xff] %vm1472, %v3469
      %3535 = vst.msk [vmem:[#allocation3 + $0x4e8] sm:$0xff] %vm1472, %v3471
      %v3536 = vld [vmem:[#allocation2 + $0x2] sm:$0xff]
      %v3537 = vld [vmem:[#allocation2 + $0xa] sm:$0xff]
      %v3538 = vld [vmem:[#allocation2 + $0x1a] sm:$0xff]
      %v3539 = vld [vmem:[#allocation2 + $0x22] sm:$0xff]
      %v3540 = vld [vmem:[#allocation2 + $0x32] sm:$0xff]
      %v3541 = vld [vmem:[#allocation2 + $0x3a] sm:$0xff]
      %v3542 = vld [vmem:[#allocation2 + $0x4a] sm:$0xff]
      %v3543 = vld [vmem:[#allocation2 + $0x52] sm:$0xff]
      %v3544 = vld [vmem:[#allocation2 + $0x62] sm:$0xff]
      %v3545 = vld [vmem:[#allocation2 + $0x6a] sm:$0xff]
      %v3546 = vld [vmem:[#allocation2 + $0x7a] sm:$0xff]
      %v3547 = vld [vmem:[#allocation2 + $0x82] sm:$0xff]
      %v3548 = vld [vmem:[#allocation2 + $0x92] sm:$0xff]
      %v3549 = vld [vmem:[#allocation2 + $0x9a] sm:$0xff]
      %v3550 = vld [vmem:[#allocation2 + $0xaa] sm:$0xff]
      %v3551 = vld [vmem:[#allocation2 + $0xb2] sm:$0xff]
      %v3552 = vld [vmem:[#allocation2 + $0xc2] sm:$0xff]
      %v3553 = vld [vmem:[#allocation2 + $0xca] sm:$0xff]
      %v3554 = vld [vmem:[#allocation2 + $0xda] sm:$0xff]
      %v3555 = vld [vmem:[#allocation2 + $0xe2] sm:$0xff]
      %v3556 = vld [vmem:[#allocation2 + $0xf2] sm:$0xff]
      %v3557 = vld [vmem:[#allocation2 + $0xfa] sm:$0xff]
      %v3558 = vld [vmem:[#allocation2 + $0x10a] sm:$0xff]
      %v3559 = vld [vmem:[#allocation2 + $0x112] sm:$0xff]
      %v3560 = vld [vmem:[#allocation2 + $0x122] sm:$0xff]
      %v3561 = vld [vmem:[#allocation2 + $0x12a] sm:$0xff]
      %v3562 = vld [vmem:[#allocation2 + $0x13a] sm:$0xff]
      %v3563 = vld [vmem:[#allocation2 + $0x142] sm:$0xff]
      %v3564 = vld [vmem:[#allocation2 + $0x152] sm:$0xff]
      %v3565 = vld [vmem:[#allocation2 + $0x15a] sm:$0xff]
      %v3566 = vld [vmem:[#allocation2 + $0x16a] sm:$0xff]
      %v3567 = vld [vmem:[#allocation2 + $0x172] sm:$0xff]
      %3600 = vrot.lane.b32.xlu0 %v3536, 96
      %v3601 = vpop.permute.xlu0 %3600
      %3602 = vrot.lane.b32.xlu0 %v3537, 96
      %v3603 = vpop.permute.xlu0 %3602
      %3604 = vrot.lane.b32.xlu0 %v3538, 96
      %v3605 = vpop.permute.xlu0 %3604
      %3606 = vrot.lane.b32.xlu0 %v3539, 96
      %v3607 = vpop.permute.xlu0 %3606
      %3608 = vrot.lane.b32.xlu0 %v3540, 96
      %v3609 = vpop.permute.xlu0 %3608
      %3610 = vrot.lane.b32.xlu0 %v3541, 96
      %v3611 = vpop.permute.xlu0 %3610
      %3612 = vrot.lane.b32.xlu0 %v3542, 96
      %v3613 = vpop.permute.xlu0 %3612
      %3614 = vrot.lane.b32.xlu0 %v3543, 96
      %v3615 = vpop.permute.xlu0 %3614
      %3616 = vrot.lane.b32.xlu0 %v3544, 96
      %v3617 = vpop.permute.xlu0 %3616
      %3618 = vrot.lane.b32.xlu0 %v3545, 96
      %v3619 = vpop.permute.xlu0 %3618
      %3620 = vrot.lane.b32.xlu0 %v3546, 96
      %v3621 = vpop.permute.xlu0 %3620
      %3622 = vrot.lane.b32.xlu0 %v3547, 96
      %v3623 = vpop.permute.xlu0 %3622
      %3624 = vrot.lane.b32.xlu0 %v3548, 96
      %v3625 = vpop.permute.xlu0 %3624
      %3626 = vrot.lane.b32.xlu0 %v3549, 96
      %v3627 = vpop.permute.xlu0 %3626
      %3628 = vrot.lane.b32.xlu0 %v3550, 96
      %v3629 = vpop.permute.xlu0 %3628
      %3630 = vrot.lane.b32.xlu0 %v3551, 96
      %v3631 = vpop.permute.xlu0 %3630
      %3632 = vrot.lane.b32.xlu0 %v3552, 96
      %v3633 = vpop.permute.xlu0 %3632
      %3634 = vrot.lane.b32.xlu0 %v3553, 96
      %v3635 = vpop.permute.xlu0 %3634
      %3636 = vrot.lane.b32.xlu0 %v3554, 96
      %v3637 = vpop.permute.xlu0 %3636
      %3638 = vrot.lane.b32.xlu0 %v3555, 96
      %v3639 = vpop.permute.xlu0 %3638
      %3640 = vrot.lane.b32.xlu0 %v3556, 96
      %v3641 = vpop.permute.xlu0 %3640
      %3642 = vrot.lane.b32.xlu0 %v3557, 96
      %v3643 = vpop.permute.xlu0 %3642
      %3644 = vrot.lane.b32.xlu0 %v3558, 96
      %v3645 = vpop.permute.xlu0 %3644
      %3646 = vrot.lane.b32.xlu0 %v3559, 96
      %v3647 = vpop.permute.xlu0 %3646
      %3648 = vrot.lane.b32.xlu0 %v3560, 96
      %v3649 = vpop.permute.xlu0 %3648
      %3650 = vrot.lane.b32.xlu0 %v3561, 96
      %v3651 = vpop.permute.xlu0 %3650
      %3652 = vrot.lane.b32.xlu0 %v3562, 96
      %v3653 = vpop.permute.xlu0 %3652
      %3654 = vrot.lane.b32.xlu0 %v3563, 96
      %v3655 = vpop.permute.xlu0 %3654
      %3656 = vrot.lane.b32.xlu0 %v3564, 96
      %v3657 = vpop.permute.xlu0 %3656
      %3658 = vrot.lane.b32.xlu0 %v3565, 96
      %v3659 = vpop.permute.xlu0 %3658
      %3660 = vrot.lane.b32.xlu0 %v3566, 96
      %v3661 = vpop.permute.xlu0 %3660
      %3662 = vrot.lane.b32.xlu0 %v3567, 96
      %v3663 = vpop.permute.xlu0 %3662
      %3696 = vst.msk [vmem:[#allocation3 + $0x10] sm:$0xff] %vm1665, %v3601
      %3697 = vst.msk [vmem:[#allocation3 + $0x38] sm:$0xff] %vm1665, %v3603
      %3698 = vst.msk [vmem:[#allocation3 + $0x60] sm:$0xff] %vm1665, %v3605
      %3699 = vst.msk [vmem:[#allocation3 + $0x88] sm:$0xff] %vm1665, %v3607
      %3700 = vst.msk [vmem:[#allocation3 + $0xb0] sm:$0xff] %vm1665, %v3609
      %3701 = vst.msk [vmem:[#allocation3 + $0xd8] sm:$0xff] %vm1665, %v3611
      %3702 = vst.msk [vmem:[#allocation3 + $0x100] sm:$0xff] %vm1665, %v3613
      %3703 = vst.msk [vmem:[#allocation3 + $0x128] sm:$0xff] %vm1665, %v3615
      %3704 = vst.msk [vmem:[#allocation3 + $0x150] sm:$0xff] %vm1665, %v3617
      %3705 = vst.msk [vmem:[#allocation3 + $0x178] sm:$0xff] %vm1665, %v3619
      %3706 = vst.msk [vmem:[#allocation3 + $0x1a0] sm:$0xff] %vm1665, %v3621
      %3707 = vst.msk [vmem:[#allocation3 + $0x1c8] sm:$0xff] %vm1665, %v3623
      %3708 = vst.msk [vmem:[#allocation3 + $0x1f0] sm:$0xff] %vm1665, %v3625
      %3709 = vst.msk [vmem:[#allocation3 + $0x218] sm:$0xff] %vm1665, %v3627
      %3710 = vst.msk [vmem:[#allocation3 + $0x240] sm:$0xff] %vm1665, %v3629
      %3711 = vst.msk [vmem:[#allocation3 + $0x268] sm:$0xff] %vm1665, %v3631
      %3712 = vst.msk [vmem:[#allocation3 + $0x290] sm:$0xff] %vm1665, %v3633
      %3713 = vst.msk [vmem:[#allocation3 + $0x2b8] sm:$0xff] %vm1665, %v3635
      %3714 = vst.msk [vmem:[#allocation3 + $0x2e0] sm:$0xff] %vm1665, %v3637
      %3715 = vst.msk [vmem:[#allocation3 + $0x308] sm:$0xff] %vm1665, %v3639
      %3716 = vst.msk [vmem:[#allocation3 + $0x330] sm:$0xff] %vm1665, %v3641
      %3717 = vst.msk [vmem:[#allocation3 + $0x358] sm:$0xff] %vm1665, %v3643
      %3718 = vst.msk [vmem:[#allocation3 + $0x380] sm:$0xff] %vm1665, %v3645
      %3719 = vst.msk [vmem:[#allocation3 + $0x3a8] sm:$0xff] %vm1665, %v3647
      %3720 = vst.msk [vmem:[#allocation3 + $0x3d0] sm:$0xff] %vm1665, %v3649
      %3721 = vst.msk [vmem:[#allocation3 + $0x3f8] sm:$0xff] %vm1665, %v3651
      %3722 = vst.msk [vmem:[#allocation3 + $0x420] sm:$0xff] %vm1665, %v3653
      %3723 = vst.msk [vmem:[#allocation3 + $0x448] sm:$0xff] %vm1665, %v3655
      %3724 = vst.msk [vmem:[#allocation3 + $0x470] sm:$0xff] %vm1665, %v3657
      %3725 = vst.msk [vmem:[#allocation3 + $0x498] sm:$0xff] %vm1665, %v3659
      %3726 = vst.msk [vmem:[#allocation3 + $0x4c0] sm:$0xff] %vm1665, %v3661
      %3727 = vst.msk [vmem:[#allocation3 + $0x4e8] sm:$0xff] %vm1665, %v3663
      %v3728 = vld [vmem:[%s1022] sm:$0xff]
      %v3729 = vld [vmem:[%s1022 + $0x8] sm:$0xff]
      %v3730 = vld [vmem:[%s1022 + $0x18] sm:$0xff]
      %v3731 = vld [vmem:[%s1022 + $0x20] sm:$0xff]
      %v3732 = vld [vmem:[%s1022 + $0x30] sm:$0xff]
      %v3733 = vld [vmem:[%s1022 + $0x38] sm:$0xff]
      %v3734 = vld [vmem:[%s1022 + $0x48] sm:$0xff]
      %v3735 = vld [vmem:[%s1022 + $0x50] sm:$0xff]
      %v3736 = vld [vmem:[%s1022 + $0x60] sm:$0xff]
      %v3737 = vld [vmem:[%s1022 + $0x68] sm:$0xff]
      %v3738 = vld [vmem:[%s1022 + $0x78] sm:$0xff]
      %v3739 = vld [vmem:[%s1022 + $0x80] sm:$0xff]
      %v3740 = vld [vmem:[%s1022 + $0x90] sm:$0xff]
      %v3741 = vld [vmem:[%s1022 + $0x98] sm:$0xff]
      %v3742 = vld [vmem:[%s1022 + $0xa8] sm:$0xff]
      %v3743 = vld [vmem:[%s1022 + $0xb0] sm:$0xff]
      %v3744 = vld [vmem:[%s1022 + $0xc0] sm:$0xff]
      %v3745 = vld [vmem:[%s1022 + $0xc8] sm:$0xff]
      %v3746 = vld [vmem:[%s1022 + $0xd8] sm:$0xff]
      %v3747 = vld [vmem:[%s1022 + $0xe0] sm:$0xff]
      %v3748 = vld [vmem:[%s1022 + $0xf0] sm:$0xff]
      %v3749 = vld [vmem:[%s1022 + $0xf8] sm:$0xff]
      %v3750 = vld [vmem:[%s1022 + $0x108] sm:$0xff]
      %v3751 = vld [vmem:[%s1022 + $0x110] sm:$0xff]
      %v3752 = vld [vmem:[%s1022 + $0x120] sm:$0xff]
      %v3753 = vld [vmem:[%s1022 + $0x128] sm:$0xff]
      %v3754 = vld [vmem:[%s1022 + $0x138] sm:$0xff]
      %v3755 = vld [vmem:[%s1022 + $0x140] sm:$0xff]
      %v3756 = vld [vmem:[%s1022 + $0x150] sm:$0xff]
      %v3757 = vld [vmem:[%s1022 + $0x158] sm:$0xff]
      %v3758 = vld [vmem:[%s1022 + $0x168] sm:$0xff]
      %v3759 = vld [vmem:[%s1022 + $0x170] sm:$0xff]
      %3760 = vst.msk [vmem:[#allocation3 + $0x18] sm:$0xff] %vm562, %v3728
      %3761 = vst.msk [vmem:[#allocation3 + $0x40] sm:$0xff] %vm562, %v3729
      %3762 = vst.msk [vmem:[#allocation3 + $0x68] sm:$0xff] %vm562, %v3730
      %3763 = vst.msk [vmem:[#allocation3 + $0x90] sm:$0xff] %vm562, %v3731
      %3764 = vst.msk [vmem:[#allocation3 + $0xb8] sm:$0xff] %vm562, %v3732
      %3765 = vst.msk [vmem:[#allocation3 + $0xe0] sm:$0xff] %vm562, %v3733
      %3766 = vst.msk [vmem:[#allocation3 + $0x108] sm:$0xff] %vm562, %v3734
      %3767 = vst.msk [vmem:[#allocation3 + $0x130] sm:$0xff] %vm562, %v3735
      %3768 = vst.msk [vmem:[#allocation3 + $0x158] sm:$0xff] %vm562, %v3736
      %3769 = vst.msk [vmem:[#allocation3 + $0x180] sm:$0xff] %vm562, %v3737
      %3770 = vst.msk [vmem:[#allocation3 + $0x1a8] sm:$0xff] %vm562, %v3738
      %3771 = vst.msk [vmem:[#allocation3 + $0x1d0] sm:$0xff] %vm562, %v3739
      %3772 = vst.msk [vmem:[#allocation3 + $0x1f8] sm:$0xff] %vm562, %v3740
      %3773 = vst.msk [vmem:[#allocation3 + $0x220] sm:$0xff] %vm562, %v3741
      %3774 = vst.msk [vmem:[#allocation3 + $0x248] sm:$0xff] %vm562, %v3742
      %3775 = vst.msk [vmem:[#allocation3 + $0x270] sm:$0xff] %vm562, %v3743
      %3776 = vst.msk [vmem:[#allocation3 + $0x298] sm:$0xff] %vm562, %v3744
      %3777 = vst.msk [vmem:[#allocation3 + $0x2c0] sm:$0xff] %vm562, %v3745
      %3778 = vst.msk [vmem:[#allocation3 + $0x2e8] sm:$0xff] %vm562, %v3746
      %3779 = vst.msk [vmem:[#allocation3 + $0x310] sm:$0xff] %vm562, %v3747
      %3780 = vst.msk [vmem:[#allocation3 + $0x338] sm:$0xff] %vm562, %v3748
      %3781 = vst.msk [vmem:[#allocation3 + $0x360] sm:$0xff] %vm562, %v3749
      %3782 = vst.msk [vmem:[#allocation3 + $0x388] sm:$0xff] %vm562, %v3750
      %3783 = vst.msk [vmem:[#allocation3 + $0x3b0] sm:$0xff] %vm562, %v3751
      %3784 = vst.msk [vmem:[#allocation3 + $0x3d8] sm:$0xff] %vm562, %v3752
      %3785 = vst.msk [vmem:[#allocation3 + $0x400] sm:$0xff] %vm562, %v3753
      %3786 = vst.msk [vmem:[#allocation3 + $0x428] sm:$0xff] %vm562, %v3754
      %3787 = vst.msk [vmem:[#allocation3 + $0x450] sm:$0xff] %vm562, %v3755
      %3788 = vst.msk [vmem:[#allocation3 + $0x478] sm:$0xff] %vm562, %v3756
      %3789 = vst.msk [vmem:[#allocation3 + $0x4a0] sm:$0xff] %vm562, %v3757
      %3790 = vst.msk [vmem:[#allocation3 + $0x4c8] sm:$0xff] %vm562, %v3758
      %3791 = vst.msk [vmem:[#allocation3 + $0x4f0] sm:$0xff] %vm562, %v3759
      %v3792 = vld [vmem:[%s1022 + $0x1] sm:$0xff]
      %v3793 = vld [vmem:[%s1022 + $0x9] sm:$0xff]
      %v3794 = vld [vmem:[%s1022 + $0x19] sm:$0xff]
      %v3795 = vld [vmem:[%s1022 + $0x21] sm:$0xff]
      %v3796 = vld [vmem:[%s1022 + $0x31] sm:$0xff]
      %v3797 = vld [vmem:[%s1022 + $0x39] sm:$0xff]
      %v3798 = vld [vmem:[%s1022 + $0x49] sm:$0xff]
      %v3799 = vld [vmem:[%s1022 + $0x51] sm:$0xff]
      %v3800 = vld [vmem:[%s1022 + $0x61] sm:$0xff]
      %v3801 = vld [vmem:[%s1022 + $0x69] sm:$0xff]
      %v3802 = vld [vmem:[%s1022 + $0x79] sm:$0xff]
      %v3803 = vld [vmem:[%s1022 + $0x81] sm:$0xff]
      %v3804 = vld [vmem:[%s1022 + $0x91] sm:$0xff]
      %v3805 = vld [vmem:[%s1022 + $0x99] sm:$0xff]
      %v3806 = vld [vmem:[%s1022 + $0xa9] sm:$0xff]
      %v3807 = vld [vmem:[%s1022 + $0xb1] sm:$0xff]
      %v3808 = vld [vmem:[%s1022 + $0xc1] sm:$0xff]
      %v3809 = vld [vmem:[%s1022 + $0xc9] sm:$0xff]
      %v3810 = vld [vmem:[%s1022 + $0xd9] sm:$0xff]
      %v3811 = vld [vmem:[%s1022 + $0xe1] sm:$0xff]
      %v3812 = vld [vmem:[%s1022 + $0xf1] sm:$0xff]
      %v3813 = vld [vmem:[%s1022 + $0xf9] sm:$0xff]
      %v3814 = vld [vmem:[%s1022 + $0x109] sm:$0xff]
      %v3815 = vld [vmem:[%s1022 + $0x111] sm:$0xff]
      %v3816 = vld [vmem:[%s1022 + $0x121] sm:$0xff]
      %v3817 = vld [vmem:[%s1022 + $0x129] sm:$0xff]
      %v3818 = vld [vmem:[%s1022 + $0x139] sm:$0xff]
      %v3819 = vld [vmem:[%s1022 + $0x141] sm:$0xff]
      %v3820 = vld [vmem:[%s1022 + $0x151] sm:$0xff]
      %v3821 = vld [vmem:[%s1022 + $0x159] sm:$0xff]
      %v3822 = vld [vmem:[%s1022 + $0x169] sm:$0xff]
      %v3823 = vld [vmem:[%s1022 + $0x171] sm:$0xff]
      %3856 = vrot.lane.b32.xlu0 %v3792, 32
      %v3857 = vpop.permute.xlu0 %3856
      %3858 = vrot.lane.b32.xlu0 %v3793, 32
      %v3859 = vpop.permute.xlu0 %3858
      %3860 = vrot.lane.b32.xlu0 %v3794, 32
      %v3861 = vpop.permute.xlu0 %3860
      %3862 = vrot.lane.b32.xlu0 %v3795, 32
      %v3863 = vpop.permute.xlu0 %3862
      %3864 = vrot.lane.b32.xlu0 %v3796, 32
      %v3865 = vpop.permute.xlu0 %3864
      %3866 = vrot.lane.b32.xlu0 %v3797, 32
      %v3867 = vpop.permute.xlu0 %3866
      %3868 = vrot.lane.b32.xlu0 %v3798, 32
      %v3869 = vpop.permute.xlu0 %3868
      %3870 = vrot.lane.b32.xlu0 %v3799, 32
      %v3871 = vpop.permute.xlu0 %3870
      %3872 = vrot.lane.b32.xlu0 %v3800, 32
      %v3873 = vpop.permute.xlu0 %3872
      %3874 = vrot.lane.b32.xlu0 %v3801, 32
      %v3875 = vpop.permute.xlu0 %3874
      %3876 = vrot.lane.b32.xlu0 %v3802, 32
      %v3877 = vpop.permute.xlu0 %3876
      %3878 = vrot.lane.b32.xlu0 %v3803, 32
      %v3879 = vpop.permute.xlu0 %3878
      %3880 = vrot.lane.b32.xlu0 %v3804, 32
      %v3881 = vpop.permute.xlu0 %3880
      %3882 = vrot.lane.b32.xlu0 %v3805, 32
      %v3883 = vpop.permute.xlu0 %3882
      %3884 = vrot.lane.b32.xlu0 %v3806, 32
      %v3885 = vpop.permute.xlu0 %3884
      %3886 = vrot.lane.b32.xlu0 %v3807, 32
      %v3887 = vpop.permute.xlu0 %3886
      %3888 = vrot.lane.b32.xlu0 %v3808, 32
      %v3889 = vpop.permute.xlu0 %3888
      %3890 = vrot.lane.b32.xlu0 %v3809, 32
      %v3891 = vpop.permute.xlu0 %3890
      %3892 = vrot.lane.b32.xlu0 %v3810, 32
      %v3893 = vpop.permute.xlu0 %3892
      %3894 = vrot.lane.b32.xlu0 %v3811, 32
      %v3895 = vpop.permute.xlu0 %3894
      %3896 = vrot.lane.b32.xlu0 %v3812, 32
      %v3897 = vpop.permute.xlu0 %3896
      %3898 = vrot.lane.b32.xlu0 %v3813, 32
      %v3899 = vpop.permute.xlu0 %3898
      %3900 = vrot.lane.b32.xlu0 %v3814, 32
      %v3901 = vpop.permute.xlu0 %3900
      %3902 = vrot.lane.b32.xlu0 %v3815, 32
      %v3903 = vpop.permute.xlu0 %3902
      %3904 = vrot.lane.b32.xlu0 %v3816, 32
      %v3905 = vpop.permute.xlu0 %3904
      %3906 = vrot.lane.b32.xlu0 %v3817, 32
      %v3907 = vpop.permute.xlu0 %3906
      %3908 = vrot.lane.b32.xlu0 %v3818, 32
      %v3909 = vpop.permute.xlu0 %3908
      %3910 = vrot.lane.b32.xlu0 %v3819, 32
      %v3911 = vpop.permute.xlu0 %3910
      %3912 = vrot.lane.b32.xlu0 %v3820, 32
      %v3913 = vpop.permute.xlu0 %3912
      %3914 = vrot.lane.b32.xlu0 %v3821, 32
      %v3915 = vpop.permute.xlu0 %3914
      %3916 = vrot.lane.b32.xlu0 %v3822, 32
      %v3917 = vpop.permute.xlu0 %3916
      %3918 = vrot.lane.b32.xlu0 %v3823, 32
      %v3919 = vpop.permute.xlu0 %3918
      %3952 = vst.msk [vmem:[#allocation3 + $0x18] sm:$0xff] %vm1279, %v3857
      %3953 = vst.msk [vmem:[#allocation3 + $0x40] sm:$0xff] %vm1279, %v3859
      %3954 = vst.msk [vmem:[#allocation3 + $0x68] sm:$0xff] %vm1279, %v3861
      %3955 = vst.msk [vmem:[#allocation3 + $0x90] sm:$0xff] %vm1279, %v3863
      %3956 = vst.msk [vmem:[#allocation3 + $0xb8] sm:$0xff] %vm1279, %v3865
      %3957 = vst.msk [vmem:[#allocation3 + $0xe0] sm:$0xff] %vm1279, %v3867
      %3958 = vst.msk [vmem:[#allocation3 + $0x108] sm:$0xff] %vm1279, %v3869
      %3959 = vst.msk [vmem:[#allocation3 + $0x130] sm:$0xff] %vm1279, %v3871
      %3960 = vst.msk [vmem:[#allocation3 + $0x158] sm:$0xff] %vm1279, %v3873
      %3961 = vst.msk [vmem:[#allocation3 + $0x180] sm:$0xff] %vm1279, %v3875
      %3962 = vst.msk [vmem:[#allocation3 + $0x1a8] sm:$0xff] %vm1279, %v3877
      %3963 = vst.msk [vmem:[#allocation3 + $0x1d0] sm:$0xff] %vm1279, %v3879
      %3964 = vst.msk [vmem:[#allocation3 + $0x1f8] sm:$0xff] %vm1279, %v3881
      %3965 = vst.msk [vmem:[#allocation3 + $0x220] sm:$0xff] %vm1279, %v3883
      %3966 = vst.msk [vmem:[#allocation3 + $0x248] sm:$0xff] %vm1279, %v3885
      %3967 = vst.msk [vmem:[#allocation3 + $0x270] sm:$0xff] %vm1279, %v3887
      %3968 = vst.msk [vmem:[#allocation3 + $0x298] sm:$0xff] %vm1279, %v3889
      %3969 = vst.msk [vmem:[#allocation3 + $0x2c0] sm:$0xff] %vm1279, %v3891
      %3970 = vst.msk [vmem:[#allocation3 + $0x2e8] sm:$0xff] %vm1279, %v3893
      %3971 = vst.msk [vmem:[#allocation3 + $0x310] sm:$0xff] %vm1279, %v3895
      %3972 = vst.msk [vmem:[#allocation3 + $0x338] sm:$0xff] %vm1279, %v3897
      %3973 = vst.msk [vmem:[#allocation3 + $0x360] sm:$0xff] %vm1279, %v3899
      %3974 = vst.msk [vmem:[#allocation3 + $0x388] sm:$0xff] %vm1279, %v3901
      %3975 = vst.msk [vmem:[#allocation3 + $0x3b0] sm:$0xff] %vm1279, %v3903
      %3976 = vst.msk [vmem:[#allocation3 + $0x3d8] sm:$0xff] %vm1279, %v3905
      %3977 = vst.msk [vmem:[#allocation3 + $0x400] sm:$0xff] %vm1279, %v3907
      %3978 = vst.msk [vmem:[#allocation3 + $0x428] sm:$0xff] %vm1279, %v3909
      %3979 = vst.msk [vmem:[#allocation3 + $0x450] sm:$0xff] %vm1279, %v3911
      %3980 = vst.msk [vmem:[#allocation3 + $0x478] sm:$0xff] %vm1279, %v3913
      %3981 = vst.msk [vmem:[#allocation3 + $0x4a0] sm:$0xff] %vm1279, %v3915
      %3982 = vst.msk [vmem:[#allocation3 + $0x4c8] sm:$0xff] %vm1279, %v3917
      %3983 = vst.msk [vmem:[#allocation3 + $0x4f0] sm:$0xff] %vm1279, %v3919
      %v3984 = vld [vmem:[%s1022 + $0x2] sm:$0xff]
      %v3985 = vld [vmem:[%s1022 + $0xa] sm:$0xff]
      %v3986 = vld [vmem:[%s1022 + $0x1a] sm:$0xff]
      %v3987 = vld [vmem:[%s1022 + $0x22] sm:$0xff]
      %v3988 = vld [vmem:[%s1022 + $0x32] sm:$0xff]
      %v3989 = vld [vmem:[%s1022 + $0x3a] sm:$0xff]
      %v3990 = vld [vmem:[%s1022 + $0x4a] sm:$0xff]
      %v3991 = vld [vmem:[%s1022 + $0x52] sm:$0xff]
      %v3992 = vld [vmem:[%s1022 + $0x62] sm:$0xff]
      %v3993 = vld [vmem:[%s1022 + $0x6a] sm:$0xff]
      %v3994 = vld [vmem:[%s1022 + $0x7a] sm:$0xff]
      %v3995 = vld [vmem:[%s1022 + $0x82] sm:$0xff]
      %v3996 = vld [vmem:[%s1022 + $0x92] sm:$0xff]
      %v3997 = vld [vmem:[%s1022 + $0x9a] sm:$0xff]
      %v3998 = vld [vmem:[%s1022 + $0xaa] sm:$0xff]
      %v3999 = vld [vmem:[%s1022 + $0xb2] sm:$0xff]
      %v4000 = vld [vmem:[%s1022 + $0xc2] sm:$0xff]
      %v4001 = vld [vmem:[%s1022 + $0xca] sm:$0xff]
      %v4002 = vld [vmem:[%s1022 + $0xda] sm:$0xff]
      %v4003 = vld [vmem:[%s1022 + $0xe2] sm:$0xff]
      %v4004 = vld [vmem:[%s1022 + $0xf2] sm:$0xff]
      %v4005 = vld [vmem:[%s1022 + $0xfa] sm:$0xff]
      %v4006 = vld [vmem:[%s1022 + $0x10a] sm:$0xff]
      %v4007 = vld [vmem:[%s1022 + $0x112] sm:$0xff]
      %v4008 = vld [vmem:[%s1022 + $0x122] sm:$0xff]
      %v4009 = vld [vmem:[%s1022 + $0x12a] sm:$0xff]
      %v4010 = vld [vmem:[%s1022 + $0x13a] sm:$0xff]
      %v4011 = vld [vmem:[%s1022 + $0x142] sm:$0xff]
      %v4012 = vld [vmem:[%s1022 + $0x152] sm:$0xff]
      %v4013 = vld [vmem:[%s1022 + $0x15a] sm:$0xff]
      %v4014 = vld [vmem:[%s1022 + $0x16a] sm:$0xff]
      %v4015 = vld [vmem:[%s1022 + $0x172] sm:$0xff]
      %4048 = vrot.lane.b32.xlu0 %v3984, 64
      %v4049 = vpop.permute.xlu0 %4048
      %4050 = vrot.lane.b32.xlu0 %v3985, 64
      %v4051 = vpop.permute.xlu0 %4050
      %4052 = vrot.lane.b32.xlu0 %v3986, 64
      %v4053 = vpop.permute.xlu0 %4052
      %4054 = vrot.lane.b32.xlu0 %v3987, 64
      %v4055 = vpop.permute.xlu0 %4054
      %4056 = vrot.lane.b32.xlu0 %v3988, 64
      %v4057 = vpop.permute.xlu0 %4056
      %4058 = vrot.lane.b32.xlu0 %v3989, 64
      %v4059 = vpop.permute.xlu0 %4058
      %4060 = vrot.lane.b32.xlu0 %v3990, 64
      %v4061 = vpop.permute.xlu0 %4060
      %4062 = vrot.lane.b32.xlu0 %v3991, 64
      %v4063 = vpop.permute.xlu0 %4062
      %4064 = vrot.lane.b32.xlu0 %v3992, 64
      %v4065 = vpop.permute.xlu0 %4064
      %4066 = vrot.lane.b32.xlu0 %v3993, 64
      %v4067 = vpop.permute.xlu0 %4066
      %4068 = vrot.lane.b32.xlu0 %v3994, 64
      %v4069 = vpop.permute.xlu0 %4068
      %4070 = vrot.lane.b32.xlu0 %v3995, 64
      %v4071 = vpop.permute.xlu0 %4070
      %4072 = vrot.lane.b32.xlu0 %v3996, 64
      %v4073 = vpop.permute.xlu0 %4072
      %4074 = vrot.lane.b32.xlu0 %v3997, 64
      %v4075 = vpop.permute.xlu0 %4074
      %4076 = vrot.lane.b32.xlu0 %v3998, 64
      %v4077 = vpop.permute.xlu0 %4076
      %4078 = vrot.lane.b32.xlu0 %v3999, 64
      %v4079 = vpop.permute.xlu0 %4078
      %4080 = vrot.lane.b32.xlu0 %v4000, 64
      %v4081 = vpop.permute.xlu0 %4080
      %4082 = vrot.lane.b32.xlu0 %v4001, 64
      %v4083 = vpop.permute.xlu0 %4082
      %4084 = vrot.lane.b32.xlu0 %v4002, 64
      %v4085 = vpop.permute.xlu0 %4084
      %4086 = vrot.lane.b32.xlu0 %v4003, 64
      %v4087 = vpop.permute.xlu0 %4086
      %4088 = vrot.lane.b32.xlu0 %v4004, 64
      %v4089 = vpop.permute.xlu0 %4088
      %4090 = vrot.lane.b32.xlu0 %v4005, 64
      %v4091 = vpop.permute.xlu0 %4090
      %4092 = vrot.lane.b32.xlu0 %v4006, 64
      %v4093 = vpop.permute.xlu0 %4092
      %4094 = vrot.lane.b32.xlu0 %v4007, 64
      %v4095 = vpop.permute.xlu0 %4094
      %4096 = vrot.lane.b32.xlu0 %v4008, 64
      %v4097 = vpop.permute.xlu0 %4096
      %4098 = vrot.lane.b32.xlu0 %v4009, 64
      %v4099 = vpop.permute.xlu0 %4098
      %4100 = vrot.lane.b32.xlu0 %v4010, 64
      %v4101 = vpop.permute.xlu0 %4100
      %4102 = vrot.lane.b32.xlu0 %v4011, 64
      %v4103 = vpop.permute.xlu0 %4102
      %4104 = vrot.lane.b32.xlu0 %v4012, 64
      %v4105 = vpop.permute.xlu0 %4104
      %4106 = vrot.lane.b32.xlu0 %v4013, 64
      %v4107 = vpop.permute.xlu0 %4106
      %4108 = vrot.lane.b32.xlu0 %v4014, 64
      %v4109 = vpop.permute.xlu0 %4108
      %4110 = vrot.lane.b32.xlu0 %v4015, 64
      %v4111 = vpop.permute.xlu0 %4110
      %4144 = vst.msk [vmem:[#allocation3 + $0x18] sm:$0xff] %vm1472, %v4049
      %4145 = vst.msk [vmem:[#allocation3 + $0x40] sm:$0xff] %vm1472, %v4051
      %4146 = vst.msk [vmem:[#allocation3 + $0x68] sm:$0xff] %vm1472, %v4053
      %4147 = vst.msk [vmem:[#allocation3 + $0x90] sm:$0xff] %vm1472, %v4055
      %4148 = vst.msk [vmem:[#allocation3 + $0xb8] sm:$0xff] %vm1472, %v4057
      %4149 = vst.msk [vmem:[#allocation3 + $0xe0] sm:$0xff] %vm1472, %v4059
      %4150 = vst.msk [vmem:[#allocation3 + $0x108] sm:$0xff] %vm1472, %v4061
      %4151 = vst.msk [vmem:[#allocation3 + $0x130] sm:$0xff] %vm1472, %v4063
      %4152 = vst.msk [vmem:[#allocation3 + $0x158] sm:$0xff] %vm1472, %v4065
      %4153 = vst.msk [vmem:[#allocation3 + $0x180] sm:$0xff] %vm1472, %v4067
      %4154 = vst.msk [vmem:[#allocation3 + $0x1a8] sm:$0xff] %vm1472, %v4069
      %4155 = vst.msk [vmem:[#allocation3 + $0x1d0] sm:$0xff] %vm1472, %v4071
      %4156 = vst.msk [vmem:[#allocation3 + $0x1f8] sm:$0xff] %vm1472, %v4073
      %4157 = vst.msk [vmem:[#allocation3 + $0x220] sm:$0xff] %vm1472, %v4075
      %4158 = vst.msk [vmem:[#allocation3 + $0x248] sm:$0xff] %vm1472, %v4077
      %4159 = vst.msk [vmem:[#allocation3 + $0x270] sm:$0xff] %vm1472, %v4079
      %4160 = vst.msk [vmem:[#allocation3 + $0x298] sm:$0xff] %vm1472, %v4081
      %4161 = vst.msk [vmem:[#allocation3 + $0x2c0] sm:$0xff] %vm1472, %v4083
      %4162 = vst.msk [vmem:[#allocation3 + $0x2e8] sm:$0xff] %vm1472, %v4085
      %4163 = vst.msk [vmem:[#allocation3 + $0x310] sm:$0xff] %vm1472, %v4087
      %4164 = vst.msk [vmem:[#allocation3 + $0x338] sm:$0xff] %vm1472, %v4089
      %4165 = vst.msk [vmem:[#allocation3 + $0x360] sm:$0xff] %vm1472, %v4091
      %4166 = vst.msk [vmem:[#allocation3 + $0x388] sm:$0xff] %vm1472, %v4093
      %4167 = vst.msk [vmem:[#allocation3 + $0x3b0] sm:$0xff] %vm1472, %v4095
      %4168 = vst.msk [vmem:[#allocation3 + $0x3d8] sm:$0xff] %vm1472, %v4097
      %4169 = vst.msk [vmem:[#allocation3 + $0x400] sm:$0xff] %vm1472, %v4099
      %4170 = vst.msk [vmem:[#allocation3 + $0x428] sm:$0xff] %vm1472, %v4101
      %4171 = vst.msk [vmem:[#allocation3 + $0x450] sm:$0xff] %vm1472, %v4103
      %4172 = vst.msk [vmem:[#allocation3 + $0x478] sm:$0xff] %vm1472, %v4105
      %4173 = vst.msk [vmem:[#allocation3 + $0x4a0] sm:$0xff] %vm1472, %v4107
      %4174 = vst.msk [vmem:[#allocation3 + $0x4c8] sm:$0xff] %vm1472, %v4109
      %4175 = vst.msk [vmem:[#allocation3 + $0x4f0] sm:$0xff] %vm1472, %v4111
      %v4176 = vld [vmem:[%s1954] sm:$0xff]
      %v4177 = vld [vmem:[%s1954 + $0x8] sm:$0xff]
      %v4178 = vld [vmem:[%s1954 + $0x18] sm:$0xff]
      %v4179 = vld [vmem:[%s1954 + $0x20] sm:$0xff]
      %v4180 = vld [vmem:[%s1954 + $0x30] sm:$0xff]
      %v4181 = vld [vmem:[%s1954 + $0x38] sm:$0xff]
      %v4182 = vld [vmem:[%s1954 + $0x48] sm:$0xff]
      %v4183 = vld [vmem:[%s1954 + $0x50] sm:$0xff]
      %v4184 = vld [vmem:[%s1954 + $0x60] sm:$0xff]
      %v4185 = vld [vmem:[%s1954 + $0x68] sm:$0xff]
      %v4186 = vld [vmem:[%s1954 + $0x78] sm:$0xff]
      %v4187 = vld [vmem:[%s1954 + $0x80] sm:$0xff]
      %v4188 = vld [vmem:[%s1954 + $0x90] sm:$0xff]
      %v4189 = vld [vmem:[%s1954 + $0x98] sm:$0xff]
      %v4190 = vld [vmem:[%s1954 + $0xa8] sm:$0xff]
      %v4191 = vld [vmem:[%s1954 + $0xb0] sm:$0xff]
      %v4192 = vld [vmem:[%s1954 + $0xc0] sm:$0xff]
      %v4193 = vld [vmem:[%s1954 + $0xc8] sm:$0xff]
      %v4194 = vld [vmem:[%s1954 + $0xd8] sm:$0xff]
      %v4195 = vld [vmem:[%s1954 + $0xe0] sm:$0xff]
      %v4196 = vld [vmem:[%s1954 + $0xf0] sm:$0xff]
      %v4197 = vld [vmem:[%s1954 + $0xf8] sm:$0xff]
      %v4198 = vld [vmem:[%s1954 + $0x108] sm:$0xff]
      %v4199 = vld [vmem:[%s1954 + $0x110] sm:$0xff]
      %v4200 = vld [vmem:[%s1954 + $0x120] sm:$0xff]
      %v4201 = vld [vmem:[%s1954 + $0x128] sm:$0xff]
      %v4202 = vld [vmem:[%s1954 + $0x138] sm:$0xff]
      %v4203 = vld [vmem:[%s1954 + $0x140] sm:$0xff]
      %v4204 = vld [vmem:[%s1954 + $0x150] sm:$0xff]
      %v4205 = vld [vmem:[%s1954 + $0x158] sm:$0xff]
      %v4206 = vld [vmem:[%s1954 + $0x168] sm:$0xff]
      %v4207 = vld [vmem:[%s1954 + $0x170] sm:$0xff]
      %4240 = vrot.lane.b32.xlu0 %v4176, 96
      %v4241 = vpop.permute.xlu0 %4240
      %4242 = vrot.lane.b32.xlu0 %v4177, 96
      %v4243 = vpop.permute.xlu0 %4242
      %4244 = vrot.lane.b32.xlu0 %v4178, 96
      %v4245 = vpop.permute.xlu0 %4244
      %4246 = vrot.lane.b32.xlu0 %v4179, 96
      %v4247 = vpop.permute.xlu0 %4246
      %4248 = vrot.lane.b32.xlu0 %v4180, 96
      %v4249 = vpop.permute.xlu0 %4248
      %4250 = vrot.lane.b32.xlu0 %v4181, 96
      %v4251 = vpop.permute.xlu0 %4250
      %4252 = vrot.lane.b32.xlu0 %v4182, 96
      %v4253 = vpop.permute.xlu0 %4252
      %4254 = vrot.lane.b32.xlu0 %v4183, 96
      %v4255 = vpop.permute.xlu0 %4254
      %4256 = vrot.lane.b32.xlu0 %v4184, 96
      %v4257 = vpop.permute.xlu0 %4256
      %4258 = vrot.lane.b32.xlu0 %v4185, 96
      %v4259 = vpop.permute.xlu0 %4258
      %4260 = vrot.lane.b32.xlu0 %v4186, 96
      %v4261 = vpop.permute.xlu0 %4260
      %4262 = vrot.lane.b32.xlu0 %v4187, 96
      %v4263 = vpop.permute.xlu0 %4262
      %4264 = vrot.lane.b32.xlu0 %v4188, 96
      %v4265 = vpop.permute.xlu0 %4264
      %4266 = vrot.lane.b32.xlu0 %v4189, 96
      %v4267 = vpop.permute.xlu0 %4266
      %4268 = vrot.lane.b32.xlu0 %v4190, 96
      %v4269 = vpop.permute.xlu0 %4268
      %4270 = vrot.lane.b32.xlu0 %v4191, 96
      %v4271 = vpop.permute.xlu0 %4270
      %4272 = vrot.lane.b32.xlu0 %v4192, 96
      %v4273 = vpop.permute.xlu0 %4272
      %4274 = vrot.lane.b32.xlu0 %v4193, 96
      %v4275 = vpop.permute.xlu0 %4274
      %4276 = vrot.lane.b32.xlu0 %v4194, 96
      %v4277 = vpop.permute.xlu0 %4276
      %4278 = vrot.lane.b32.xlu0 %v4195, 96
      %v4279 = vpop.permute.xlu0 %4278
      %4280 = vrot.lane.b32.xlu0 %v4196, 96
      %v4281 = vpop.permute.xlu0 %4280
      %4282 = vrot.lane.b32.xlu0 %v4197, 96
      %v4283 = vpop.permute.xlu0 %4282
      %4284 = vrot.lane.b32.xlu0 %v4198, 96
      %v4285 = vpop.permute.xlu0 %4284
      %4286 = vrot.lane.b32.xlu0 %v4199, 96
      %v4287 = vpop.permute.xlu0 %4286
      %4288 = vrot.lane.b32.xlu0 %v4200, 96
      %v4289 = vpop.permute.xlu0 %4288
      %4290 = vrot.lane.b32.xlu0 %v4201, 96
      %v4291 = vpop.permute.xlu0 %4290
      %4292 = vrot.lane.b32.xlu0 %v4202, 96
      %v4293 = vpop.permute.xlu0 %4292
      %4294 = vrot.lane.b32.xlu0 %v4203, 96
      %v4295 = vpop.permute.xlu0 %4294
      %4296 = vrot.lane.b32.xlu0 %v4204, 96
      %v4297 = vpop.permute.xlu0 %4296
      %4298 = vrot.lane.b32.xlu0 %v4205, 96
      %v4299 = vpop.permute.xlu0 %4298
      %4300 = vrot.lane.b32.xlu0 %v4206, 96
      %v4301 = vpop.permute.xlu0 %4300
      %4302 = vrot.lane.b32.xlu0 %v4207, 96
      %v4303 = vpop.permute.xlu0 %4302
      %4336 = vst.msk [vmem:[#allocation3 + $0x18] sm:$0xff] %vm1665, %v4241
      %4337 = vst.msk [vmem:[#allocation3 + $0x40] sm:$0xff] %vm1665, %v4243
      %4338 = vst.msk [vmem:[#allocation3 + $0x68] sm:$0xff] %vm1665, %v4245
      %4339 = vst.msk [vmem:[#allocation3 + $0x90] sm:$0xff] %vm1665, %v4247
      %4340 = vst.msk [vmem:[#allocation3 + $0xb8] sm:$0xff] %vm1665, %v4249
      %4341 = vst.msk [vmem:[#allocation3 + $0xe0] sm:$0xff] %vm1665, %v4251
      %4342 = vst.msk [vmem:[#allocation3 + $0x108] sm:$0xff] %vm1665, %v4253
      %4343 = vst.msk [vmem:[#allocation3 + $0x130] sm:$0xff] %vm1665, %v4255
      %4344 = vst.msk [vmem:[#allocation3 + $0x158] sm:$0xff] %vm1665, %v4257
      %4345 = vst.msk [vmem:[#allocation3 + $0x180] sm:$0xff] %vm1665, %v4259
      %4346 = vst.msk [vmem:[#allocation3 + $0x1a8] sm:$0xff] %vm1665, %v4261
      %4347 = vst.msk [vmem:[#allocation3 + $0x1d0] sm:$0xff] %vm1665, %v4263
      %4348 = vst.msk [vmem:[#allocation3 + $0x1f8] sm:$0xff] %vm1665, %v4265
      %4349 = vst.msk [vmem:[#allocation3 + $0x220] sm:$0xff] %vm1665, %v4267
      %4350 = vst.msk [vmem:[#allocation3 + $0x248] sm:$0xff] %vm1665, %v4269
      %4351 = vst.msk [vmem:[#allocation3 + $0x270] sm:$0xff] %vm1665, %v4271
      %4352 = vst.msk [vmem:[#allocation3 + $0x298] sm:$0xff] %vm1665, %v4273
      %4353 = vst.msk [vmem:[#allocation3 + $0x2c0] sm:$0xff] %vm1665, %v4275
      %4354 = vst.msk [vmem:[#allocation3 + $0x2e8] sm:$0xff] %vm1665, %v4277
      %4355 = vst.msk [vmem:[#allocation3 + $0x310] sm:$0xff] %vm1665, %v4279
      %4356 = vst.msk [vmem:[#allocation3 + $0x338] sm:$0xff] %vm1665, %v4281
      %4357 = vst.msk [vmem:[#allocation3 + $0x360] sm:$0xff] %vm1665, %v4283
      %4358 = vst.msk [vmem:[#allocation3 + $0x388] sm:$0xff] %vm1665, %v4285
      %4359 = vst.msk [vmem:[#allocation3 + $0x3b0] sm:$0xff] %vm1665, %v4287
      %4360 = vst.msk [vmem:[#allocation3 + $0x3d8] sm:$0xff] %vm1665, %v4289
      %4361 = vst.msk [vmem:[#allocation3 + $0x400] sm:$0xff] %vm1665, %v4291
      %4362 = vst.msk [vmem:[#allocation3 + $0x428] sm:$0xff] %vm1665, %v4293
      %4363 = vst.msk [vmem:[#allocation3 + $0x450] sm:$0xff] %vm1665, %v4295
      %4364 = vst.msk [vmem:[#allocation3 + $0x478] sm:$0xff] %vm1665, %v4297
      %4365 = vst.msk [vmem:[#allocation3 + $0x4a0] sm:$0xff] %vm1665, %v4299
      %4366 = vst.msk [vmem:[#allocation3 + $0x4c8] sm:$0xff] %vm1665, %v4301
      %4367 = vst.msk [vmem:[#allocation3 + $0x4f0] sm:$0xff] %vm1665, %v4303
      %v4368 = vld [vmem:[%s1954 + $0x1] sm:$0xff]
      %v4369 = vld [vmem:[%s1954 + $0x9] sm:$0xff]
      %v4370 = vld [vmem:[%s1954 + $0x19] sm:$0xff]
      %v4371 = vld [vmem:[%s1954 + $0x21] sm:$0xff]
      %v4372 = vld [vmem:[%s1954 + $0x31] sm:$0xff]
      %v4373 = vld [vmem:[%s1954 + $0x39] sm:$0xff]
      %v4374 = vld [vmem:[%s1954 + $0x49] sm:$0xff]
      %v4375 = vld [vmem:[%s1954 + $0x51] sm:$0xff]
      %v4376 = vld [vmem:[%s1954 + $0x61] sm:$0xff]
      %v4377 = vld [vmem:[%s1954 + $0x69] sm:$0xff]
      %v4378 = vld [vmem:[%s1954 + $0x79] sm:$0xff]
      %v4379 = vld [vmem:[%s1954 + $0x81] sm:$0xff]
      %v4380 = vld [vmem:[%s1954 + $0x91] sm:$0xff]
      %v4381 = vld [vmem:[%s1954 + $0x99] sm:$0xff]
      %v4382 = vld [vmem:[%s1954 + $0xa9] sm:$0xff]
      %v4383 = vld [vmem:[%s1954 + $0xb1] sm:$0xff]
      %v4384 = vld [vmem:[%s1954 + $0xc1] sm:$0xff]
      %v4385 = vld [vmem:[%s1954 + $0xc9] sm:$0xff]
      %v4386 = vld [vmem:[%s1954 + $0xd9] sm:$0xff]
      %v4387 = vld [vmem:[%s1954 + $0xe1] sm:$0xff]
      %v4388 = vld [vmem:[%s1954 + $0xf1] sm:$0xff]
      %v4389 = vld [vmem:[%s1954 + $0xf9] sm:$0xff]
      %v4390 = vld [vmem:[%s1954 + $0x109] sm:$0xff]
      %v4391 = vld [vmem:[%s1954 + $0x111] sm:$0xff]
      %v4392 = vld [vmem:[%s1954 + $0x121] sm:$0xff]
      %v4393 = vld [vmem:[%s1954 + $0x129] sm:$0xff]
      %v4394 = vld [vmem:[%s1954 + $0x139] sm:$0xff]
      %v4395 = vld [vmem:[%s1954 + $0x141] sm:$0xff]
      %v4396 = vld [vmem:[%s1954 + $0x151] sm:$0xff]
      %v4397 = vld [vmem:[%s1954 + $0x159] sm:$0xff]
      %v4398 = vld [vmem:[%s1954 + $0x169] sm:$0xff]
      %v4399 = vld [vmem:[%s1954 + $0x171] sm:$0xff]
      %4400 = vst.msk [vmem:[#allocation3 + $0x20] sm:$0xff] %vm562, %v4368
      %4401 = vst.msk [vmem:[#allocation3 + $0x48] sm:$0xff] %vm562, %v4369
      %4402 = vst.msk [vmem:[#allocation3 + $0x70] sm:$0xff] %vm562, %v4370
      %4403 = vst.msk [vmem:[#allocation3 + $0x98] sm:$0xff] %vm562, %v4371
      %4404 = vst.msk [vmem:[#allocation3 + $0xc0] sm:$0xff] %vm562, %v4372
      %4405 = vst.msk [vmem:[#allocation3 + $0xe8] sm:$0xff] %vm562, %v4373
      %4406 = vst.msk [vmem:[#allocation3 + $0x110] sm:$0xff] %vm562, %v4374
      %4407 = vst.msk [vmem:[#allocation3 + $0x138] sm:$0xff] %vm562, %v4375
      %4408 = vst.msk [vmem:[#allocation3 + $0x160] sm:$0xff] %vm562, %v4376
      %4409 = vst.msk [vmem:[#allocation3 + $0x188] sm:$0xff] %vm562, %v4377
      %4410 = vst.msk [vmem:[#allocation3 + $0x1b0] sm:$0xff] %vm562, %v4378
      %4411 = vst.msk [vmem:[#allocation3 + $0x1d8] sm:$0xff] %vm562, %v4379
      %4412 = vst.msk [vmem:[#allocation3 + $0x200] sm:$0xff] %vm562, %v4380
      %4413 = vst.msk [vmem:[#allocation3 + $0x228] sm:$0xff] %vm562, %v4381
      %4414 = vst.msk [vmem:[#allocation3 + $0x250] sm:$0xff] %vm562, %v4382
      %4415 = vst.msk [vmem:[#allocation3 + $0x278] sm:$0xff] %vm562, %v4383
      %4416 = vst.msk [vmem:[#allocation3 + $0x2a0] sm:$0xff] %vm562, %v4384
      %4417 = vst.msk [vmem:[#allocation3 + $0x2c8] sm:$0xff] %vm562, %v4385
      %4418 = vst.msk [vmem:[#allocation3 + $0x2f0] sm:$0xff] %vm562, %v4386
      %4419 = vst.msk [vmem:[#allocation3 + $0x318] sm:$0xff] %vm562, %v4387
      %4420 = vst.msk [vmem:[#allocation3 + $0x340] sm:$0xff] %vm562, %v4388
      %4421 = vst.msk [vmem:[#allocation3 + $0x368] sm:$0xff] %vm562, %v4389
      %4422 = vst.msk [vmem:[#allocation3 + $0x390] sm:$0xff] %vm562, %v4390
      %4423 = vst.msk [vmem:[#allocation3 + $0x3b8] sm:$0xff] %vm562, %v4391
      %4424 = vst.msk [vmem:[#allocation3 + $0x3e0] sm:$0xff] %vm562, %v4392
      %4425 = vst.msk [vmem:[#allocation3 + $0x408] sm:$0xff] %vm562, %v4393
      %4426 = vst.msk [vmem:[#allocation3 + $0x430] sm:$0xff] %vm562, %v4394
      %4427 = vst.msk [vmem:[#allocation3 + $0x458] sm:$0xff] %vm562, %v4395
      %4428 = vst.msk [vmem:[#allocation3 + $0x480] sm:$0xff] %vm562, %v4396
      %4429 = vst.msk [vmem:[#allocation3 + $0x4a8] sm:$0xff] %vm562, %v4397
      %4430 = vst.msk [vmem:[#allocation3 + $0x4d0] sm:$0xff] %vm562, %v4398
      %4431 = vst.msk [vmem:[#allocation3 + $0x4f8] sm:$0xff] %vm562, %v4399
      %v4432 = vld [vmem:[%s1954 + $0x2] sm:$0xff]
      %v4433 = vld [vmem:[%s1954 + $0xa] sm:$0xff]
      %v4434 = vld [vmem:[%s1954 + $0x1a] sm:$0xff]
      %v4435 = vld [vmem:[%s1954 + $0x22] sm:$0xff]
      %v4436 = vld [vmem:[%s1954 + $0x32] sm:$0xff]
      %v4437 = vld [vmem:[%s1954 + $0x3a] sm:$0xff]
      %v4438 = vld [vmem:[%s1954 + $0x4a] sm:$0xff]
      %v4439 = vld [vmem:[%s1954 + $0x52] sm:$0xff]
      %v4440 = vld [vmem:[%s1954 + $0x62] sm:$0xff]
      %v4441 = vld [vmem:[%s1954 + $0x6a] sm:$0xff]
      %v4442 = vld [vmem:[%s1954 + $0x7a] sm:$0xff]
      %v4443 = vld [vmem:[%s1954 + $0x82] sm:$0xff]
      %v4444 = vld [vmem:[%s1954 + $0x92] sm:$0xff]
      %v4445 = vld [vmem:[%s1954 + $0x9a] sm:$0xff]
      %v4446 = vld [vmem:[%s1954 + $0xaa] sm:$0xff]
      %v4447 = vld [vmem:[%s1954 + $0xb2] sm:$0xff]
      %v4448 = vld [vmem:[%s1954 + $0xc2] sm:$0xff]
      %v4449 = vld [vmem:[%s1954 + $0xca] sm:$0xff]
      %v4450 = vld [vmem:[%s1954 + $0xda] sm:$0xff]
      %v4451 = vld [vmem:[%s1954 + $0xe2] sm:$0xff]
      %v4452 = vld [vmem:[%s1954 + $0xf2] sm:$0xff]
      %v4453 = vld [vmem:[%s1954 + $0xfa] sm:$0xff]
      %v4454 = vld [vmem:[%s1954 + $0x10a] sm:$0xff]
      %v4455 = vld [vmem:[%s1954 + $0x112] sm:$0xff]
      %v4456 = vld [vmem:[%s1954 + $0x122] sm:$0xff]
      %v4457 = vld [vmem:[%s1954 + $0x12a] sm:$0xff]
      %v4458 = vld [vmem:[%s1954 + $0x13a] sm:$0xff]
      %v4459 = vld [vmem:[%s1954 + $0x142] sm:$0xff]
      %v4460 = vld [vmem:[%s1954 + $0x152] sm:$0xff]
      %v4461 = vld [vmem:[%s1954 + $0x15a] sm:$0xff]
      %v4462 = vld [vmem:[%s1954 + $0x16a] sm:$0xff]
      %v4463 = vld [vmem:[%s1954 + $0x172] sm:$0xff]
      %4496 = vrot.lane.b32.xlu0 %v4432, 32
      %v4497 = vpop.permute.xlu0 %4496
      %4498 = vrot.lane.b32.xlu0 %v4433, 32
      %v4499 = vpop.permute.xlu0 %4498
      %4500 = vrot.lane.b32.xlu0 %v4434, 32
      %v4501 = vpop.permute.xlu0 %4500
      %4502 = vrot.lane.b32.xlu0 %v4435, 32
      %v4503 = vpop.permute.xlu0 %4502
      %4504 = vrot.lane.b32.xlu0 %v4436, 32
      %v4505 = vpop.permute.xlu0 %4504
      %4506 = vrot.lane.b32.xlu0 %v4437, 32
      %v4507 = vpop.permute.xlu0 %4506
      %4508 = vrot.lane.b32.xlu0 %v4438, 32
      %v4509 = vpop.permute.xlu0 %4508
      %4510 = vrot.lane.b32.xlu0 %v4439, 32
      %v4511 = vpop.permute.xlu0 %4510
      %4512 = vrot.lane.b32.xlu0 %v4440, 32
      %v4513 = vpop.permute.xlu0 %4512
      %4514 = vrot.lane.b32.xlu0 %v4441, 32
      %v4515 = vpop.permute.xlu0 %4514
      %4516 = vrot.lane.b32.xlu0 %v4442, 32
      %v4517 = vpop.permute.xlu0 %4516
      %4518 = vrot.lane.b32.xlu0 %v4443, 32
      %v4519 = vpop.permute.xlu0 %4518
      %4520 = vrot.lane.b32.xlu0 %v4444, 32
      %v4521 = vpop.permute.xlu0 %4520
      %4522 = vrot.lane.b32.xlu0 %v4445, 32
      %v4523 = vpop.permute.xlu0 %4522
      %4524 = vrot.lane.b32.xlu0 %v4446, 32
      %v4525 = vpop.permute.xlu0 %4524
      %4526 = vrot.lane.b32.xlu0 %v4447, 32
      %v4527 = vpop.permute.xlu0 %4526
      %4528 = vrot.lane.b32.xlu0 %v4448, 32
      %v4529 = vpop.permute.xlu0 %4528
      %4530 = vrot.lane.b32.xlu0 %v4449, 32
      %v4531 = vpop.permute.xlu0 %4530
      %4532 = vrot.lane.b32.xlu0 %v4450, 32
      %v4533 = vpop.permute.xlu0 %4532
      %4534 = vrot.lane.b32.xlu0 %v4451, 32
      %v4535 = vpop.permute.xlu0 %4534
      %4536 = vrot.lane.b32.xlu0 %v4452, 32
      %v4537 = vpop.permute.xlu0 %4536
      %4538 = vrot.lane.b32.xlu0 %v4453, 32
      %v4539 = vpop.permute.xlu0 %4538
      %4540 = vrot.lane.b32.xlu0 %v4454, 32
      %v4541 = vpop.permute.xlu0 %4540
      %4542 = vrot.lane.b32.xlu0 %v4455, 32
      %v4543 = vpop.permute.xlu0 %4542
      %4544 = vrot.lane.b32.xlu0 %v4456, 32
      %v4545 = vpop.permute.xlu0 %4544
      %4546 = vrot.lane.b32.xlu0 %v4457, 32
      %v4547 = vpop.permute.xlu0 %4546
      %4548 = vrot.lane.b32.xlu0 %v4458, 32
      %v4549 = vpop.permute.xlu0 %4548
      %4550 = vrot.lane.b32.xlu0 %v4459, 32
      %v4551 = vpop.permute.xlu0 %4550
      %4552 = vrot.lane.b32.xlu0 %v4460, 32
      %v4553 = vpop.permute.xlu0 %4552
      %4554 = vrot.lane.b32.xlu0 %v4461, 32
      %v4555 = vpop.permute.xlu0 %4554
      %4556 = vrot.lane.b32.xlu0 %v4462, 32
      %v4557 = vpop.permute.xlu0 %4556
      %4558 = vrot.lane.b32.xlu0 %v4463, 32
      %v4559 = vpop.permute.xlu0 %4558
      %4592 = vst.msk [vmem:[#allocation3 + $0x20] sm:$0xff] %vm1279, %v4497
      %4593 = vst.msk [vmem:[#allocation3 + $0x48] sm:$0xff] %vm1279, %v4499
      %4594 = vst.msk [vmem:[#allocation3 + $0x70] sm:$0xff] %vm1279, %v4501
      %4595 = vst.msk [vmem:[#allocation3 + $0x98] sm:$0xff] %vm1279, %v4503
      %4596 = vst.msk [vmem:[#allocation3 + $0xc0] sm:$0xff] %vm1279, %v4505
      %4597 = vst.msk [vmem:[#allocation3 + $0xe8] sm:$0xff] %vm1279, %v4507
      %4598 = vst.msk [vmem:[#allocation3 + $0x110] sm:$0xff] %vm1279, %v4509
      %4599 = vst.msk [vmem:[#allocation3 + $0x138] sm:$0xff] %vm1279, %v4511
      %4600 = vst.msk [vmem:[#allocation3 + $0x160] sm:$0xff] %vm1279, %v4513
      %4601 = vst.msk [vmem:[#allocation3 + $0x188] sm:$0xff] %vm1279, %v4515
      %4602 = vst.msk [vmem:[#allocation3 + $0x1b0] sm:$0xff] %vm1279, %v4517
      %4603 = vst.msk [vmem:[#allocation3 + $0x1d8] sm:$0xff] %vm1279, %v4519
      %4604 = vst.msk [vmem:[#allocation3 + $0x200] sm:$0xff] %vm1279, %v4521
      %4605 = vst.msk [vmem:[#allocation3 + $0x228] sm:$0xff] %vm1279, %v4523
      %4606 = vst.msk [vmem:[#allocation3 + $0x250] sm:$0xff] %vm1279, %v4525
      %4607 = vst.msk [vmem:[#allocation3 + $0x278] sm:$0xff] %vm1279, %v4527
      %4608 = vst.msk [vmem:[#allocation3 + $0x2a0] sm:$0xff] %vm1279, %v4529
      %4609 = vst.msk [vmem:[#allocation3 + $0x2c8] sm:$0xff] %vm1279, %v4531
      %4610 = vst.msk [vmem:[#allocation3 + $0x2f0] sm:$0xff] %vm1279, %v4533
      %4611 = vst.msk [vmem:[#allocation3 + $0x318] sm:$0xff] %vm1279, %v4535
      %4612 = vst.msk [vmem:[#allocation3 + $0x340] sm:$0xff] %vm1279, %v4537
      %4613 = vst.msk [vmem:[#allocation3 + $0x368] sm:$0xff] %vm1279, %v4539
      %4614 = vst.msk [vmem:[#allocation3 + $0x390] sm:$0xff] %vm1279, %v4541
      %4615 = vst.msk [vmem:[#allocation3 + $0x3b8] sm:$0xff] %vm1279, %v4543
      %4616 = vst.msk [vmem:[#allocation3 + $0x3e0] sm:$0xff] %vm1279, %v4545
      %4617 = vst.msk [vmem:[#allocation3 + $0x408] sm:$0xff] %vm1279, %v4547
      %4618 = vst.msk [vmem:[#allocation3 + $0x430] sm:$0xff] %vm1279, %v4549
      %4619 = vst.msk [vmem:[#allocation3 + $0x458] sm:$0xff] %vm1279, %v4551
      %4620 = vst.msk [vmem:[#allocation3 + $0x480] sm:$0xff] %vm1279, %v4553
      %4621 = vst.msk [vmem:[#allocation3 + $0x4a8] sm:$0xff] %vm1279, %v4555
      %4622 = vst.msk [vmem:[#allocation3 + $0x4d0] sm:$0xff] %vm1279, %v4557
      %4623 = vst.msk [vmem:[#allocation3 + $0x4f8] sm:$0xff] %vm1279, %v4559
      %v4624 = vld [vmem:[%s546] sm:$0xff]
      %v4625 = vld [vmem:[%s546 + $0x8] sm:$0xff]
      %v4626 = vld [vmem:[%s546 + $0x10] sm:$0xff]
      %v4627 = vld [vmem:[%s546 + $0x18] sm:$0xff]
      %v4628 = vld [vmem:[%s546 + $0x20] sm:$0xff]
      %v4629 = vld [vmem:[%s546 + $0x28] sm:$0xff]
      %v4630 = vld [vmem:[%s546 + $0x30] sm:$0xff]
      %v4631 = vld [vmem:[%s546 + $0x38] sm:$0xff]
      %v4632 = vld [vmem:[%s546 + $0x40] sm:$0xff]
      %v4633 = vld [vmem:[%s546 + $0x48] sm:$0xff]
      %v4634 = vld [vmem:[%s546 + $0x50] sm:$0xff]
      %v4635 = vld [vmem:[%s546 + $0x58] sm:$0xff]
      %v4636 = vld [vmem:[%s546 + $0x60] sm:$0xff]
      %v4637 = vld [vmem:[%s546 + $0x68] sm:$0xff]
      %v4638 = vld [vmem:[%s546 + $0x70] sm:$0xff]
      %v4639 = vld [vmem:[%s546 + $0x78] sm:$0xff]
      %v4640 = vld [vmem:[%s546 + $0x80] sm:$0xff]
      %v4641 = vld [vmem:[%s546 + $0x88] sm:$0xff]
      %v4642 = vld [vmem:[%s546 + $0x90] sm:$0xff]
      %v4643 = vld [vmem:[%s546 + $0x98] sm:$0xff]
      %v4644 = vld [vmem:[%s546 + $0xa0] sm:$0xff]
      %v4645 = vld [vmem:[%s546 + $0xa8] sm:$0xff]
      %v4646 = vld [vmem:[%s546 + $0xb0] sm:$0xff]
      %v4647 = vld [vmem:[%s546 + $0xb8] sm:$0xff]
      %v4648 = vld [vmem:[%s546 + $0xc0] sm:$0xff]
      %v4649 = vld [vmem:[%s546 + $0xc8] sm:$0xff]
      %v4650 = vld [vmem:[%s546 + $0xd0] sm:$0xff]
      %v4651 = vld [vmem:[%s546 + $0xd8] sm:$0xff]
      %v4652 = vld [vmem:[%s546 + $0xe0] sm:$0xff]
      %v4653 = vld [vmem:[%s546 + $0xe8] sm:$0xff]
      %v4654 = vld [vmem:[%s546 + $0xf0] sm:$0xff]
      %v4655 = vld [vmem:[%s546 + $0xf8] sm:$0xff]
      %v4656 = vld [vmem:[%s3] sm:$0xf]
      %v4657 = vld [vmem:[%s4] sm:$0x1]
      %v4659 = vlaneseq
      %v4660 = vshrl.u32 %v4659, 7
      %v4661 = vsub.s32 0, %v4660
      %v4662 = vrot.slane %v4657, %v4661
      %vm4664 = vcmask 31744
      %v4666 = vsel %vm4664, %v4624, 0
      %v4669 = vsel %vm4664, %v4625, 0
      %v4672 = vsel %vm4664, %v4626, 0
      %v4675 = vsel %vm4664, %v4627, 0
      %v4678 = vsel %vm4664, %v4628, 0
      %v4681 = vsel %vm4664, %v4629, 0
      %v4684 = vsel %vm4664, %v4630, 0
      %v4687 = vsel %vm4664, %v4631, 0
      %v4690 = vsel %vm4664, %v4632, 0
      %v4693 = vsel %vm4664, %v4633, 0
      %v4696 = vsel %vm4664, %v4634, 0
      %v4699 = vsel %vm4664, %v4635, 0
      %v4702 = vsel %vm4664, %v4636, 0
      %v4705 = vsel %vm4664, %v4637, 0
      %v4708 = vsel %vm4664, %v4638, 0
      %v4711 = vsel %vm4664, %v4639, 0
      %v4714 = vsel %vm4664, %v4640, 0
      %v4717 = vsel %vm4664, %v4641, 0
      %v4720 = vsel %vm4664, %v4642, 0
      %v4723 = vsel %vm4664, %v4643, 0
      %v4726 = vsel %vm4664, %v4644, 0
      %v4729 = vsel %vm4664, %v4645, 0
      %v4732 = vsel %vm4664, %v4646, 0
      %v4735 = vsel %vm4664, %v4647, 0
      %v4738 = vsel %vm4664, %v4648, 0
      %v4741 = vsel %vm4664, %v4649, 0
      %v4744 = vsel %vm4664, %v4650, 0
      %v4747 = vsel %vm4664, %v4651, 0
      %v4750 = vsel %vm4664, %v4652, 0
      %v4753 = vsel %vm4664, %v4653, 0
      %v4756 = vsel %vm4664, %v4654, 0
      %v4759 = vsel %vm4664, %v4655, 0
      %vm4761 = vcmask 1043456
      %v4763 = vsel %vm4761, %v4656, 0
      %4765 = vmatprep.subr.mxu0 0.0
      %4766 = vmatpush1.msra.mxu0 %v4763
      %4767 = vmatprep.subr.mxu0 0.0
      %4768 = vmatpush1.msra.mxu0 0.0
      %4769 = vmatprep.subr.mxu0 0.0
      %4770 = vmatpush1.msra.mxu0 0.0
      %4771 = vmatprep.subr.mxu0 0.0
      %4772 = vmatpush1.msra.mxu0 0.0
      %4773 = vmatprep.subr.mxu0 0.0
      %4774 = vmatpush1.msra.mxu0 0.0
      %4775 = vmatprep.subr.mxu0 0.0
      %4776 = vmatpush1.msra.mxu0 0.0
      %4777 = vmatprep.subr.mxu0 0.0
      %4778 = vmatpush1.msra.mxu0 0.0
      %4779 = vmatprep.subr.mxu0 0.0
      %4780 = vmatpush1.msra.mxu0 0.0
      %4781 = vmatprep.subr.mxu0 0.0
      %4782 = vmatpush1.msra.mxu0 0.0
      %4783 = vmatprep.subr.mxu0 0.0
      %4784 = vmatpush1.msra.mxu0 0.0
      %4785 = vmatprep.subr.mxu0 0.0
      %4786 = vmatpush1.msra.mxu0 0.0
      %4787 = vmatprep.subr.mxu0 0.0
      %4788 = vmatpush1.msra.mxu0 0.0
      %4789 = vmatprep.subr.mxu0 0.0
      %4790 = vmatpush1.msra.mxu0 0.0
      %4791 = vmatprep.subr.mxu0 0.0
      %4792 = vmatpush1.msra.mxu0 0.0
      %4793 = vmatprep.subr.mxu0 0.0
      %4794 = vmatpush1.msra.mxu0 0.0
      %4795 = vmatprep.subr.mxu0 0.0
      %4796 = vmatpush1.msra.mxu0 0.0
      %4797 = vmatprep.subr.mxu0 0.0
      %4798 = vmatpush1.msra.mxu0 0.0
      %4799 = vmatprep.subr.mxu0 0.0
      %4800 = vmatpush1.msra.mxu0 0.0
      %4801 = vmatprep.subr.mxu0 0.0
      %4802 = vmatpush1.msra.mxu0 0.0
      %4803 = vmatprep.subr.mxu0 0.0
      %4804 = vmatpush1.msra.mxu0 0.0
      %4805 = vmatprep.subr.mxu0 0.0
      %4806 = vmatpush1.msra.mxu0 0.0
      %4807 = vmatprep.subr.mxu0 0.0
      %4808 = vmatpush1.msra.mxu0 0.0
      %4809 = vmatprep.subr.mxu0 0.0
      %4810 = vmatpush1.msra.mxu0 0.0
      %4811 = vmatprep.subr.mxu0 0.0
      %4812 = vmatpush1.msra.mxu0 0.0
      %4813 = vmatprep.subr.mxu0 0.0
      %4814 = vmatpush1.msra.mxu0 0.0
      %4815 = vmatprep.subr.mxu0 0.0
      %4816 = vmatpush1.msra.mxu0 0.0
      %4817 = vmatprep.subr.mxu0 0.0
      %4818 = vmatpush1.msra.mxu0 0.0
      %4819 = vmatprep.subr.mxu0 0.0
      %4820 = vmatpush1.msra.mxu0 0.0
      %4821 = vmatprep.subr.mxu0 0.0
      %4822 = vmatpush1.msra.mxu0 0.0
      %4823 = vmatprep.subr.mxu0 0.0
      %4824 = vmatpush1.msra.mxu0 0.0
      %4825 = vmatprep.subr.mxu0 0.0
      %4826 = vmatpush1.msra.mxu0 0.0
      %4827 = vmatprep.subr.mxu0 0.0
      %4828 = vmatpush1.msra.mxu0 0.0
      %4829 = vmatprep.mubr.f32.mxu0 0.0
      %4830 = vmatmul.mubr.f32.gmra.mrb[0].mxu0 %v4666
      %v4831 = vpop.f32.mrb[0].mxu0
      %v4832 = vadd.f32 %v4662, %v4831
      %v4833 = vpop.f32.mrb[0].mxu0
      %4834 = vmatprep.mubr.f32.mxu0 0.0
      %4835 = vmatmul.mubr.f32.gmra.mrb[0].mxu0 %v4669
      %v4836 = vpop.f32.mrb[0].mxu0
      %v4837 = vadd.f32 %v4662, %v4836
      %v4838 = vpop.f32.mrb[0].mxu0
      %4839 = vmatprep.mubr.f32.mxu0 0.0
      %4840 = vmatmul.mubr.f32.gmra.mrb[0].mxu0 %v4672
      %v4841 = vpop.f32.mrb[0].mxu0
      %v4842 = vadd.f32 %v4662, %v4841
      %v4843 = vpop.f32.mrb[0].mxu0
      %4844 = vmatprep.mubr.f32.mxu0 0.0
      %4845 = vmatmul.mubr.f32.gmra.mrb[0].mxu0 %v4675
      %v4846 = vpop.f32.mrb[0].mxu0
      %v4847 = vadd.f32 %v4662, %v4846
      %v4848 = vpop.f32.mrb[0].mxu0
      %4849 = vmatprep.mubr.f32.mxu0 0.0
      %4850 = vmatmul.mubr.f32.gmra.mrb[0].mxu0 %v4678
      %v4851 = vpop.f32.mrb[0].mxu0
      %v4852 = vadd.f32 %v4662, %v4851
      %v4853 = vpop.f32.mrb[0].mxu0
      %4854 = vmatprep.mubr.f32.mxu0 0.0
      %4855 = vmatmul.mubr.f32.gmra.mrb[0].mxu0 %v4681
      %v4856 = vpop.f32.mrb[0].mxu0
      %v4857 = vadd.f32 %v4662, %v4856
      %v4858 = vpop.f32.mrb[0].mxu0
      %4859 = vmatprep.mubr.f32.mxu0 0.0
      %4860 = vmatmul.mubr.f32.gmra.mrb[0].mxu0 %v4684
      %v4861 = vpop.f32.mrb[0].mxu0
      %v4862 = vadd.f32 %v4662, %v4861
      %v4863 = vpop.f32.mrb[0].mxu0
      %4864 = vmatprep.mubr.f32.mxu0 0.0
      %4865 = vmatmul.mubr.f32.gmra.mrb[0].mxu0 %v4687
      %v4866 = vpop.f32.mrb[0].mxu0
      %v4867 = vadd.f32 %v4662, %v4866
      %v4868 = vpop.f32.mrb[0].mxu0
      %4869 = vmatprep.mubr.f32.mxu0 0.0
      %4870 = vmatmul.mubr.f32.gmra.mrb[0].mxu0 %v4690
      %v4871 = vpop.f32.mrb[0].mxu0
      %v4872 = vadd.f32 %v4662, %v4871
      %v4873 = vpop.f32.mrb[0].mxu0
      %4874 = vmatprep.mubr.f32.mxu0 0.0
      %4875 = vmatmul.mubr.f32.gmra.mrb[0].mxu0 %v4693
      %v4876 = vpop.f32.mrb[0].mxu0
      %v4877 = vadd.f32 %v4662, %v4876
      %v4878 = vpop.f32.mrb[0].mxu0
      %4879 = vmatprep.mubr.f32.mxu0 0.0
      %4880 = vmatmul.mubr.f32.gmra.mrb[0].mxu0 %v4696
      %v4881 = vpop.f32.mrb[0].mxu0
      %v4882 = vadd.f32 %v4662, %v4881
      %v4883 = vpop.f32.mrb[0].mxu0
      %4884 = vmatprep.mubr.f32.mxu0 0.0
      %4885 = vmatmul.mubr.f32.gmra.mrb[0].mxu0 %v4699
      %v4886 = vpop.f32.mrb[0].mxu0
      %v4887 = vadd.f32 %v4662, %v4886
      %v4888 = vpop.f32.mrb[0].mxu0
      %4889 = vmatprep.mubr.f32.mxu0 0.0
      %4890 = vmatmul.mubr.f32.gmra.mrb[0].mxu0 %v4702
      %v4891 = vpop.f32.mrb[0].mxu0
      %v4892 = vadd.f32 %v4662, %v4891
      %v4893 = vpop.f32.mrb[0].mxu0
      %4894 = vmatprep.mubr.f32.mxu0 0.0
      %4895 = vmatmul.mubr.f32.gmra.mrb[0].mxu0 %v4705
      %v4896 = vpop.f32.mrb[0].mxu0
      %v4897 = vadd.f32 %v4662, %v4896
      %v4898 = vpop.f32.mrb[0].mxu0
      %4899 = vmatprep.mubr.f32.mxu0 0.0
      %4900 = vmatmul.mubr.f32.gmra.mrb[0].mxu0 %v4708
      %v4901 = vpop.f32.mrb[0].mxu0
      %v4902 = vadd.f32 %v4662, %v4901
      %v4903 = vpop.f32.mrb[0].mxu0
      %4904 = vmatprep.mubr.f32.mxu0 0.0
      %4905 = vmatmul.mubr.f32.gmra.mrb[0].mxu0 %v4711
      %v4906 = vpop.f32.mrb[0].mxu0
      %v4907 = vadd.f32 %v4662, %v4906
      %v4908 = vpop.f32.mrb[0].mxu0
      %4909 = vmatprep.mubr.f32.mxu0 0.0
      %4910 = vmatmul.mubr.f32.gmra.mrb[0].mxu0 %v4714
      %v4911 = vpop.f32.mrb[0].mxu0
      %v4912 = vadd.f32 %v4662, %v4911
      %v4913 = vpop.f32.mrb[0].mxu0
      %4914 = vmatprep.mubr.f32.mxu0 0.0
      %4915 = vmatmul.mubr.f32.gmra.mrb[0].mxu0 %v4717
      %v4916 = vpop.f32.mrb[0].mxu0
      %v4917 = vadd.f32 %v4662, %v4916
      %v4918 = vpop.f32.mrb[0].mxu0
      %4919 = vmatprep.mubr.f32.mxu0 0.0
      %4920 = vmatmul.mubr.f32.gmra.mrb[0].mxu0 %v4720
      %v4921 = vpop.f32.mrb[0].mxu0
      %v4922 = vadd.f32 %v4662, %v4921
      %v4923 = vpop.f32.mrb[0].mxu0
      %4924 = vmatprep.mubr.f32.mxu0 0.0
      %4925 = vmatmul.mubr.f32.gmra.mrb[0].mxu0 %v4723
      %v4926 = vpop.f32.mrb[0].mxu0
      %v4927 = vadd.f32 %v4662, %v4926
      %v4928 = vpop.f32.mrb[0].mxu0
      %4929 = vmatprep.mubr.f32.mxu0 0.0
      %4930 = vmatmul.mubr.f32.gmra.mrb[0].mxu0 %v4726
      %v4931 = vpop.f32.mrb[0].mxu0
      %v4932 = vadd.f32 %v4662, %v4931
      %v4933 = vpop.f32.mrb[0].mxu0
      %4934 = vmatprep.mubr.f32.mxu0 0.0
      %4935 = vmatmul.mubr.f32.gmra.mrb[0].mxu0 %v4729
      %v4936 = vpop.f32.mrb[0].mxu0
      %v4937 = vadd.f32 %v4662, %v4936
      %v4938 = vpop.f32.mrb[0].mxu0
      %4939 = vmatprep.mubr.f32.mxu0 0.0
      %4940 = vmatmul.mubr.f32.gmra.mrb[0].mxu0 %v4732
      %v4941 = vpop.f32.mrb[0].mxu0
      %v4942 = vadd.f32 %v4662, %v4941
      %v4943 = vpop.f32.mrb[0].mxu0
      %4944 = vmatprep.mubr.f32.mxu0 0.0
      %4945 = vmatmul.mubr.f32.gmra.mrb[0].mxu0 %v4735
      %v4946 = vpop.f32.mrb[0].mxu0
      %v4947 = vadd.f32 %v4662, %v4946
      %v4948 = vpop.f32.mrb[0].mxu0
      %4949 = vmatprep.mubr.f32.mxu0 0.0
      %4950 = vmatmul.mubr.f32.gmra.mrb[0].mxu0 %v4738
      %v4951 = vpop.f32.mrb[0].mxu0
      %v4952 = vadd.f32 %v4662, %v4951
      %v4953 = vpop.f32.mrb[0].mxu0
      %4954 = vmatprep.mubr.f32.mxu0 0.0
      %4955 = vmatmul.mubr.f32.gmra.mrb[0].mxu0 %v4741
      %v4956 = vpop.f32.mrb[0].mxu0
      %v4957 = vadd.f32 %v4662, %v4956
      %v4958 = vpop.f32.mrb[0].mxu0
      %4959 = vmatprep.mubr.f32.mxu0 0.0
      %4960 = vmatmul.mubr.f32.gmra.mrb[0].mxu0 %v4744
      %v4961 = vpop.f32.mrb[0].mxu0
      %v4962 = vadd.f32 %v4662, %v4961
      %v4963 = vpop.f32.mrb[0].mxu0
      %4964 = vmatprep.mubr.f32.mxu0 0.0
      %4965 = vmatmul.mubr.f32.gmra.mrb[0].mxu0 %v4747
      %v4966 = vpop.f32.mrb[0].mxu0
      %v4967 = vadd.f32 %v4662, %v4966
      %v4968 = vpop.f32.mrb[0].mxu0
      %4969 = vmatprep.mubr.f32.mxu0 0.0
      %4970 = vmatmul.mubr.f32.gmra.mrb[0].mxu0 %v4750
      %v4971 = vpop.f32.mrb[0].mxu0
      %v4972 = vadd.f32 %v4662, %v4971
      %v4973 = vpop.f32.mrb[0].mxu0
      %4974 = vmatprep.mubr.f32.mxu0 0.0
      %4975 = vmatmul.mubr.f32.gmra.mrb[0].mxu0 %v4753
      %v4976 = vpop.f32.mrb[0].mxu0
      %v4977 = vadd.f32 %v4662, %v4976
      %v4978 = vpop.f32.mrb[0].mxu0
      %4979 = vmatprep.mubr.f32.mxu0 0.0
      %4980 = vmatmul.mubr.f32.gmra.mrb[0].mxu0 %v4756
      %v4981 = vpop.f32.mrb[0].mxu0
      %v4982 = vadd.f32 %v4662, %v4981
      %v4983 = vpop.f32.mrb[0].mxu0
      %4984 = vmatprep.mubr.f32.mxu0 0.0
      %4985 = vmatmul.mubr.f32.gmra.mrb[0].mxu0 %v4759
      %v4986 = vpop.f32.mrb[0].mxu0
      %v4987 = vadd.f32 %v4662, %v4986
      %v4988 = vpop.f32.mrb[0].mxu0
      %4989 = vdwg.mxu0
      %v4990 = vmax.f32 %v4832, 0.0
      %v4991 = vmax.f32 %v4837, 0.0
      %v4992 = vmax.f32 %v4842, 0.0
      %v4993 = vmax.f32 %v4847, 0.0
      %v4994 = vmax.f32 %v4852, 0.0
      %v4995 = vmax.f32 %v4857, 0.0
      %v4996 = vmax.f32 %v4862, 0.0
      %v4997 = vmax.f32 %v4867, 0.0
      %v4998 = vmax.f32 %v4872, 0.0
      %v4999 = vmax.f32 %v4877, 0.0
      %v5000 = vmax.f32 %v4882, 0.0
      %v5001 = vmax.f32 %v4887, 0.0
      %v5002 = vmax.f32 %v4892, 0.0
      %v5003 = vmax.f32 %v4897, 0.0
      %v5004 = vmax.f32 %v4902, 0.0
      %v5005 = vmax.f32 %v4907, 0.0
      %v5006 = vmax.f32 %v4912, 0.0
      %v5007 = vmax.f32 %v4917, 0.0
      %v5008 = vmax.f32 %v4922, 0.0
      %v5009 = vmax.f32 %v4927, 0.0
      %v5010 = vmax.f32 %v4932, 0.0
      %v5011 = vmax.f32 %v4937, 0.0
      %v5012 = vmax.f32 %v4942, 0.0
      %v5013 = vmax.f32 %v4947, 0.0
      %v5014 = vmax.f32 %v4952, 0.0
      %v5015 = vmax.f32 %v4957, 0.0
      %v5016 = vmax.f32 %v4962, 0.0
      %v5017 = vmax.f32 %v4967, 0.0
      %v5018 = vmax.f32 %v4972, 0.0
      %v5019 = vmax.f32 %v4977, 0.0
      %v5020 = vmax.f32 %v4982, 0.0
      %v5021 = vmax.f32 %v4987, 0.0
      %5022 = vst.msk [vmem:[%s1022 + $0x1] sm:$0xff] %vm562, %v4990
      %5023 = vst.msk [vmem:[%s1022 + $0x9] sm:$0xff] %vm562, %v4991
      %5024 = vst.msk [vmem:[%s1022 + $0x19] sm:$0xff] %vm562, %v4992
      %5025 = vst.msk [vmem:[%s1022 + $0x21] sm:$0xff] %vm562, %v4993
      %5026 = vst.msk [vmem:[%s1022 + $0x31] sm:$0xff] %vm562, %v4994
      %5027 = vst.msk [vmem:[%s1022 + $0x39] sm:$0xff] %vm562, %v4995
      %5028 = vst.msk [vmem:[%s1022 + $0x49] sm:$0xff] %vm562, %v4996
      %5029 = vst.msk [vmem:[%s1022 + $0x51] sm:$0xff] %vm562, %v4997
      %5030 = vst.msk [vmem:[%s1022 + $0x61] sm:$0xff] %vm562, %v4998
      %5031 = vst.msk [vmem:[%s1022 + $0x69] sm:$0xff] %vm562, %v4999
      %5032 = vst.msk [vmem:[%s1022 + $0x79] sm:$0xff] %vm562, %v5000
      %5033 = vst.msk [vmem:[%s1022 + $0x81] sm:$0xff] %vm562, %v5001
      %5034 = vst.msk [vmem:[%s1022 + $0x91] sm:$0xff] %vm562, %v5002
      %5035 = vst.msk [vmem:[%s1022 + $0x99] sm:$0xff] %vm562, %v5003
      %5036 = vst.msk [vmem:[%s1022 + $0xa9] sm:$0xff] %vm562, %v5004
      %5037 = vst.msk [vmem:[%s1022 + $0xb1] sm:$0xff] %vm562, %v5005
      %5038 = vst.msk [vmem:[%s1022 + $0xc1] sm:$0xff] %vm562, %v5006
      %5039 = vst.msk [vmem:[%s1022 + $0xc9] sm:$0xff] %vm562, %v5007
      %5040 = vst.msk [vmem:[%s1022 + $0xd9] sm:$0xff] %vm562, %v5008
      %5041 = vst.msk [vmem:[%s1022 + $0xe1] sm:$0xff] %vm562, %v5009
      %5042 = vst.msk [vmem:[%s1022 + $0xf1] sm:$0xff] %vm562, %v5010
      %5043 = vst.msk [vmem:[%s1022 + $0xf9] sm:$0xff] %vm562, %v5011
      %5044 = vst.msk [vmem:[%s1022 + $0x109] sm:$0xff] %vm562, %v5012
      %5045 = vst.msk [vmem:[%s1022 + $0x111] sm:$0xff] %vm562, %v5013
      %5046 = vst.msk [vmem:[%s1022 + $0x121] sm:$0xff] %vm562, %v5014
      %5047 = vst.msk [vmem:[%s1022 + $0x129] sm:$0xff] %vm562, %v5015
      %5048 = vst.msk [vmem:[%s1022 + $0x139] sm:$0xff] %vm562, %v5016
      %5049 = vst.msk [vmem:[%s1022 + $0x141] sm:$0xff] %vm562, %v5017
      %5050 = vst.msk [vmem:[%s1022 + $0x151] sm:$0xff] %vm562, %v5018
      %5051 = vst.msk [vmem:[%s1022 + $0x159] sm:$0xff] %vm562, %v5019
      %5052 = vst.msk [vmem:[%s1022 + $0x169] sm:$0xff] %vm562, %v5020
      %5053 = vst.msk [vmem:[%s1022 + $0x171] sm:$0xff] %vm562, %v5021
      %v5054 = vld [vmem:[#allocation2] sm:$0xff]
      %v5055 = vld [vmem:[#allocation2 + $0x8] sm:$0xff]
      %v5056 = vld [vmem:[#allocation2 + $0x18] sm:$0xff]
      %v5057 = vld [vmem:[#allocation2 + $0x20] sm:$0xff]
      %v5058 = vld [vmem:[#allocation2 + $0x30] sm:$0xff]
      %v5059 = vld [vmem:[#allocation2 + $0x38] sm:$0xff]
      %v5060 = vld [vmem:[#allocation2 + $0x48] sm:$0xff]
      %v5061 = vld [vmem:[#allocation2 + $0x50] sm:$0xff]
      %v5062 = vld [vmem:[#allocation2 + $0x60] sm:$0xff]
      %v5063 = vld [vmem:[#allocation2 + $0x68] sm:$0xff]
      %v5064 = vld [vmem:[#allocation2 + $0x78] sm:$0xff]
      %v5065 = vld [vmem:[#allocation2 + $0x80] sm:$0xff]
      %v5066 = vld [vmem:[#allocation2 + $0x90] sm:$0xff]
      %v5067 = vld [vmem:[#allocation2 + $0x98] sm:$0xff]
      %v5068 = vld [vmem:[#allocation2 + $0xa8] sm:$0xff]
      %v5069 = vld [vmem:[#allocation2 + $0xb0] sm:$0xff]
      %v5070 = vld [vmem:[#allocation2 + $0xc0] sm:$0xff]
      %v5071 = vld [vmem:[#allocation2 + $0xc8] sm:$0xff]
      %v5072 = vld [vmem:[#allocation2 + $0xd8] sm:$0xff]
      %v5073 = vld [vmem:[#allocation2 + $0xe0] sm:$0xff]
      %v5074 = vld [vmem:[#allocation2 + $0xf0] sm:$0xff]
      %v5075 = vld [vmem:[#allocation2 + $0xf8] sm:$0xff]
      %v5076 = vld [vmem:[#allocation2 + $0x108] sm:$0xff]
      %v5077 = vld [vmem:[#allocation2 + $0x110] sm:$0xff]
      %v5078 = vld [vmem:[#allocation2 + $0x120] sm:$0xff]
      %v5079 = vld [vmem:[#allocation2 + $0x128] sm:$0xff]
      %v5080 = vld [vmem:[#allocation2 + $0x138] sm:$0xff]
      %v5081 = vld [vmem:[#allocation2 + $0x140] sm:$0xff]
      %v5082 = vld [vmem:[#allocation2 + $0x150] sm:$0xff]
      %v5083 = vld [vmem:[#allocation2 + $0x158] sm:$0xff]
      %v5084 = vld [vmem:[#allocation2 + $0x168] sm:$0xff]
      %v5085 = vld [vmem:[#allocation2 + $0x170] sm:$0xff]
      %5086 = vst.msk [vmem:[#allocation3] sm:$0xff] %vm562, %v5054
      %5087 = vst.msk [vmem:[#allocation3 + $0x28] sm:$0xff] %vm562, %v5055
      %5088 = vst.msk [vmem:[#allocation3 + $0x50] sm:$0xff] %vm562, %v5056
      %5089 = vst.msk [vmem:[#allocation3 + $0x78] sm:$0xff] %vm562, %v5057
      %5090 = vst.msk [vmem:[#allocation3 + $0xa0] sm:$0xff] %vm562, %v5058
      %5091 = vst.msk [vmem:[#allocation3 + $0xc8] sm:$0xff] %vm562, %v5059
      %5092 = vst.msk [vmem:[#allocation3 + $0xf0] sm:$0xff] %vm562, %v5060
      %5093 = vst.msk [vmem:[#allocation3 + $0x118] sm:$0xff] %vm562, %v5061
      %5094 = vst.msk [vmem:[#allocation3 + $0x140] sm:$0xff] %vm562, %v5062
      %5095 = vst.msk [vmem:[#allocation3 + $0x168] sm:$0xff] %vm562, %v5063
      %5096 = vst.msk [vmem:[#allocation3 + $0x190] sm:$0xff] %vm562, %v5064
      %5097 = vst.msk [vmem:[#allocation3 + $0x1b8] sm:$0xff] %vm562, %v5065
      %5098 = vst.msk [vmem:[#allocation3 + $0x1e0] sm:$0xff] %vm562, %v5066
      %5099 = vst.msk [vmem:[#allocation3 + $0x208] sm:$0xff] %vm562, %v5067
      %5100 = vst.msk [vmem:[#allocation3 + $0x230] sm:$0xff] %vm562, %v5068
      %5101 = vst.msk [vmem:[#allocation3 + $0x258] sm:$0xff] %vm562, %v5069
      %5102 = vst.msk [vmem:[#allocation3 + $0x280] sm:$0xff] %vm562, %v5070
      %5103 = vst.msk [vmem:[#allocation3 + $0x2a8] sm:$0xff] %vm562, %v5071
      %5104 = vst.msk [vmem:[#allocation3 + $0x2d0] sm:$0xff] %vm562, %v5072
      %5105 = vst.msk [vmem:[#allocation3 + $0x2f8] sm:$0xff] %vm562, %v5073
      %5106 = vst.msk [vmem:[#allocation3 + $0x320] sm:$0xff] %vm562, %v5074
      %5107 = vst.msk [vmem:[#allocation3 + $0x348] sm:$0xff] %vm562, %v5075
      %5108 = vst.msk [vmem:[#allocation3 + $0x370] sm:$0xff] %vm562, %v5076
      %5109 = vst.msk [vmem:[#allocation3 + $0x398] sm:$0xff] %vm562, %v5077
      %5110 = vst.msk [vmem:[#allocation3 + $0x3c0] sm:$0xff] %vm562, %v5078
      %5111 = vst.msk [vmem:[#allocation3 + $0x3e8] sm:$0xff] %vm562, %v5079
      %5112 = vst.msk [vmem:[#allocation3 + $0x410] sm:$0xff] %vm562, %v5080
      %5113 = vst.msk [vmem:[#allocation3 + $0x438] sm:$0xff] %vm562, %v5081
      %5114 = vst.msk [vmem:[#allocation3 + $0x460] sm:$0xff] %vm562, %v5082
      %5115 = vst.msk [vmem:[#allocation3 + $0x488] sm:$0xff] %vm562, %v5083
      %5116 = vst.msk [vmem:[#allocation3 + $0x4b0] sm:$0xff] %vm562, %v5084
      %5117 = vst.msk [vmem:[#allocation3 + $0x4d8] sm:$0xff] %vm562, %v5085
      %v5118 = vld [vmem:[#allocation2 + $0x1] sm:$0xff]
      %v5119 = vld [vmem:[#allocation2 + $0x9] sm:$0xff]
      %v5120 = vld [vmem:[#allocation2 + $0x19] sm:$0xff]
      %v5121 = vld [vmem:[#allocation2 + $0x21] sm:$0xff]
      %v5122 = vld [vmem:[#allocation2 + $0x31] sm:$0xff]
      %v5123 = vld [vmem:[#allocation2 + $0x39] sm:$0xff]
      %v5124 = vld [vmem:[#allocation2 + $0x49] sm:$0xff]
      %v5125 = vld [vmem:[#allocation2 + $0x51] sm:$0xff]
      %v5126 = vld [vmem:[#allocation2 + $0x61] sm:$0xff]
      %v5127 = vld [vmem:[#allocation2 + $0x69] sm:$0xff]
      %v5128 = vld [vmem:[#allocation2 + $0x79] sm:$0xff]
      %v5129 = vld [vmem:[#allocation2 + $0x81] sm:$0xff]
      %v5130 = vld [vmem:[#allocation2 + $0x91] sm:$0xff]
      %v5131 = vld [vmem:[#allocation2 + $0x99] sm:$0xff]
      %v5132 = vld [vmem:[#allocation2 + $0xa9] sm:$0xff]
      %v5133 = vld [vmem:[#allocation2 + $0xb1] sm:$0xff]
      %v5134 = vld [vmem:[#allocation2 + $0xc1] sm:$0xff]
      %v5135 = vld [vmem:[#allocation2 + $0xc9] sm:$0xff]
      %v5136 = vld [vmem:[#allocation2 + $0xd9] sm:$0xff]
      %v5137 = vld [vmem:[#allocation2 + $0xe1] sm:$0xff]
      %v5138 = vld [vmem:[#allocation2 + $0xf1] sm:$0xff]
      %v5139 = vld [vmem:[#allocation2 + $0xf9] sm:$0xff]
      %v5140 = vld [vmem:[#allocation2 + $0x109] sm:$0xff]
      %v5141 = vld [vmem:[#allocation2 + $0x111] sm:$0xff]
      %v5142 = vld [vmem:[#allocation2 + $0x121] sm:$0xff]
      %v5143 = vld [vmem:[#allocation2 + $0x129] sm:$0xff]
      %v5144 = vld [vmem:[#allocation2 + $0x139] sm:$0xff]
      %v5145 = vld [vmem:[#allocation2 + $0x141] sm:$0xff]
      %v5146 = vld [vmem:[#allocation2 + $0x151] sm:$0xff]
      %v5147 = vld [vmem:[#allocation2 + $0x159] sm:$0xff]
      %v5148 = vld [vmem:[#allocation2 + $0x169] sm:$0xff]
      %v5149 = vld [vmem:[#allocation2 + $0x171] sm:$0xff]
      %5182 = vrot.lane.b32.xlu0 %v5118, 32
      %v5183 = vpop.permute.xlu0 %5182
      %5184 = vrot.lane.b32.xlu0 %v5119, 32
      %v5185 = vpop.permute.xlu0 %5184
      %5186 = vrot.lane.b32.xlu0 %v5120, 32
      %v5187 = vpop.permute.xlu0 %5186
      %5188 = vrot.lane.b32.xlu0 %v5121, 32
      %v5189 = vpop.permute.xlu0 %5188
      %5190 = vrot.lane.b32.xlu0 %v5122, 32
      %v5191 = vpop.permute.xlu0 %5190
      %5192 = vrot.lane.b32.xlu0 %v5123, 32
      %v5193 = vpop.permute.xlu0 %5192
      %5194 = vrot.lane.b32.xlu0 %v5124, 32
      %v5195 = vpop.permute.xlu0 %5194
      %5196 = vrot.lane.b32.xlu0 %v5125, 32
      %v5197 = vpop.permute.xlu0 %5196
      %5198 = vrot.lane.b32.xlu0 %v5126, 32
      %v5199 = vpop.permute.xlu0 %5198
      %5200 = vrot.lane.b32.xlu0 %v5127, 32
      %v5201 = vpop.permute.xlu0 %5200
      %5202 = vrot.lane.b32.xlu0 %v5128, 32
      %v5203 = vpop.permute.xlu0 %5202
      %5204 = vrot.lane.b32.xlu0 %v5129, 32
      %v5205 = vpop.permute.xlu0 %5204
      %5206 = vrot.lane.b32.xlu0 %v5130, 32
      %v5207 = vpop.permute.xlu0 %5206
      %5208 = vrot.lane.b32.xlu0 %v5131, 32
      %v5209 = vpop.permute.xlu0 %5208
      %5210 = vrot.lane.b32.xlu0 %v5132, 32
      %v5211 = vpop.permute.xlu0 %5210
      %5212 = vrot.lane.b32.xlu0 %v5133, 32
      %v5213 = vpop.permute.xlu0 %5212
      %5214 = vrot.lane.b32.xlu0 %v5134, 32
      %v5215 = vpop.permute.xlu0 %5214
      %5216 = vrot.lane.b32.xlu0 %v5135, 32
      %v5217 = vpop.permute.xlu0 %5216
      %5218 = vrot.lane.b32.xlu0 %v5136, 32
      %v5219 = vpop.permute.xlu0 %5218
      %5220 = vrot.lane.b32.xlu0 %v5137, 32
      %v5221 = vpop.permute.xlu0 %5220
      %5222 = vrot.lane.b32.xlu0 %v5138, 32
      %v5223 = vpop.permute.xlu0 %5222
      %5224 = vrot.lane.b32.xlu0 %v5139, 32
      %v5225 = vpop.permute.xlu0 %5224
      %5226 = vrot.lane.b32.xlu0 %v5140, 32
      %v5227 = vpop.permute.xlu0 %5226
      %5228 = vrot.lane.b32.xlu0 %v5141, 32
      %v5229 = vpop.permute.xlu0 %5228
      %5230 = vrot.lane.b32.xlu0 %v5142, 32
      %v5231 = vpop.permute.xlu0 %5230
      %5232 = vrot.lane.b32.xlu0 %v5143, 32
      %v5233 = vpop.permute.xlu0 %5232
      %5234 = vrot.lane.b32.xlu0 %v5144, 32
      %v5235 = vpop.permute.xlu0 %5234
      %5236 = vrot.lane.b32.xlu0 %v5145, 32
      %v5237 = vpop.permute.xlu0 %5236
      %5238 = vrot.lane.b32.xlu0 %v5146, 32
      %v5239 = vpop.permute.xlu0 %5238
      %5240 = vrot.lane.b32.xlu0 %v5147, 32
      %v5241 = vpop.permute.xlu0 %5240
      %5242 = vrot.lane.b32.xlu0 %v5148, 32
      %v5243 = vpop.permute.xlu0 %5242
      %5244 = vrot.lane.b32.xlu0 %v5149, 32
      %v5245 = vpop.permute.xlu0 %5244
      %5278 = vst.msk [vmem:[#allocation3] sm:$0xff] %vm1279, %v5183
      %5279 = vst.msk [vmem:[#allocation3 + $0x28] sm:$0xff] %vm1279, %v5185
      %5280 = vst.msk [vmem:[#allocation3 + $0x50] sm:$0xff] %vm1279, %v5187
      %5281 = vst.msk [vmem:[#allocation3 + $0x78] sm:$0xff] %vm1279, %v5189
      %5282 = vst.msk [vmem:[#allocation3 + $0xa0] sm:$0xff] %vm1279, %v5191
      %5283 = vst.msk [vmem:[#allocation3 + $0xc8] sm:$0xff] %vm1279, %v5193
      %5284 = vst.msk [vmem:[#allocation3 + $0xf0] sm:$0xff] %vm1279, %v5195
      %5285 = vst.msk [vmem:[#allocation3 + $0x118] sm:$0xff] %vm1279, %v5197
      %5286 = vst.msk [vmem:[#allocation3 + $0x140] sm:$0xff] %vm1279, %v5199
      %5287 = vst.msk [vmem:[#allocation3 + $0x168] sm:$0xff] %vm1279, %v5201
      %5288 = vst.msk [vmem:[#allocation3 + $0x190] sm:$0xff] %vm1279, %v5203
      %5289 = vst.msk [vmem:[#allocation3 + $0x1b8] sm:$0xff] %vm1279, %v5205
      %5290 = vst.msk [vmem:[#allocation3 + $0x1e0] sm:$0xff] %vm1279, %v5207
      %5291 = vst.msk [vmem:[#allocation3 + $0x208] sm:$0xff] %vm1279, %v5209
      %5292 = vst.msk [vmem:[#allocation3 + $0x230] sm:$0xff] %vm1279, %v5211
      %5293 = vst.msk [vmem:[#allocation3 + $0x258] sm:$0xff] %vm1279, %v5213
      %5294 = vst.msk [vmem:[#allocation3 + $0x280] sm:$0xff] %vm1279, %v5215
      %5295 = vst.msk [vmem:[#allocation3 + $0x2a8] sm:$0xff] %vm1279, %v5217
      %5296 = vst.msk [vmem:[#allocation3 + $0x2d0] sm:$0xff] %vm1279, %v5219
      %5297 = vst.msk [vmem:[#allocation3 + $0x2f8] sm:$0xff] %vm1279, %v5221
      %5298 = vst.msk [vmem:[#allocation3 + $0x320] sm:$0xff] %vm1279, %v5223
      %5299 = vst.msk [vmem:[#allocation3 + $0x348] sm:$0xff] %vm1279, %v5225
      %5300 = vst.msk [vmem:[#allocation3 + $0x370] sm:$0xff] %vm1279, %v5227
      %5301 = vst.msk [vmem:[#allocation3 + $0x398] sm:$0xff] %vm1279, %v5229
      %5302 = vst.msk [vmem:[#allocation3 + $0x3c0] sm:$0xff] %vm1279, %v5231
      %5303 = vst.msk [vmem:[#allocation3 + $0x3e8] sm:$0xff] %vm1279, %v5233
      %5304 = vst.msk [vmem:[#allocation3 + $0x410] sm:$0xff] %vm1279, %v5235
      %5305 = vst.msk [vmem:[#allocation3 + $0x438] sm:$0xff] %vm1279, %v5237
      %5306 = vst.msk [vmem:[#allocation3 + $0x460] sm:$0xff] %vm1279, %v5239
      %5307 = vst.msk [vmem:[#allocation3 + $0x488] sm:$0xff] %vm1279, %v5241
      %5308 = vst.msk [vmem:[#allocation3 + $0x4b0] sm:$0xff] %vm1279, %v5243
      %5309 = vst.msk [vmem:[#allocation3 + $0x4d8] sm:$0xff] %vm1279, %v5245
      %v5310 = vld [vmem:[#allocation2 + $0x2] sm:$0xff]
      %v5311 = vld [vmem:[#allocation2 + $0xa] sm:$0xff]
      %v5312 = vld [vmem:[#allocation2 + $0x1a] sm:$0xff]
      %v5313 = vld [vmem:[#allocation2 + $0x22] sm:$0xff]
      %v5314 = vld [vmem:[#allocation2 + $0x32] sm:$0xff]
      %v5315 = vld [vmem:[#allocation2 + $0x3a] sm:$0xff]
      %v5316 = vld [vmem:[#allocation2 + $0x4a] sm:$0xff]
      %v5317 = vld [vmem:[#allocation2 + $0x52] sm:$0xff]
      %v5318 = vld [vmem:[#allocation2 + $0x62] sm:$0xff]
      %v5319 = vld [vmem:[#allocation2 + $0x6a] sm:$0xff]
      %v5320 = vld [vmem:[#allocation2 + $0x7a] sm:$0xff]
      %v5321 = vld [vmem:[#allocation2 + $0x82] sm:$0xff]
      %v5322 = vld [vmem:[#allocation2 + $0x92] sm:$0xff]
      %v5323 = vld [vmem:[#allocation2 + $0x9a] sm:$0xff]
      %v5324 = vld [vmem:[#allocation2 + $0xaa] sm:$0xff]
      %v5325 = vld [vmem:[#allocation2 + $0xb2] sm:$0xff]
      %v5326 = vld [vmem:[#allocation2 + $0xc2] sm:$0xff]
      %v5327 = vld [vmem:[#allocation2 + $0xca] sm:$0xff]
      %v5328 = vld [vmem:[#allocation2 + $0xda] sm:$0xff]
      %v5329 = vld [vmem:[#allocation2 + $0xe2] sm:$0xff]
      %v5330 = vld [vmem:[#allocation2 + $0xf2] sm:$0xff]
      %v5331 = vld [vmem:[#allocation2 + $0xfa] sm:$0xff]
      %v5332 = vld [vmem:[#allocation2 + $0x10a] sm:$0xff]
      %v5333 = vld [vmem:[#allocation2 + $0x112] sm:$0xff]
      %v5334 = vld [vmem:[#allocation2 + $0x122] sm:$0xff]
      %v5335 = vld [vmem:[#allocation2 + $0x12a] sm:$0xff]
      %v5336 = vld [vmem:[#allocation2 + $0x13a] sm:$0xff]
      %v5337 = vld [vmem:[#allocation2 + $0x142] sm:$0xff]
      %v5338 = vld [vmem:[#allocation2 + $0x152] sm:$0xff]
      %v5339 = vld [vmem:[#allocation2 + $0x15a] sm:$0xff]
      %v5340 = vld [vmem:[#allocation2 + $0x16a] sm:$0xff]
      %v5341 = vld [vmem:[#allocation2 + $0x172] sm:$0xff]
      %5374 = vrot.lane.b32.xlu0 %v5310, 64
      %v5375 = vpop.permute.xlu0 %5374
      %5376 = vrot.lane.b32.xlu0 %v5311, 64
      %v5377 = vpop.permute.xlu0 %5376
      %5378 = vrot.lane.b32.xlu0 %v5312, 64
      %v5379 = vpop.permute.xlu0 %5378
      %5380 = vrot.lane.b32.xlu0 %v5313, 64
      %v5381 = vpop.permute.xlu0 %5380
      %5382 = vrot.lane.b32.xlu0 %v5314, 64
      %v5383 = vpop.permute.xlu0 %5382
      %5384 = vrot.lane.b32.xlu0 %v5315, 64
      %v5385 = vpop.permute.xlu0 %5384
      %5386 = vrot.lane.b32.xlu0 %v5316, 64
      %v5387 = vpop.permute.xlu0 %5386
      %5388 = vrot.lane.b32.xlu0 %v5317, 64
      %v5389 = vpop.permute.xlu0 %5388
      %5390 = vrot.lane.b32.xlu0 %v5318, 64
      %v5391 = vpop.permute.xlu0 %5390
      %5392 = vrot.lane.b32.xlu0 %v5319, 64
      %v5393 = vpop.permute.xlu0 %5392
      %5394 = vrot.lane.b32.xlu0 %v5320, 64
      %v5395 = vpop.permute.xlu0 %5394
      %5396 = vrot.lane.b32.xlu0 %v5321, 64
      %v5397 = vpop.permute.xlu0 %5396
      %5398 = vrot.lane.b32.xlu0 %v5322, 64
      %v5399 = vpop.permute.xlu0 %5398
      %5400 = vrot.lane.b32.xlu0 %v5323, 64
      %v5401 = vpop.permute.xlu0 %5400
      %5402 = vrot.lane.b32.xlu0 %v5324, 64
      %v5403 = vpop.permute.xlu0 %5402
      %5404 = vrot.lane.b32.xlu0 %v5325, 64
      %v5405 = vpop.permute.xlu0 %5404
      %5406 = vrot.lane.b32.xlu0 %v5326, 64
      %v5407 = vpop.permute.xlu0 %5406
      %5408 = vrot.lane.b32.xlu0 %v5327, 64
      %v5409 = vpop.permute.xlu0 %5408
      %5410 = vrot.lane.b32.xlu0 %v5328, 64
      %v5411 = vpop.permute.xlu0 %5410
      %5412 = vrot.lane.b32.xlu0 %v5329, 64
      %v5413 = vpop.permute.xlu0 %5412
      %5414 = vrot.lane.b32.xlu0 %v5330, 64
      %v5415 = vpop.permute.xlu0 %5414
      %5416 = vrot.lane.b32.xlu0 %v5331, 64
      %v5417 = vpop.permute.xlu0 %5416
      %5418 = vrot.lane.b32.xlu0 %v5332, 64
      %v5419 = vpop.permute.xlu0 %5418
      %5420 = vrot.lane.b32.xlu0 %v5333, 64
      %v5421 = vpop.permute.xlu0 %5420
      %5422 = vrot.lane.b32.xlu0 %v5334, 64
      %v5423 = vpop.permute.xlu0 %5422
      %5424 = vrot.lane.b32.xlu0 %v5335, 64
      %v5425 = vpop.permute.xlu0 %5424
      %5426 = vrot.lane.b32.xlu0 %v5336, 64
      %v5427 = vpop.permute.xlu0 %5426
      %5428 = vrot.lane.b32.xlu0 %v5337, 64
      %v5429 = vpop.permute.xlu0 %5428
      %5430 = vrot.lane.b32.xlu0 %v5338, 64
      %v5431 = vpop.permute.xlu0 %5430
      %5432 = vrot.lane.b32.xlu0 %v5339, 64
      %v5433 = vpop.permute.xlu0 %5432
      %5434 = vrot.lane.b32.xlu0 %v5340, 64
      %v5435 = vpop.permute.xlu0 %5434
      %5436 = vrot.lane.b32.xlu0 %v5341, 64
      %v5437 = vpop.permute.xlu0 %5436
      %5470 = vst.msk [vmem:[#allocation3] sm:$0xff] %vm1472, %v5375
      %5471 = vst.msk [vmem:[#allocation3 + $0x28] sm:$0xff] %vm1472, %v5377
      %5472 = vst.msk [vmem:[#allocation3 + $0x50] sm:$0xff] %vm1472, %v5379
      %5473 = vst.msk [vmem:[#allocation3 + $0x78] sm:$0xff] %vm1472, %v5381
      %5474 = vst.msk [vmem:[#allocation3 + $0xa0] sm:$0xff] %vm1472, %v5383
      %5475 = vst.msk [vmem:[#allocation3 + $0xc8] sm:$0xff] %vm1472, %v5385
      %5476 = vst.msk [vmem:[#allocation3 + $0xf0] sm:$0xff] %vm1472, %v5387
      %5477 = vst.msk [vmem:[#allocation3 + $0x118] sm:$0xff] %vm1472, %v5389
      %5478 = vst.msk [vmem:[#allocation3 + $0x140] sm:$0xff] %vm1472, %v5391
      %5479 = vst.msk [vmem:[#allocation3 + $0x168] sm:$0xff] %vm1472, %v5393
      %5480 = vst.msk [vmem:[#allocation3 + $0x190] sm:$0xff] %vm1472, %v5395
      %5481 = vst.msk [vmem:[#allocation3 + $0x1b8] sm:$0xff] %vm1472, %v5397
      %5482 = vst.msk [vmem:[#allocation3 + $0x1e0] sm:$0xff] %vm1472, %v5399
      %5483 = vst.msk [vmem:[#allocation3 + $0x208] sm:$0xff] %vm1472, %v5401
      %5484 = vst.msk [vmem:[#allocation3 + $0x230] sm:$0xff] %vm1472, %v5403
      %5485 = vst.msk [vmem:[#allocation3 + $0x258] sm:$0xff] %vm1472, %v5405
      %5486 = vst.msk [vmem:[#allocation3 + $0x280] sm:$0xff] %vm1472, %v5407
      %5487 = vst.msk [vmem:[#allocation3 + $0x2a8] sm:$0xff] %vm1472, %v5409
      %5488 = vst.msk [vmem:[#allocation3 + $0x2d0] sm:$0xff] %vm1472, %v5411
      %5489 = vst.msk [vmem:[#allocation3 + $0x2f8] sm:$0xff] %vm1472, %v5413
      %5490 = vst.msk [vmem:[#allocation3 + $0x320] sm:$0xff] %vm1472, %v5415
      %5491 = vst.msk [vmem:[#allocation3 + $0x348] sm:$0xff] %vm1472, %v5417
      %5492 = vst.msk [vmem:[#allocation3 + $0x370] sm:$0xff] %vm1472, %v5419
      %5493 = vst.msk [vmem:[#allocation3 + $0x398] sm:$0xff] %vm1472, %v5421
      %5494 = vst.msk [vmem:[#allocation3 + $0x3c0] sm:$0xff] %vm1472, %v5423
      %5495 = vst.msk [vmem:[#allocation3 + $0x3e8] sm:$0xff] %vm1472, %v5425
      %5496 = vst.msk [vmem:[#allocation3 + $0x410] sm:$0xff] %vm1472, %v5427
      %5497 = vst.msk [vmem:[#allocation3 + $0x438] sm:$0xff] %vm1472, %v5429
      %5498 = vst.msk [vmem:[#allocation3 + $0x460] sm:$0xff] %vm1472, %v5431
      %5499 = vst.msk [vmem:[#allocation3 + $0x488] sm:$0xff] %vm1472, %v5433
      %5500 = vst.msk [vmem:[#allocation3 + $0x4b0] sm:$0xff] %vm1472, %v5435
      %5501 = vst.msk [vmem:[#allocation3 + $0x4d8] sm:$0xff] %vm1472, %v5437
      %v5502 = vld [vmem:[%s1022] sm:$0xff]
      %v5503 = vld [vmem:[%s1022 + $0x8] sm:$0xff]
      %v5504 = vld [vmem:[%s1022 + $0x18] sm:$0xff]
      %v5505 = vld [vmem:[%s1022 + $0x20] sm:$0xff]
      %v5506 = vld [vmem:[%s1022 + $0x30] sm:$0xff]
      %v5507 = vld [vmem:[%s1022 + $0x38] sm:$0xff]
      %v5508 = vld [vmem:[%s1022 + $0x48] sm:$0xff]
      %v5509 = vld [vmem:[%s1022 + $0x50] sm:$0xff]
      %v5510 = vld [vmem:[%s1022 + $0x60] sm:$0xff]
      %v5511 = vld [vmem:[%s1022 + $0x68] sm:$0xff]
      %v5512 = vld [vmem:[%s1022 + $0x78] sm:$0xff]
      %v5513 = vld [vmem:[%s1022 + $0x80] sm:$0xff]
      %v5514 = vld [vmem:[%s1022 + $0x90] sm:$0xff]
      %v5515 = vld [vmem:[%s1022 + $0x98] sm:$0xff]
      %v5516 = vld [vmem:[%s1022 + $0xa8] sm:$0xff]
      %v5517 = vld [vmem:[%s1022 + $0xb0] sm:$0xff]
      %v5518 = vld [vmem:[%s1022 + $0xc0] sm:$0xff]
      %v5519 = vld [vmem:[%s1022 + $0xc8] sm:$0xff]
      %v5520 = vld [vmem:[%s1022 + $0xd8] sm:$0xff]
      %v5521 = vld [vmem:[%s1022 + $0xe0] sm:$0xff]
      %v5522 = vld [vmem:[%s1022 + $0xf0] sm:$0xff]
      %v5523 = vld [vmem:[%s1022 + $0xf8] sm:$0xff]
      %v5524 = vld [vmem:[%s1022 + $0x108] sm:$0xff]
      %v5525 = vld [vmem:[%s1022 + $0x110] sm:$0xff]
      %v5526 = vld [vmem:[%s1022 + $0x120] sm:$0xff]
      %v5527 = vld [vmem:[%s1022 + $0x128] sm:$0xff]
      %v5528 = vld [vmem:[%s1022 + $0x138] sm:$0xff]
      %v5529 = vld [vmem:[%s1022 + $0x140] sm:$0xff]
      %v5530 = vld [vmem:[%s1022 + $0x150] sm:$0xff]
      %v5531 = vld [vmem:[%s1022 + $0x158] sm:$0xff]
      %v5532 = vld [vmem:[%s1022 + $0x168] sm:$0xff]
      %v5533 = vld [vmem:[%s1022 + $0x170] sm:$0xff]
      %5566 = vrot.lane.b32.xlu0 %v5502, 96
      %v5567 = vpop.permute.xlu0 %5566
      %5568 = vrot.lane.b32.xlu0 %v5503, 96
      %v5569 = vpop.permute.xlu0 %5568
      %5570 = vrot.lane.b32.xlu0 %v5504, 96
      %v5571 = vpop.permute.xlu0 %5570
      %5572 = vrot.lane.b32.xlu0 %v5505, 96
      %v5573 = vpop.permute.xlu0 %5572
      %5574 = vrot.lane.b32.xlu0 %v5506, 96
      %v5575 = vpop.permute.xlu0 %5574
      %5576 = vrot.lane.b32.xlu0 %v5507, 96
      %v5577 = vpop.permute.xlu0 %5576
      %5578 = vrot.lane.b32.xlu0 %v5508, 96
      %v5579 = vpop.permute.xlu0 %5578
      %5580 = vrot.lane.b32.xlu0 %v5509, 96
      %v5581 = vpop.permute.xlu0 %5580
      %5582 = vrot.lane.b32.xlu0 %v5510, 96
      %v5583 = vpop.permute.xlu0 %5582
      %5584 = vrot.lane.b32.xlu0 %v5511, 96
      %v5585 = vpop.permute.xlu0 %5584
      %5586 = vrot.lane.b32.xlu0 %v5512, 96
      %v5587 = vpop.permute.xlu0 %5586
      %5588 = vrot.lane.b32.xlu0 %v5513, 96
      %v5589 = vpop.permute.xlu0 %5588
      %5590 = vrot.lane.b32.xlu0 %v5514, 96
      %v5591 = vpop.permute.xlu0 %5590
      %5592 = vrot.lane.b32.xlu0 %v5515, 96
      %v5593 = vpop.permute.xlu0 %5592
      %5594 = vrot.lane.b32.xlu0 %v5516, 96
      %v5595 = vpop.permute.xlu0 %5594
      %5596 = vrot.lane.b32.xlu0 %v5517, 96
      %v5597 = vpop.permute.xlu0 %5596
      %5598 = vrot.lane.b32.xlu0 %v5518, 96
      %v5599 = vpop.permute.xlu0 %5598
      %5600 = vrot.lane.b32.xlu0 %v5519, 96
      %v5601 = vpop.permute.xlu0 %5600
      %5602 = vrot.lane.b32.xlu0 %v5520, 96
      %v5603 = vpop.permute.xlu0 %5602
      %5604 = vrot.lane.b32.xlu0 %v5521, 96
      %v5605 = vpop.permute.xlu0 %5604
      %5606 = vrot.lane.b32.xlu0 %v5522, 96
      %v5607 = vpop.permute.xlu0 %5606
      %5608 = vrot.lane.b32.xlu0 %v5523, 96
      %v5609 = vpop.permute.xlu0 %5608
      %5610 = vrot.lane.b32.xlu0 %v5524, 96
      %v5611 = vpop.permute.xlu0 %5610
      %5612 = vrot.lane.b32.xlu0 %v5525, 96
      %v5613 = vpop.permute.xlu0 %5612
      %5614 = vrot.lane.b32.xlu0 %v5526, 96
      %v5615 = vpop.permute.xlu0 %5614
      %5616 = vrot.lane.b32.xlu0 %v5527, 96
      %v5617 = vpop.permute.xlu0 %5616
      %5618 = vrot.lane.b32.xlu0 %v5528, 96
      %v5619 = vpop.permute.xlu0 %5618
      %5620 = vrot.lane.b32.xlu0 %v5529, 96
      %v5621 = vpop.permute.xlu0 %5620
      %5622 = vrot.lane.b32.xlu0 %v5530, 96
      %v5623 = vpop.permute.xlu0 %5622
      %5624 = vrot.lane.b32.xlu0 %v5531, 96
      %v5625 = vpop.permute.xlu0 %5624
      %5626 = vrot.lane.b32.xlu0 %v5532, 96
      %v5627 = vpop.permute.xlu0 %5626
      %5628 = vrot.lane.b32.xlu0 %v5533, 96
      %v5629 = vpop.permute.xlu0 %5628
      %5662 = vst.msk [vmem:[#allocation3] sm:$0xff] %vm1665, %v5567
      %5663 = vst.msk [vmem:[#allocation3 + $0x28] sm:$0xff] %vm1665, %v5569
      %5664 = vst.msk [vmem:[#allocation3 + $0x50] sm:$0xff] %vm1665, %v5571
      %5665 = vst.msk [vmem:[#allocation3 + $0x78] sm:$0xff] %vm1665, %v5573
      %5666 = vst.msk [vmem:[#allocation3 + $0xa0] sm:$0xff] %vm1665, %v5575
      %5667 = vst.msk [vmem:[#allocation3 + $0xc8] sm:$0xff] %vm1665, %v5577
      %5668 = vst.msk [vmem:[#allocation3 + $0xf0] sm:$0xff] %vm1665, %v5579
      %5669 = vst.msk [vmem:[#allocation3 + $0x118] sm:$0xff] %vm1665, %v5581
      %5670 = vst.msk [vmem:[#allocation3 + $0x140] sm:$0xff] %vm1665, %v5583
      %5671 = vst.msk [vmem:[#allocation3 + $0x168] sm:$0xff] %vm1665, %v5585
      %5672 = vst.msk [vmem:[#allocation3 + $0x190] sm:$0xff] %vm1665, %v5587
      %5673 = vst.msk [vmem:[#allocation3 + $0x1b8] sm:$0xff] %vm1665, %v5589
      %5674 = vst.msk [vmem:[#allocation3 + $0x1e0] sm:$0xff] %vm1665, %v5591
      %5675 = vst.msk [vmem:[#allocation3 + $0x208] sm:$0xff] %vm1665, %v5593
      %5676 = vst.msk [vmem:[#allocation3 + $0x230] sm:$0xff] %vm1665, %v5595
      %5677 = vst.msk [vmem:[#allocation3 + $0x258] sm:$0xff] %vm1665, %v5597
      %5678 = vst.msk [vmem:[#allocation3 + $0x280] sm:$0xff] %vm1665, %v5599
      %5679 = vst.msk [vmem:[#allocation3 + $0x2a8] sm:$0xff] %vm1665, %v5601
      %5680 = vst.msk [vmem:[#allocation3 + $0x2d0] sm:$0xff] %vm1665, %v5603
      %5681 = vst.msk [vmem:[#allocation3 + $0x2f8] sm:$0xff] %vm1665, %v5605
      %5682 = vst.msk [vmem:[#allocation3 + $0x320] sm:$0xff] %vm1665, %v5607
      %5683 = vst.msk [vmem:[#allocation3 + $0x348] sm:$0xff] %vm1665, %v5609
      %5684 = vst.msk [vmem:[#allocation3 + $0x370] sm:$0xff] %vm1665, %v5611
      %5685 = vst.msk [vmem:[#allocation3 + $0x398] sm:$0xff] %vm1665, %v5613
      %5686 = vst.msk [vmem:[#allocation3 + $0x3c0] sm:$0xff] %vm1665, %v5615
      %5687 = vst.msk [vmem:[#allocation3 + $0x3e8] sm:$0xff] %vm1665, %v5617
      %5688 = vst.msk [vmem:[#allocation3 + $0x410] sm:$0xff] %vm1665, %v5619
      %5689 = vst.msk [vmem:[#allocation3 + $0x438] sm:$0xff] %vm1665, %v5621
      %5690 = vst.msk [vmem:[#allocation3 + $0x460] sm:$0xff] %vm1665, %v5623
      %5691 = vst.msk [vmem:[#allocation3 + $0x488] sm:$0xff] %vm1665, %v5625
      %5692 = vst.msk [vmem:[#allocation3 + $0x4b0] sm:$0xff] %vm1665, %v5627
      %5693 = vst.msk [vmem:[#allocation3 + $0x4d8] sm:$0xff] %vm1665, %v5629
      %v5694 = vld [vmem:[%s1022 + $0x1] sm:$0xff]
      %v5695 = vld [vmem:[%s1022 + $0x9] sm:$0xff]
      %v5696 = vld [vmem:[%s1022 + $0x19] sm:$0xff]
      %v5697 = vld [vmem:[%s1022 + $0x21] sm:$0xff]
      %v5698 = vld [vmem:[%s1022 + $0x31] sm:$0xff]
      %v5699 = vld [vmem:[%s1022 + $0x39] sm:$0xff]
      %v5700 = vld [vmem:[%s1022 + $0x49] sm:$0xff]
      %v5701 = vld [vmem:[%s1022 + $0x51] sm:$0xff]
      %v5702 = vld [vmem:[%s1022 + $0x61] sm:$0xff]
      %v5703 = vld [vmem:[%s1022 + $0x69] sm:$0xff]
      %v5704 = vld [vmem:[%s1022 + $0x79] sm:$0xff]
      %v5705 = vld [vmem:[%s1022 + $0x81] sm:$0xff]
      %v5706 = vld [vmem:[%s1022 + $0x91] sm:$0xff]
      %v5707 = vld [vmem:[%s1022 + $0x99] sm:$0xff]
      %v5708 = vld [vmem:[%s1022 + $0xa9] sm:$0xff]
      %v5709 = vld [vmem:[%s1022 + $0xb1] sm:$0xff]
      %v5710 = vld [vmem:[%s1022 + $0xc1] sm:$0xff]
      %v5711 = vld [vmem:[%s1022 + $0xc9] sm:$0xff]
      %v5712 = vld [vmem:[%s1022 + $0xd9] sm:$0xff]
      %v5713 = vld [vmem:[%s1022 + $0xe1] sm:$0xff]
      %v5714 = vld [vmem:[%s1022 + $0xf1] sm:$0xff]
      %v5715 = vld [vmem:[%s1022 + $0xf9] sm:$0xff]
      %v5716 = vld [vmem:[%s1022 + $0x109] sm:$0xff]
      %v5717 = vld [vmem:[%s1022 + $0x111] sm:$0xff]
      %v5718 = vld [vmem:[%s1022 + $0x121] sm:$0xff]
      %v5719 = vld [vmem:[%s1022 + $0x129] sm:$0xff]
      %v5720 = vld [vmem:[%s1022 + $0x139] sm:$0xff]
      %v5721 = vld [vmem:[%s1022 + $0x141] sm:$0xff]
      %v5722 = vld [vmem:[%s1022 + $0x151] sm:$0xff]
      %v5723 = vld [vmem:[%s1022 + $0x159] sm:$0xff]
      %v5724 = vld [vmem:[%s1022 + $0x169] sm:$0xff]
      %v5725 = vld [vmem:[%s1022 + $0x171] sm:$0xff]
      %5726 = vst.msk [vmem:[#allocation3 + $0x8] sm:$0xff] %vm562, %v5694
      %5727 = vst.msk [vmem:[#allocation3 + $0x30] sm:$0xff] %vm562, %v5695
      %5728 = vst.msk [vmem:[#allocation3 + $0x58] sm:$0xff] %vm562, %v5696
      %5729 = vst.msk [vmem:[#allocation3 + $0x80] sm:$0xff] %vm562, %v5697
      %5730 = vst.msk [vmem:[#allocation3 + $0xa8] sm:$0xff] %vm562, %v5698
      %5731 = vst.msk [vmem:[#allocation3 + $0xd0] sm:$0xff] %vm562, %v5699
      %5732 = vst.msk [vmem:[#allocation3 + $0xf8] sm:$0xff] %vm562, %v5700
      %5733 = vst.msk [vmem:[#allocation3 + $0x120] sm:$0xff] %vm562, %v5701
      %5734 = vst.msk [vmem:[#allocation3 + $0x148] sm:$0xff] %vm562, %v5702
      %5735 = vst.msk [vmem:[#allocation3 + $0x170] sm:$0xff] %vm562, %v5703
      %5736 = vst.msk [vmem:[#allocation3 + $0x198] sm:$0xff] %vm562, %v5704
      %5737 = vst.msk [vmem:[#allocation3 + $0x1c0] sm:$0xff] %vm562, %v5705
      %5738 = vst.msk [vmem:[#allocation3 + $0x1e8] sm:$0xff] %vm562, %v5706
      %5739 = vst.msk [vmem:[#allocation3 + $0x210] sm:$0xff] %vm562, %v5707
      %5740 = vst.msk [vmem:[#allocation3 + $0x238] sm:$0xff] %vm562, %v5708
      %5741 = vst.msk [vmem:[#allocation3 + $0x260] sm:$0xff] %vm562, %v5709
      %5742 = vst.msk [vmem:[#allocation3 + $0x288] sm:$0xff] %vm562, %v5710
      %5743 = vst.msk [vmem:[#allocation3 + $0x2b0] sm:$0xff] %vm562, %v5711
      %5744 = vst.msk [vmem:[#allocation3 + $0x2d8] sm:$0xff] %vm562, %v5712
      %5745 = vst.msk [vmem:[#allocation3 + $0x300] sm:$0xff] %vm562, %v5713
      %5746 = vst.msk [vmem:[#allocation3 + $0x328] sm:$0xff] %vm562, %v5714
      %5747 = vst.msk [vmem:[#allocation3 + $0x350] sm:$0xff] %vm562, %v5715
      %5748 = vst.msk [vmem:[#allocation3 + $0x378] sm:$0xff] %vm562, %v5716
      %5749 = vst.msk [vmem:[#allocation3 + $0x3a0] sm:$0xff] %vm562, %v5717
      %5750 = vst.msk [vmem:[#allocation3 + $0x3c8] sm:$0xff] %vm562, %v5718
      %5751 = vst.msk [vmem:[#allocation3 + $0x3f0] sm:$0xff] %vm562, %v5719
      %5752 = vst.msk [vmem:[#allocation3 + $0x418] sm:$0xff] %vm562, %v5720
      %5753 = vst.msk [vmem:[#allocation3 + $0x440] sm:$0xff] %vm562, %v5721
      %5754 = vst.msk [vmem:[#allocation3 + $0x468] sm:$0xff] %vm562, %v5722
      %5755 = vst.msk [vmem:[#allocation3 + $0x490] sm:$0xff] %vm562, %v5723
      %5756 = vst.msk [vmem:[#allocation3 + $0x4b8] sm:$0xff] %vm562, %v5724
      %5757 = vst.msk [vmem:[#allocation3 + $0x4e0] sm:$0xff] %vm562, %v5725
      %v5758 = vld [vmem:[%s1022 + $0x2] sm:$0xff]
      %v5759 = vld [vmem:[%s1022 + $0xa] sm:$0xff]
      %v5760 = vld [vmem:[%s1022 + $0x1a] sm:$0xff]
      %v5761 = vld [vmem:[%s1022 + $0x22] sm:$0xff]
      %v5762 = vld [vmem:[%s1022 + $0x32] sm:$0xff]
      %v5763 = vld [vmem:[%s1022 + $0x3a] sm:$0xff]
      %v5764 = vld [vmem:[%s1022 + $0x4a] sm:$0xff]
      %v5765 = vld [vmem:[%s1022 + $0x52] sm:$0xff]
      %v5766 = vld [vmem:[%s1022 + $0x62] sm:$0xff]
      %v5767 = vld [vmem:[%s1022 + $0x6a] sm:$0xff]
      %v5768 = vld [vmem:[%s1022 + $0x7a] sm:$0xff]
      %v5769 = vld [vmem:[%s1022 + $0x82] sm:$0xff]
      %v5770 = vld [vmem:[%s1022 + $0x92] sm:$0xff]
      %v5771 = vld [vmem:[%s1022 + $0x9a] sm:$0xff]
      %v5772 = vld [vmem:[%s1022 + $0xaa] sm:$0xff]
      %v5773 = vld [vmem:[%s1022 + $0xb2] sm:$0xff]
      %v5774 = vld [vmem:[%s1022 + $0xc2] sm:$0xff]
      %v5775 = vld [vmem:[%s1022 + $0xca] sm:$0xff]
      %v5776 = vld [vmem:[%s1022 + $0xda] sm:$0xff]
      %v5777 = vld [vmem:[%s1022 + $0xe2] sm:$0xff]
      %v5778 = vld [vmem:[%s1022 + $0xf2] sm:$0xff]
      %v5779 = vld [vmem:[%s1022 + $0xfa] sm:$0xff]
      %v5780 = vld [vmem:[%s1022 + $0x10a] sm:$0xff]
      %v5781 = vld [vmem:[%s1022 + $0x112] sm:$0xff]
      %v5782 = vld [vmem:[%s1022 + $0x122] sm:$0xff]
      %v5783 = vld [vmem:[%s1022 + $0x12a] sm:$0xff]
      %v5784 = vld [vmem:[%s1022 + $0x13a] sm:$0xff]
      %v5785 = vld [vmem:[%s1022 + $0x142] sm:$0xff]
      %v5786 = vld [vmem:[%s1022 + $0x152] sm:$0xff]
      %v5787 = vld [vmem:[%s1022 + $0x15a] sm:$0xff]
      %v5788 = vld [vmem:[%s1022 + $0x16a] sm:$0xff]
      %v5789 = vld [vmem:[%s1022 + $0x172] sm:$0xff]
      %5822 = vrot.lane.b32.xlu0 %v5758, 32
      %v5823 = vpop.permute.xlu0 %5822
      %5824 = vrot.lane.b32.xlu0 %v5759, 32
      %v5825 = vpop.permute.xlu0 %5824
      %5826 = vrot.lane.b32.xlu0 %v5760, 32
      %v5827 = vpop.permute.xlu0 %5826
      %5828 = vrot.lane.b32.xlu0 %v5761, 32
      %v5829 = vpop.permute.xlu0 %5828
      %5830 = vrot.lane.b32.xlu0 %v5762, 32
      %v5831 = vpop.permute.xlu0 %5830
      %5832 = vrot.lane.b32.xlu0 %v5763, 32
      %v5833 = vpop.permute.xlu0 %5832
      %5834 = vrot.lane.b32.xlu0 %v5764, 32
      %v5835 = vpop.permute.xlu0 %5834
      %5836 = vrot.lane.b32.xlu0 %v5765, 32
      %v5837 = vpop.permute.xlu0 %5836
      %5838 = vrot.lane.b32.xlu0 %v5766, 32
      %v5839 = vpop.permute.xlu0 %5838
      %5840 = vrot.lane.b32.xlu0 %v5767, 32
      %v5841 = vpop.permute.xlu0 %5840
      %5842 = vrot.lane.b32.xlu0 %v5768, 32
      %v5843 = vpop.permute.xlu0 %5842
      %5844 = vrot.lane.b32.xlu0 %v5769, 32
      %v5845 = vpop.permute.xlu0 %5844
      %5846 = vrot.lane.b32.xlu0 %v5770, 32
      %v5847 = vpop.permute.xlu0 %5846
      %5848 = vrot.lane.b32.xlu0 %v5771, 32
      %v5849 = vpop.permute.xlu0 %5848
      %5850 = vrot.lane.b32.xlu0 %v5772, 32
      %v5851 = vpop.permute.xlu0 %5850
      %5852 = vrot.lane.b32.xlu0 %v5773, 32
      %v5853 = vpop.permute.xlu0 %5852
      %5854 = vrot.lane.b32.xlu0 %v5774, 32
      %v5855 = vpop.permute.xlu0 %5854
      %5856 = vrot.lane.b32.xlu0 %v5775, 32
      %v5857 = vpop.permute.xlu0 %5856
      %5858 = vrot.lane.b32.xlu0 %v5776, 32
      %v5859 = vpop.permute.xlu0 %5858
      %5860 = vrot.lane.b32.xlu0 %v5777, 32
      %v5861 = vpop.permute.xlu0 %5860
      %5862 = vrot.lane.b32.xlu0 %v5778, 32
      %v5863 = vpop.permute.xlu0 %5862
      %5864 = vrot.lane.b32.xlu0 %v5779, 32
      %v5865 = vpop.permute.xlu0 %5864
      %5866 = vrot.lane.b32.xlu0 %v5780, 32
      %v5867 = vpop.permute.xlu0 %5866
      %5868 = vrot.lane.b32.xlu0 %v5781, 32
      %v5869 = vpop.permute.xlu0 %5868
      %5870 = vrot.lane.b32.xlu0 %v5782, 32
      %v5871 = vpop.permute.xlu0 %5870
      %5872 = vrot.lane.b32.xlu0 %v5783, 32
      %v5873 = vpop.permute.xlu0 %5872
      %5874 = vrot.lane.b32.xlu0 %v5784, 32
      %v5875 = vpop.permute.xlu0 %5874
      %5876 = vrot.lane.b32.xlu0 %v5785, 32
      %v5877 = vpop.permute.xlu0 %5876
      %5878 = vrot.lane.b32.xlu0 %v5786, 32
      %v5879 = vpop.permute.xlu0 %5878
      %5880 = vrot.lane.b32.xlu0 %v5787, 32
      %v5881 = vpop.permute.xlu0 %5880
      %5882 = vrot.lane.b32.xlu0 %v5788, 32
      %v5883 = vpop.permute.xlu0 %5882
      %5884 = vrot.lane.b32.xlu0 %v5789, 32
      %v5885 = vpop.permute.xlu0 %5884
      %5918 = vst.msk [vmem:[#allocation3 + $0x8] sm:$0xff] %vm1279, %v5823
      %5919 = vst.msk [vmem:[#allocation3 + $0x30] sm:$0xff] %vm1279, %v5825
      %5920 = vst.msk [vmem:[#allocation3 + $0x58] sm:$0xff] %vm1279, %v5827
      %5921 = vst.msk [vmem:[#allocation3 + $0x80] sm:$0xff] %vm1279, %v5829
      %5922 = vst.msk [vmem:[#allocation3 + $0xa8] sm:$0xff] %vm1279, %v5831
      %5923 = vst.msk [vmem:[#allocation3 + $0xd0] sm:$0xff] %vm1279, %v5833
      %5924 = vst.msk [vmem:[#allocation3 + $0xf8] sm:$0xff] %vm1279, %v5835
      %5925 = vst.msk [vmem:[#allocation3 + $0x120] sm:$0xff] %vm1279, %v5837
      %5926 = vst.msk [vmem:[#allocation3 + $0x148] sm:$0xff] %vm1279, %v5839
      %5927 = vst.msk [vmem:[#allocation3 + $0x170] sm:$0xff] %vm1279, %v5841
      %5928 = vst.msk [vmem:[#allocation3 + $0x198] sm:$0xff] %vm1279, %v5843
      %5929 = vst.msk [vmem:[#allocation3 + $0x1c0] sm:$0xff] %vm1279, %v5845
      %5930 = vst.msk [vmem:[#allocation3 + $0x1e8] sm:$0xff] %vm1279, %v5847
      %5931 = vst.msk [vmem:[#allocation3 + $0x210] sm:$0xff] %vm1279, %v5849
      %5932 = vst.msk [vmem:[#allocation3 + $0x238] sm:$0xff] %vm1279, %v5851
      %5933 = vst.msk [vmem:[#allocation3 + $0x260] sm:$0xff] %vm1279, %v5853
      %5934 = vst.msk [vmem:[#allocation3 + $0x288] sm:$0xff] %vm1279, %v5855
      %5935 = vst.msk [vmem:[#allocation3 + $0x2b0] sm:$0xff] %vm1279, %v5857
      %5936 = vst.msk [vmem:[#allocation3 + $0x2d8] sm:$0xff] %vm1279, %v5859
      %5937 = vst.msk [vmem:[#allocation3 + $0x300] sm:$0xff] %vm1279, %v5861
      %5938 = vst.msk [vmem:[#allocation3 + $0x328] sm:$0xff] %vm1279, %v5863
      %5939 = vst.msk [vmem:[#allocation3 + $0x350] sm:$0xff] %vm1279, %v5865
      %5940 = vst.msk [vmem:[#allocation3 + $0x378] sm:$0xff] %vm1279, %v5867
      %5941 = vst.msk [vmem:[#allocation3 + $0x3a0] sm:$0xff] %vm1279, %v5869
      %5942 = vst.msk [vmem:[#allocation3 + $0x3c8] sm:$0xff] %vm1279, %v5871
      %5943 = vst.msk [vmem:[#allocation3 + $0x3f0] sm:$0xff] %vm1279, %v5873
      %5944 = vst.msk [vmem:[#allocation3 + $0x418] sm:$0xff] %vm1279, %v5875
      %5945 = vst.msk [vmem:[#allocation3 + $0x440] sm:$0xff] %vm1279, %v5877
      %5946 = vst.msk [vmem:[#allocation3 + $0x468] sm:$0xff] %vm1279, %v5879
      %5947 = vst.msk [vmem:[#allocation3 + $0x490] sm:$0xff] %vm1279, %v5881
      %5948 = vst.msk [vmem:[#allocation3 + $0x4b8] sm:$0xff] %vm1279, %v5883
      %5949 = vst.msk [vmem:[#allocation3 + $0x4e0] sm:$0xff] %vm1279, %v5885
      %v5950 = vld [vmem:[%s1954] sm:$0xff]
      %v5951 = vld [vmem:[%s1954 + $0x8] sm:$0xff]
      %v5952 = vld [vmem:[%s1954 + $0x18] sm:$0xff]
      %v5953 = vld [vmem:[%s1954 + $0x20] sm:$0xff]
      %v5954 = vld [vmem:[%s1954 + $0x30] sm:$0xff]
      %v5955 = vld [vmem:[%s1954 + $0x38] sm:$0xff]
      %v5956 = vld [vmem:[%s1954 + $0x48] sm:$0xff]
      %v5957 = vld [vmem:[%s1954 + $0x50] sm:$0xff]
      %v5958 = vld [vmem:[%s1954 + $0x60] sm:$0xff]
      %v5959 = vld [vmem:[%s1954 + $0x68] sm:$0xff]
      %v5960 = vld [vmem:[%s1954 + $0x78] sm:$0xff]
      %v5961 = vld [vmem:[%s1954 + $0x80] sm:$0xff]
      %v5962 = vld [vmem:[%s1954 + $0x90] sm:$0xff]
      %v5963 = vld [vmem:[%s1954 + $0x98] sm:$0xff]
      %v5964 = vld [vmem:[%s1954 + $0xa8] sm:$0xff]
      %v5965 = vld [vmem:[%s1954 + $0xb0] sm:$0xff]
      %v5966 = vld [vmem:[%s1954 + $0xc0] sm:$0xff]
      %v5967 = vld [vmem:[%s1954 + $0xc8] sm:$0xff]
      %v5968 = vld [vmem:[%s1954 + $0xd8] sm:$0xff]
      %v5969 = vld [vmem:[%s1954 + $0xe0] sm:$0xff]
      %v5970 = vld [vmem:[%s1954 + $0xf0] sm:$0xff]
      %v5971 = vld [vmem:[%s1954 + $0xf8] sm:$0xff]
      %v5972 = vld [vmem:[%s1954 + $0x108] sm:$0xff]
      %v5973 = vld [vmem:[%s1954 + $0x110] sm:$0xff]
      %v5974 = vld [vmem:[%s1954 + $0x120] sm:$0xff]
      %v5975 = vld [vmem:[%s1954 + $0x128] sm:$0xff]
      %v5976 = vld [vmem:[%s1954 + $0x138] sm:$0xff]
      %v5977 = vld [vmem:[%s1954 + $0x140] sm:$0xff]
      %v5978 = vld [vmem:[%s1954 + $0x150] sm:$0xff]
      %v5979 = vld [vmem:[%s1954 + $0x158] sm:$0xff]
      %v5980 = vld [vmem:[%s1954 + $0x168] sm:$0xff]
      %v5981 = vld [vmem:[%s1954 + $0x170] sm:$0xff]
      %6014 = vrot.lane.b32.xlu0 %v5950, 64
      %v6015 = vpop.permute.xlu0 %6014
      %6016 = vrot.lane.b32.xlu0 %v5951, 64
      %v6017 = vpop.permute.xlu0 %6016
      %6018 = vrot.lane.b32.xlu0 %v5952, 64
      %v6019 = vpop.permute.xlu0 %6018
      %6020 = vrot.lane.b32.xlu0 %v5953, 64
      %v6021 = vpop.permute.xlu0 %6020
      %6022 = vrot.lane.b32.xlu0 %v5954, 64
      %v6023 = vpop.permute.xlu0 %6022
      %6024 = vrot.lane.b32.xlu0 %v5955, 64
      %v6025 = vpop.permute.xlu0 %6024
      %6026 = vrot.lane.b32.xlu0 %v5956, 64
      %v6027 = vpop.permute.xlu0 %6026
      %6028 = vrot.lane.b32.xlu0 %v5957, 64
      %v6029 = vpop.permute.xlu0 %6028
      %6030 = vrot.lane.b32.xlu0 %v5958, 64
      %v6031 = vpop.permute.xlu0 %6030
      %6032 = vrot.lane.b32.xlu0 %v5959, 64
      %v6033 = vpop.permute.xlu0 %6032
      %6034 = vrot.lane.b32.xlu0 %v5960, 64
      %v6035 = vpop.permute.xlu0 %6034
      %6036 = vrot.lane.b32.xlu0 %v5961, 64
      %v6037 = vpop.permute.xlu0 %6036
      %6038 = vrot.lane.b32.xlu0 %v5962, 64
      %v6039 = vpop.permute.xlu0 %6038
      %6040 = vrot.lane.b32.xlu0 %v5963, 64
      %v6041 = vpop.permute.xlu0 %6040
      %6042 = vrot.lane.b32.xlu0 %v5964, 64
      %v6043 = vpop.permute.xlu0 %6042
      %6044 = vrot.lane.b32.xlu0 %v5965, 64
      %v6045 = vpop.permute.xlu0 %6044
      %6046 = vrot.lane.b32.xlu0 %v5966, 64
      %v6047 = vpop.permute.xlu0 %6046
      %6048 = vrot.lane.b32.xlu0 %v5967, 64
      %v6049 = vpop.permute.xlu0 %6048
      %6050 = vrot.lane.b32.xlu0 %v5968, 64
      %v6051 = vpop.permute.xlu0 %6050
      %6052 = vrot.lane.b32.xlu0 %v5969, 64
      %v6053 = vpop.permute.xlu0 %6052
      %6054 = vrot.lane.b32.xlu0 %v5970, 64
      %v6055 = vpop.permute.xlu0 %6054
      %6056 = vrot.lane.b32.xlu0 %v5971, 64
      %v6057 = vpop.permute.xlu0 %6056
      %6058 = vrot.lane.b32.xlu0 %v5972, 64
      %v6059 = vpop.permute.xlu0 %6058
      %6060 = vrot.lane.b32.xlu0 %v5973, 64
      %v6061 = vpop.permute.xlu0 %6060
      %6062 = vrot.lane.b32.xlu0 %v5974, 64
      %v6063 = vpop.permute.xlu0 %6062
      %6064 = vrot.lane.b32.xlu0 %v5975, 64
      %v6065 = vpop.permute.xlu0 %6064
      %6066 = vrot.lane.b32.xlu0 %v5976, 64
      %v6067 = vpop.permute.xlu0 %6066
      %6068 = vrot.lane.b32.xlu0 %v5977, 64
      %v6069 = vpop.permute.xlu0 %6068
      %6070 = vrot.lane.b32.xlu0 %v5978, 64
      %v6071 = vpop.permute.xlu0 %6070
      %6072 = vrot.lane.b32.xlu0 %v5979, 64
      %v6073 = vpop.permute.xlu0 %6072
      %6074 = vrot.lane.b32.xlu0 %v5980, 64
      %v6075 = vpop.permute.xlu0 %6074
      %6076 = vrot.lane.b32.xlu0 %v5981, 64
      %v6077 = vpop.permute.xlu0 %6076
      %6110 = vst.msk [vmem:[#allocation3 + $0x8] sm:$0xff] %vm1472, %v6015
      %6111 = vst.msk [vmem:[#allocation3 + $0x30] sm:$0xff] %vm1472, %v6017
      %6112 = vst.msk [vmem:[#allocation3 + $0x58] sm:$0xff] %vm1472, %v6019
      %6113 = vst.msk [vmem:[#allocation3 + $0x80] sm:$0xff] %vm1472, %v6021
      %6114 = vst.msk [vmem:[#allocation3 + $0xa8] sm:$0xff] %vm1472, %v6023
      %6115 = vst.msk [vmem:[#allocation3 + $0xd0] sm:$0xff] %vm1472, %v6025
      %6116 = vst.msk [vmem:[#allocation3 + $0xf8] sm:$0xff] %vm1472, %v6027
      %6117 = vst.msk [vmem:[#allocation3 + $0x120] sm:$0xff] %vm1472, %v6029
      %6118 = vst.msk [vmem:[#allocation3 + $0x148] sm:$0xff] %vm1472, %v6031
      %6119 = vst.msk [vmem:[#allocation3 + $0x170] sm:$0xff] %vm1472, %v6033
      %6120 = vst.msk [vmem:[#allocation3 + $0x198] sm:$0xff] %vm1472, %v6035
      %6121 = vst.msk [vmem:[#allocation3 + $0x1c0] sm:$0xff] %vm1472, %v6037
      %6122 = vst.msk [vmem:[#allocation3 + $0x1e8] sm:$0xff] %vm1472, %v6039
      %6123 = vst.msk [vmem:[#allocation3 + $0x210] sm:$0xff] %vm1472, %v6041
      %6124 = vst.msk [vmem:[#allocation3 + $0x238] sm:$0xff] %vm1472, %v6043
      %6125 = vst.msk [vmem:[#allocation3 + $0x260] sm:$0xff] %vm1472, %v6045
      %6126 = vst.msk [vmem:[#allocation3 + $0x288] sm:$0xff] %vm1472, %v6047
      %6127 = vst.msk [vmem:[#allocation3 + $0x2b0] sm:$0xff] %vm1472, %v6049
      %6128 = vst.msk [vmem:[#allocation3 + $0x2d8] sm:$0xff] %vm1472, %v6051
      %6129 = vst.msk [vmem:[#allocation3 + $0x300] sm:$0xff] %vm1472, %v6053
      %6130 = vst.msk [vmem:[#allocation3 + $0x328] sm:$0xff] %vm1472, %v6055
      %6131 = vst.msk [vmem:[#allocation3 + $0x350] sm:$0xff] %vm1472, %v6057
      %6132 = vst.msk [vmem:[#allocation3 + $0x378] sm:$0xff] %vm1472, %v6059
      %6133 = vst.msk [vmem:[#allocation3 + $0x3a0] sm:$0xff] %vm1472, %v6061
      %6134 = vst.msk [vmem:[#allocation3 + $0x3c8] sm:$0xff] %vm1472, %v6063
      %6135 = vst.msk [vmem:[#allocation3 + $0x3f0] sm:$0xff] %vm1472, %v6065
      %6136 = vst.msk [vmem:[#allocation3 + $0x418] sm:$0xff] %vm1472, %v6067
      %6137 = vst.msk [vmem:[#allocation3 + $0x440] sm:$0xff] %vm1472, %v6069
      %6138 = vst.msk [vmem:[#allocation3 + $0x468] sm:$0xff] %vm1472, %v6071
      %6139 = vst.msk [vmem:[#allocation3 + $0x490] sm:$0xff] %vm1472, %v6073
      %6140 = vst.msk [vmem:[#allocation3 + $0x4b8] sm:$0xff] %vm1472, %v6075
      %6141 = vst.msk [vmem:[#allocation3 + $0x4e0] sm:$0xff] %vm1472, %v6077
      %v6142 = vld [vmem:[%s1954 + $0x1] sm:$0xff]
      %v6143 = vld [vmem:[%s1954 + $0x9] sm:$0xff]
      %v6144 = vld [vmem:[%s1954 + $0x19] sm:$0xff]
      %v6145 = vld [vmem:[%s1954 + $0x21] sm:$0xff]
      %v6146 = vld [vmem:[%s1954 + $0x31] sm:$0xff]
      %v6147 = vld [vmem:[%s1954 + $0x39] sm:$0xff]
      %v6148 = vld [vmem:[%s1954 + $0x49] sm:$0xff]
      %v6149 = vld [vmem:[%s1954 + $0x51] sm:$0xff]
      %v6150 = vld [vmem:[%s1954 + $0x61] sm:$0xff]
      %v6151 = vld [vmem:[%s1954 + $0x69] sm:$0xff]
      %v6152 = vld [vmem:[%s1954 + $0x79] sm:$0xff]
      %v6153 = vld [vmem:[%s1954 + $0x81] sm:$0xff]
      %v6154 = vld [vmem:[%s1954 + $0x91] sm:$0xff]
      %v6155 = vld [vmem:[%s1954 + $0x99] sm:$0xff]
      %v6156 = vld [vmem:[%s1954 + $0xa9] sm:$0xff]
      %v6157 = vld [vmem:[%s1954 + $0xb1] sm:$0xff]
      %v6158 = vld [vmem:[%s1954 + $0xc1] sm:$0xff]
      %v6159 = vld [vmem:[%s1954 + $0xc9] sm:$0xff]
      %v6160 = vld [vmem:[%s1954 + $0xd9] sm:$0xff]
      %v6161 = vld [vmem:[%s1954 + $0xe1] sm:$0xff]
      %v6162 = vld [vmem:[%s1954 + $0xf1] sm:$0xff]
      %v6163 = vld [vmem:[%s1954 + $0xf9] sm:$0xff]
      %v6164 = vld [vmem:[%s1954 + $0x109] sm:$0xff]
      %v6165 = vld [vmem:[%s1954 + $0x111] sm:$0xff]
      %v6166 = vld [vmem:[%s1954 + $0x121] sm:$0xff]
      %v6167 = vld [vmem:[%s1954 + $0x129] sm:$0xff]
      %v6168 = vld [vmem:[%s1954 + $0x139] sm:$0xff]
      %v6169 = vld [vmem:[%s1954 + $0x141] sm:$0xff]
      %v6170 = vld [vmem:[%s1954 + $0x151] sm:$0xff]
      %v6171 = vld [vmem:[%s1954 + $0x159] sm:$0xff]
      %v6172 = vld [vmem:[%s1954 + $0x169] sm:$0xff]
      %v6173 = vld [vmem:[%s1954 + $0x171] sm:$0xff]
      %6206 = vrot.lane.b32.xlu0 %v6142, 96
      %v6207 = vpop.permute.xlu0 %6206
      %6208 = vrot.lane.b32.xlu0 %v6143, 96
      %v6209 = vpop.permute.xlu0 %6208
      %6210 = vrot.lane.b32.xlu0 %v6144, 96
      %v6211 = vpop.permute.xlu0 %6210
      %6212 = vrot.lane.b32.xlu0 %v6145, 96
      %v6213 = vpop.permute.xlu0 %6212
      %6214 = vrot.lane.b32.xlu0 %v6146, 96
      %v6215 = vpop.permute.xlu0 %6214
      %6216 = vrot.lane.b32.xlu0 %v6147, 96
      %v6217 = vpop.permute.xlu0 %6216
      %6218 = vrot.lane.b32.xlu0 %v6148, 96
      %v6219 = vpop.permute.xlu0 %6218
      %6220 = vrot.lane.b32.xlu0 %v6149, 96
      %v6221 = vpop.permute.xlu0 %6220
      %6222 = vrot.lane.b32.xlu0 %v6150, 96
      %v6223 = vpop.permute.xlu0 %6222
      %6224 = vrot.lane.b32.xlu0 %v6151, 96
      %v6225 = vpop.permute.xlu0 %6224
      %6226 = vrot.lane.b32.xlu0 %v6152, 96
      %v6227 = vpop.permute.xlu0 %6226
      %6228 = vrot.lane.b32.xlu0 %v6153, 96
      %v6229 = vpop.permute.xlu0 %6228
      %6230 = vrot.lane.b32.xlu0 %v6154, 96
      %v6231 = vpop.permute.xlu0 %6230
      %6232 = vrot.lane.b32.xlu0 %v6155, 96
      %v6233 = vpop.permute.xlu0 %6232
      %6234 = vrot.lane.b32.xlu0 %v6156, 96
      %v6235 = vpop.permute.xlu0 %6234
      %6236 = vrot.lane.b32.xlu0 %v6157, 96
      %v6237 = vpop.permute.xlu0 %6236
      %6238 = vrot.lane.b32.xlu0 %v6158, 96
      %v6239 = vpop.permute.xlu0 %6238
      %6240 = vrot.lane.b32.xlu0 %v6159, 96
      %v6241 = vpop.permute.xlu0 %6240
      %6242 = vrot.lane.b32.xlu0 %v6160, 96
      %v6243 = vpop.permute.xlu0 %6242
      %6244 = vrot.lane.b32.xlu0 %v6161, 96
      %v6245 = vpop.permute.xlu0 %6244
      %6246 = vrot.lane.b32.xlu0 %v6162, 96
      %v6247 = vpop.permute.xlu0 %6246
      %6248 = vrot.lane.b32.xlu0 %v6163, 96
      %v6249 = vpop.permute.xlu0 %6248
      %6250 = vrot.lane.b32.xlu0 %v6164, 96
      %v6251 = vpop.permute.xlu0 %6250
      %6252 = vrot.lane.b32.xlu0 %v6165, 96
      %v6253 = vpop.permute.xlu0 %6252
      %6254 = vrot.lane.b32.xlu0 %v6166, 96
      %v6255 = vpop.permute.xlu0 %6254
      %6256 = vrot.lane.b32.xlu0 %v6167, 96
      %v6257 = vpop.permute.xlu0 %6256
      %6258 = vrot.lane.b32.xlu0 %v6168, 96
      %v6259 = vpop.permute.xlu0 %6258
      %6260 = vrot.lane.b32.xlu0 %v6169, 96
      %v6261 = vpop.permute.xlu0 %6260
      %6262 = vrot.lane.b32.xlu0 %v6170, 96
      %v6263 = vpop.permute.xlu0 %6262
      %6264 = vrot.lane.b32.xlu0 %v6171, 96
      %v6265 = vpop.permute.xlu0 %6264
      %6266 = vrot.lane.b32.xlu0 %v6172, 96
      %v6267 = vpop.permute.xlu0 %6266
      %6268 = vrot.lane.b32.xlu0 %v6173, 96
      %v6269 = vpop.permute.xlu0 %6268
      %6302 = vst.msk [vmem:[#allocation3 + $0x8] sm:$0xff] %vm1665, %v6207
      %6303 = vst.msk [vmem:[#allocation3 + $0x30] sm:$0xff] %vm1665, %v6209
      %6304 = vst.msk [vmem:[#allocation3 + $0x58] sm:$0xff] %vm1665, %v6211
      %6305 = vst.msk [vmem:[#allocation3 + $0x80] sm:$0xff] %vm1665, %v6213
      %6306 = vst.msk [vmem:[#allocation3 + $0xa8] sm:$0xff] %vm1665, %v6215
      %6307 = vst.msk [vmem:[#allocation3 + $0xd0] sm:$0xff] %vm1665, %v6217
      %6308 = vst.msk [vmem:[#allocation3 + $0xf8] sm:$0xff] %vm1665, %v6219
      %6309 = vst.msk [vmem:[#allocation3 + $0x120] sm:$0xff] %vm1665, %v6221
      %6310 = vst.msk [vmem:[#allocation3 + $0x148] sm:$0xff] %vm1665, %v6223
      %6311 = vst.msk [vmem:[#allocation3 + $0x170] sm:$0xff] %vm1665, %v6225
      %6312 = vst.msk [vmem:[#allocation3 + $0x198] sm:$0xff] %vm1665, %v6227
      %6313 = vst.msk [vmem:[#allocation3 + $0x1c0] sm:$0xff] %vm1665, %v6229
      %6314 = vst.msk [vmem:[#allocation3 + $0x1e8] sm:$0xff] %vm1665, %v6231
      %6315 = vst.msk [vmem:[#allocation3 + $0x210] sm:$0xff] %vm1665, %v6233
      %6316 = vst.msk [vmem:[#allocation3 + $0x238] sm:$0xff] %vm1665, %v6235
      %6317 = vst.msk [vmem:[#allocation3 + $0x260] sm:$0xff] %vm1665, %v6237
      %6318 = vst.msk [vmem:[#allocation3 + $0x288] sm:$0xff] %vm1665, %v6239
      %6319 = vst.msk [vmem:[#allocation3 + $0x2b0] sm:$0xff] %vm1665, %v6241
      %6320 = vst.msk [vmem:[#allocation3 + $0x2d8] sm:$0xff] %vm1665, %v6243
      %6321 = vst.msk [vmem:[#allocation3 + $0x300] sm:$0xff] %vm1665, %v6245
      %6322 = vst.msk [vmem:[#allocation3 + $0x328] sm:$0xff] %vm1665, %v6247
      %6323 = vst.msk [vmem:[#allocation3 + $0x350] sm:$0xff] %vm1665, %v6249
      %6324 = vst.msk [vmem:[#allocation3 + $0x378] sm:$0xff] %vm1665, %v6251
      %6325 = vst.msk [vmem:[#allocation3 + $0x3a0] sm:$0xff] %vm1665, %v6253
      %6326 = vst.msk [vmem:[#allocation3 + $0x3c8] sm:$0xff] %vm1665, %v6255
      %6327 = vst.msk [vmem:[#allocation3 + $0x3f0] sm:$0xff] %vm1665, %v6257
      %6328 = vst.msk [vmem:[#allocation3 + $0x418] sm:$0xff] %vm1665, %v6259
      %6329 = vst.msk [vmem:[#allocation3 + $0x440] sm:$0xff] %vm1665, %v6261
      %6330 = vst.msk [vmem:[#allocation3 + $0x468] sm:$0xff] %vm1665, %v6263
      %6331 = vst.msk [vmem:[#allocation3 + $0x490] sm:$0xff] %vm1665, %v6265
      %6332 = vst.msk [vmem:[#allocation3 + $0x4b8] sm:$0xff] %vm1665, %v6267
      %6333 = vst.msk [vmem:[#allocation3 + $0x4e0] sm:$0xff] %vm1665, %v6269
      %v6334 = vld [vmem:[%s1954 + $0x2] sm:$0xff]
      %v6335 = vld [vmem:[%s1954 + $0xa] sm:$0xff]
      %v6336 = vld [vmem:[%s1954 + $0x1a] sm:$0xff]
      %v6337 = vld [vmem:[%s1954 + $0x22] sm:$0xff]
      %v6338 = vld [vmem:[%s1954 + $0x32] sm:$0xff]
      %v6339 = vld [vmem:[%s1954 + $0x3a] sm:$0xff]
      %v6340 = vld [vmem:[%s1954 + $0x4a] sm:$0xff]
      %v6341 = vld [vmem:[%s1954 + $0x52] sm:$0xff]
      %v6342 = vld [vmem:[%s1954 + $0x62] sm:$0xff]
      %v6343 = vld [vmem:[%s1954 + $0x6a] sm:$0xff]
      %v6344 = vld [vmem:[%s1954 + $0x7a] sm:$0xff]
      %v6345 = vld [vmem:[%s1954 + $0x82] sm:$0xff]
      %v6346 = vld [vmem:[%s1954 + $0x92] sm:$0xff]
      %v6347 = vld [vmem:[%s1954 + $0x9a] sm:$0xff]
      %v6348 = vld [vmem:[%s1954 + $0xaa] sm:$0xff]
      %v6349 = vld [vmem:[%s1954 + $0xb2] sm:$0xff]
      %v6350 = vld [vmem:[%s1954 + $0xc2] sm:$0xff]
      %v6351 = vld [vmem:[%s1954 + $0xca] sm:$0xff]
      %v6352 = vld [vmem:[%s1954 + $0xda] sm:$0xff]
      %v6353 = vld [vmem:[%s1954 + $0xe2] sm:$0xff]
      %v6354 = vld [vmem:[%s1954 + $0xf2] sm:$0xff]
      %v6355 = vld [vmem:[%s1954 + $0xfa] sm:$0xff]
      %v6356 = vld [vmem:[%s1954 + $0x10a] sm:$0xff]
      %v6357 = vld [vmem:[%s1954 + $0x112] sm:$0xff]
      %v6358 = vld [vmem:[%s1954 + $0x122] sm:$0xff]
      %v6359 = vld [vmem:[%s1954 + $0x12a] sm:$0xff]
      %v6360 = vld [vmem:[%s1954 + $0x13a] sm:$0xff]
      %v6361 = vld [vmem:[%s1954 + $0x142] sm:$0xff]
      %v6362 = vld [vmem:[%s1954 + $0x152] sm:$0xff]
      %v6363 = vld [vmem:[%s1954 + $0x15a] sm:$0xff]
      %v6364 = vld [vmem:[%s1954 + $0x16a] sm:$0xff]
      %v6365 = vld [vmem:[%s1954 + $0x172] sm:$0xff]
      %6366 = vst.msk [vmem:[#allocation3 + $0x10] sm:$0xff] %vm562, %v6334
      %6367 = vst.msk [vmem:[#allocation3 + $0x38] sm:$0xff] %vm562, %v6335
      %6368 = vst.msk [vmem:[#allocation3 + $0x60] sm:$0xff] %vm562, %v6336
      %6369 = vst.msk [vmem:[#allocation3 + $0x88] sm:$0xff] %vm562, %v6337
      %6370 = vst.msk [vmem:[#allocation3 + $0xb0] sm:$0xff] %vm562, %v6338
      %6371 = vst.msk [vmem:[#allocation3 + $0xd8] sm:$0xff] %vm562, %v6339
      %6372 = vst.msk [vmem:[#allocation3 + $0x100] sm:$0xff] %vm562, %v6340
      %6373 = vst.msk [vmem:[#allocation3 + $0x128] sm:$0xff] %vm562, %v6341
      %6374 = vst.msk [vmem:[#allocation3 + $0x150] sm:$0xff] %vm562, %v6342
      %6375 = vst.msk [vmem:[#allocation3 + $0x178] sm:$0xff] %vm562, %v6343
      %6376 = vst.msk [vmem:[#allocation3 + $0x1a0] sm:$0xff] %vm562, %v6344
      %6377 = vst.msk [vmem:[#allocation3 + $0x1c8] sm:$0xff] %vm562, %v6345
      %6378 = vst.msk [vmem:[#allocation3 + $0x1f0] sm:$0xff] %vm562, %v6346
      %6379 = vst.msk [vmem:[#allocation3 + $0x218] sm:$0xff] %vm562, %v6347
      %6380 = vst.msk [vmem:[#allocation3 + $0x240] sm:$0xff] %vm562, %v6348
      %6381 = vst.msk [vmem:[#allocation3 + $0x268] sm:$0xff] %vm562, %v6349
      %6382 = vst.msk [vmem:[#allocation3 + $0x290] sm:$0xff] %vm562, %v6350
      %6383 = vst.msk [vmem:[#allocation3 + $0x2b8] sm:$0xff] %vm562, %v6351
      %6384 = vst.msk [vmem:[#allocation3 + $0x2e0] sm:$0xff] %vm562, %v6352
      %6385 = vst.msk [vmem:[#allocation3 + $0x308] sm:$0xff] %vm562, %v6353
      %6386 = vst.msk [vmem:[#allocation3 + $0x330] sm:$0xff] %vm562, %v6354
      %6387 = vst.msk [vmem:[#allocation3 + $0x358] sm:$0xff] %vm562, %v6355
      %6388 = vst.msk [vmem:[#allocation3 + $0x380] sm:$0xff] %vm562, %v6356
      %6389 = vst.msk [vmem:[#allocation3 + $0x3a8] sm:$0xff] %vm562, %v6357
      %6390 = vst.msk [vmem:[#allocation3 + $0x3d0] sm:$0xff] %vm562, %v6358
      %6391 = vst.msk [vmem:[#allocation3 + $0x3f8] sm:$0xff] %vm562, %v6359
      %6392 = vst.msk [vmem:[#allocation3 + $0x420] sm:$0xff] %vm562, %v6360
      %6393 = vst.msk [vmem:[#allocation3 + $0x448] sm:$0xff] %vm562, %v6361
      %6394 = vst.msk [vmem:[#allocation3 + $0x470] sm:$0xff] %vm562, %v6362
      %6395 = vst.msk [vmem:[#allocation3 + $0x498] sm:$0xff] %vm562, %v6363
      %6396 = vst.msk [vmem:[#allocation3 + $0x4c0] sm:$0xff] %vm562, %v6364
      %6397 = vst.msk [vmem:[#allocation3 + $0x4e8] sm:$0xff] %vm562, %v6365
      %v6398 = vld [vmem:[#allocation3] sm:$0xff]
      %v6399 = vld [vmem:[#allocation3 + $0x8] sm:$0xff]
      %v6400 = vld [vmem:[#allocation3 + $0x10] sm:$0xff]
      %v6401 = vld [vmem:[#allocation3 + $0x28] sm:$0xff]
      %v6402 = vld [vmem:[#allocation3 + $0x30] sm:$0xff]
      %v6403 = vld [vmem:[#allocation3 + $0x38] sm:$0xff]
      %v6404 = vld [vmem:[#allocation3 + $0x50] sm:$0xff]
      %v6405 = vld [vmem:[#allocation3 + $0x58] sm:$0xff]
      %v6406 = vld [vmem:[#allocation3 + $0x60] sm:$0xff]
      %v6407 = vld [vmem:[#allocation3 + $0x78] sm:$0xff]
      %v6408 = vld [vmem:[#allocation3 + $0x80] sm:$0xff]
      %v6409 = vld [vmem:[#allocation3 + $0x88] sm:$0xff]
      %v6410 = vld [vmem:[#allocation3 + $0xa0] sm:$0xff]
      %v6411 = vld [vmem:[#allocation3 + $0xa8] sm:$0xff]
      %v6412 = vld [vmem:[#allocation3 + $0xb0] sm:$0xff]
      %v6413 = vld [vmem:[#allocation3 + $0xc8] sm:$0xff]
      %v6414 = vld [vmem:[#allocation3 + $0xd0] sm:$0xff]
      %v6415 = vld [vmem:[#allocation3 + $0xd8] sm:$0xff]
      %v6416 = vld [vmem:[#allocation3 + $0xf0] sm:$0xff]
      %v6417 = vld [vmem:[#allocation3 + $0xf8] sm:$0xff]
      %v6418 = vld [vmem:[#allocation3 + $0x100] sm:$0xff]
      %v6419 = vld [vmem:[#allocation3 + $0x118] sm:$0xff]
      %v6420 = vld [vmem:[#allocation3 + $0x120] sm:$0xff]
      %v6421 = vld [vmem:[#allocation3 + $0x128] sm:$0xff]
      %v6422 = vld [vmem:[#allocation3 + $0x140] sm:$0xff]
      %v6423 = vld [vmem:[#allocation3 + $0x148] sm:$0xff]
      %v6424 = vld [vmem:[#allocation3 + $0x150] sm:$0xff]
      %v6425 = vld [vmem:[#allocation3 + $0x168] sm:$0xff]
      %v6426 = vld [vmem:[#allocation3 + $0x170] sm:$0xff]
      %v6427 = vld [vmem:[#allocation3 + $0x178] sm:$0xff]
      %v6428 = vld [vmem:[#allocation3 + $0x190] sm:$0xff]
      %v6429 = vld [vmem:[#allocation3 + $0x198] sm:$0xff]
      %v6430 = vld [vmem:[#allocation3 + $0x1a0] sm:$0xff]
      %v6431 = vld [vmem:[#allocation3 + $0x1b8] sm:$0xff]
      %v6432 = vld [vmem:[#allocation3 + $0x1c0] sm:$0xff]
      %v6433 = vld [vmem:[#allocation3 + $0x1c8] sm:$0xff]
      %v6434 = vld [vmem:[#allocation3 + $0x1e0] sm:$0xff]
      %v6435 = vld [vmem:[#allocation3 + $0x1e8] sm:$0xff]
      %v6436 = vld [vmem:[#allocation3 + $0x1f0] sm:$0xff]
      %v6437 = vld [vmem:[#allocation3 + $0x208] sm:$0xff]
      %v6438 = vld [vmem:[#allocation3 + $0x210] sm:$0xff]
      %v6439 = vld [vmem:[#allocation3 + $0x218] sm:$0xff]
      %v6440 = vld [vmem:[#allocation3 + $0x230] sm:$0xff]
      %v6441 = vld [vmem:[#allocation3 + $0x238] sm:$0xff]
      %v6442 = vld [vmem:[#allocation3 + $0x240] sm:$0xff]
      %v6443 = vld [vmem:[#allocation3 + $0x258] sm:$0xff]
      %v6444 = vld [vmem:[#allocation3 + $0x260] sm:$0xff]
      %v6445 = vld [vmem:[#allocation3 + $0x268] sm:$0xff]
      %v6446 = vld [vmem:[#allocation3 + $0x280] sm:$0xff]
      %v6447 = vld [vmem:[#allocation3 + $0x288] sm:$0xff]
      %v6448 = vld [vmem:[#allocation3 + $0x290] sm:$0xff]
      %v6449 = vld [vmem:[#allocation3 + $0x2a8] sm:$0xff]
      %v6450 = vld [vmem:[#allocation3 + $0x2b0] sm:$0xff]
      %v6451 = vld [vmem:[#allocation3 + $0x2b8] sm:$0xff]
      %v6452 = vld [vmem:[#allocation3 + $0x2d0] sm:$0xff]
      %v6453 = vld [vmem:[#allocation3 + $0x2d8] sm:$0xff]
      %v6454 = vld [vmem:[#allocation3 + $0x2e0] sm:$0xff]
      %v6455 = vld [vmem:[#allocation3 + $0x2f8] sm:$0xff]
      %v6456 = vld [vmem:[#allocation3 + $0x300] sm:$0xff]
      %v6457 = vld [vmem:[#allocation3 + $0x308] sm:$0xff]
      %v6458 = vld [vmem:[#allocation3 + $0x320] sm:$0xff]
      %v6459 = vld [vmem:[#allocation3 + $0x328] sm:$0xff]
      %v6460 = vld [vmem:[#allocation3 + $0x330] sm:$0xff]
      %v6461 = vld [vmem:[#allocation3 + $0x348] sm:$0xff]
      %v6462 = vld [vmem:[#allocation3 + $0x350] sm:$0xff]
      %v6463 = vld [vmem:[#allocation3 + $0x358] sm:$0xff]
      %v6464 = vld [vmem:[#allocation3 + $0x370] sm:$0xff]
      %v6465 = vld [vmem:[#allocation3 + $0x378] sm:$0xff]
      %v6466 = vld [vmem:[#allocation3 + $0x380] sm:$0xff]
      %v6467 = vld [vmem:[#allocation3 + $0x398] sm:$0xff]
      %v6468 = vld [vmem:[#allocation3 + $0x3a0] sm:$0xff]
      %v6469 = vld [vmem:[#allocation3 + $0x3a8] sm:$0xff]
      %v6470 = vld [vmem:[#allocation3 + $0x3c0] sm:$0xff]
      %v6471 = vld [vmem:[#allocation3 + $0x3c8] sm:$0xff]
      %v6472 = vld [vmem:[#allocation3 + $0x3d0] sm:$0xff]
      %v6473 = vld [vmem:[#allocation3 + $0x3e8] sm:$0xff]
      %v6474 = vld [vmem:[#allocation3 + $0x3f0] sm:$0xff]
      %v6475 = vld [vmem:[#allocation3 + $0x3f8] sm:$0xff]
      %v6476 = vld [vmem:[#allocation3 + $0x410] sm:$0xff]
      %v6477 = vld [vmem:[#allocation3 + $0x418] sm:$0xff]
      %v6478 = vld [vmem:[#allocation3 + $0x420] sm:$0xff]
      %v6479 = vld [vmem:[#allocation3 + $0x438] sm:$0xff]
      %v6480 = vld [vmem:[#allocation3 + $0x440] sm:$0xff]
      %v6481 = vld [vmem:[#allocation3 + $0x448] sm:$0xff]
      %v6482 = vld [vmem:[#allocation3 + $0x460] sm:$0xff]
      %v6483 = vld [vmem:[#allocation3 + $0x468] sm:$0xff]
      %v6484 = vld [vmem:[#allocation3 + $0x470] sm:$0xff]
      %v6485 = vld [vmem:[#allocation3 + $0x488] sm:$0xff]
      %v6486 = vld [vmem:[#allocation3 + $0x490] sm:$0xff]
      %v6487 = vld [vmem:[#allocation3 + $0x498] sm:$0xff]
      %v6488 = vld [vmem:[#allocation3 + $0x4b0] sm:$0xff]
      %v6489 = vld [vmem:[#allocation3 + $0x4b8] sm:$0xff]
      %v6490 = vld [vmem:[#allocation3 + $0x4c0] sm:$0xff]
      %v6491 = vld [vmem:[#allocation3 + $0x4d8] sm:$0xff]
      %v6492 = vld [vmem:[#allocation3 + $0x4e0] sm:$0xff]
      %v6493 = vld [vmem:[#allocation3 + $0x4e8] sm:$0xff]
      %v6494 = vld [vmem:[%s5] sm:$0xff]
      %v6495 = vld [vmem:[%s5 + $0x8] sm:$0xff]
      %v6496 = vld [vmem:[%s5 + $0x10] sm:$0xff]
      %v6497 = vld [vmem:[%s5 + $0x18] sm:$0xff]
      %v6498 = vld [vmem:[%s5 + $0x20] sm:$0xff]
      %v6499 = vld [vmem:[%s5 + $0x28] sm:$0xff]
      %v6500 = vld [vmem:[%s5 + $0x30] sm:$0xff]
      %v6501 = vld [vmem:[%s5 + $0x38] sm:$0xff]
      %v6502 = vld [vmem:[%s5 + $0x40] sm:$0xff]
      %v6503 = vld [vmem:[%s5 + $0x48] sm:$0xff]
      %v6504 = vld [vmem:[%s5 + $0x50] sm:$0xff]
      %v6505 = vld [vmem:[%s5 + $0x58] sm:$0xff]
      %v6506 = vld [vmem:[%s5 + $0x60] sm:$0xff]
      %v6507 = vld [vmem:[%s5 + $0x68] sm:$0xff]
      %v6508 = vld [vmem:[%s5 + $0x70] sm:$0xff]
      %v6509 = vld [vmem:[%s5 + $0x78] sm:$0xff]
      %v6510 = vld [vmem:[%s5 + $0x80] sm:$0xff]
      %v6511 = vld [vmem:[%s5 + $0x88] sm:$0xff]
      %v6512 = vld [vmem:[%s5 + $0x90] sm:$0xff]
      %v6513 = vld [vmem:[%s5 + $0x98] sm:$0xff]
      %v6514 = vld [vmem:[%s5 + $0xa0] sm:$0xff]
      %v6515 = vld [vmem:[%s5 + $0xa8] sm:$0xff]
      %v6516 = vld [vmem:[%s5 + $0xb0] sm:$0xff]
      %v6517 = vld [vmem:[%s5 + $0xb8] sm:$0xff]
      %v6518 = vld [vmem:[%s5 + $0xc0] sm:$0xff]
      %v6519 = vld [vmem:[%s5 + $0xc8] sm:$0xff]
      %v6520 = vld [vmem:[%s5 + $0xd0] sm:$0xff]
      %v6521 = vld [vmem:[%s5 + $0xd8] sm:$0xff]
      %v6522 = vld [vmem:[%s5 + $0xe0] sm:$0xff]
      %v6523 = vld [vmem:[%s5 + $0xe8] sm:$0xff]
      %v6524 = vld [vmem:[%s5 + $0xf0] sm:$0xff]
      %v6525 = vld [vmem:[%s5 + $0xf8] sm:$0xff]
      %v6526 = vld [vmem:[%s5 + $0x100] sm:$0xff]
      %v6527 = vld [vmem:[%s5 + $0x108] sm:$0xff]
      %v6528 = vld [vmem:[%s5 + $0x110] sm:$0xff]
      %v6529 = vld [vmem:[%s5 + $0x118] sm:$0xff]
      %v6530 = vld [vmem:[%s6] sm:$0x1]
      %v6532 = vlaneseq
      %v6533 = vshrl.u32 %v6532, 7
      %v6534 = vsub.s32 0, %v6533
      %v6535 = vrot.slane %v6530, %v6534
      %v6538 = vsel %vm562, %v6400, 0
      %v6541 = vsel %vm562, %v6403, 0
      %v6544 = vsel %vm562, %v6406, 0
      %v6547 = vsel %vm562, %v6409, 0
      %v6550 = vsel %vm562, %v6412, 0
      %v6553 = vsel %vm562, %v6415, 0
      %v6556 = vsel %vm562, %v6418, 0
      %v6559 = vsel %vm562, %v6421, 0
      %v6562 = vsel %vm562, %v6424, 0
      %v6565 = vsel %vm562, %v6427, 0
      %v6568 = vsel %vm562, %v6430, 0
      %v6571 = vsel %vm562, %v6433, 0
      %v6574 = vsel %vm562, %v6436, 0
      %v6577 = vsel %vm562, %v6439, 0
      %v6580 = vsel %vm562, %v6442, 0
      %v6583 = vsel %vm562, %v6445, 0
      %v6586 = vsel %vm562, %v6448, 0
      %v6589 = vsel %vm562, %v6451, 0
      %v6592 = vsel %vm562, %v6454, 0
      %v6595 = vsel %vm562, %v6457, 0
      %v6598 = vsel %vm562, %v6460, 0
      %v6601 = vsel %vm562, %v6463, 0
      %v6604 = vsel %vm562, %v6466, 0
      %v6607 = vsel %vm562, %v6469, 0
      %v6610 = vsel %vm562, %v6472, 0
      %v6613 = vsel %vm562, %v6475, 0
      %v6616 = vsel %vm562, %v6478, 0
      %v6619 = vsel %vm562, %v6481, 0
      %v6622 = vsel %vm562, %v6484, 0
      %v6625 = vsel %vm562, %v6487, 0
      %v6628 = vsel %vm562, %v6490, 0
      %v6631 = vsel %vm562, %v6493, 0
      %6633 = vmatprep.subr.mxu0 0.0
      %6634 = vmatpush1.msra.mxu0 %v6494
      %6635 = vmatprep.subr.mxu0 0.0
      %6636 = vmatpush1.msra.mxu0 %v6495
      %6637 = vmatprep.subr.mxu0 0.0
      %6638 = vmatpush1.msra.mxu0 %v6496
      %6639 = vmatprep.subr.mxu0 0.0
      %6640 = vmatpush1.msra.mxu0 %v6497
      %6641 = vmatprep.subr.mxu0 0.0
      %6642 = vmatpush1.msra.mxu0 %v6498
      %6643 = vmatprep.subr.mxu0 0.0
      %6644 = vmatpush1.msra.mxu0 %v6499
      %6645 = vmatprep.subr.mxu0 0.0
      %6646 = vmatpush1.msra.mxu0 %v6500
      %6647 = vmatprep.subr.mxu0 0.0
      %6648 = vmatpush1.msra.mxu0 %v6501
      %6649 = vmatprep.subr.mxu0 0.0
      %6650 = vmatpush1.msra.mxu0 %v6502
      %6651 = vmatprep.subr.mxu0 0.0
      %6652 = vmatpush1.msra.mxu0 %v6503
      %6653 = vmatprep.subr.mxu0 0.0
      %6654 = vmatpush1.msra.mxu0 %v6504
      %6655 = vmatprep.subr.mxu0 0.0
      %6656 = vmatpush1.msra.mxu0 %v6505
      %6657 = vmatprep.subr.mxu0 0.0
      %6658 = vmatpush1.msra.mxu0 %v6506
      %6659 = vmatprep.subr.mxu0 0.0
      %6660 = vmatpush1.msra.mxu0 %v6507
      %6661 = vmatprep.subr.mxu0 0.0
      %6662 = vmatpush1.msra.mxu0 %v6508
      %6663 = vmatprep.subr.mxu0 0.0
      %6664 = vmatpush1.msra.mxu0 %v6509
      %6665 = vmatprep.subr.mxu0 0.0
      %6666 = vmatpush1.msra.mxu0 %v6510
      %6667 = vmatprep.subr.mxu0 0.0
      %6668 = vmatpush1.msra.mxu0 %v6511
      %6669 = vmatprep.subr.mxu0 0.0
      %6670 = vmatpush1.msra.mxu0 %v6512
      %6671 = vmatprep.subr.mxu0 0.0
      %6672 = vmatpush1.msra.mxu0 %v6513
      %6673 = vmatprep.subr.mxu0 0.0
      %6674 = vmatpush1.msra.mxu0 %v6514
      %6675 = vmatprep.subr.mxu0 0.0
      %6676 = vmatpush1.msra.mxu0 %v6515
      %6677 = vmatprep.subr.mxu0 0.0
      %6678 = vmatpush1.msra.mxu0 %v6516
      %6679 = vmatprep.subr.mxu0 0.0
      %6680 = vmatpush1.msra.mxu0 %v6517
      %6681 = vmatprep.subr.mxu0 0.0
      %6682 = vmatpush1.msra.mxu0 %v6518
      %6683 = vmatprep.subr.mxu0 0.0
      %6684 = vmatpush1.msra.mxu0 %v6519
      %6685 = vmatprep.subr.mxu0 0.0
      %6686 = vmatpush1.msra.mxu0 %v6520
      %6687 = vmatprep.subr.mxu0 0.0
      %6688 = vmatpush1.msra.mxu0 %v6521
      %6689 = vmatprep.subr.mxu0 0.0
      %6690 = vmatpush1.msra.mxu0 %v6522
      %6691 = vmatprep.subr.mxu0 0.0
      %6692 = vmatpush1.msra.mxu0 %v6523
      %6693 = vmatprep.subr.mxu0 0.0
      %6694 = vmatpush1.msra.mxu0 %v6524
      %6695 = vmatprep.subr.mxu0 0.0
      %6696 = vmatpush1.msra.mxu0 %v6525
      %6697 = vmatprep.mubr.f32.mxu0 %v6399
      %6698 = vmatmul.mubr.f32.gmra.mrb[0].mxu0 %v6398
      %v6699 = vpop.f32.mrb[0].mxu0
      %v6700 = vadd.f32 %v6535, %v6699
      %v6701 = vpop.f32.mrb[0].mxu0
      %6702 = vmatprep.mubr.f32.mxu0 %v6402
      %6703 = vmatmul.mubr.f32.gmra.mrb[0].mxu0 %v6401
      %v6704 = vpop.f32.mrb[0].mxu0
      %v6705 = vadd.f32 %v6535, %v6704
      %v6706 = vpop.f32.mrb[0].mxu0
      %6707 = vmatprep.mubr.f32.mxu0 %v6405
      %6708 = vmatmul.mubr.f32.gmra.mrb[0].mxu0 %v6404
      %v6709 = vpop.f32.mrb[0].mxu0
      %v6710 = vadd.f32 %v6535, %v6709
      %v6711 = vpop.f32.mrb[0].mxu0
      %6712 = vmatprep.mubr.f32.mxu0 %v6408
      %6713 = vmatmul.mubr.f32.gmra.mrb[0].mxu0 %v6407
      %v6714 = vpop.f32.mrb[0].mxu0
      %v6715 = vadd.f32 %v6535, %v6714
      %v6716 = vpop.f32.mrb[0].mxu0
      %6717 = vmatprep.mubr.f32.mxu0 %v6411
      %6718 = vmatmul.mubr.f32.gmra.mrb[0].mxu0 %v6410
      %v6719 = vpop.f32.mrb[0].mxu0
      %v6720 = vadd.f32 %v6535, %v6719
      %v6721 = vpop.f32.mrb[0].mxu0
      %6722 = vmatprep.mubr.f32.mxu0 %v6414
      %6723 = vmatmul.mubr.f32.gmra.mrb[0].mxu0 %v6413
      %v6724 = vpop.f32.mrb[0].mxu0
      %v6725 = vadd.f32 %v6535, %v6724
      %v6726 = vpop.f32.mrb[0].mxu0
      %6727 = vmatprep.mubr.f32.mxu0 %v6417
      %6728 = vmatmul.mubr.f32.gmra.mrb[0].mxu0 %v6416
      %v6729 = vpop.f32.mrb[0].mxu0
      %v6730 = vadd.f32 %v6535, %v6729
      %v6731 = vpop.f32.mrb[0].mxu0
      %6732 = vmatprep.mubr.f32.mxu0 %v6420
      %6733 = vmatmul.mubr.f32.gmra.mrb[0].mxu0 %v6419
      %v6734 = vpop.f32.mrb[0].mxu0
      %v6735 = vadd.f32 %v6535, %v6734
      %v6736 = vpop.f32.mrb[0].mxu0
      %6737 = vmatprep.mubr.f32.mxu0 %v6423
      %6738 = vmatmul.mubr.f32.gmra.mrb[0].mxu0 %v6422
      %v6739 = vpop.f32.mrb[0].mxu0
      %v6740 = vadd.f32 %v6535, %v6739
      %v6741 = vpop.f32.mrb[0].mxu0
      %6742 = vmatprep.mubr.f32.mxu0 %v6426
      %6743 = vmatmul.mubr.f32.gmra.mrb[0].mxu0 %v6425
      %v6744 = vpop.f32.mrb[0].mxu0
      %v6745 = vadd.f32 %v6535, %v6744
      %v6746 = vpop.f32.mrb[0].mxu0
      %6747 = vmatprep.mubr.f32.mxu0 %v6429
      %6748 = vmatmul.mubr.f32.gmra.mrb[0].mxu0 %v6428
      %v6749 = vpop.f32.mrb[0].mxu0
      %v6750 = vadd.f32 %v6535, %v6749
      %v6751 = vpop.f32.mrb[0].mxu0
      %6752 = vmatprep.mubr.f32.mxu0 %v6432
      %6753 = vmatmul.mubr.f32.gmra.mrb[0].mxu0 %v6431
      %v6754 = vpop.f32.mrb[0].mxu0
      %v6755 = vadd.f32 %v6535, %v6754
      %v6756 = vpop.f32.mrb[0].mxu0
      %6757 = vmatprep.mubr.f32.mxu0 %v6435
      %6758 = vmatmul.mubr.f32.gmra.mrb[0].mxu0 %v6434
      %v6759 = vpop.f32.mrb[0].mxu0
      %v6760 = vadd.f32 %v6535, %v6759
      %v6761 = vpop.f32.mrb[0].mxu0
      %6762 = vmatprep.mubr.f32.mxu0 %v6438
      %6763 = vmatmul.mubr.f32.gmra.mrb[0].mxu0 %v6437
      %v6764 = vpop.f32.mrb[0].mxu0
      %v6765 = vadd.f32 %v6535, %v6764
      %v6766 = vpop.f32.mrb[0].mxu0
      %6767 = vmatprep.mubr.f32.mxu0 %v6441
      %6768 = vmatmul.mubr.f32.gmra.mrb[0].mxu0 %v6440
      %v6769 = vpop.f32.mrb[0].mxu0
      %v6770 = vadd.f32 %v6535, %v6769
      %v6771 = vpop.f32.mrb[0].mxu0
      %6772 = vmatprep.mubr.f32.mxu0 %v6444
      %6773 = vmatmul.mubr.f32.gmra.mrb[0].mxu0 %v6443
      %v6774 = vpop.f32.mrb[0].mxu0
      %v6775 = vadd.f32 %v6535, %v6774
      %v6776 = vpop.f32.mrb[0].mxu0
      %6777 = vmatprep.mubr.f32.mxu0 %v6447
      %6778 = vmatmul.mubr.f32.gmra.mrb[0].mxu0 %v6446
      %v6779 = vpop.f32.mrb[0].mxu0
      %v6780 = vadd.f32 %v6535, %v6779
      %v6781 = vpop.f32.mrb[0].mxu0
      %6782 = vmatprep.mubr.f32.mxu0 %v6450
      %6783 = vmatmul.mubr.f32.gmra.mrb[0].mxu0 %v6449
      %v6784 = vpop.f32.mrb[0].mxu0
      %v6785 = vadd.f32 %v6535, %v6784
      %v6786 = vpop.f32.mrb[0].mxu0
      %6787 = vmatprep.mubr.f32.mxu0 %v6453
      %6788 = vmatmul.mubr.f32.gmra.mrb[0].mxu0 %v6452
      %v6789 = vpop.f32.mrb[0].mxu0
      %v6790 = vadd.f32 %v6535, %v6789
      %v6791 = vpop.f32.mrb[0].mxu0
      %6792 = vmatprep.mubr.f32.mxu0 %v6456
      %6793 = vmatmul.mubr.f32.gmra.mrb[0].mxu0 %v6455
      %v6794 = vpop.f32.mrb[0].mxu0
      %v6795 = vadd.f32 %v6535, %v6794
      %v6796 = vpop.f32.mrb[0].mxu0
      %6797 = vmatprep.mubr.f32.mxu0 %v6459
      %6798 = vmatmul.mubr.f32.gmra.mrb[0].mxu0 %v6458
      %v6799 = vpop.f32.mrb[0].mxu0
      %v6800 = vadd.f32 %v6535, %v6799
      %v6801 = vpop.f32.mrb[0].mxu0
      %6802 = vmatprep.mubr.f32.mxu0 %v6462
      %6803 = vmatmul.mubr.f32.gmra.mrb[0].mxu0 %v6461
      %v6804 = vpop.f32.mrb[0].mxu0
      %v6805 = vadd.f32 %v6535, %v6804
      %v6806 = vpop.f32.mrb[0].mxu0
      %6807 = vmatprep.mubr.f32.mxu0 %v6465
      %6808 = vmatmul.mubr.f32.gmra.mrb[0].mxu0 %v6464
      %v6809 = vpop.f32.mrb[0].mxu0
      %v6810 = vadd.f32 %v6535, %v6809
      %v6811 = vpop.f32.mrb[0].mxu0
      %6812 = vmatprep.mubr.f32.mxu0 %v6468
      %6813 = vmatmul.mubr.f32.gmra.mrb[0].mxu0 %v6467
      %v6814 = vpop.f32.mrb[0].mxu0
      %v6815 = vadd.f32 %v6535, %v6814
      %v6816 = vpop.f32.mrb[0].mxu0
      %6817 = vmatprep.mubr.f32.mxu0 %v6471
      %6818 = vmatmul.mubr.f32.gmra.mrb[0].mxu0 %v6470
      %v6819 = vpop.f32.mrb[0].mxu0
      %v6820 = vadd.f32 %v6535, %v6819
      %v6821 = vpop.f32.mrb[0].mxu0
      %6822 = vmatprep.mubr.f32.mxu0 %v6474
      %6823 = vmatmul.mubr.f32.gmra.mrb[0].mxu0 %v6473
      %v6824 = vpop.f32.mrb[0].mxu0
      %v6825 = vadd.f32 %v6535, %v6824
      %v6826 = vpop.f32.mrb[0].mxu0
      %6827 = vmatprep.mubr.f32.mxu0 %v6477
      %6828 = vmatmul.mubr.f32.gmra.mrb[0].mxu0 %v6476
      %v6829 = vpop.f32.mrb[0].mxu0
      %v6830 = vadd.f32 %v6535, %v6829
      %v6831 = vpop.f32.mrb[0].mxu0
      %6832 = vmatprep.mubr.f32.mxu0 %v6480
      %6833 = vmatmul.mubr.f32.gmra.mrb[0].mxu0 %v6479
      %v6834 = vpop.f32.mrb[0].mxu0
      %v6835 = vadd.f32 %v6535, %v6834
      %v6836 = vpop.f32.mrb[0].mxu0
      %6837 = vmatprep.mubr.f32.mxu0 %v6483
      %6838 = vmatmul.mubr.f32.gmra.mrb[0].mxu0 %v6482
      %v6839 = vpop.f32.mrb[0].mxu0
      %v6840 = vadd.f32 %v6535, %v6839
      %v6841 = vpop.f32.mrb[0].mxu0
      %6842 = vmatprep.mubr.f32.mxu0 %v6486
      %6843 = vmatmul.mubr.f32.gmra.mrb[0].mxu0 %v6485
      %v6844 = vpop.f32.mrb[0].mxu0
      %v6845 = vadd.f32 %v6535, %v6844
      %v6846 = vpop.f32.mrb[0].mxu0
      %6847 = vmatprep.mubr.f32.mxu0 %v6489
      %6848 = vmatmul.mubr.f32.gmra.mrb[0].mxu0 %v6488
      %v6849 = vpop.f32.mrb[0].mxu0
      %v6850 = vadd.f32 %v6535, %v6849
      %v6851 = vpop.f32.mrb[0].mxu0
      %6852 = vmatprep.mubr.f32.mxu0 %v6492
      %6853 = vmatmul.mubr.f32.gmra.mrb[0].mxu0 %v6491
      %v6854 = vpop.f32.mrb[0].mxu0
      %v6855 = vadd.f32 %v6535, %v6854
      %v6856 = vpop.f32.mrb[0].mxu0
      %6857 = vdwg.mxu0
      %6858 = vmatprep.subr.mxu0 0.0
      %6859 = vmatpush1.msra.mxu0 %v6526
      %6860 = vmatprep.subr.mxu0 0.0
      %6861 = vmatpush1.msra.mxu0 %v6527
      %6862 = vmatprep.subr.mxu0 0.0
      %6863 = vmatpush1.msra.mxu0 %v6528
      %6864 = vmatprep.subr.mxu0 0.0
      %6865 = vmatpush1.msra.mxu0 %v6529
      %6866 = vmatprep.subr.mxu0 0.0
      %6867 = vmatpush1.msra.mxu0 0.0
      %6868 = vmatprep.subr.mxu0 0.0
      %6869 = vmatpush1.msra.mxu0 0.0
      %6870 = vmatprep.subr.mxu0 0.0
      %6871 = vmatpush1.msra.mxu0 0.0
      %6872 = vmatprep.subr.mxu0 0.0
      %6873 = vmatpush1.msra.mxu0 0.0
      %6874 = vmatprep.subr.mxu0 0.0
      %6875 = vmatpush1.msra.mxu0 0.0
      %6876 = vmatprep.subr.mxu0 0.0
      %6877 = vmatpush1.msra.mxu0 0.0
      %6878 = vmatprep.subr.mxu0 0.0
      %6879 = vmatpush1.msra.mxu0 0.0
      %6880 = vmatprep.subr.mxu0 0.0
      %6881 = vmatpush1.msra.mxu0 0.0
      %6882 = vmatprep.subr.mxu0 0.0
      %6883 = vmatpush1.msra.mxu0 0.0
      %6884 = vmatprep.subr.mxu0 0.0
      %6885 = vmatpush1.msra.mxu0 0.0
      %6886 = vmatprep.subr.mxu0 0.0
      %6887 = vmatpush1.msra.mxu0 0.0
      %6888 = vmatprep.subr.mxu0 0.0
      %6889 = vmatpush1.msra.mxu0 0.0
      %6890 = vmatprep.subr.mxu0 0.0
      %6891 = vmatpush1.msra.mxu0 0.0
      %6892 = vmatprep.subr.mxu0 0.0
      %6893 = vmatpush1.msra.mxu0 0.0
      %6894 = vmatprep.subr.mxu0 0.0
      %6895 = vmatpush1.msra.mxu0 0.0
      %6896 = vmatprep.subr.mxu0 0.0
      %6897 = vmatpush1.msra.mxu0 0.0
      %6898 = vmatprep.subr.mxu0 0.0
      %6899 = vmatpush1.msra.mxu0 0.0
      %6900 = vmatprep.subr.mxu0 0.0
      %6901 = vmatpush1.msra.mxu0 0.0
      %6902 = vmatprep.subr.mxu0 0.0
      %6903 = vmatpush1.msra.mxu0 0.0
      %6904 = vmatprep.subr.mxu0 0.0
      %6905 = vmatpush1.msra.mxu0 0.0
      %6906 = vmatprep.subr.mxu0 0.0
      %6907 = vmatpush1.msra.mxu0 0.0
      %6908 = vmatprep.subr.mxu0 0.0
      %6909 = vmatpush1.msra.mxu0 0.0
      %6910 = vmatprep.subr.mxu0 0.0
      %6911 = vmatpush1.msra.mxu0 0.0
      %6912 = vmatprep.subr.mxu0 0.0
      %6913 = vmatpush1.msra.mxu0 0.0
      %6914 = vmatprep.subr.mxu0 0.0
      %6915 = vmatpush1.msra.mxu0 0.0
      %6916 = vmatprep.subr.mxu0 0.0
      %6917 = vmatpush1.msra.mxu0 0.0
      %6918 = vmatprep.subr.mxu0 0.0
      %6919 = vmatpush1.msra.mxu0 0.0
      %6920 = vmatprep.subr.mxu0 0.0
      %6921 = vmatpush1.msra.mxu0 0.0
      %6922 = vmatprep.mubr.f32.mxu0 0.0
      %6923 = vmatmul.mubr.f32.gmra.mrb[0].mxu0 %v6538
      %v6924 = vpop.f32.mrb[0].mxu0
      %v6925 = vadd.f32 %v6700, %v6924
      %v6926 = vpop.f32.mrb[0].mxu0
      %6927 = vmatprep.mubr.f32.mxu0 0.0
      %6928 = vmatmul.mubr.f32.gmra.mrb[0].mxu0 %v6541
      %v6929 = vpop.f32.mrb[0].mxu0
      %v6930 = vadd.f32 %v6705, %v6929
      %v6931 = vpop.f32.mrb[0].mxu0
      %6932 = vmatprep.mubr.f32.mxu0 0.0
      %6933 = vmatmul.mubr.f32.gmra.mrb[0].mxu0 %v6544
      %v6934 = vpop.f32.mrb[0].mxu0
      %v6935 = vadd.f32 %v6710, %v6934
      %v6936 = vpop.f32.mrb[0].mxu0
      %6937 = vmatprep.mubr.f32.mxu0 0.0
      %6938 = vmatmul.mubr.f32.gmra.mrb[0].mxu0 %v6547
      %v6939 = vpop.f32.mrb[0].mxu0
      %v6940 = vadd.f32 %v6715, %v6939
      %v6941 = vpop.f32.mrb[0].mxu0
      %6942 = vmatprep.mubr.f32.mxu0 0.0
      %6943 = vmatmul.mubr.f32.gmra.mrb[0].mxu0 %v6550
      %v6944 = vpop.f32.mrb[0].mxu0
      %v6945 = vadd.f32 %v6720, %v6944
      %v6946 = vpop.f32.mrb[0].mxu0
      %6947 = vmatprep.mubr.f32.mxu0 0.0
      %6948 = vmatmul.mubr.f32.gmra.mrb[0].mxu0 %v6553
      %v6949 = vpop.f32.mrb[0].mxu0
      %v6950 = vadd.f32 %v6725, %v6949
      %v6951 = vpop.f32.mrb[0].mxu0
      %6952 = vmatprep.mubr.f32.mxu0 0.0
      %6953 = vmatmul.mubr.f32.gmra.mrb[0].mxu0 %v6556
      %v6954 = vpop.f32.mrb[0].mxu0
      %v6955 = vadd.f32 %v6730, %v6954
      %v6956 = vpop.f32.mrb[0].mxu0
      %6957 = vmatprep.mubr.f32.mxu0 0.0
      %6958 = vmatmul.mubr.f32.gmra.mrb[0].mxu0 %v6559
      %v6959 = vpop.f32.mrb[0].mxu0
      %v6960 = vadd.f32 %v6735, %v6959
      %v6961 = vpop.f32.mrb[0].mxu0
      %6962 = vmatprep.mubr.f32.mxu0 0.0
      %6963 = vmatmul.mubr.f32.gmra.mrb[0].mxu0 %v6562
      %v6964 = vpop.f32.mrb[0].mxu0
      %v6965 = vadd.f32 %v6740, %v6964
      %v6966 = vpop.f32.mrb[0].mxu0
      %6967 = vmatprep.mubr.f32.mxu0 0.0
      %6968 = vmatmul.mubr.f32.gmra.mrb[0].mxu0 %v6565
      %v6969 = vpop.f32.mrb[0].mxu0
      %v6970 = vadd.f32 %v6745, %v6969
      %v6971 = vpop.f32.mrb[0].mxu0
      %6972 = vmatprep.mubr.f32.mxu0 0.0
      %6973 = vmatmul.mubr.f32.gmra.mrb[0].mxu0 %v6568
      %v6974 = vpop.f32.mrb[0].mxu0
      %v6975 = vadd.f32 %v6750, %v6974
      %v6976 = vpop.f32.mrb[0].mxu0
      %6977 = vmatprep.mubr.f32.mxu0 0.0
      %6978 = vmatmul.mubr.f32.gmra.mrb[0].mxu0 %v6571
      %v6979 = vpop.f32.mrb[0].mxu0
      %v6980 = vadd.f32 %v6755, %v6979
      %v6981 = vpop.f32.mrb[0].mxu0
      %6982 = vmatprep.mubr.f32.mxu0 0.0
      %6983 = vmatmul.mubr.f32.gmra.mrb[0].mxu0 %v6574
      %v6984 = vpop.f32.mrb[0].mxu0
      %v6985 = vadd.f32 %v6760, %v6984
      %v6986 = vpop.f32.mrb[0].mxu0
      %6987 = vmatprep.mubr.f32.mxu0 0.0
      %6988 = vmatmul.mubr.f32.gmra.mrb[0].mxu0 %v6577
      %v6989 = vpop.f32.mrb[0].mxu0
      %v6990 = vadd.f32 %v6765, %v6989
      %v6991 = vpop.f32.mrb[0].mxu0
      %6992 = vmatprep.mubr.f32.mxu0 0.0
      %6993 = vmatmul.mubr.f32.gmra.mrb[0].mxu0 %v6580
      %v6994 = vpop.f32.mrb[0].mxu0
      %v6995 = vadd.f32 %v6770, %v6994
      %v6996 = vpop.f32.mrb[0].mxu0
      %6997 = vmatprep.mubr.f32.mxu0 0.0
      %6998 = vmatmul.mubr.f32.gmra.mrb[0].mxu0 %v6583
      %v6999 = vpop.f32.mrb[0].mxu0
      %v7000 = vadd.f32 %v6775, %v6999
      %v7001 = vpop.f32.mrb[0].mxu0
      %7002 = vmatprep.mubr.f32.mxu0 0.0
      %7003 = vmatmul.mubr.f32.gmra.mrb[0].mxu0 %v6586
      %v7004 = vpop.f32.mrb[0].mxu0
      %v7005 = vadd.f32 %v6780, %v7004
      %v7006 = vpop.f32.mrb[0].mxu0
      %7007 = vmatprep.mubr.f32.mxu0 0.0
      %7008 = vmatmul.mubr.f32.gmra.mrb[0].mxu0 %v6589
      %v7009 = vpop.f32.mrb[0].mxu0
      %v7010 = vadd.f32 %v6785, %v7009
      %v7011 = vpop.f32.mrb[0].mxu0
      %7012 = vmatprep.mubr.f32.mxu0 0.0
      %7013 = vmatmul.mubr.f32.gmra.mrb[0].mxu0 %v6592
      %v7014 = vpop.f32.mrb[0].mxu0
      %v7015 = vadd.f32 %v6790, %v7014
      %v7016 = vpop.f32.mrb[0].mxu0
      %7017 = vmatprep.mubr.f32.mxu0 0.0
      %7018 = vmatmul.mubr.f32.gmra.mrb[0].mxu0 %v6595
      %v7019 = vpop.f32.mrb[0].mxu0
      %v7020 = vadd.f32 %v6795, %v7019
      %v7021 = vpop.f32.mrb[0].mxu0
      %7022 = vmatprep.mubr.f32.mxu0 0.0
      %7023 = vmatmul.mubr.f32.gmra.mrb[0].mxu0 %v6598
      %v7024 = vpop.f32.mrb[0].mxu0
      %v7025 = vadd.f32 %v6800, %v7024
      %v7026 = vpop.f32.mrb[0].mxu0
      %7027 = vmatprep.mubr.f32.mxu0 0.0
      %7028 = vmatmul.mubr.f32.gmra.mrb[0].mxu0 %v6601
      %v7029 = vpop.f32.mrb[0].mxu0
      %v7030 = vadd.f32 %v6805, %v7029
      %v7031 = vpop.f32.mrb[0].mxu0
      %7032 = vmatprep.mubr.f32.mxu0 0.0
      %7033 = vmatmul.mubr.f32.gmra.mrb[0].mxu0 %v6604
      %v7034 = vpop.f32.mrb[0].mxu0
      %v7035 = vadd.f32 %v6810, %v7034
      %v7036 = vpop.f32.mrb[0].mxu0
      %7037 = vmatprep.mubr.f32.mxu0 0.0
      %7038 = vmatmul.mubr.f32.gmra.mrb[0].mxu0 %v6607
      %v7039 = vpop.f32.mrb[0].mxu0
      %v7040 = vadd.f32 %v6815, %v7039
      %v7041 = vpop.f32.mrb[0].mxu0
      %7042 = vmatprep.mubr.f32.mxu0 0.0
      %7043 = vmatmul.mubr.f32.gmra.mrb[0].mxu0 %v6610
      %v7044 = vpop.f32.mrb[0].mxu0
      %v7045 = vadd.f32 %v6820, %v7044
      %v7046 = vpop.f32.mrb[0].mxu0
      %7047 = vmatprep.mubr.f32.mxu0 0.0
      %7048 = vmatmul.mubr.f32.gmra.mrb[0].mxu0 %v6613
      %v7049 = vpop.f32.mrb[0].mxu0
      %v7050 = vadd.f32 %v6825, %v7049
      %v7051 = vpop.f32.mrb[0].mxu0
      %7052 = vmatprep.mubr.f32.mxu0 0.0
      %7053 = vmatmul.mubr.f32.gmra.mrb[0].mxu0 %v6616
      %v7054 = vpop.f32.mrb[0].mxu0
      %v7055 = vadd.f32 %v6830, %v7054
      %v7056 = vpop.f32.mrb[0].mxu0
      %7057 = vmatprep.mubr.f32.mxu0 0.0
      %7058 = vmatmul.mubr.f32.gmra.mrb[0].mxu0 %v6619
      %v7059 = vpop.f32.mrb[0].mxu0
      %v7060 = vadd.f32 %v6835, %v7059
      %v7061 = vpop.f32.mrb[0].mxu0
      %7062 = vmatprep.mubr.f32.mxu0 0.0
      %7063 = vmatmul.mubr.f32.gmra.mrb[0].mxu0 %v6622
      %v7064 = vpop.f32.mrb[0].mxu0
      %v7065 = vadd.f32 %v6840, %v7064
      %v7066 = vpop.f32.mrb[0].mxu0
      %7067 = vmatprep.mubr.f32.mxu0 0.0
      %7068 = vmatmul.mubr.f32.gmra.mrb[0].mxu0 %v6625
      %v7069 = vpop.f32.mrb[0].mxu0
      %v7070 = vadd.f32 %v6845, %v7069
      %v7071 = vpop.f32.mrb[0].mxu0
      %7072 = vmatprep.mubr.f32.mxu0 0.0
      %7073 = vmatmul.mubr.f32.gmra.mrb[0].mxu0 %v6628
      %v7074 = vpop.f32.mrb[0].mxu0
      %v7075 = vadd.f32 %v6850, %v7074
      %v7076 = vpop.f32.mrb[0].mxu0
      %7077 = vmatprep.mubr.f32.mxu0 0.0
      %7078 = vmatmul.mubr.f32.gmra.mrb[0].mxu0 %v6631
      %v7079 = vpop.f32.mrb[0].mxu0
      %v7080 = vadd.f32 %v6855, %v7079
      %v7081 = vpop.f32.mrb[0].mxu0
      %7082 = vdwg.mxu0
      %v7083 = vmax.f32 %v6925, 0.0
      %v7084 = vmax.f32 %v6930, 0.0
      %v7085 = vmax.f32 %v6935, 0.0
      %v7086 = vmax.f32 %v6940, 0.0
      %v7087 = vmax.f32 %v6945, 0.0
      %v7088 = vmax.f32 %v6950, 0.0
      %v7089 = vmax.f32 %v6955, 0.0
      %v7090 = vmax.f32 %v6960, 0.0
      %v7091 = vmax.f32 %v6965, 0.0
      %v7092 = vmax.f32 %v6970, 0.0
      %v7093 = vmax.f32 %v6975, 0.0
      %v7094 = vmax.f32 %v6980, 0.0
      %v7095 = vmax.f32 %v6985, 0.0
      %v7096 = vmax.f32 %v6990, 0.0
      %v7097 = vmax.f32 %v6995, 0.0
      %v7098 = vmax.f32 %v7000, 0.0
      %v7099 = vmax.f32 %v7005, 0.0
      %v7100 = vmax.f32 %v7010, 0.0
      %v7101 = vmax.f32 %v7015, 0.0
      %v7102 = vmax.f32 %v7020, 0.0
      %v7103 = vmax.f32 %v7025, 0.0
      %v7104 = vmax.f32 %v7030, 0.0
      %v7105 = vmax.f32 %v7035, 0.0
      %v7106 = vmax.f32 %v7040, 0.0
      %v7107 = vmax.f32 %v7045, 0.0
      %v7108 = vmax.f32 %v7050, 0.0
      %v7109 = vmax.f32 %v7055, 0.0
      %v7110 = vmax.f32 %v7060, 0.0
      %v7111 = vmax.f32 %v7065, 0.0
      %v7112 = vmax.f32 %v7070, 0.0
      %v7113 = vmax.f32 %v7075, 0.0
      %v7114 = vmax.f32 %v7080, 0.0
      %7115 = vst.msk [vmem:[%s1022 + $0x1] sm:$0xff] %vm562, %v7083
      %7116 = vst.msk [vmem:[%s1022 + $0x9] sm:$0xff] %vm562, %v7084
      %7117 = vst.msk [vmem:[%s1022 + $0x19] sm:$0xff] %vm562, %v7085
      %7118 = vst.msk [vmem:[%s1022 + $0x21] sm:$0xff] %vm562, %v7086
      %7119 = vst.msk [vmem:[%s1022 + $0x31] sm:$0xff] %vm562, %v7087
      %7120 = vst.msk [vmem:[%s1022 + $0x39] sm:$0xff] %vm562, %v7088
      %7121 = vst.msk [vmem:[%s1022 + $0x49] sm:$0xff] %vm562, %v7089
      %7122 = vst.msk [vmem:[%s1022 + $0x51] sm:$0xff] %vm562, %v7090
      %7123 = vst.msk [vmem:[%s1022 + $0x61] sm:$0xff] %vm562, %v7091
      %7124 = vst.msk [vmem:[%s1022 + $0x69] sm:$0xff] %vm562, %v7092
      %7125 = vst.msk [vmem:[%s1022 + $0x79] sm:$0xff] %vm562, %v7093
      %7126 = vst.msk [vmem:[%s1022 + $0x81] sm:$0xff] %vm562, %v7094
      %7127 = vst.msk [vmem:[%s1022 + $0x91] sm:$0xff] %vm562, %v7095
      %7128 = vst.msk [vmem:[%s1022 + $0x99] sm:$0xff] %vm562, %v7096
      %7129 = vst.msk [vmem:[%s1022 + $0xa9] sm:$0xff] %vm562, %v7097
      %7130 = vst.msk [vmem:[%s1022 + $0xb1] sm:$0xff] %vm562, %v7098
      %7131 = vst.msk [vmem:[%s1022 + $0xc1] sm:$0xff] %vm562, %v7099
      %7132 = vst.msk [vmem:[%s1022 + $0xc9] sm:$0xff] %vm562, %v7100
      %7133 = vst.msk [vmem:[%s1022 + $0xd9] sm:$0xff] %vm562, %v7101
      %7134 = vst.msk [vmem:[%s1022 + $0xe1] sm:$0xff] %vm562, %v7102
      %7135 = vst.msk [vmem:[%s1022 + $0xf1] sm:$0xff] %vm562, %v7103
      %7136 = vst.msk [vmem:[%s1022 + $0xf9] sm:$0xff] %vm562, %v7104
      %7137 = vst.msk [vmem:[%s1022 + $0x109] sm:$0xff] %vm562, %v7105
      %7138 = vst.msk [vmem:[%s1022 + $0x111] sm:$0xff] %vm562, %v7106
      %7139 = vst.msk [vmem:[%s1022 + $0x121] sm:$0xff] %vm562, %v7107
      %7140 = vst.msk [vmem:[%s1022 + $0x129] sm:$0xff] %vm562, %v7108
      %7141 = vst.msk [vmem:[%s1022 + $0x139] sm:$0xff] %vm562, %v7109
      %7142 = vst.msk [vmem:[%s1022 + $0x141] sm:$0xff] %vm562, %v7110
      %7143 = vst.msk [vmem:[%s1022 + $0x151] sm:$0xff] %vm562, %v7111
      %7144 = vst.msk [vmem:[%s1022 + $0x159] sm:$0xff] %vm562, %v7112
      %7145 = vst.msk [vmem:[%s1022 + $0x169] sm:$0xff] %vm562, %v7113
      %7146 = vst.msk [vmem:[%s1022 + $0x171] sm:$0xff] %vm562, %v7114
      %v7147 = vld [vmem:[#allocation2] sm:$0xff]
      %v7148 = vld [vmem:[#allocation2 + $0x8] sm:$0xff]
      %v7149 = vld [vmem:[#allocation2 + $0x18] sm:$0xff]
      %v7150 = vld [vmem:[#allocation2 + $0x20] sm:$0xff]
      %v7151 = vld [vmem:[#allocation2 + $0x30] sm:$0xff]
      %v7152 = vld [vmem:[#allocation2 + $0x38] sm:$0xff]
      %v7153 = vld [vmem:[#allocation2 + $0x48] sm:$0xff]
      %v7154 = vld [vmem:[#allocation2 + $0x50] sm:$0xff]
      %v7155 = vld [vmem:[#allocation2 + $0x60] sm:$0xff]
      %v7156 = vld [vmem:[#allocation2 + $0x68] sm:$0xff]
      %v7157 = vld [vmem:[#allocation2 + $0x78] sm:$0xff]
      %v7158 = vld [vmem:[#allocation2 + $0x80] sm:$0xff]
      %v7159 = vld [vmem:[#allocation2 + $0x90] sm:$0xff]
      %v7160 = vld [vmem:[#allocation2 + $0x98] sm:$0xff]
      %v7161 = vld [vmem:[#allocation2 + $0xa8] sm:$0xff]
      %v7162 = vld [vmem:[#allocation2 + $0xb0] sm:$0xff]
      %v7163 = vld [vmem:[#allocation2 + $0xc0] sm:$0xff]
      %v7164 = vld [vmem:[#allocation2 + $0xc8] sm:$0xff]
      %v7165 = vld [vmem:[#allocation2 + $0xd8] sm:$0xff]
      %v7166 = vld [vmem:[#allocation2 + $0xe0] sm:$0xff]
      %v7167 = vld [vmem:[#allocation2 + $0xf0] sm:$0xff]
      %v7168 = vld [vmem:[#allocation2 + $0xf8] sm:$0xff]
      %v7169 = vld [vmem:[#allocation2 + $0x108] sm:$0xff]
      %v7170 = vld [vmem:[#allocation2 + $0x110] sm:$0xff]
      %v7171 = vld [vmem:[#allocation2 + $0x120] sm:$0xff]
      %v7172 = vld [vmem:[#allocation2 + $0x128] sm:$0xff]
      %v7173 = vld [vmem:[#allocation2 + $0x138] sm:$0xff]
      %v7174 = vld [vmem:[#allocation2 + $0x140] sm:$0xff]
      %v7175 = vld [vmem:[#allocation2 + $0x150] sm:$0xff]
      %v7176 = vld [vmem:[#allocation2 + $0x158] sm:$0xff]
      %v7177 = vld [vmem:[#allocation2 + $0x168] sm:$0xff]
      %v7178 = vld [vmem:[#allocation2 + $0x170] sm:$0xff]
      %7179 = vst.msk [vmem:[#allocation3] sm:$0xff] %vm562, %v7147
      %7180 = vst.msk [vmem:[#allocation3 + $0x28] sm:$0xff] %vm562, %v7148
      %7181 = vst.msk [vmem:[#allocation3 + $0x50] sm:$0xff] %vm562, %v7149
      %7182 = vst.msk [vmem:[#allocation3 + $0x78] sm:$0xff] %vm562, %v7150
      %7183 = vst.msk [vmem:[#allocation3 + $0xa0] sm:$0xff] %vm562, %v7151
      %7184 = vst.msk [vmem:[#allocation3 + $0xc8] sm:$0xff] %vm562, %v7152
      %7185 = vst.msk [vmem:[#allocation3 + $0xf0] sm:$0xff] %vm562, %v7153
      %7186 = vst.msk [vmem:[#allocation3 + $0x118] sm:$0xff] %vm562, %v7154
      %7187 = vst.msk [vmem:[#allocation3 + $0x140] sm:$0xff] %vm562, %v7155
      %7188 = vst.msk [vmem:[#allocation3 + $0x168] sm:$0xff] %vm562, %v7156
      %7189 = vst.msk [vmem:[#allocation3 + $0x190] sm:$0xff] %vm562, %v7157
      %7190 = vst.msk [vmem:[#allocation3 + $0x1b8] sm:$0xff] %vm562, %v7158
      %7191 = vst.msk [vmem:[#allocation3 + $0x1e0] sm:$0xff] %vm562, %v7159
      %7192 = vst.msk [vmem:[#allocation3 + $0x208] sm:$0xff] %vm562, %v7160
      %7193 = vst.msk [vmem:[#allocation3 + $0x230] sm:$0xff] %vm562, %v7161
      %7194 = vst.msk [vmem:[#allocation3 + $0x258] sm:$0xff] %vm562, %v7162
      %7195 = vst.msk [vmem:[#allocation3 + $0x280] sm:$0xff] %vm562, %v7163
      %7196 = vst.msk [vmem:[#allocation3 + $0x2a8] sm:$0xff] %vm562, %v7164
      %7197 = vst.msk [vmem:[#allocation3 + $0x2d0] sm:$0xff] %vm562, %v7165
      %7198 = vst.msk [vmem:[#allocation3 + $0x2f8] sm:$0xff] %vm562, %v7166
      %7199 = vst.msk [vmem:[#allocation3 + $0x320] sm:$0xff] %vm562, %v7167
      %7200 = vst.msk [vmem:[#allocation3 + $0x348] sm:$0xff] %vm562, %v7168
      %7201 = vst.msk [vmem:[#allocation3 + $0x370] sm:$0xff] %vm562, %v7169
      %7202 = vst.msk [vmem:[#allocation3 + $0x398] sm:$0xff] %vm562, %v7170
      %7203 = vst.msk [vmem:[#allocation3 + $0x3c0] sm:$0xff] %vm562, %v7171
      %7204 = vst.msk [vmem:[#allocation3 + $0x3e8] sm:$0xff] %vm562, %v7172
      %7205 = vst.msk [vmem:[#allocation3 + $0x410] sm:$0xff] %vm562, %v7173
      %7206 = vst.msk [vmem:[#allocation3 + $0x438] sm:$0xff] %vm562, %v7174
      %7207 = vst.msk [vmem:[#allocation3 + $0x460] sm:$0xff] %vm562, %v7175
      %7208 = vst.msk [vmem:[#allocation3 + $0x488] sm:$0xff] %vm562, %v7176
      %7209 = vst.msk [vmem:[#allocation3 + $0x4b0] sm:$0xff] %vm562, %v7177
      %7210 = vst.msk [vmem:[#allocation3 + $0x4d8] sm:$0xff] %vm562, %v7178
      %v7211 = vld [vmem:[#allocation2 + $0x1] sm:$0xff]
      %v7212 = vld [vmem:[#allocation2 + $0x9] sm:$0xff]
      %v7213 = vld [vmem:[#allocation2 + $0x19] sm:$0xff]
      %v7214 = vld [vmem:[#allocation2 + $0x21] sm:$0xff]
      %v7215 = vld [vmem:[#allocation2 + $0x31] sm:$0xff]
      %v7216 = vld [vmem:[#allocation2 + $0x39] sm:$0xff]
      %v7217 = vld [vmem:[#allocation2 + $0x49] sm:$0xff]
      %v7218 = vld [vmem:[#allocation2 + $0x51] sm:$0xff]
      %v7219 = vld [vmem:[#allocation2 + $0x61] sm:$0xff]
      %v7220 = vld [vmem:[#allocation2 + $0x69] sm:$0xff]
      %v7221 = vld [vmem:[#allocation2 + $0x79] sm:$0xff]
      %v7222 = vld [vmem:[#allocation2 + $0x81] sm:$0xff]
      %v7223 = vld [vmem:[#allocation2 + $0x91] sm:$0xff]
      %v7224 = vld [vmem:[#allocation2 + $0x99] sm:$0xff]
      %v7225 = vld [vmem:[#allocation2 + $0xa9] sm:$0xff]
      %v7226 = vld [vmem:[#allocation2 + $0xb1] sm:$0xff]
      %v7227 = vld [vmem:[#allocation2 + $0xc1] sm:$0xff]
      %v7228 = vld [vmem:[#allocation2 + $0xc9] sm:$0xff]
      %v7229 = vld [vmem:[#allocation2 + $0xd9] sm:$0xff]
      %v7230 = vld [vmem:[#allocation2 + $0xe1] sm:$0xff]
      %v7231 = vld [vmem:[#allocation2 + $0xf1] sm:$0xff]
      %v7232 = vld [vmem:[#allocation2 + $0xf9] sm:$0xff]
      %v7233 = vld [vmem:[#allocation2 + $0x109] sm:$0xff]
      %v7234 = vld [vmem:[#allocation2 + $0x111] sm:$0xff]
      %v7235 = vld [vmem:[#allocation2 + $0x121] sm:$0xff]
      %v7236 = vld [vmem:[#allocation2 + $0x129] sm:$0xff]
      %v7237 = vld [vmem:[#allocation2 + $0x139] sm:$0xff]
      %v7238 = vld [vmem:[#allocation2 + $0x141] sm:$0xff]
      %v7239 = vld [vmem:[#allocation2 + $0x151] sm:$0xff]
      %v7240 = vld [vmem:[#allocation2 + $0x159] sm:$0xff]
      %v7241 = vld [vmem:[#allocation2 + $0x169] sm:$0xff]
      %v7242 = vld [vmem:[#allocation2 + $0x171] sm:$0xff]
      %7275 = vrot.lane.b32.xlu0 %v7211, 32
      %v7276 = vpop.permute.xlu0 %7275
      %7277 = vrot.lane.b32.xlu0 %v7212, 32
      %v7278 = vpop.permute.xlu0 %7277
      %7279 = vrot.lane.b32.xlu0 %v7213, 32
      %v7280 = vpop.permute.xlu0 %7279
      %7281 = vrot.lane.b32.xlu0 %v7214, 32
      %v7282 = vpop.permute.xlu0 %7281
      %7283 = vrot.lane.b32.xlu0 %v7215, 32
      %v7284 = vpop.permute.xlu0 %7283
      %7285 = vrot.lane.b32.xlu0 %v7216, 32
      %v7286 = vpop.permute.xlu0 %7285
      %7287 = vrot.lane.b32.xlu0 %v7217, 32
      %v7288 = vpop.permute.xlu0 %7287
      %7289 = vrot.lane.b32.xlu0 %v7218, 32
      %v7290 = vpop.permute.xlu0 %7289
      %7291 = vrot.lane.b32.xlu0 %v7219, 32
      %v7292 = vpop.permute.xlu0 %7291
      %7293 = vrot.lane.b32.xlu0 %v7220, 32
      %v7294 = vpop.permute.xlu0 %7293
      %7295 = vrot.lane.b32.xlu0 %v7221, 32
      %v7296 = vpop.permute.xlu0 %7295
      %7297 = vrot.lane.b32.xlu0 %v7222, 32
      %v7298 = vpop.permute.xlu0 %7297
      %7299 = vrot.lane.b32.xlu0 %v7223, 32
      %v7300 = vpop.permute.xlu0 %7299
      %7301 = vrot.lane.b32.xlu0 %v7224, 32
      %v7302 = vpop.permute.xlu0 %7301
      %7303 = vrot.lane.b32.xlu0 %v7225, 32
      %v7304 = vpop.permute.xlu0 %7303
      %7305 = vrot.lane.b32.xlu0 %v7226, 32
      %v7306 = vpop.permute.xlu0 %7305
      %7307 = vrot.lane.b32.xlu0 %v7227, 32
      %v7308 = vpop.permute.xlu0 %7307
      %7309 = vrot.lane.b32.xlu0 %v7228, 32
      %v7310 = vpop.permute.xlu0 %7309
      %7311 = vrot.lane.b32.xlu0 %v7229, 32
      %v7312 = vpop.permute.xlu0 %7311
      %7313 = vrot.lane.b32.xlu0 %v7230, 32
      %v7314 = vpop.permute.xlu0 %7313
      %7315 = vrot.lane.b32.xlu0 %v7231, 32
      %v7316 = vpop.permute.xlu0 %7315
      %7317 = vrot.lane.b32.xlu0 %v7232, 32
      %v7318 = vpop.permute.xlu0 %7317
      %7319 = vrot.lane.b32.xlu0 %v7233, 32
      %v7320 = vpop.permute.xlu0 %7319
      %7321 = vrot.lane.b32.xlu0 %v7234, 32
      %v7322 = vpop.permute.xlu0 %7321
      %7323 = vrot.lane.b32.xlu0 %v7235, 32
      %v7324 = vpop.permute.xlu0 %7323
      %7325 = vrot.lane.b32.xlu0 %v7236, 32
      %v7326 = vpop.permute.xlu0 %7325
      %7327 = vrot.lane.b32.xlu0 %v7237, 32
      %v7328 = vpop.permute.xlu0 %7327
      %7329 = vrot.lane.b32.xlu0 %v7238, 32
      %v7330 = vpop.permute.xlu0 %7329
      %7331 = vrot.lane.b32.xlu0 %v7239, 32
      %v7332 = vpop.permute.xlu0 %7331
      %7333 = vrot.lane.b32.xlu0 %v7240, 32
      %v7334 = vpop.permute.xlu0 %7333
      %7335 = vrot.lane.b32.xlu0 %v7241, 32
      %v7336 = vpop.permute.xlu0 %7335
      %7337 = vrot.lane.b32.xlu0 %v7242, 32
      %v7338 = vpop.permute.xlu0 %7337
      %7371 = vst.msk [vmem:[#allocation3] sm:$0xff] %vm1279, %v7276
      %7372 = vst.msk [vmem:[#allocation3 + $0x28] sm:$0xff] %vm1279, %v7278
      %7373 = vst.msk [vmem:[#allocation3 + $0x50] sm:$0xff] %vm1279, %v7280
      %7374 = vst.msk [vmem:[#allocation3 + $0x78] sm:$0xff] %vm1279, %v7282
      %7375 = vst.msk [vmem:[#allocation3 + $0xa0] sm:$0xff] %vm1279, %v7284
      %7376 = vst.msk [vmem:[#allocation3 + $0xc8] sm:$0xff] %vm1279, %v7286
      %7377 = vst.msk [vmem:[#allocation3 + $0xf0] sm:$0xff] %vm1279, %v7288
      %7378 = vst.msk [vmem:[#allocation3 + $0x118] sm:$0xff] %vm1279, %v7290
      %7379 = vst.msk [vmem:[#allocation3 + $0x140] sm:$0xff] %vm1279, %v7292
      %7380 = vst.msk [vmem:[#allocation3 + $0x168] sm:$0xff] %vm1279, %v7294
      %7381 = vst.msk [vmem:[#allocation3 + $0x190] sm:$0xff] %vm1279, %v7296
      %7382 = vst.msk [vmem:[#allocation3 + $0x1b8] sm:$0xff] %vm1279, %v7298
      %7383 = vst.msk [vmem:[#allocation3 + $0x1e0] sm:$0xff] %vm1279, %v7300
      %7384 = vst.msk [vmem:[#allocation3 + $0x208] sm:$0xff] %vm1279, %v7302
      %7385 = vst.msk [vmem:[#allocation3 + $0x230] sm:$0xff] %vm1279, %v7304
      %7386 = vst.msk [vmem:[#allocation3 + $0x258] sm:$0xff] %vm1279, %v7306
      %7387 = vst.msk [vmem:[#allocation3 + $0x280] sm:$0xff] %vm1279, %v7308
      %7388 = vst.msk [vmem:[#allocation3 + $0x2a8] sm:$0xff] %vm1279, %v7310
      %7389 = vst.msk [vmem:[#allocation3 + $0x2d0] sm:$0xff] %vm1279, %v7312
      %7390 = vst.msk [vmem:[#allocation3 + $0x2f8] sm:$0xff] %vm1279, %v7314
      %7391 = vst.msk [vmem:[#allocation3 + $0x320] sm:$0xff] %vm1279, %v7316
      %7392 = vst.msk [vmem:[#allocation3 + $0x348] sm:$0xff] %vm1279, %v7318
      %7393 = vst.msk [vmem:[#allocation3 + $0x370] sm:$0xff] %vm1279, %v7320
      %7394 = vst.msk [vmem:[#allocation3 + $0x398] sm:$0xff] %vm1279, %v7322
      %7395 = vst.msk [vmem:[#allocation3 + $0x3c0] sm:$0xff] %vm1279, %v7324
      %7396 = vst.msk [vmem:[#allocation3 + $0x3e8] sm:$0xff] %vm1279, %v7326
      %7397 = vst.msk [vmem:[#allocation3 + $0x410] sm:$0xff] %vm1279, %v7328
      %7398 = vst.msk [vmem:[#allocation3 + $0x438] sm:$0xff] %vm1279, %v7330
      %7399 = vst.msk [vmem:[#allocation3 + $0x460] sm:$0xff] %vm1279, %v7332
      %7400 = vst.msk [vmem:[#allocation3 + $0x488] sm:$0xff] %vm1279, %v7334
      %7401 = vst.msk [vmem:[#allocation3 + $0x4b0] sm:$0xff] %vm1279, %v7336
      %7402 = vst.msk [vmem:[#allocation3 + $0x4d8] sm:$0xff] %vm1279, %v7338
      %v7403 = vld [vmem:[#allocation2 + $0x2] sm:$0xff]
      %v7404 = vld [vmem:[#allocation2 + $0xa] sm:$0xff]
      %v7405 = vld [vmem:[#allocation2 + $0x1a] sm:$0xff]
      %v7406 = vld [vmem:[#allocation2 + $0x22] sm:$0xff]
      %v7407 = vld [vmem:[#allocation2 + $0x32] sm:$0xff]
      %v7408 = vld [vmem:[#allocation2 + $0x3a] sm:$0xff]
      %v7409 = vld [vmem:[#allocation2 + $0x4a] sm:$0xff]
      %v7410 = vld [vmem:[#allocation2 + $0x52] sm:$0xff]
      %v7411 = vld [vmem:[#allocation2 + $0x62] sm:$0xff]
      %v7412 = vld [vmem:[#allocation2 + $0x6a] sm:$0xff]
      %v7413 = vld [vmem:[#allocation2 + $0x7a] sm:$0xff]
      %v7414 = vld [vmem:[#allocation2 + $0x82] sm:$0xff]
      %v7415 = vld [vmem:[#allocation2 + $0x92] sm:$0xff]
      %v7416 = vld [vmem:[#allocation2 + $0x9a] sm:$0xff]
      %v7417 = vld [vmem:[#allocation2 + $0xaa] sm:$0xff]
      %v7418 = vld [vmem:[#allocation2 + $0xb2] sm:$0xff]
      %v7419 = vld [vmem:[#allocation2 + $0xc2] sm:$0xff]
      %v7420 = vld [vmem:[#allocation2 + $0xca] sm:$0xff]
      %v7421 = vld [vmem:[#allocation2 + $0xda] sm:$0xff]
      %v7422 = vld [vmem:[#allocation2 + $0xe2] sm:$0xff]
      %v7423 = vld [vmem:[#allocation2 + $0xf2] sm:$0xff]
      %v7424 = vld [vmem:[#allocation2 + $0xfa] sm:$0xff]
      %v7425 = vld [vmem:[#allocation2 + $0x10a] sm:$0xff]
      %v7426 = vld [vmem:[#allocation2 + $0x112] sm:$0xff]
      %v7427 = vld [vmem:[#allocation2 + $0x122] sm:$0xff]
      %v7428 = vld [vmem:[#allocation2 + $0x12a] sm:$0xff]
      %v7429 = vld [vmem:[#allocation2 + $0x13a] sm:$0xff]
      %v7430 = vld [vmem:[#allocation2 + $0x142] sm:$0xff]
      %v7431 = vld [vmem:[#allocation2 + $0x152] sm:$0xff]
      %v7432 = vld [vmem:[#allocation2 + $0x15a] sm:$0xff]
      %v7433 = vld [vmem:[#allocation2 + $0x16a] sm:$0xff]
      %v7434 = vld [vmem:[#allocation2 + $0x172] sm:$0xff]
      %7467 = vrot.lane.b32.xlu0 %v7403, 64
      %v7468 = vpop.permute.xlu0 %7467
      %7469 = vrot.lane.b32.xlu0 %v7404, 64
      %v7470 = vpop.permute.xlu0 %7469
      %7471 = vrot.lane.b32.xlu0 %v7405, 64
      %v7472 = vpop.permute.xlu0 %7471
      %7473 = vrot.lane.b32.xlu0 %v7406, 64
      %v7474 = vpop.permute.xlu0 %7473
      %7475 = vrot.lane.b32.xlu0 %v7407, 64
      %v7476 = vpop.permute.xlu0 %7475
      %7477 = vrot.lane.b32.xlu0 %v7408, 64
      %v7478 = vpop.permute.xlu0 %7477
      %7479 = vrot.lane.b32.xlu0 %v7409, 64
      %v7480 = vpop.permute.xlu0 %7479
      %7481 = vrot.lane.b32.xlu0 %v7410, 64
      %v7482 = vpop.permute.xlu0 %7481
      %7483 = vrot.lane.b32.xlu0 %v7411, 64
      %v7484 = vpop.permute.xlu0 %7483
      %7485 = vrot.lane.b32.xlu0 %v7412, 64
      %v7486 = vpop.permute.xlu0 %7485
      %7487 = vrot.lane.b32.xlu0 %v7413, 64
      %v7488 = vpop.permute.xlu0 %7487
      %7489 = vrot.lane.b32.xlu0 %v7414, 64
      %v7490 = vpop.permute.xlu0 %7489
      %7491 = vrot.lane.b32.xlu0 %v7415, 64
      %v7492 = vpop.permute.xlu0 %7491
      %7493 = vrot.lane.b32.xlu0 %v7416, 64
      %v7494 = vpop.permute.xlu0 %7493
      %7495 = vrot.lane.b32.xlu0 %v7417, 64
      %v7496 = vpop.permute.xlu0 %7495
      %7497 = vrot.lane.b32.xlu0 %v7418, 64
      %v7498 = vpop.permute.xlu0 %7497
      %7499 = vrot.lane.b32.xlu0 %v7419, 64
      %v7500 = vpop.permute.xlu0 %7499
      %7501 = vrot.lane.b32.xlu0 %v7420, 64
      %v7502 = vpop.permute.xlu0 %7501
      %7503 = vrot.lane.b32.xlu0 %v7421, 64
      %v7504 = vpop.permute.xlu0 %7503
      %7505 = vrot.lane.b32.xlu0 %v7422, 64
      %v7506 = vpop.permute.xlu0 %7505
      %7507 = vrot.lane.b32.xlu0 %v7423, 64
      %v7508 = vpop.permute.xlu0 %7507
      %7509 = vrot.lane.b32.xlu0 %v7424, 64
      %v7510 = vpop.permute.xlu0 %7509
      %7511 = vrot.lane.b32.xlu0 %v7425, 64
      %v7512 = vpop.permute.xlu0 %7511
      %7513 = vrot.lane.b32.xlu0 %v7426, 64
      %v7514 = vpop.permute.xlu0 %7513
      %7515 = vrot.lane.b32.xlu0 %v7427, 64
      %v7516 = vpop.permute.xlu0 %7515
      %7517 = vrot.lane.b32.xlu0 %v7428, 64
      %v7518 = vpop.permute.xlu0 %7517
      %7519 = vrot.lane.b32.xlu0 %v7429, 64
      %v7520 = vpop.permute.xlu0 %7519
      %7521 = vrot.lane.b32.xlu0 %v7430, 64
      %v7522 = vpop.permute.xlu0 %7521
      %7523 = vrot.lane.b32.xlu0 %v7431, 64
      %v7524 = vpop.permute.xlu0 %7523
      %7525 = vrot.lane.b32.xlu0 %v7432, 64
      %v7526 = vpop.permute.xlu0 %7525
      %7527 = vrot.lane.b32.xlu0 %v7433, 64
      %v7528 = vpop.permute.xlu0 %7527
      %7529 = vrot.lane.b32.xlu0 %v7434, 64
      %v7530 = vpop.permute.xlu0 %7529
      %7563 = vst.msk [vmem:[#allocation3] sm:$0xff] %vm1472, %v7468
      %7564 = vst.msk [vmem:[#allocation3 + $0x28] sm:$0xff] %vm1472, %v7470
      %7565 = vst.msk [vmem:[#allocation3 + $0x50] sm:$0xff] %vm1472, %v7472
      %7566 = vst.msk [vmem:[#allocation3 + $0x78] sm:$0xff] %vm1472, %v7474
      %7567 = vst.msk [vmem:[#allocation3 + $0xa0] sm:$0xff] %vm1472, %v7476
      %7568 = vst.msk [vmem:[#allocation3 + $0xc8] sm:$0xff] %vm1472, %v7478
      %7569 = vst.msk [vmem:[#allocation3 + $0xf0] sm:$0xff] %vm1472, %v7480
      %7570 = vst.msk [vmem:[#allocation3 + $0x118] sm:$0xff] %vm1472, %v7482
      %7571 = vst.msk [vmem:[#allocation3 + $0x140] sm:$0xff] %vm1472, %v7484
      %7572 = vst.msk [vmem:[#allocation3 + $0x168] sm:$0xff] %vm1472, %v7486
      %7573 = vst.msk [vmem:[#allocation3 + $0x190] sm:$0xff] %vm1472, %v7488
      %7574 = vst.msk [vmem:[#allocation3 + $0x1b8] sm:$0xff] %vm1472, %v7490
      %7575 = vst.msk [vmem:[#allocation3 + $0x1e0] sm:$0xff] %vm1472, %v7492
      %7576 = vst.msk [vmem:[#allocation3 + $0x208] sm:$0xff] %vm1472, %v7494
      %7577 = vst.msk [vmem:[#allocation3 + $0x230] sm:$0xff] %vm1472, %v7496
      %7578 = vst.msk [vmem:[#allocation3 + $0x258] sm:$0xff] %vm1472, %v7498
      %7579 = vst.msk [vmem:[#allocation3 + $0x280] sm:$0xff] %vm1472, %v7500
      %7580 = vst.msk [vmem:[#allocation3 + $0x2a8] sm:$0xff] %vm1472, %v7502
      %7581 = vst.msk [vmem:[#allocation3 + $0x2d0] sm:$0xff] %vm1472, %v7504
      %7582 = vst.msk [vmem:[#allocation3 + $0x2f8] sm:$0xff] %vm1472, %v7506
      %7583 = vst.msk [vmem:[#allocation3 + $0x320] sm:$0xff] %vm1472, %v7508
      %7584 = vst.msk [vmem:[#allocation3 + $0x348] sm:$0xff] %vm1472, %v7510
      %7585 = vst.msk [vmem:[#allocation3 + $0x370] sm:$0xff] %vm1472, %v7512
      %7586 = vst.msk [vmem:[#allocation3 + $0x398] sm:$0xff] %vm1472, %v7514
      %7587 = vst.msk [vmem:[#allocation3 + $0x3c0] sm:$0xff] %vm1472, %v7516
      %7588 = vst.msk [vmem:[#allocation3 + $0x3e8] sm:$0xff] %vm1472, %v7518
      %7589 = vst.msk [vmem:[#allocation3 + $0x410] sm:$0xff] %vm1472, %v7520
      %7590 = vst.msk [vmem:[#allocation3 + $0x438] sm:$0xff] %vm1472, %v7522
      %7591 = vst.msk [vmem:[#allocation3 + $0x460] sm:$0xff] %vm1472, %v7524
      %7592 = vst.msk [vmem:[#allocation3 + $0x488] sm:$0xff] %vm1472, %v7526
      %7593 = vst.msk [vmem:[#allocation3 + $0x4b0] sm:$0xff] %vm1472, %v7528
      %7594 = vst.msk [vmem:[#allocation3 + $0x4d8] sm:$0xff] %vm1472, %v7530
      %v7595 = vld [vmem:[%s1022] sm:$0xff]
      %v7596 = vld [vmem:[%s1022 + $0x8] sm:$0xff]
      %v7597 = vld [vmem:[%s1022 + $0x18] sm:$0xff]
      %v7598 = vld [vmem:[%s1022 + $0x20] sm:$0xff]
      %v7599 = vld [vmem:[%s1022 + $0x30] sm:$0xff]
      %v7600 = vld [vmem:[%s1022 + $0x38] sm:$0xff]
      %v7601 = vld [vmem:[%s1022 + $0x48] sm:$0xff]
      %v7602 = vld [vmem:[%s1022 + $0x50] sm:$0xff]
      %v7603 = vld [vmem:[%s1022 + $0x60] sm:$0xff]
      %v7604 = vld [vmem:[%s1022 + $0x68] sm:$0xff]
      %v7605 = vld [vmem:[%s1022 + $0x78] sm:$0xff]
      %v7606 = vld [vmem:[%s1022 + $0x80] sm:$0xff]
      %v7607 = vld [vmem:[%s1022 + $0x90] sm:$0xff]
      %v7608 = vld [vmem:[%s1022 + $0x98] sm:$0xff]
      %v7609 = vld [vmem:[%s1022 + $0xa8] sm:$0xff]
      %v7610 = vld [vmem:[%s1022 + $0xb0] sm:$0xff]
      %v7611 = vld [vmem:[%s1022 + $0xc0] sm:$0xff]
      %v7612 = vld [vmem:[%s1022 + $0xc8] sm:$0xff]
      %v7613 = vld [vmem:[%s1022 + $0xd8] sm:$0xff]
      %v7614 = vld [vmem:[%s1022 + $0xe0] sm:$0xff]
      %v7615 = vld [vmem:[%s1022 + $0xf0] sm:$0xff]
      %v7616 = vld [vmem:[%s1022 + $0xf8] sm:$0xff]
      %v7617 = vld [vmem:[%s1022 + $0x108] sm:$0xff]
      %v7618 = vld [vmem:[%s1022 + $0x110] sm:$0xff]
      %v7619 = vld [vmem:[%s1022 + $0x120] sm:$0xff]
      %v7620 = vld [vmem:[%s1022 + $0x128] sm:$0xff]
      %v7621 = vld [vmem:[%s1022 + $0x138] sm:$0xff]
      %v7622 = vld [vmem:[%s1022 + $0x140] sm:$0xff]
      %v7623 = vld [vmem:[%s1022 + $0x150] sm:$0xff]
      %v7624 = vld [vmem:[%s1022 + $0x158] sm:$0xff]
      %v7625 = vld [vmem:[%s1022 + $0x168] sm:$0xff]
      %v7626 = vld [vmem:[%s1022 + $0x170] sm:$0xff]
      %7659 = vrot.lane.b32.xlu0 %v7595, 96
      %v7660 = vpop.permute.xlu0 %7659
      %7661 = vrot.lane.b32.xlu0 %v7596, 96
      %v7662 = vpop.permute.xlu0 %7661
      %7663 = vrot.lane.b32.xlu0 %v7597, 96
      %v7664 = vpop.permute.xlu0 %7663
      %7665 = vrot.lane.b32.xlu0 %v7598, 96
      %v7666 = vpop.permute.xlu0 %7665
      %7667 = vrot.lane.b32.xlu0 %v7599, 96
      %v7668 = vpop.permute.xlu0 %7667
      %7669 = vrot.lane.b32.xlu0 %v7600, 96
      %v7670 = vpop.permute.xlu0 %7669
      %7671 = vrot.lane.b32.xlu0 %v7601, 96
      %v7672 = vpop.permute.xlu0 %7671
      %7673 = vrot.lane.b32.xlu0 %v7602, 96
      %v7674 = vpop.permute.xlu0 %7673
      %7675 = vrot.lane.b32.xlu0 %v7603, 96
      %v7676 = vpop.permute.xlu0 %7675
      %7677 = vrot.lane.b32.xlu0 %v7604, 96
      %v7678 = vpop.permute.xlu0 %7677
      %7679 = vrot.lane.b32.xlu0 %v7605, 96
      %v7680 = vpop.permute.xlu0 %7679
      %7681 = vrot.lane.b32.xlu0 %v7606, 96
      %v7682 = vpop.permute.xlu0 %7681
      %7683 = vrot.lane.b32.xlu0 %v7607, 96
      %v7684 = vpop.permute.xlu0 %7683
      %7685 = vrot.lane.b32.xlu0 %v7608, 96
      %v7686 = vpop.permute.xlu0 %7685
      %7687 = vrot.lane.b32.xlu0 %v7609, 96
      %v7688 = vpop.permute.xlu0 %7687
      %7689 = vrot.lane.b32.xlu0 %v7610, 96
      %v7690 = vpop.permute.xlu0 %7689
      %7691 = vrot.lane.b32.xlu0 %v7611, 96
      %v7692 = vpop.permute.xlu0 %7691
      %7693 = vrot.lane.b32.xlu0 %v7612, 96
      %v7694 = vpop.permute.xlu0 %7693
      %7695 = vrot.lane.b32.xlu0 %v7613, 96
      %v7696 = vpop.permute.xlu0 %7695
      %7697 = vrot.lane.b32.xlu0 %v7614, 96
      %v7698 = vpop.permute.xlu0 %7697
      %7699 = vrot.lane.b32.xlu0 %v7615, 96
      %v7700 = vpop.permute.xlu0 %7699
      %7701 = vrot.lane.b32.xlu0 %v7616, 96
      %v7702 = vpop.permute.xlu0 %7701
      %7703 = vrot.lane.b32.xlu0 %v7617, 96
      %v7704 = vpop.permute.xlu0 %7703
      %7705 = vrot.lane.b32.xlu0 %v7618, 96
      %v7706 = vpop.permute.xlu0 %7705
      %7707 = vrot.lane.b32.xlu0 %v7619, 96
      %v7708 = vpop.permute.xlu0 %7707
      %7709 = vrot.lane.b32.xlu0 %v7620, 96
      %v7710 = vpop.permute.xlu0 %7709
      %7711 = vrot.lane.b32.xlu0 %v7621, 96
      %v7712 = vpop.permute.xlu0 %7711
      %7713 = vrot.lane.b32.xlu0 %v7622, 96
      %v7714 = vpop.permute.xlu0 %7713
      %7715 = vrot.lane.b32.xlu0 %v7623, 96
      %v7716 = vpop.permute.xlu0 %7715
      %7717 = vrot.lane.b32.xlu0 %v7624, 96
      %v7718 = vpop.permute.xlu0 %7717
      %7719 = vrot.lane.b32.xlu0 %v7625, 96
      %v7720 = vpop.permute.xlu0 %7719
      %7721 = vrot.lane.b32.xlu0 %v7626, 96
      %v7722 = vpop.permute.xlu0 %7721
      %7755 = vst.msk [vmem:[#allocation3] sm:$0xff] %vm1665, %v7660
      %7756 = vst.msk [vmem:[#allocation3 + $0x28] sm:$0xff] %vm1665, %v7662
      %7757 = vst.msk [vmem:[#allocation3 + $0x50] sm:$0xff] %vm1665, %v7664
      %7758 = vst.msk [vmem:[#allocation3 + $0x78] sm:$0xff] %vm1665, %v7666
      %7759 = vst.msk [vmem:[#allocation3 + $0xa0] sm:$0xff] %vm1665, %v7668
      %7760 = vst.msk [vmem:[#allocation3 + $0xc8] sm:$0xff] %vm1665, %v7670
      %7761 = vst.msk [vmem:[#allocation3 + $0xf0] sm:$0xff] %vm1665, %v7672
      %7762 = vst.msk [vmem:[#allocation3 + $0x118] sm:$0xff] %vm1665, %v7674
      %7763 = vst.msk [vmem:[#allocation3 + $0x140] sm:$0xff] %vm1665, %v7676
      %7764 = vst.msk [vmem:[#allocation3 + $0x168] sm:$0xff] %vm1665, %v7678
      %7765 = vst.msk [vmem:[#allocation3 + $0x190] sm:$0xff] %vm1665, %v7680
      %7766 = vst.msk [vmem:[#allocation3 + $0x1b8] sm:$0xff] %vm1665, %v7682
      %7767 = vst.msk [vmem:[#allocation3 + $0x1e0] sm:$0xff] %vm1665, %v7684
      %7768 = vst.msk [vmem:[#allocation3 + $0x208] sm:$0xff] %vm1665, %v7686
      %7769 = vst.msk [vmem:[#allocation3 + $0x230] sm:$0xff] %vm1665, %v7688
      %7770 = vst.msk [vmem:[#allocation3 + $0x258] sm:$0xff] %vm1665, %v7690
      %7771 = vst.msk [vmem:[#allocation3 + $0x280] sm:$0xff] %vm1665, %v7692
      %7772 = vst.msk [vmem:[#allocation3 + $0x2a8] sm:$0xff] %vm1665, %v7694
      %7773 = vst.msk [vmem:[#allocation3 + $0x2d0] sm:$0xff] %vm1665, %v7696
      %7774 = vst.msk [vmem:[#allocation3 + $0x2f8] sm:$0xff] %vm1665, %v7698
      %7775 = vst.msk [vmem:[#allocation3 + $0x320] sm:$0xff] %vm1665, %v7700
      %7776 = vst.msk [vmem:[#allocation3 + $0x348] sm:$0xff] %vm1665, %v7702
      %7777 = vst.msk [vmem:[#allocation3 + $0x370] sm:$0xff] %vm1665, %v7704
      %7778 = vst.msk [vmem:[#allocation3 + $0x398] sm:$0xff] %vm1665, %v7706
      %7779 = vst.msk [vmem:[#allocation3 + $0x3c0] sm:$0xff] %vm1665, %v7708
      %7780 = vst.msk [vmem:[#allocation3 + $0x3e8] sm:$0xff] %vm1665, %v7710
      %7781 = vst.msk [vmem:[#allocation3 + $0x410] sm:$0xff] %vm1665, %v7712
      %7782 = vst.msk [vmem:[#allocation3 + $0x438] sm:$0xff] %vm1665, %v7714
      %7783 = vst.msk [vmem:[#allocation3 + $0x460] sm:$0xff] %vm1665, %v7716
      %7784 = vst.msk [vmem:[#allocation3 + $0x488] sm:$0xff] %vm1665, %v7718
      %7785 = vst.msk [vmem:[#allocation3 + $0x4b0] sm:$0xff] %vm1665, %v7720
      %7786 = vst.msk [vmem:[#allocation3 + $0x4d8] sm:$0xff] %vm1665, %v7722
      %v7787 = vld [vmem:[%s1022 + $0x1] sm:$0xff]
      %v7788 = vld [vmem:[%s1022 + $0x9] sm:$0xff]
      %v7789 = vld [vmem:[%s1022 + $0x19] sm:$0xff]
      %v7790 = vld [vmem:[%s1022 + $0x21] sm:$0xff]
      %v7791 = vld [vmem:[%s1022 + $0x31] sm:$0xff]
      %v7792 = vld [vmem:[%s1022 + $0x39] sm:$0xff]
      %v7793 = vld [vmem:[%s1022 + $0x49] sm:$0xff]
      %v7794 = vld [vmem:[%s1022 + $0x51] sm:$0xff]
      %v7795 = vld [vmem:[%s1022 + $0x61] sm:$0xff]
      %v7796 = vld [vmem:[%s1022 + $0x69] sm:$0xff]
      %v7797 = vld [vmem:[%s1022 + $0x79] sm:$0xff]
      %v7798 = vld [vmem:[%s1022 + $0x81] sm:$0xff]
      %v7799 = vld [vmem:[%s1022 + $0x91] sm:$0xff]
      %v7800 = vld [vmem:[%s1022 + $0x99] sm:$0xff]
      %v7801 = vld [vmem:[%s1022 + $0xa9] sm:$0xff]
      %v7802 = vld [vmem:[%s1022 + $0xb1] sm:$0xff]
      %v7803 = vld [vmem:[%s1022 + $0xc1] sm:$0xff]
      %v7804 = vld [vmem:[%s1022 + $0xc9] sm:$0xff]
      %v7805 = vld [vmem:[%s1022 + $0xd9] sm:$0xff]
      %v7806 = vld [vmem:[%s1022 + $0xe1] sm:$0xff]
      %v7807 = vld [vmem:[%s1022 + $0xf1] sm:$0xff]
      %v7808 = vld [vmem:[%s1022 + $0xf9] sm:$0xff]
      %v7809 = vld [vmem:[%s1022 + $0x109] sm:$0xff]
      %v7810 = vld [vmem:[%s1022 + $0x111] sm:$0xff]
      %v7811 = vld [vmem:[%s1022 + $0x121] sm:$0xff]
      %v7812 = vld [vmem:[%s1022 + $0x129] sm:$0xff]
      %v7813 = vld [vmem:[%s1022 + $0x139] sm:$0xff]
      %v7814 = vld [vmem:[%s1022 + $0x141] sm:$0xff]
      %v7815 = vld [vmem:[%s1022 + $0x151] sm:$0xff]
      %v7816 = vld [vmem:[%s1022 + $0x159] sm:$0xff]
      %v7817 = vld [vmem:[%s1022 + $0x169] sm:$0xff]
      %v7818 = vld [vmem:[%s1022 + $0x171] sm:$0xff]
      %7819 = vst.msk [vmem:[#allocation3 + $0x8] sm:$0xff] %vm562, %v7787
      %7820 = vst.msk [vmem:[#allocation3 + $0x30] sm:$0xff] %vm562, %v7788
      %7821 = vst.msk [vmem:[#allocation3 + $0x58] sm:$0xff] %vm562, %v7789
      %7822 = vst.msk [vmem:[#allocation3 + $0x80] sm:$0xff] %vm562, %v7790
      %7823 = vst.msk [vmem:[#allocation3 + $0xa8] sm:$0xff] %vm562, %v7791
      %7824 = vst.msk [vmem:[#allocation3 + $0xd0] sm:$0xff] %vm562, %v7792
      %7825 = vst.msk [vmem:[#allocation3 + $0xf8] sm:$0xff] %vm562, %v7793
      %7826 = vst.msk [vmem:[#allocation3 + $0x120] sm:$0xff] %vm562, %v7794
      %7827 = vst.msk [vmem:[#allocation3 + $0x148] sm:$0xff] %vm562, %v7795
      %7828 = vst.msk [vmem:[#allocation3 + $0x170] sm:$0xff] %vm562, %v7796
      %7829 = vst.msk [vmem:[#allocation3 + $0x198] sm:$0xff] %vm562, %v7797
      %7830 = vst.msk [vmem:[#allocation3 + $0x1c0] sm:$0xff] %vm562, %v7798
      %7831 = vst.msk [vmem:[#allocation3 + $0x1e8] sm:$0xff] %vm562, %v7799
      %7832 = vst.msk [vmem:[#allocation3 + $0x210] sm:$0xff] %vm562, %v7800
      %7833 = vst.msk [vmem:[#allocation3 + $0x238] sm:$0xff] %vm562, %v7801
      %7834 = vst.msk [vmem:[#allocation3 + $0x260] sm:$0xff] %vm562, %v7802
      %7835 = vst.msk [vmem:[#allocation3 + $0x288] sm:$0xff] %vm562, %v7803
      %7836 = vst.msk [vmem:[#allocation3 + $0x2b0] sm:$0xff] %vm562, %v7804
      %7837 = vst.msk [vmem:[#allocation3 + $0x2d8] sm:$0xff] %vm562, %v7805
      %7838 = vst.msk [vmem:[#allocation3 + $0x300] sm:$0xff] %vm562, %v7806
      %7839 = vst.msk [vmem:[#allocation3 + $0x328] sm:$0xff] %vm562, %v7807
      %7840 = vst.msk [vmem:[#allocation3 + $0x350] sm:$0xff] %vm562, %v7808
      %7841 = vst.msk [vmem:[#allocation3 + $0x378] sm:$0xff] %vm562, %v7809
      %7842 = vst.msk [vmem:[#allocation3 + $0x3a0] sm:$0xff] %vm562, %v7810
      %7843 = vst.msk [vmem:[#allocation3 + $0x3c8] sm:$0xff] %vm562, %v7811
      %7844 = vst.msk [vmem:[#allocation3 + $0x3f0] sm:$0xff] %vm562, %v7812
      %7845 = vst.msk [vmem:[#allocation3 + $0x418] sm:$0xff] %vm562, %v7813
      %7846 = vst.msk [vmem:[#allocation3 + $0x440] sm:$0xff] %vm562, %v7814
      %7847 = vst.msk [vmem:[#allocation3 + $0x468] sm:$0xff] %vm562, %v7815
      %7848 = vst.msk [vmem:[#allocation3 + $0x490] sm:$0xff] %vm562, %v7816
      %7849 = vst.msk [vmem:[#allocation3 + $0x4b8] sm:$0xff] %vm562, %v7817
      %7850 = vst.msk [vmem:[#allocation3 + $0x4e0] sm:$0xff] %vm562, %v7818
      %v7851 = vld [vmem:[%s1022 + $0x2] sm:$0xff]
      %v7852 = vld [vmem:[%s1022 + $0xa] sm:$0xff]
      %v7853 = vld [vmem:[%s1022 + $0x1a] sm:$0xff]
      %v7854 = vld [vmem:[%s1022 + $0x22] sm:$0xff]
      %v7855 = vld [vmem:[%s1022 + $0x32] sm:$0xff]
      %v7856 = vld [vmem:[%s1022 + $0x3a] sm:$0xff]
      %v7857 = vld [vmem:[%s1022 + $0x4a] sm:$0xff]
      %v7858 = vld [vmem:[%s1022 + $0x52] sm:$0xff]
      %v7859 = vld [vmem:[%s1022 + $0x62] sm:$0xff]
      %v7860 = vld [vmem:[%s1022 + $0x6a] sm:$0xff]
      %v7861 = vld [vmem:[%s1022 + $0x7a] sm:$0xff]
      %v7862 = vld [vmem:[%s1022 + $0x82] sm:$0xff]
      %v7863 = vld [vmem:[%s1022 + $0x92] sm:$0xff]
      %v7864 = vld [vmem:[%s1022 + $0x9a] sm:$0xff]
      %v7865 = vld [vmem:[%s1022 + $0xaa] sm:$0xff]
      %v7866 = vld [vmem:[%s1022 + $0xb2] sm:$0xff]
      %v7867 = vld [vmem:[%s1022 + $0xc2] sm:$0xff]
      %v7868 = vld [vmem:[%s1022 + $0xca] sm:$0xff]
      %v7869 = vld [vmem:[%s1022 + $0xda] sm:$0xff]
      %v7870 = vld [vmem:[%s1022 + $0xe2] sm:$0xff]
      %v7871 = vld [vmem:[%s1022 + $0xf2] sm:$0xff]
      %v7872 = vld [vmem:[%s1022 + $0xfa] sm:$0xff]
      %v7873 = vld [vmem:[%s1022 + $0x10a] sm:$0xff]
      %v7874 = vld [vmem:[%s1022 + $0x112] sm:$0xff]
      %v7875 = vld [vmem:[%s1022 + $0x122] sm:$0xff]
      %v7876 = vld [vmem:[%s1022 + $0x12a] sm:$0xff]
      %v7877 = vld [vmem:[%s1022 + $0x13a] sm:$0xff]
      %v7878 = vld [vmem:[%s1022 + $0x142] sm:$0xff]
      %v7879 = vld [vmem:[%s1022 + $0x152] sm:$0xff]
      %v7880 = vld [vmem:[%s1022 + $0x15a] sm:$0xff]
      %v7881 = vld [vmem:[%s1022 + $0x16a] sm:$0xff]
      %v7882 = vld [vmem:[%s1022 + $0x172] sm:$0xff]
      %7915 = vrot.lane.b32.xlu0 %v7851, 32
      %v7916 = vpop.permute.xlu0 %7915
      %7917 = vrot.lane.b32.xlu0 %v7852, 32
      %v7918 = vpop.permute.xlu0 %7917
      %7919 = vrot.lane.b32.xlu0 %v7853, 32
      %v7920 = vpop.permute.xlu0 %7919
      %7921 = vrot.lane.b32.xlu0 %v7854, 32
      %v7922 = vpop.permute.xlu0 %7921
      %7923 = vrot.lane.b32.xlu0 %v7855, 32
      %v7924 = vpop.permute.xlu0 %7923
      %7925 = vrot.lane.b32.xlu0 %v7856, 32
      %v7926 = vpop.permute.xlu0 %7925
      %7927 = vrot.lane.b32.xlu0 %v7857, 32
      %v7928 = vpop.permute.xlu0 %7927
      %7929 = vrot.lane.b32.xlu0 %v7858, 32
      %v7930 = vpop.permute.xlu0 %7929
      %7931 = vrot.lane.b32.xlu0 %v7859, 32
      %v7932 = vpop.permute.xlu0 %7931
      %7933 = vrot.lane.b32.xlu0 %v7860, 32
      %v7934 = vpop.permute.xlu0 %7933
      %7935 = vrot.lane.b32.xlu0 %v7861, 32
      %v7936 = vpop.permute.xlu0 %7935
      %7937 = vrot.lane.b32.xlu0 %v7862, 32
      %v7938 = vpop.permute.xlu0 %7937
      %7939 = vrot.lane.b32.xlu0 %v7863, 32
      %v7940 = vpop.permute.xlu0 %7939
      %7941 = vrot.lane.b32.xlu0 %v7864, 32
      %v7942 = vpop.permute.xlu0 %7941
      %7943 = vrot.lane.b32.xlu0 %v7865, 32
      %v7944 = vpop.permute.xlu0 %7943
      %7945 = vrot.lane.b32.xlu0 %v7866, 32
      %v7946 = vpop.permute.xlu0 %7945
      %7947 = vrot.lane.b32.xlu0 %v7867, 32
      %v7948 = vpop.permute.xlu0 %7947
      %7949 = vrot.lane.b32.xlu0 %v7868, 32
      %v7950 = vpop.permute.xlu0 %7949
      %7951 = vrot.lane.b32.xlu0 %v7869, 32
      %v7952 = vpop.permute.xlu0 %7951
      %7953 = vrot.lane.b32.xlu0 %v7870, 32
      %v7954 = vpop.permute.xlu0 %7953
      %7955 = vrot.lane.b32.xlu0 %v7871, 32
      %v7956 = vpop.permute.xlu0 %7955
      %7957 = vrot.lane.b32.xlu0 %v7872, 32
      %v7958 = vpop.permute.xlu0 %7957
      %7959 = vrot.lane.b32.xlu0 %v7873, 32
      %v7960 = vpop.permute.xlu0 %7959
      %7961 = vrot.lane.b32.xlu0 %v7874, 32
      %v7962 = vpop.permute.xlu0 %7961
      %7963 = vrot.lane.b32.xlu0 %v7875, 32
      %v7964 = vpop.permute.xlu0 %7963
      %7965 = vrot.lane.b32.xlu0 %v7876, 32
      %v7966 = vpop.permute.xlu0 %7965
      %7967 = vrot.lane.b32.xlu0 %v7877, 32
      %v7968 = vpop.permute.xlu0 %7967
      %7969 = vrot.lane.b32.xlu0 %v7878, 32
      %v7970 = vpop.permute.xlu0 %7969
      %7971 = vrot.lane.b32.xlu0 %v7879, 32
      %v7972 = vpop.permute.xlu0 %7971
      %7973 = vrot.lane.b32.xlu0 %v7880, 32
      %v7974 = vpop.permute.xlu0 %7973
      %7975 = vrot.lane.b32.xlu0 %v7881, 32
      %v7976 = vpop.permute.xlu0 %7975
      %7977 = vrot.lane.b32.xlu0 %v7882, 32
      %v7978 = vpop.permute.xlu0 %7977
      %8011 = vst.msk [vmem:[#allocation3 + $0x8] sm:$0xff] %vm1279, %v7916
      %8012 = vst.msk [vmem:[#allocation3 + $0x30] sm:$0xff] %vm1279, %v7918
      %8013 = vst.msk [vmem:[#allocation3 + $0x58] sm:$0xff] %vm1279, %v7920
      %8014 = vst.msk [vmem:[#allocation3 + $0x80] sm:$0xff] %vm1279, %v7922
      %8015 = vst.msk [vmem:[#allocation3 + $0xa8] sm:$0xff] %vm1279, %v7924
      %8016 = vst.msk [vmem:[#allocation3 + $0xd0] sm:$0xff] %vm1279, %v7926
      %8017 = vst.msk [vmem:[#allocation3 + $0xf8] sm:$0xff] %vm1279, %v7928
      %8018 = vst.msk [vmem:[#allocation3 + $0x120] sm:$0xff] %vm1279, %v7930
      %8019 = vst.msk [vmem:[#allocation3 + $0x148] sm:$0xff] %vm1279, %v7932
      %8020 = vst.msk [vmem:[#allocation3 + $0x170] sm:$0xff] %vm1279, %v7934
      %8021 = vst.msk [vmem:[#allocation3 + $0x198] sm:$0xff] %vm1279, %v7936
      %8022 = vst.msk [vmem:[#allocation3 + $0x1c0] sm:$0xff] %vm1279, %v7938
      %8023 = vst.msk [vmem:[#allocation3 + $0x1e8] sm:$0xff] %vm1279, %v7940
      %8024 = vst.msk [vmem:[#allocation3 + $0x210] sm:$0xff] %vm1279, %v7942
      %8025 = vst.msk [vmem:[#allocation3 + $0x238] sm:$0xff] %vm1279, %v7944
      %8026 = vst.msk [vmem:[#allocation3 + $0x260] sm:$0xff] %vm1279, %v7946
      %8027 = vst.msk [vmem:[#allocation3 + $0x288] sm:$0xff] %vm1279, %v7948
      %8028 = vst.msk [vmem:[#allocation3 + $0x2b0] sm:$0xff] %vm1279, %v7950
      %8029 = vst.msk [vmem:[#allocation3 + $0x2d8] sm:$0xff] %vm1279, %v7952
      %8030 = vst.msk [vmem:[#allocation3 + $0x300] sm:$0xff] %vm1279, %v7954
      %8031 = vst.msk [vmem:[#allocation3 + $0x328] sm:$0xff] %vm1279, %v7956
      %8032 = vst.msk [vmem:[#allocation3 + $0x350] sm:$0xff] %vm1279, %v7958
      %8033 = vst.msk [vmem:[#allocation3 + $0x378] sm:$0xff] %vm1279, %v7960
      %8034 = vst.msk [vmem:[#allocation3 + $0x3a0] sm:$0xff] %vm1279, %v7962
      %8035 = vst.msk [vmem:[#allocation3 + $0x3c8] sm:$0xff] %vm1279, %v7964
      %8036 = vst.msk [vmem:[#allocation3 + $0x3f0] sm:$0xff] %vm1279, %v7966
      %8037 = vst.msk [vmem:[#allocation3 + $0x418] sm:$0xff] %vm1279, %v7968
      %8038 = vst.msk [vmem:[#allocation3 + $0x440] sm:$0xff] %vm1279, %v7970
      %8039 = vst.msk [vmem:[#allocation3 + $0x468] sm:$0xff] %vm1279, %v7972
      %8040 = vst.msk [vmem:[#allocation3 + $0x490] sm:$0xff] %vm1279, %v7974
      %8041 = vst.msk [vmem:[#allocation3 + $0x4b8] sm:$0xff] %vm1279, %v7976
      %8042 = vst.msk [vmem:[#allocation3 + $0x4e0] sm:$0xff] %vm1279, %v7978
      %v8043 = vld [vmem:[%s1954] sm:$0xff]
      %v8044 = vld [vmem:[%s1954 + $0x8] sm:$0xff]
      %v8045 = vld [vmem:[%s1954 + $0x18] sm:$0xff]
      %v8046 = vld [vmem:[%s1954 + $0x20] sm:$0xff]
      %v8047 = vld [vmem:[%s1954 + $0x30] sm:$0xff]
      %v8048 = vld [vmem:[%s1954 + $0x38] sm:$0xff]
      %v8049 = vld [vmem:[%s1954 + $0x48] sm:$0xff]
      %v8050 = vld [vmem:[%s1954 + $0x50] sm:$0xff]
      %v8051 = vld [vmem:[%s1954 + $0x60] sm:$0xff]
      %v8052 = vld [vmem:[%s1954 + $0x68] sm:$0xff]
      %v8053 = vld [vmem:[%s1954 + $0x78] sm:$0xff]
      %v8054 = vld [vmem:[%s1954 + $0x80] sm:$0xff]
      %v8055 = vld [vmem:[%s1954 + $0x90] sm:$0xff]
      %v8056 = vld [vmem:[%s1954 + $0x98] sm:$0xff]
      %v8057 = vld [vmem:[%s1954 + $0xa8] sm:$0xff]
      %v8058 = vld [vmem:[%s1954 + $0xb0] sm:$0xff]
      %v8059 = vld [vmem:[%s1954 + $0xc0] sm:$0xff]
      %v8060 = vld [vmem:[%s1954 + $0xc8] sm:$0xff]
      %v8061 = vld [vmem:[%s1954 + $0xd8] sm:$0xff]
      %v8062 = vld [vmem:[%s1954 + $0xe0] sm:$0xff]
      %v8063 = vld [vmem:[%s1954 + $0xf0] sm:$0xff]
      %v8064 = vld [vmem:[%s1954 + $0xf8] sm:$0xff]
      %v8065 = vld [vmem:[%s1954 + $0x108] sm:$0xff]
      %v8066 = vld [vmem:[%s1954 + $0x110] sm:$0xff]
      %v8067 = vld [vmem:[%s1954 + $0x120] sm:$0xff]
      %v8068 = vld [vmem:[%s1954 + $0x128] sm:$0xff]
      %v8069 = vld [vmem:[%s1954 + $0x138] sm:$0xff]
      %v8070 = vld [vmem:[%s1954 + $0x140] sm:$0xff]
      %v8071 = vld [vmem:[%s1954 + $0x150] sm:$0xff]
      %v8072 = vld [vmem:[%s1954 + $0x158] sm:$0xff]
      %v8073 = vld [vmem:[%s1954 + $0x168] sm:$0xff]
      %v8074 = vld [vmem:[%s1954 + $0x170] sm:$0xff]
      %8107 = vrot.lane.b32.xlu0 %v8043, 64
      %v8108 = vpop.permute.xlu0 %8107
      %8109 = vrot.lane.b32.xlu0 %v8044, 64
      %v8110 = vpop.permute.xlu0 %8109
      %8111 = vrot.lane.b32.xlu0 %v8045, 64
      %v8112 = vpop.permute.xlu0 %8111
      %8113 = vrot.lane.b32.xlu0 %v8046, 64
      %v8114 = vpop.permute.xlu0 %8113
      %8115 = vrot.lane.b32.xlu0 %v8047, 64
      %v8116 = vpop.permute.xlu0 %8115
      %8117 = vrot.lane.b32.xlu0 %v8048, 64
      %v8118 = vpop.permute.xlu0 %8117
      %8119 = vrot.lane.b32.xlu0 %v8049, 64
      %v8120 = vpop.permute.xlu0 %8119
      %8121 = vrot.lane.b32.xlu0 %v8050, 64
      %v8122 = vpop.permute.xlu0 %8121
      %8123 = vrot.lane.b32.xlu0 %v8051, 64
      %v8124 = vpop.permute.xlu0 %8123
      %8125 = vrot.lane.b32.xlu0 %v8052, 64
      %v8126 = vpop.permute.xlu0 %8125
      %8127 = vrot.lane.b32.xlu0 %v8053, 64
      %v8128 = vpop.permute.xlu0 %8127
      %8129 = vrot.lane.b32.xlu0 %v8054, 64
      %v8130 = vpop.permute.xlu0 %8129
      %8131 = vrot.lane.b32.xlu0 %v8055, 64
      %v8132 = vpop.permute.xlu0 %8131
      %8133 = vrot.lane.b32.xlu0 %v8056, 64
      %v8134 = vpop.permute.xlu0 %8133
      %8135 = vrot.lane.b32.xlu0 %v8057, 64
      %v8136 = vpop.permute.xlu0 %8135
      %8137 = vrot.lane.b32.xlu0 %v8058, 64
      %v8138 = vpop.permute.xlu0 %8137
      %8139 = vrot.lane.b32.xlu0 %v8059, 64
      %v8140 = vpop.permute.xlu0 %8139
      %8141 = vrot.lane.b32.xlu0 %v8060, 64
      %v8142 = vpop.permute.xlu0 %8141
      %8143 = vrot.lane.b32.xlu0 %v8061, 64
      %v8144 = vpop.permute.xlu0 %8143
      %8145 = vrot.lane.b32.xlu0 %v8062, 64
      %v8146 = vpop.permute.xlu0 %8145
      %8147 = vrot.lane.b32.xlu0 %v8063, 64
      %v8148 = vpop.permute.xlu0 %8147
      %8149 = vrot.lane.b32.xlu0 %v8064, 64
      %v8150 = vpop.permute.xlu0 %8149
      %8151 = vrot.lane.b32.xlu0 %v8065, 64
      %v8152 = vpop.permute.xlu0 %8151
      %8153 = vrot.lane.b32.xlu0 %v8066, 64
      %v8154 = vpop.permute.xlu0 %8153
      %8155 = vrot.lane.b32.xlu0 %v8067, 64
      %v8156 = vpop.permute.xlu0 %8155
      %8157 = vrot.lane.b32.xlu0 %v8068, 64
      %v8158 = vpop.permute.xlu0 %8157
      %8159 = vrot.lane.b32.xlu0 %v8069, 64
      %v8160 = vpop.permute.xlu0 %8159
      %8161 = vrot.lane.b32.xlu0 %v8070, 64
      %v8162 = vpop.permute.xlu0 %8161
      %8163 = vrot.lane.b32.xlu0 %v8071, 64
      %v8164 = vpop.permute.xlu0 %8163
      %8165 = vrot.lane.b32.xlu0 %v8072, 64
      %v8166 = vpop.permute.xlu0 %8165
      %8167 = vrot.lane.b32.xlu0 %v8073, 64
      %v8168 = vpop.permute.xlu0 %8167
      %8169 = vrot.lane.b32.xlu0 %v8074, 64
      %v8170 = vpop.permute.xlu0 %8169
      %8203 = vst.msk [vmem:[#allocation3 + $0x8] sm:$0xff] %vm1472, %v8108
      %8204 = vst.msk [vmem:[#allocation3 + $0x30] sm:$0xff] %vm1472, %v8110
      %8205 = vst.msk [vmem:[#allocation3 + $0x58] sm:$0xff] %vm1472, %v8112
      %8206 = vst.msk [vmem:[#allocation3 + $0x80] sm:$0xff] %vm1472, %v8114
      %8207 = vst.msk [vmem:[#allocation3 + $0xa8] sm:$0xff] %vm1472, %v8116
      %8208 = vst.msk [vmem:[#allocation3 + $0xd0] sm:$0xff] %vm1472, %v8118
      %8209 = vst.msk [vmem:[#allocation3 + $0xf8] sm:$0xff] %vm1472, %v8120
      %8210 = vst.msk [vmem:[#allocation3 + $0x120] sm:$0xff] %vm1472, %v8122
      %8211 = vst.msk [vmem:[#allocation3 + $0x148] sm:$0xff] %vm1472, %v8124
      %8212 = vst.msk [vmem:[#allocation3 + $0x170] sm:$0xff] %vm1472, %v8126
      %8213 = vst.msk [vmem:[#allocation3 + $0x198] sm:$0xff] %vm1472, %v8128
      %8214 = vst.msk [vmem:[#allocation3 + $0x1c0] sm:$0xff] %vm1472, %v8130
      %8215 = vst.msk [vmem:[#allocation3 + $0x1e8] sm:$0xff] %vm1472, %v8132
      %8216 = vst.msk [vmem:[#allocation3 + $0x210] sm:$0xff] %vm1472, %v8134
      %8217 = vst.msk [vmem:[#allocation3 + $0x238] sm:$0xff] %vm1472, %v8136
      %8218 = vst.msk [vmem:[#allocation3 + $0x260] sm:$0xff] %vm1472, %v8138
      %8219 = vst.msk [vmem:[#allocation3 + $0x288] sm:$0xff] %vm1472, %v8140
      %8220 = vst.msk [vmem:[#allocation3 + $0x2b0] sm:$0xff] %vm1472, %v8142
      %8221 = vst.msk [vmem:[#allocation3 + $0x2d8] sm:$0xff] %vm1472, %v8144
      %8222 = vst.msk [vmem:[#allocation3 + $0x300] sm:$0xff] %vm1472, %v8146
      %8223 = vst.msk [vmem:[#allocation3 + $0x328] sm:$0xff] %vm1472, %v8148
      %8224 = vst.msk [vmem:[#allocation3 + $0x350] sm:$0xff] %vm1472, %v8150
      %8225 = vst.msk [vmem:[#allocation3 + $0x378] sm:$0xff] %vm1472, %v8152
      %8226 = vst.msk [vmem:[#allocation3 + $0x3a0] sm:$0xff] %vm1472, %v8154
      %8227 = vst.msk [vmem:[#allocation3 + $0x3c8] sm:$0xff] %vm1472, %v8156
      %8228 = vst.msk [vmem:[#allocation3 + $0x3f0] sm:$0xff] %vm1472, %v8158
      %8229 = vst.msk [vmem:[#allocation3 + $0x418] sm:$0xff] %vm1472, %v8160
      %8230 = vst.msk [vmem:[#allocation3 + $0x440] sm:$0xff] %vm1472, %v8162
      %8231 = vst.msk [vmem:[#allocation3 + $0x468] sm:$0xff] %vm1472, %v8164
      %8232 = vst.msk [vmem:[#allocation3 + $0x490] sm:$0xff] %vm1472, %v8166
      %8233 = vst.msk [vmem:[#allocation3 + $0x4b8] sm:$0xff] %vm1472, %v8168
      %8234 = vst.msk [vmem:[#allocation3 + $0x4e0] sm:$0xff] %vm1472, %v8170
      %v8235 = vld [vmem:[%s1954 + $0x1] sm:$0xff]
      %v8236 = vld [vmem:[%s1954 + $0x9] sm:$0xff]
      %v8237 = vld [vmem:[%s1954 + $0x19] sm:$0xff]
      %v8238 = vld [vmem:[%s1954 + $0x21] sm:$0xff]
      %v8239 = vld [vmem:[%s1954 + $0x31] sm:$0xff]
      %v8240 = vld [vmem:[%s1954 + $0x39] sm:$0xff]
      %v8241 = vld [vmem:[%s1954 + $0x49] sm:$0xff]
      %v8242 = vld [vmem:[%s1954 + $0x51] sm:$0xff]
      %v8243 = vld [vmem:[%s1954 + $0x61] sm:$0xff]
      %v8244 = vld [vmem:[%s1954 + $0x69] sm:$0xff]
      %v8245 = vld [vmem:[%s1954 + $0x79] sm:$0xff]
      %v8246 = vld [vmem:[%s1954 + $0x81] sm:$0xff]
      %v8247 = vld [vmem:[%s1954 + $0x91] sm:$0xff]
      %v8248 = vld [vmem:[%s1954 + $0x99] sm:$0xff]
      %v8249 = vld [vmem:[%s1954 + $0xa9] sm:$0xff]
      %v8250 = vld [vmem:[%s1954 + $0xb1] sm:$0xff]
      %v8251 = vld [vmem:[%s1954 + $0xc1] sm:$0xff]
      %v8252 = vld [vmem:[%s1954 + $0xc9] sm:$0xff]
      %v8253 = vld [vmem:[%s1954 + $0xd9] sm:$0xff]
      %v8254 = vld [vmem:[%s1954 + $0xe1] sm:$0xff]
      %v8255 = vld [vmem:[%s1954 + $0xf1] sm:$0xff]
      %v8256 = vld [vmem:[%s1954 + $0xf9] sm:$0xff]
      %v8257 = vld [vmem:[%s1954 + $0x109] sm:$0xff]
      %v8258 = vld [vmem:[%s1954 + $0x111] sm:$0xff]
      %v8259 = vld [vmem:[%s1954 + $0x121] sm:$0xff]
      %v8260 = vld [vmem:[%s1954 + $0x129] sm:$0xff]
      %v8261 = vld [vmem:[%s1954 + $0x139] sm:$0xff]
      %v8262 = vld [vmem:[%s1954 + $0x141] sm:$0xff]
      %v8263 = vld [vmem:[%s1954 + $0x151] sm:$0xff]
      %v8264 = vld [vmem:[%s1954 + $0x159] sm:$0xff]
      %v8265 = vld [vmem:[%s1954 + $0x169] sm:$0xff]
      %v8266 = vld [vmem:[%s1954 + $0x171] sm:$0xff]
      %8299 = vrot.lane.b32.xlu0 %v8235, 96
      %v8300 = vpop.permute.xlu0 %8299
      %8301 = vrot.lane.b32.xlu0 %v8236, 96
      %v8302 = vpop.permute.xlu0 %8301
      %8303 = vrot.lane.b32.xlu0 %v8237, 96
      %v8304 = vpop.permute.xlu0 %8303
      %8305 = vrot.lane.b32.xlu0 %v8238, 96
      %v8306 = vpop.permute.xlu0 %8305
      %8307 = vrot.lane.b32.xlu0 %v8239, 96
      %v8308 = vpop.permute.xlu0 %8307
      %8309 = vrot.lane.b32.xlu0 %v8240, 96
      %v8310 = vpop.permute.xlu0 %8309
      %8311 = vrot.lane.b32.xlu0 %v8241, 96
      %v8312 = vpop.permute.xlu0 %8311
      %8313 = vrot.lane.b32.xlu0 %v8242, 96
      %v8314 = vpop.permute.xlu0 %8313
      %8315 = vrot.lane.b32.xlu0 %v8243, 96
      %v8316 = vpop.permute.xlu0 %8315
      %8317 = vrot.lane.b32.xlu0 %v8244, 96
      %v8318 = vpop.permute.xlu0 %8317
      %8319 = vrot.lane.b32.xlu0 %v8245, 96
      %v8320 = vpop.permute.xlu0 %8319
      %8321 = vrot.lane.b32.xlu0 %v8246, 96
      %v8322 = vpop.permute.xlu0 %8321
      %8323 = vrot.lane.b32.xlu0 %v8247, 96
      %v8324 = vpop.permute.xlu0 %8323
      %8325 = vrot.lane.b32.xlu0 %v8248, 96
      %v8326 = vpop.permute.xlu0 %8325
      %8327 = vrot.lane.b32.xlu0 %v8249, 96
      %v8328 = vpop.permute.xlu0 %8327
      %8329 = vrot.lane.b32.xlu0 %v8250, 96
      %v8330 = vpop.permute.xlu0 %8329
      %8331 = vrot.lane.b32.xlu0 %v8251, 96
      %v8332 = vpop.permute.xlu0 %8331
      %8333 = vrot.lane.b32.xlu0 %v8252, 96
      %v8334 = vpop.permute.xlu0 %8333
      %8335 = vrot.lane.b32.xlu0 %v8253, 96
      %v8336 = vpop.permute.xlu0 %8335
      %8337 = vrot.lane.b32.xlu0 %v8254, 96
      %v8338 = vpop.permute.xlu0 %8337
      %8339 = vrot.lane.b32.xlu0 %v8255, 96
      %v8340 = vpop.permute.xlu0 %8339
      %8341 = vrot.lane.b32.xlu0 %v8256, 96
      %v8342 = vpop.permute.xlu0 %8341
      %8343 = vrot.lane.b32.xlu0 %v8257, 96
      %v8344 = vpop.permute.xlu0 %8343
      %8345 = vrot.lane.b32.xlu0 %v8258, 96
      %v8346 = vpop.permute.xlu0 %8345
      %8347 = vrot.lane.b32.xlu0 %v8259, 96
      %v8348 = vpop.permute.xlu0 %8347
      %8349 = vrot.lane.b32.xlu0 %v8260, 96
      %v8350 = vpop.permute.xlu0 %8349
      %8351 = vrot.lane.b32.xlu0 %v8261, 96
      %v8352 = vpop.permute.xlu0 %8351
      %8353 = vrot.lane.b32.xlu0 %v8262, 96
      %v8354 = vpop.permute.xlu0 %8353
      %8355 = vrot.lane.b32.xlu0 %v8263, 96
      %v8356 = vpop.permute.xlu0 %8355
      %8357 = vrot.lane.b32.xlu0 %v8264, 96
      %v8358 = vpop.permute.xlu0 %8357
      %8359 = vrot.lane.b32.xlu0 %v8265, 96
      %v8360 = vpop.permute.xlu0 %8359
      %8361 = vrot.lane.b32.xlu0 %v8266, 96
      %v8362 = vpop.permute.xlu0 %8361
      %8395 = vst.msk [vmem:[#allocation3 + $0x8] sm:$0xff] %vm1665, %v8300
      %8396 = vst.msk [vmem:[#allocation3 + $0x30] sm:$0xff] %vm1665, %v8302
      %8397 = vst.msk [vmem:[#allocation3 + $0x58] sm:$0xff] %vm1665, %v8304
      %8398 = vst.msk [vmem:[#allocation3 + $0x80] sm:$0xff] %vm1665, %v8306
      %8399 = vst.msk [vmem:[#allocation3 + $0xa8] sm:$0xff] %vm1665, %v8308
      %8400 = vst.msk [vmem:[#allocation3 + $0xd0] sm:$0xff] %vm1665, %v8310
      %8401 = vst.msk [vmem:[#allocation3 + $0xf8] sm:$0xff] %vm1665, %v8312
      %8402 = vst.msk [vmem:[#allocation3 + $0x120] sm:$0xff] %vm1665, %v8314
      %8403 = vst.msk [vmem:[#allocation3 + $0x148] sm:$0xff] %vm1665, %v8316
      %8404 = vst.msk [vmem:[#allocation3 + $0x170] sm:$0xff] %vm1665, %v8318
      %8405 = vst.msk [vmem:[#allocation3 + $0x198] sm:$0xff] %vm1665, %v8320
      %8406 = vst.msk [vmem:[#allocation3 + $0x1c0] sm:$0xff] %vm1665, %v8322
      %8407 = vst.msk [vmem:[#allocation3 + $0x1e8] sm:$0xff] %vm1665, %v8324
      %8408 = vst.msk [vmem:[#allocation3 + $0x210] sm:$0xff] %vm1665, %v8326
      %8409 = vst.msk [vmem:[#allocation3 + $0x238] sm:$0xff] %vm1665, %v8328
      %8410 = vst.msk [vmem:[#allocation3 + $0x260] sm:$0xff] %vm1665, %v8330
      %8411 = vst.msk [vmem:[#allocation3 + $0x288] sm:$0xff] %vm1665, %v8332
      %8412 = vst.msk [vmem:[#allocation3 + $0x2b0] sm:$0xff] %vm1665, %v8334
      %8413 = vst.msk [vmem:[#allocation3 + $0x2d8] sm:$0xff] %vm1665, %v8336
      %8414 = vst.msk [vmem:[#allocation3 + $0x300] sm:$0xff] %vm1665, %v8338
      %8415 = vst.msk [vmem:[#allocation3 + $0x328] sm:$0xff] %vm1665, %v8340
      %8416 = vst.msk [vmem:[#allocation3 + $0x350] sm:$0xff] %vm1665, %v8342
      %8417 = vst.msk [vmem:[#allocation3 + $0x378] sm:$0xff] %vm1665, %v8344
      %8418 = vst.msk [vmem:[#allocation3 + $0x3a0] sm:$0xff] %vm1665, %v8346
      %8419 = vst.msk [vmem:[#allocation3 + $0x3c8] sm:$0xff] %vm1665, %v8348
      %8420 = vst.msk [vmem:[#allocation3 + $0x3f0] sm:$0xff] %vm1665, %v8350
      %8421 = vst.msk [vmem:[#allocation3 + $0x418] sm:$0xff] %vm1665, %v8352
      %8422 = vst.msk [vmem:[#allocation3 + $0x440] sm:$0xff] %vm1665, %v8354
      %8423 = vst.msk [vmem:[#allocation3 + $0x468] sm:$0xff] %vm1665, %v8356
      %8424 = vst.msk [vmem:[#allocation3 + $0x490] sm:$0xff] %vm1665, %v8358
      %8425 = vst.msk [vmem:[#allocation3 + $0x4b8] sm:$0xff] %vm1665, %v8360
      %8426 = vst.msk [vmem:[#allocation3 + $0x4e0] sm:$0xff] %vm1665, %v8362
      %v8427 = vld [vmem:[%s1954 + $0x2] sm:$0xff]
      %v8428 = vld [vmem:[%s1954 + $0xa] sm:$0xff]
      %v8429 = vld [vmem:[%s1954 + $0x1a] sm:$0xff]
      %v8430 = vld [vmem:[%s1954 + $0x22] sm:$0xff]
      %v8431 = vld [vmem:[%s1954 + $0x32] sm:$0xff]
      %v8432 = vld [vmem:[%s1954 + $0x3a] sm:$0xff]
      %v8433 = vld [vmem:[%s1954 + $0x4a] sm:$0xff]
      %v8434 = vld [vmem:[%s1954 + $0x52] sm:$0xff]
      %v8435 = vld [vmem:[%s1954 + $0x62] sm:$0xff]
      %v8436 = vld [vmem:[%s1954 + $0x6a] sm:$0xff]
      %v8437 = vld [vmem:[%s1954 + $0x7a] sm:$0xff]
      %v8438 = vld [vmem:[%s1954 + $0x82] sm:$0xff]
      %v8439 = vld [vmem:[%s1954 + $0x92] sm:$0xff]
      %v8440 = vld [vmem:[%s1954 + $0x9a] sm:$0xff]
      %v8441 = vld [vmem:[%s1954 + $0xaa] sm:$0xff]
      %v8442 = vld [vmem:[%s1954 + $0xb2] sm:$0xff]
      %v8443 = vld [vmem:[%s1954 + $0xc2] sm:$0xff]
      %v8444 = vld [vmem:[%s1954 + $0xca] sm:$0xff]
      %v8445 = vld [vmem:[%s1954 + $0xda] sm:$0xff]
      %v8446 = vld [vmem:[%s1954 + $0xe2] sm:$0xff]
      %v8447 = vld [vmem:[%s1954 + $0xf2] sm:$0xff]
      %v8448 = vld [vmem:[%s1954 + $0xfa] sm:$0xff]
      %v8449 = vld [vmem:[%s1954 + $0x10a] sm:$0xff]
      %v8450 = vld [vmem:[%s1954 + $0x112] sm:$0xff]
      %v8451 = vld [vmem:[%s1954 + $0x122] sm:$0xff]
      %v8452 = vld [vmem:[%s1954 + $0x12a] sm:$0xff]
      %v8453 = vld [vmem:[%s1954 + $0x13a] sm:$0xff]
      %v8454 = vld [vmem:[%s1954 + $0x142] sm:$0xff]
      %v8455 = vld [vmem:[%s1954 + $0x152] sm:$0xff]
      %v8456 = vld [vmem:[%s1954 + $0x15a] sm:$0xff]
      %v8457 = vld [vmem:[%s1954 + $0x16a] sm:$0xff]
      %v8458 = vld [vmem:[%s1954 + $0x172] sm:$0xff]
      %8459 = vst.msk [vmem:[#allocation3 + $0x10] sm:$0xff] %vm562, %v8427
      %8460 = vst.msk [vmem:[#allocation3 + $0x38] sm:$0xff] %vm562, %v8428
      %8461 = vst.msk [vmem:[#allocation3 + $0x60] sm:$0xff] %vm562, %v8429
      %8462 = vst.msk [vmem:[#allocation3 + $0x88] sm:$0xff] %vm562, %v8430
      %8463 = vst.msk [vmem:[#allocation3 + $0xb0] sm:$0xff] %vm562, %v8431
      %8464 = vst.msk [vmem:[#allocation3 + $0xd8] sm:$0xff] %vm562, %v8432
      %8465 = vst.msk [vmem:[#allocation3 + $0x100] sm:$0xff] %vm562, %v8433
      %8466 = vst.msk [vmem:[#allocation3 + $0x128] sm:$0xff] %vm562, %v8434
      %8467 = vst.msk [vmem:[#allocation3 + $0x150] sm:$0xff] %vm562, %v8435
      %8468 = vst.msk [vmem:[#allocation3 + $0x178] sm:$0xff] %vm562, %v8436
      %8469 = vst.msk [vmem:[#allocation3 + $0x1a0] sm:$0xff] %vm562, %v8437
      %8470 = vst.msk [vmem:[#allocation3 + $0x1c8] sm:$0xff] %vm562, %v8438
      %8471 = vst.msk [vmem:[#allocation3 + $0x1f0] sm:$0xff] %vm562, %v8439
      %8472 = vst.msk [vmem:[#allocation3 + $0x218] sm:$0xff] %vm562, %v8440
      %8473 = vst.msk [vmem:[#allocation3 + $0x240] sm:$0xff] %vm562, %v8441
      %8474 = vst.msk [vmem:[#allocation3 + $0x268] sm:$0xff] %vm562, %v8442
      %8475 = vst.msk [vmem:[#allocation3 + $0x290] sm:$0xff] %vm562, %v8443
      %8476 = vst.msk [vmem:[#allocation3 + $0x2b8] sm:$0xff] %vm562, %v8444
      %8477 = vst.msk [vmem:[#allocation3 + $0x2e0] sm:$0xff] %vm562, %v8445
      %8478 = vst.msk [vmem:[#allocation3 + $0x308] sm:$0xff] %vm562, %v8446
      %8479 = vst.msk [vmem:[#allocation3 + $0x330] sm:$0xff] %vm562, %v8447
      %8480 = vst.msk [vmem:[#allocation3 + $0x358] sm:$0xff] %vm562, %v8448
      %8481 = vst.msk [vmem:[#allocation3 + $0x380] sm:$0xff] %vm562, %v8449
      %8482 = vst.msk [vmem:[#allocation3 + $0x3a8] sm:$0xff] %vm562, %v8450
      %8483 = vst.msk [vmem:[#allocation3 + $0x3d0] sm:$0xff] %vm562, %v8451
      %8484 = vst.msk [vmem:[#allocation3 + $0x3f8] sm:$0xff] %vm562, %v8452
      %8485 = vst.msk [vmem:[#allocation3 + $0x420] sm:$0xff] %vm562, %v8453
      %8486 = vst.msk [vmem:[#allocation3 + $0x448] sm:$0xff] %vm562, %v8454
      %8487 = vst.msk [vmem:[#allocation3 + $0x470] sm:$0xff] %vm562, %v8455
      %8488 = vst.msk [vmem:[#allocation3 + $0x498] sm:$0xff] %vm562, %v8456
      %8489 = vst.msk [vmem:[#allocation3 + $0x4c0] sm:$0xff] %vm562, %v8457
      %8490 = vst.msk [vmem:[#allocation3 + $0x4e8] sm:$0xff] %vm562, %v8458
      %v8491 = vld [vmem:[#allocation3] sm:$0xff]
      %v8492 = vld [vmem:[#allocation3 + $0x8] sm:$0xff]
      %v8493 = vld [vmem:[#allocation3 + $0x10] sm:$0xff]
      %v8494 = vld [vmem:[#allocation3 + $0x18] sm:$0xff]
      %v8495 = vld [vmem:[#allocation3 + $0x20] sm:$0xff]
      %v8496 = vld [vmem:[#allocation3 + $0x28] sm:$0xff]
      %v8497 = vld [vmem:[#allocation3 + $0x30] sm:$0xff]
      %v8498 = vld [vmem:[#allocation3 + $0x38] sm:$0xff]
      %v8499 = vld [vmem:[#allocation3 + $0x40] sm:$0xff]
      %v8500 = vld [vmem:[#allocation3 + $0x48] sm:$0xff]
      %v8501 = vld [vmem:[#allocation3 + $0x50] sm:$0xff]
      %v8502 = vld [vmem:[#allocation3 + $0x58] sm:$0xff]
      %v8503 = vld [vmem:[#allocation3 + $0x60] sm:$0xff]
      %v8504 = vld [vmem:[#allocation3 + $0x68] sm:$0xff]
      %v8505 = vld [vmem:[#allocation3 + $0x70] sm:$0xff]
      %v8506 = vld [vmem:[#allocation3 + $0x78] sm:$0xff]
      %v8507 = vld [vmem:[#allocation3 + $0x80] sm:$0xff]
      %v8508 = vld [vmem:[#allocation3 + $0x88] sm:$0xff]
      %v8509 = vld [vmem:[#allocation3 + $0x90] sm:$0xff]
      %v8510 = vld [vmem:[#allocation3 + $0x98] sm:$0xff]
      %v8511 = vld [vmem:[#allocation3 + $0xa0] sm:$0xff]
      %v8512 = vld [vmem:[#allocation3 + $0xa8] sm:$0xff]
      %v8513 = vld [vmem:[#allocation3 + $0xb0] sm:$0xff]
      %v8514 = vld [vmem:[#allocation3 + $0xb8] sm:$0xff]
      %v8515 = vld [vmem:[#allocation3 + $0xc0] sm:$0xff]
      %v8516 = vld [vmem:[#allocation3 + $0xc8] sm:$0xff]
      %v8517 = vld [vmem:[#allocation3 + $0xd0] sm:$0xff]
      %v8518 = vld [vmem:[#allocation3 + $0xd8] sm:$0xff]
      %v8519 = vld [vmem:[#allocation3 + $0xe0] sm:$0xff]
      %v8520 = vld [vmem:[#allocation3 + $0xe8] sm:$0xff]
      %v8521 = vld [vmem:[#allocation3 + $0xf0] sm:$0xff]
      %v8522 = vld [vmem:[#allocation3 + $0xf8] sm:$0xff]
      %v8523 = vld [vmem:[#allocation3 + $0x100] sm:$0xff]
      %v8524 = vld [vmem:[#allocation3 + $0x108] sm:$0xff]
      %v8525 = vld [vmem:[#allocation3 + $0x110] sm:$0xff]
      %v8526 = vld [vmem:[#allocation3 + $0x118] sm:$0xff]
      %v8527 = vld [vmem:[#allocation3 + $0x120] sm:$0xff]
      %v8528 = vld [vmem:[#allocation3 + $0x128] sm:$0xff]
      %v8529 = vld [vmem:[#allocation3 + $0x130] sm:$0xff]
      %v8530 = vld [vmem:[#allocation3 + $0x138] sm:$0xff]
      %v8531 = vld [vmem:[#allocation3 + $0x140] sm:$0xff]
      %v8532 = vld [vmem:[#allocation3 + $0x148] sm:$0xff]
      %v8533 = vld [vmem:[#allocation3 + $0x150] sm:$0xff]
      %v8534 = vld [vmem:[#allocation3 + $0x158] sm:$0xff]
      %v8535 = vld [vmem:[#allocation3 + $0x160] sm:$0xff]
      %v8536 = vld [vmem:[#allocation3 + $0x168] sm:$0xff]
      %v8537 = vld [vmem:[#allocation3 + $0x170] sm:$0xff]
      %v8538 = vld [vmem:[#allocation3 + $0x178] sm:$0xff]
      %v8539 = vld [vmem:[#allocation3 + $0x180] sm:$0xff]
      %v8540 = vld [vmem:[#allocation3 + $0x188] sm:$0xff]
      %v8541 = vld [vmem:[#allocation3 + $0x190] sm:$0xff]
      %v8542 = vld [vmem:[#allocation3 + $0x198] sm:$0xff]
      %v8543 = vld [vmem:[#allocation3 + $0x1a0] sm:$0xff]
      %v8544 = vld [vmem:[#allocation3 + $0x1a8] sm:$0xff]
      %v8545 = vld [vmem:[#allocation3 + $0x1b0] sm:$0xff]
      %v8546 = vld [vmem:[#allocation3 + $0x1b8] sm:$0xff]
      %v8547 = vld [vmem:[#allocation3 + $0x1c0] sm:$0xff]
      %v8548 = vld [vmem:[#allocation3 + $0x1c8] sm:$0xff]
      %v8549 = vld [vmem:[#allocation3 + $0x1d0] sm:$0xff]
      %v8550 = vld [vmem:[#allocation3 + $0x1d8] sm:$0xff]
      %v8551 = vld [vmem:[#allocation3 + $0x1e0] sm:$0xff]
      %v8552 = vld [vmem:[#allocation3 + $0x1e8] sm:$0xff]
      %v8553 = vld [vmem:[#allocation3 + $0x1f0] sm:$0xff]
      %v8554 = vld [vmem:[#allocation3 + $0x1f8] sm:$0xff]
      %v8555 = vld [vmem:[#allocation3 + $0x200] sm:$0xff]
      %v8556 = vld [vmem:[#allocation3 + $0x208] sm:$0xff]
      %v8557 = vld [vmem:[#allocation3 + $0x210] sm:$0xff]
      %v8558 = vld [vmem:[#allocation3 + $0x218] sm:$0xff]
      %v8559 = vld [vmem:[#allocation3 + $0x220] sm:$0xff]
      %v8560 = vld [vmem:[#allocation3 + $0x228] sm:$0xff]
      %v8561 = vld [vmem:[#allocation3 + $0x230] sm:$0xff]
      %v8562 = vld [vmem:[#allocation3 + $0x238] sm:$0xff]
      %v8563 = vld [vmem:[#allocation3 + $0x240] sm:$0xff]
      %v8564 = vld [vmem:[#allocation3 + $0x248] sm:$0xff]
      %v8565 = vld [vmem:[#allocation3 + $0x250] sm:$0xff]
      %v8566 = vld [vmem:[#allocation3 + $0x258] sm:$0xff]
      %v8567 = vld [vmem:[#allocation3 + $0x260] sm:$0xff]
      %v8568 = vld [vmem:[#allocation3 + $0x268] sm:$0xff]
      %v8569 = vld [vmem:[#allocation3 + $0x270] sm:$0xff]
      %v8570 = vld [vmem:[#allocation3 + $0x278] sm:$0xff]
      %v8571 = vld [vmem:[#allocation3 + $0x280] sm:$0xff]
      %v8572 = vld [vmem:[#allocation3 + $0x288] sm:$0xff]
      %v8573 = vld [vmem:[#allocation3 + $0x290] sm:$0xff]
      %v8574 = vld [vmem:[#allocation3 + $0x298] sm:$0xff]
      %v8575 = vld [vmem:[#allocation3 + $0x2a0] sm:$0xff]
      %v8576 = vld [vmem:[#allocation3 + $0x2a8] sm:$0xff]
      %v8577 = vld [vmem:[#allocation3 + $0x2b0] sm:$0xff]
      %v8578 = vld [vmem:[#allocation3 + $0x2b8] sm:$0xff]
      %v8579 = vld [vmem:[#allocation3 + $0x2c0] sm:$0xff]
      %v8580 = vld [vmem:[#allocation3 + $0x2c8] sm:$0xff]
      %v8581 = vld [vmem:[#allocation3 + $0x2d0] sm:$0xff]
      %v8582 = vld [vmem:[#allocation3 + $0x2d8] sm:$0xff]
      %v8583 = vld [vmem:[#allocation3 + $0x2e0] sm:$0xff]
      %v8584 = vld [vmem:[#allocation3 + $0x2e8] sm:$0xff]
      %v8585 = vld [vmem:[#allocation3 + $0x2f0] sm:$0xff]
      %v8586 = vld [vmem:[#allocation3 + $0x2f8] sm:$0xff]
      %v8587 = vld [vmem:[#allocation3 + $0x300] sm:$0xff]
      %v8588 = vld [vmem:[#allocation3 + $0x308] sm:$0xff]
      %v8589 = vld [vmem:[#allocation3 + $0x310] sm:$0xff]
      %v8590 = vld [vmem:[#allocation3 + $0x318] sm:$0xff]
      %v8591 = vld [vmem:[#allocation3 + $0x320] sm:$0xff]
      %v8592 = vld [vmem:[#allocation3 + $0x328] sm:$0xff]
      %v8593 = vld [vmem:[#allocation3 + $0x330] sm:$0xff]
      %v8594 = vld [vmem:[#allocation3 + $0x338] sm:$0xff]
      %v8595 = vld [vmem:[#allocation3 + $0x340] sm:$0xff]
      %v8596 = vld [vmem:[#allocation3 + $0x348] sm:$0xff]
      %v8597 = vld [vmem:[#allocation3 + $0x350] sm:$0xff]
      %v8598 = vld [vmem:[#allocation3 + $0x358] sm:$0xff]
      %v8599 = vld [vmem:[#allocation3 + $0x360] sm:$0xff]
      %v8600 = vld [vmem:[#allocation3 + $0x368] sm:$0xff]
      %v8601 = vld [vmem:[#allocation3 + $0x370] sm:$0xff]
      %v8602 = vld [vmem:[#allocation3 + $0x378] sm:$0xff]
      %v8603 = vld [vmem:[#allocation3 + $0x380] sm:$0xff]
      %v8604 = vld [vmem:[#allocation3 + $0x388] sm:$0xff]
      %v8605 = vld [vmem:[#allocation3 + $0x390] sm:$0xff]
      %v8606 = vld [vmem:[#allocation3 + $0x398] sm:$0xff]
      %v8607 = vld [vmem:[#allocation3 + $0x3a0] sm:$0xff]
      %v8608 = vld [vmem:[#allocation3 + $0x3a8] sm:$0xff]
      %v8609 = vld [vmem:[#allocation3 + $0x3b0] sm:$0xff]
      %v8610 = vld [vmem:[#allocation3 + $0x3b8] sm:$0xff]
      %v8611 = vld [vmem:[#allocation3 + $0x3c0] sm:$0xff]
      %v8612 = vld [vmem:[#allocation3 + $0x3c8] sm:$0xff]
      %v8613 = vld [vmem:[#allocation3 + $0x3d0] sm:$0xff]
      %v8614 = vld [vmem:[#allocation3 + $0x3d8] sm:$0xff]
      %v8615 = vld [vmem:[#allocation3 + $0x3e0] sm:$0xff]
      %v8616 = vld [vmem:[#allocation3 + $0x3e8] sm:$0xff]
      %v8617 = vld [vmem:[#allocation3 + $0x3f0] sm:$0xff]
      %v8618 = vld [vmem:[#allocation3 + $0x3f8] sm:$0xff]
      %v8619 = vld [vmem:[#allocation3 + $0x400] sm:$0xff]
      %v8620 = vld [vmem:[#allocation3 + $0x408] sm:$0xff]
      %v8621 = vld [vmem:[#allocation3 + $0x410] sm:$0xff]
      %v8622 = vld [vmem:[#allocation3 + $0x418] sm:$0xff]
      %v8623 = vld [vmem:[#allocation3 + $0x420] sm:$0xff]
      %v8624 = vld [vmem:[#allocation3 + $0x428] sm:$0xff]
      %v8625 = vld [vmem:[#allocation3 + $0x430] sm:$0xff]
      %v8626 = vld [vmem:[#allocation3 + $0x438] sm:$0xff]
      %v8627 = vld [vmem:[#allocation3 + $0x440] sm:$0xff]
      %v8628 = vld [vmem:[#allocation3 + $0x448] sm:$0xff]
      %v8629 = vld [vmem:[#allocation3 + $0x450] sm:$0xff]
      %v8630 = vld [vmem:[#allocation3 + $0x458] sm:$0xff]
      %v8631 = vld [vmem:[#allocation3 + $0x460] sm:$0xff]
      %v8632 = vld [vmem:[#allocation3 + $0x468] sm:$0xff]
      %v8633 = vld [vmem:[#allocation3 + $0x470] sm:$0xff]
      %v8634 = vld [vmem:[#allocation3 + $0x478] sm:$0xff]
      %v8635 = vld [vmem:[#allocation3 + $0x480] sm:$0xff]
      %v8636 = vld [vmem:[#allocation3 + $0x488] sm:$0xff]
      %v8637 = vld [vmem:[#allocation3 + $0x490] sm:$0xff]
      %v8638 = vld [vmem:[#allocation3 + $0x498] sm:$0xff]
      %v8639 = vld [vmem:[#allocation3 + $0x4a0] sm:$0xff]
      %v8640 = vld [vmem:[#allocation3 + $0x4a8] sm:$0xff]
      %v8641 = vld [vmem:[#allocation3 + $0x4b0] sm:$0xff]
      %v8642 = vld [vmem:[#allocation3 + $0x4b8] sm:$0xff]
      %v8643 = vld [vmem:[#allocation3 + $0x4c0] sm:$0xff]
      %v8644 = vld [vmem:[#allocation3 + $0x4c8] sm:$0xff]
      %v8645 = vld [vmem:[#allocation3 + $0x4d0] sm:$0xff]
      %v8646 = vld [vmem:[#allocation3 + $0x4d8] sm:$0xff]
      %v8647 = vld [vmem:[#allocation3 + $0x4e0] sm:$0xff]
      %v8648 = vld [vmem:[#allocation3 + $0x4e8] sm:$0xff]
      %v8649 = vld [vmem:[#allocation3 + $0x4f0] sm:$0xff]
      %v8650 = vld [vmem:[#allocation3 + $0x4f8] sm:$0xff]
      %v8651 = vld [vmem:[%s11] sm:$0xff]
      %v8652 = vld [vmem:[%s11 + $0x8] sm:$0xff]
      %v8653 = vld [vmem:[%s11 + $0x10] sm:$0xff]
      %v8654 = vld [vmem:[%s11 + $0x18] sm:$0xff]
      %v8655 = vld [vmem:[%s11 + $0x20] sm:$0xff]
      %v8656 = vld [vmem:[%s11 + $0x28] sm:$0xff]
      %v8657 = vld [vmem:[%s11 + $0x30] sm:$0xff]
      %v8658 = vld [vmem:[%s11 + $0x38] sm:$0xff]
      %v8659 = vld [vmem:[%s11 + $0x40] sm:$0xff]
      %v8660 = vld [vmem:[%s11 + $0x48] sm:$0xff]
      %v8661 = vld [vmem:[%s11 + $0x50] sm:$0xff]
      %v8662 = vld [vmem:[%s11 + $0x58] sm:$0xff]
      %v8663 = vld [vmem:[%s11 + $0x60] sm:$0xff]
      %v8664 = vld [vmem:[%s11 + $0x68] sm:$0xff]
      %v8665 = vld [vmem:[%s11 + $0x70] sm:$0xff]
      %v8666 = vld [vmem:[%s11 + $0x78] sm:$0xff]
      %v8667 = vld [vmem:[%s11 + $0x80] sm:$0xff]
      %v8668 = vld [vmem:[%s11 + $0x88] sm:$0xff]
      %v8669 = vld [vmem:[%s11 + $0x90] sm:$0xff]
      %v8670 = vld [vmem:[%s11 + $0x98] sm:$0xff]
      %v8671 = vld [vmem:[%s11 + $0xa0] sm:$0xff]
      %v8672 = vld [vmem:[%s11 + $0xa8] sm:$0xff]
      %v8673 = vld [vmem:[%s11 + $0xb0] sm:$0xff]
      %v8674 = vld [vmem:[%s11 + $0xb8] sm:$0xff]
      %v8675 = vld [vmem:[%s11 + $0xc0] sm:$0xff]
      %v8676 = vld [vmem:[%s11 + $0xc8] sm:$0xff]
      %v8677 = vld [vmem:[%s11 + $0xd0] sm:$0xff]
      %v8678 = vld [vmem:[%s11 + $0xd8] sm:$0xff]
      %v8679 = vld [vmem:[%s11 + $0xe0] sm:$0xff]
      %v8680 = vld [vmem:[%s11 + $0xe8] sm:$0xff]
      %v8681 = vld [vmem:[%s11 + $0xf0] sm:$0xff]
      %v8682 = vld [vmem:[%s11 + $0xf8] sm:$0xff]
      %v8683 = vld [vmem:[%s11 + $0x100] sm:$0xff]
      %v8684 = vld [vmem:[%s11 + $0x108] sm:$0xff]
      %v8685 = vld [vmem:[%s11 + $0x110] sm:$0xff]
      %v8686 = vld [vmem:[%s11 + $0x118] sm:$0xff]
      %v8687 = vld [vmem:[%s11 + $0x120] sm:$0xff]
      %v8688 = vld [vmem:[%s11 + $0x128] sm:$0xff]
      %v8689 = vld [vmem:[%s11 + $0x130] sm:$0xff]
      %v8690 = vld [vmem:[%s11 + $0x138] sm:$0xff]
      %v8691 = vld [vmem:[%s11 + $0x140] sm:$0xff]
      %v8692 = vld [vmem:[%s11 + $0x148] sm:$0xff]
      %v8693 = vld [vmem:[%s11 + $0x150] sm:$0xff]
      %v8694 = vld [vmem:[%s11 + $0x158] sm:$0xff]
      %v8695 = vld [vmem:[%s11 + $0x160] sm:$0xff]
      %v8696 = vld [vmem:[%s11 + $0x168] sm:$0xff]
      %v8697 = vld [vmem:[%s11 + $0x170] sm:$0xff]
      %v8698 = vld [vmem:[%s11 + $0x178] sm:$0xff]
      %v8699 = vld [vmem:[%s11 + $0x180] sm:$0xff]
      %v8700 = vld [vmem:[%s11 + $0x188] sm:$0xff]
      %v8701 = vld [vmem:[%s11 + $0x190] sm:$0xff]
      %v8702 = vld [vmem:[%s11 + $0x198] sm:$0xff]
      %v8703 = vld [vmem:[%s11 + $0x1a0] sm:$0xff]
      %v8704 = vld [vmem:[%s11 + $0x1a8] sm:$0xff]
      %v8705 = vld [vmem:[%s11 + $0x1b0] sm:$0xff]
      %v8706 = vld [vmem:[%s11 + $0x1b8] sm:$0xff]
      %v8707 = vld [vmem:[%s11 + $0x1c0] sm:$0xff]
      %v8708 = vld [vmem:[%s11 + $0x1c8] sm:$0xff]
      %v8709 = vld [vmem:[%s11 + $0x1d0] sm:$0xff]
      %v8710 = vld [vmem:[%s11 + $0x1d8] sm:$0xff]
      %v8711 = vld [vmem:[%s11 + $0x1e0] sm:$0xff]
      %v8712 = vld [vmem:[%s11 + $0x1e8] sm:$0xff]
      %v8713 = vld [vmem:[%s11 + $0x1f0] sm:$0xff]
      %v8714 = vld [vmem:[%s11 + $0x1f8] sm:$0xff]
      %v8715 = vld [vmem:[%s11 + $0x200] sm:$0xff]
      %v8716 = vld [vmem:[%s11 + $0x208] sm:$0xff]
      %v8717 = vld [vmem:[%s11 + $0x210] sm:$0xff]
      %v8718 = vld [vmem:[%s11 + $0x218] sm:$0xff]
      %v8719 = vld [vmem:[%s11 + $0x220] sm:$0xff]
      %v8720 = vld [vmem:[%s11 + $0x228] sm:$0xff]
      %v8721 = vld [vmem:[%s11 + $0x230] sm:$0xff]
      %v8722 = vld [vmem:[%s11 + $0x238] sm:$0xff]
      %v8723 = vld [vmem:[%s12] sm:$0x1]
      %v8725 = vlaneseq
      %v8726 = vshrl.u32 %v8725, 7
      %v8727 = vsub.s32 0, %v8726
      %v8728 = vrot.slane %v8723, %v8727
      %vm8730 = vcmask 523264
      %v8732 = vsel %vm8730, %v8495, 0
      %v8735 = vsel %vm8730, %v8500, 0
      %v8738 = vsel %vm8730, %v8505, 0
      %v8741 = vsel %vm8730, %v8510, 0
      %v8744 = vsel %vm8730, %v8515, 0
      %v8747 = vsel %vm8730, %v8520, 0
      %v8750 = vsel %vm8730, %v8525, 0
      %v8753 = vsel %vm8730, %v8530, 0
      %v8756 = vsel %vm8730, %v8535, 0
      %v8759 = vsel %vm8730, %v8540, 0
      %v8762 = vsel %vm8730, %v8545, 0
      %v8765 = vsel %vm8730, %v8550, 0
      %v8768 = vsel %vm8730, %v8555, 0
      %v8771 = vsel %vm8730, %v8560, 0
      %v8774 = vsel %vm8730, %v8565, 0
      %v8777 = vsel %vm8730, %v8570, 0
      %v8780 = vsel %vm8730, %v8575, 0
      %v8783 = vsel %vm8730, %v8580, 0
      %v8786 = vsel %vm8730, %v8585, 0
      %v8789 = vsel %vm8730, %v8590, 0
      %v8792 = vsel %vm8730, %v8595, 0
      %v8795 = vsel %vm8730, %v8600, 0
      %v8798 = vsel %vm8730, %v8605, 0
      %v8801 = vsel %vm8730, %v8610, 0
      %v8804 = vsel %vm8730, %v8615, 0
      %v8807 = vsel %vm8730, %v8620, 0
      %v8810 = vsel %vm8730, %v8625, 0
      %v8813 = vsel %vm8730, %v8630, 0
      %v8816 = vsel %vm8730, %v8635, 0
      %v8819 = vsel %vm8730, %v8640, 0
      %v8822 = vsel %vm8730, %v8645, 0
      %v8825 = vsel %vm8730, %v8650, 0
      %8827 = vmatprep.subr.mxu0 0.0
      %8828 = vmatpush1.msra.mxu0 %v8651
      %8829 = vmatprep.subr.mxu0 0.0
      %8830 = vmatpush1.msra.mxu0 %v8652
      %8831 = vmatprep.subr.mxu0 0.0
      %8832 = vmatpush1.msra.mxu0 %v8653
      %8833 = vmatprep.subr.mxu0 0.0
      %8834 = vmatpush1.msra.mxu0 %v8654
      %8835 = vmatprep.subr.mxu0 0.0
      %8836 = vmatpush1.msra.mxu0 %v8655
      %8837 = vmatprep.subr.mxu0 0.0
      %8838 = vmatpush1.msra.mxu0 %v8656
      %8839 = vmatprep.subr.mxu0 0.0
      %8840 = vmatpush1.msra.mxu0 %v8657
      %8841 = vmatprep.subr.mxu0 0.0
      %8842 = vmatpush1.msra.mxu0 %v8658
      %8843 = vmatprep.subr.mxu0 0.0
      %8844 = vmatpush1.msra.mxu0 %v8659
      %8845 = vmatprep.subr.mxu0 0.0
      %8846 = vmatpush1.msra.mxu0 %v8660
      %8847 = vmatprep.subr.mxu0 0.0
      %8848 = vmatpush1.msra.mxu0 %v8661
      %8849 = vmatprep.subr.mxu0 0.0
      %8850 = vmatpush1.msra.mxu0 %v8662
      %8851 = vmatprep.subr.mxu0 0.0
      %8852 = vmatpush1.msra.mxu0 %v8663
      %8853 = vmatprep.subr.mxu0 0.0
      %8854 = vmatpush1.msra.mxu0 %v8664
      %8855 = vmatprep.subr.mxu0 0.0
      %8856 = vmatpush1.msra.mxu0 %v8665
      %8857 = vmatprep.subr.mxu0 0.0
      %8858 = vmatpush1.msra.mxu0 %v8666
      %8859 = vmatprep.subr.mxu0 0.0
      %8860 = vmatpush1.msra.mxu0 %v8667
      %8861 = vmatprep.subr.mxu0 0.0
      %8862 = vmatpush1.msra.mxu0 %v8668
      %8863 = vmatprep.subr.mxu0 0.0
      %8864 = vmatpush1.msra.mxu0 %v8669
      %8865 = vmatprep.subr.mxu0 0.0
      %8866 = vmatpush1.msra.mxu0 %v8670
      %8867 = vmatprep.subr.mxu0 0.0
      %8868 = vmatpush1.msra.mxu0 %v8671
      %8869 = vmatprep.subr.mxu0 0.0
      %8870 = vmatpush1.msra.mxu0 %v8672
      %8871 = vmatprep.subr.mxu0 0.0
      %8872 = vmatpush1.msra.mxu0 %v8673
      %8873 = vmatprep.subr.mxu0 0.0
      %8874 = vmatpush1.msra.mxu0 %v8674
      %8875 = vmatprep.subr.mxu0 0.0
      %8876 = vmatpush1.msra.mxu0 %v8675
      %8877 = vmatprep.subr.mxu0 0.0
      %8878 = vmatpush1.msra.mxu0 %v8676
      %8879 = vmatprep.subr.mxu0 0.0
      %8880 = vmatpush1.msra.mxu0 %v8677
      %8881 = vmatprep.subr.mxu0 0.0
      %8882 = vmatpush1.msra.mxu0 %v8678
      %8883 = vmatprep.subr.mxu0 0.0
      %8884 = vmatpush1.msra.mxu0 %v8679
      %8885 = vmatprep.subr.mxu0 0.0
      %8886 = vmatpush1.msra.mxu0 %v8680
      %8887 = vmatprep.subr.mxu0 0.0
      %8888 = vmatpush1.msra.mxu0 %v8681
      %8889 = vmatprep.subr.mxu0 0.0
      %8890 = vmatpush1.msra.mxu0 %v8682
      %8891 = vmatprep.mubr.f32.mxu0 %v8492
      %8892 = vmatmul.mubr.f32.gmra.mrb[0].mxu0 %v8491
      %v8893 = vpop.f32.mrb[0].mxu0
      %v8894 = vadd.f32 %v8728, %v8893
      %v8895 = vpop.f32.mrb[0].mxu0
      %8896 = vmatprep.mubr.f32.mxu0 %v8497
      %8897 = vmatmul.mubr.f32.gmra.mrb[0].mxu0 %v8496
      %v8898 = vpop.f32.mrb[0].mxu0
      %v8899 = vadd.f32 %v8728, %v8898
      %v8900 = vpop.f32.mrb[0].mxu0
      %8901 = vmatprep.mubr.f32.mxu0 %v8502
      %8902 = vmatmul.mubr.f32.gmra.mrb[0].mxu0 %v8501
      %v8903 = vpop.f32.mrb[0].mxu0
      %v8904 = vadd.f32 %v8728, %v8903
      %v8905 = vpop.f32.mrb[0].mxu0
      %8906 = vmatprep.mubr.f32.mxu0 %v8507
      %8907 = vmatmul.mubr.f32.gmra.mrb[0].mxu0 %v8506
      %v8908 = vpop.f32.mrb[0].mxu0
      %v8909 = vadd.f32 %v8728, %v8908
      %v8910 = vpop.f32.mrb[0].mxu0
      %8911 = vmatprep.mubr.f32.mxu0 %v8512
      %8912 = vmatmul.mubr.f32.gmra.mrb[0].mxu0 %v8511
      %v8913 = vpop.f32.mrb[0].mxu0
      %v8914 = vadd.f32 %v8728, %v8913
      %v8915 = vpop.f32.mrb[0].mxu0
      %8916 = vmatprep.mubr.f32.mxu0 %v8517
      %8917 = vmatmul.mubr.f32.gmra.mrb[0].mxu0 %v8516
      %v8918 = vpop.f32.mrb[0].mxu0
      %v8919 = vadd.f32 %v8728, %v8918
      %v8920 = vpop.f32.mrb[0].mxu0
      %8921 = vmatprep.mubr.f32.mxu0 %v8522
      %8922 = vmatmul.mubr.f32.gmra.mrb[0].mxu0 %v8521
      %v8923 = vpop.f32.mrb[0].mxu0
      %v8924 = vadd.f32 %v8728, %v8923
      %v8925 = vpop.f32.mrb[0].mxu0
      %8926 = vmatprep.mubr.f32.mxu0 %v8527
      %8927 = vmatmul.mubr.f32.gmra.mrb[0].mxu0 %v8526
      %v8928 = vpop.f32.mrb[0].mxu0
      %v8929 = vadd.f32 %v8728, %v8928
      %v8930 = vpop.f32.mrb[0].mxu0
      %8931 = vmatprep.mubr.f32.mxu0 %v8532
      %8932 = vmatmul.mubr.f32.gmra.mrb[0].mxu0 %v8531
      %v8933 = vpop.f32.mrb[0].mxu0
      %v8934 = vadd.f32 %v8728, %v8933
      %v8935 = vpop.f32.mrb[0].mxu0
      %8936 = vmatprep.mubr.f32.mxu0 %v8537
      %8937 = vmatmul.mubr.f32.gmra.mrb[0].mxu0 %v8536
      %v8938 = vpop.f32.mrb[0].mxu0
      %v8939 = vadd.f32 %v8728, %v8938
      %v8940 = vpop.f32.mrb[0].mxu0
      %8941 = vmatprep.mubr.f32.mxu0 %v8542
      %8942 = vmatmul.mubr.f32.gmra.mrb[0].mxu0 %v8541
      %v8943 = vpop.f32.mrb[0].mxu0
      %v8944 = vadd.f32 %v8728, %v8943
      %v8945 = vpop.f32.mrb[0].mxu0
      %8946 = vmatprep.mubr.f32.mxu0 %v8547
      %8947 = vmatmul.mubr.f32.gmra.mrb[0].mxu0 %v8546
      %v8948 = vpop.f32.mrb[0].mxu0
      %v8949 = vadd.f32 %v8728, %v8948
      %v8950 = vpop.f32.mrb[0].mxu0
      %8951 = vmatprep.mubr.f32.mxu0 %v8552
      %8952 = vmatmul.mubr.f32.gmra.mrb[0].mxu0 %v8551
      %v8953 = vpop.f32.mrb[0].mxu0
      %v8954 = vadd.f32 %v8728, %v8953
      %v8955 = vpop.f32.mrb[0].mxu0
      %8956 = vmatprep.mubr.f32.mxu0 %v8557
      %8957 = vmatmul.mubr.f32.gmra.mrb[0].mxu0 %v8556
      %v8958 = vpop.f32.mrb[0].mxu0
      %v8959 = vadd.f32 %v8728, %v8958
      %v8960 = vpop.f32.mrb[0].mxu0
      %8961 = vmatprep.mubr.f32.mxu0 %v8562
      %8962 = vmatmul.mubr.f32.gmra.mrb[0].mxu0 %v8561
      %v8963 = vpop.f32.mrb[0].mxu0
      %v8964 = vadd.f32 %v8728, %v8963
      %v8965 = vpop.f32.mrb[0].mxu0
      %8966 = vmatprep.mubr.f32.mxu0 %v8567
      %8967 = vmatmul.mubr.f32.gmra.mrb[0].mxu0 %v8566
      %v8968 = vpop.f32.mrb[0].mxu0
      %v8969 = vadd.f32 %v8728, %v8968
      %v8970 = vpop.f32.mrb[0].mxu0
      %8971 = vmatprep.mubr.f32.mxu0 %v8572
      %8972 = vmatmul.mubr.f32.gmra.mrb[0].mxu0 %v8571
      %v8973 = vpop.f32.mrb[0].mxu0
      %v8974 = vadd.f32 %v8728, %v8973
      %v8975 = vpop.f32.mrb[0].mxu0
      %8976 = vmatprep.mubr.f32.mxu0 %v8577
      %8977 = vmatmul.mubr.f32.gmra.mrb[0].mxu0 %v8576
      %v8978 = vpop.f32.mrb[0].mxu0
      %v8979 = vadd.f32 %v8728, %v8978
      %v8980 = vpop.f32.mrb[0].mxu0
      %8981 = vmatprep.mubr.f32.mxu0 %v8582
      %8982 = vmatmul.mubr.f32.gmra.mrb[0].mxu0 %v8581
      %v8983 = vpop.f32.mrb[0].mxu0
      %v8984 = vadd.f32 %v8728, %v8983
      %v8985 = vpop.f32.mrb[0].mxu0
      %8986 = vmatprep.mubr.f32.mxu0 %v8587
      %8987 = vmatmul.mubr.f32.gmra.mrb[0].mxu0 %v8586
      %v8988 = vpop.f32.mrb[0].mxu0
      %v8989 = vadd.f32 %v8728, %v8988
      %v8990 = vpop.f32.mrb[0].mxu0
      %8991 = vmatprep.mubr.f32.mxu0 %v8592
      %8992 = vmatmul.mubr.f32.gmra.mrb[0].mxu0 %v8591
      %v8993 = vpop.f32.mrb[0].mxu0
      %v8994 = vadd.f32 %v8728, %v8993
      %v8995 = vpop.f32.mrb[0].mxu0
      %8996 = vmatprep.mubr.f32.mxu0 %v8597
      %8997 = vmatmul.mubr.f32.gmra.mrb[0].mxu0 %v8596
      %v8998 = vpop.f32.mrb[0].mxu0
      %v8999 = vadd.f32 %v8728, %v8998
      %v9000 = vpop.f32.mrb[0].mxu0
      %9001 = vmatprep.mubr.f32.mxu0 %v8602
      %9002 = vmatmul.mubr.f32.gmra.mrb[0].mxu0 %v8601
      %v9003 = vpop.f32.mrb[0].mxu0
      %v9004 = vadd.f32 %v8728, %v9003
      %v9005 = vpop.f32.mrb[0].mxu0
      %9006 = vmatprep.mubr.f32.mxu0 %v8607
      %9007 = vmatmul.mubr.f32.gmra.mrb[0].mxu0 %v8606
      %v9008 = vpop.f32.mrb[0].mxu0
      %v9009 = vadd.f32 %v8728, %v9008
      %v9010 = vpop.f32.mrb[0].mxu0
      %9011 = vmatprep.mubr.f32.mxu0 %v8612
      %9012 = vmatmul.mubr.f32.gmra.mrb[0].mxu0 %v8611
      %v9013 = vpop.f32.mrb[0].mxu0
      %v9014 = vadd.f32 %v8728, %v9013
      %v9015 = vpop.f32.mrb[0].mxu0
      %9016 = vmatprep.mubr.f32.mxu0 %v8617
      %9017 = vmatmul.mubr.f32.gmra.mrb[0].mxu0 %v8616
      %v9018 = vpop.f32.mrb[0].mxu0
      %v9019 = vadd.f32 %v8728, %v9018
      %v9020 = vpop.f32.mrb[0].mxu0
      %9021 = vmatprep.mubr.f32.mxu0 %v8622
      %9022 = vmatmul.mubr.f32.gmra.mrb[0].mxu0 %v8621
      %v9023 = vpop.f32.mrb[0].mxu0
      %v9024 = vadd.f32 %v8728, %v9023
      %v9025 = vpop.f32.mrb[0].mxu0
      %9026 = vmatprep.mubr.f32.mxu0 %v8627
      %9027 = vmatmul.mubr.f32.gmra.mrb[0].mxu0 %v8626
      %v9028 = vpop.f32.mrb[0].mxu0
      %v9029 = vadd.f32 %v8728, %v9028
      %v9030 = vpop.f32.mrb[0].mxu0
      %9031 = vmatprep.mubr.f32.mxu0 %v8632
      %9032 = vmatmul.mubr.f32.gmra.mrb[0].mxu0 %v8631
      %v9033 = vpop.f32.mrb[0].mxu0
      %v9034 = vadd.f32 %v8728, %v9033
      %v9035 = vpop.f32.mrb[0].mxu0
      %9036 = vmatprep.mubr.f32.mxu0 %v8637
      %9037 = vmatmul.mubr.f32.gmra.mrb[0].mxu0 %v8636
      %v9038 = vpop.f32.mrb[0].mxu0
      %v9039 = vadd.f32 %v8728, %v9038
      %v9040 = vpop.f32.mrb[0].mxu0
      %9041 = vmatprep.mubr.f32.mxu0 %v8642
      %9042 = vmatmul.mubr.f32.gmra.mrb[0].mxu0 %v8641
      %v9043 = vpop.f32.mrb[0].mxu0
      %v9044 = vadd.f32 %v8728, %v9043
      %v9045 = vpop.f32.mrb[0].mxu0
      %9046 = vmatprep.mubr.f32.mxu0 %v8647
      %9047 = vmatmul.mubr.f32.gmra.mrb[0].mxu0 %v8646
      %v9048 = vpop.f32.mrb[0].mxu0
      %v9049 = vadd.f32 %v8728, %v9048
      %v9050 = vpop.f32.mrb[0].mxu0
      %9051 = vdwg.mxu0
      %9052 = vmatprep.subr.mxu0 0.0
      %9053 = vmatpush1.msra.mxu0 %v8683
      %9054 = vmatprep.subr.mxu0 0.0
      %9055 = vmatpush1.msra.mxu0 %v8684
      %9056 = vmatprep.subr.mxu0 0.0
      %9057 = vmatpush1.msra.mxu0 %v8685
      %9058 = vmatprep.subr.mxu0 0.0
      %9059 = vmatpush1.msra.mxu0 %v8686
      %9060 = vmatprep.subr.mxu0 0.0
      %9061 = vmatpush1.msra.mxu0 %v8687
      %9062 = vmatprep.subr.mxu0 0.0
      %9063 = vmatpush1.msra.mxu0 %v8688
      %9064 = vmatprep.subr.mxu0 0.0
      %9065 = vmatpush1.msra.mxu0 %v8689
      %9066 = vmatprep.subr.mxu0 0.0
      %9067 = vmatpush1.msra.mxu0 %v8690
      %9068 = vmatprep.subr.mxu0 0.0
      %9069 = vmatpush1.msra.mxu0 %v8691
      %9070 = vmatprep.subr.mxu0 0.0
      %9071 = vmatpush1.msra.mxu0 %v8692
      %9072 = vmatprep.subr.mxu0 0.0
      %9073 = vmatpush1.msra.mxu0 %v8693
      %9074 = vmatprep.subr.mxu0 0.0
      %9075 = vmatpush1.msra.mxu0 %v8694
      %9076 = vmatprep.subr.mxu0 0.0
      %9077 = vmatpush1.msra.mxu0 %v8695
      %9078 = vmatprep.subr.mxu0 0.0
      %9079 = vmatpush1.msra.mxu0 %v8696
      %9080 = vmatprep.subr.mxu0 0.0
      %9081 = vmatpush1.msra.mxu0 %v8697
      %9082 = vmatprep.subr.mxu0 0.0
      %9083 = vmatpush1.msra.mxu0 %v8698
      %9084 = vmatprep.subr.mxu0 0.0
      %9085 = vmatpush1.msra.mxu0 %v8699
      %9086 = vmatprep.subr.mxu0 0.0
      %9087 = vmatpush1.msra.mxu0 %v8700
      %9088 = vmatprep.subr.mxu0 0.0
      %9089 = vmatpush1.msra.mxu0 %v8701
      %9090 = vmatprep.subr.mxu0 0.0
      %9091 = vmatpush1.msra.mxu0 %v8702
      %9092 = vmatprep.subr.mxu0 0.0
      %9093 = vmatpush1.msra.mxu0 %v8703
      %9094 = vmatprep.subr.mxu0 0.0
      %9095 = vmatpush1.msra.mxu0 %v8704
      %9096 = vmatprep.subr.mxu0 0.0
      %9097 = vmatpush1.msra.mxu0 %v8705
      %9098 = vmatprep.subr.mxu0 0.0
      %9099 = vmatpush1.msra.mxu0 %v8706
      %9100 = vmatprep.subr.mxu0 0.0
      %9101 = vmatpush1.msra.mxu0 %v8707
      %9102 = vmatprep.subr.mxu0 0.0
      %9103 = vmatpush1.msra.mxu0 %v8708
      %9104 = vmatprep.subr.mxu0 0.0
      %9105 = vmatpush1.msra.mxu0 %v8709
      %9106 = vmatprep.subr.mxu0 0.0
      %9107 = vmatpush1.msra.mxu0 %v8710
      %9108 = vmatprep.subr.mxu0 0.0
      %9109 = vmatpush1.msra.mxu0 %v8711
      %9110 = vmatprep.subr.mxu0 0.0
      %9111 = vmatpush1.msra.mxu0 %v8712
      %9112 = vmatprep.subr.mxu0 0.0
      %9113 = vmatpush1.msra.mxu0 %v8713
      %9114 = vmatprep.subr.mxu0 0.0
      %9115 = vmatpush1.msra.mxu0 %v8714
      %9116 = vmatprep.mubr.f32.mxu0 %v8494
      %9117 = vmatmul.mubr.f32.gmra.mrb[0].mxu0 %v8493
      %v9118 = vpop.f32.mrb[0].mxu0
      %v9119 = vadd.f32 %v8894, %v9118
      %v9120 = vpop.f32.mrb[0].mxu0
      %9121 = vmatprep.mubr.f32.mxu0 %v8499
      %9122 = vmatmul.mubr.f32.gmra.mrb[0].mxu0 %v8498
      %v9123 = vpop.f32.mrb[0].mxu0
      %v9124 = vadd.f32 %v8899, %v9123
      %v9125 = vpop.f32.mrb[0].mxu0
      %9126 = vmatprep.mubr.f32.mxu0 %v8504
      %9127 = vmatmul.mubr.f32.gmra.mrb[0].mxu0 %v8503
      %v9128 = vpop.f32.mrb[0].mxu0
      %v9129 = vadd.f32 %v8904, %v9128
      %v9130 = vpop.f32.mrb[0].mxu0
      %9131 = vmatprep.mubr.f32.mxu0 %v8509
      %9132 = vmatmul.mubr.f32.gmra.mrb[0].mxu0 %v8508
      %v9133 = vpop.f32.mrb[0].mxu0
      %v9134 = vadd.f32 %v8909, %v9133
      %v9135 = vpop.f32.mrb[0].mxu0
      %9136 = vmatprep.mubr.f32.mxu0 %v8514
      %9137 = vmatmul.mubr.f32.gmra.mrb[0].mxu0 %v8513
      %v9138 = vpop.f32.mrb[0].mxu0
      %v9139 = vadd.f32 %v8914, %v9138
      %v9140 = vpop.f32.mrb[0].mxu0
      %9141 = vmatprep.mubr.f32.mxu0 %v8519
      %9142 = vmatmul.mubr.f32.gmra.mrb[0].mxu0 %v8518
      %v9143 = vpop.f32.mrb[0].mxu0
      %v9144 = vadd.f32 %v8919, %v9143
      %v9145 = vpop.f32.mrb[0].mxu0
      %9146 = vmatprep.mubr.f32.mxu0 %v8524
      %9147 = vmatmul.mubr.f32.gmra.mrb[0].mxu0 %v8523
      %v9148 = vpop.f32.mrb[0].mxu0
      %v9149 = vadd.f32 %v8924, %v9148
      %v9150 = vpop.f32.mrb[0].mxu0
      %9151 = vmatprep.mubr.f32.mxu0 %v8529
      %9152 = vmatmul.mubr.f32.gmra.mrb[0].mxu0 %v8528
      %v9153 = vpop.f32.mrb[0].mxu0
      %v9154 = vadd.f32 %v8929, %v9153
      %v9155 = vpop.f32.mrb[0].mxu0
      %9156 = vmatprep.mubr.f32.mxu0 %v8534
      %9157 = vmatmul.mubr.f32.gmra.mrb[0].mxu0 %v8533
      %v9158 = vpop.f32.mrb[0].mxu0
      %v9159 = vadd.f32 %v8934, %v9158
      %v9160 = vpop.f32.mrb[0].mxu0
      %9161 = vmatprep.mubr.f32.mxu0 %v8539
      %9162 = vmatmul.mubr.f32.gmra.mrb[0].mxu0 %v8538
      %v9163 = vpop.f32.mrb[0].mxu0
      %v9164 = vadd.f32 %v8939, %v9163
      %v9165 = vpop.f32.mrb[0].mxu0
      %9166 = vmatprep.mubr.f32.mxu0 %v8544
      %9167 = vmatmul.mubr.f32.gmra.mrb[0].mxu0 %v8543
      %v9168 = vpop.f32.mrb[0].mxu0
      %v9169 = vadd.f32 %v8944, %v9168
      %v9170 = vpop.f32.mrb[0].mxu0
      %9171 = vmatprep.mubr.f32.mxu0 %v8549
      %9172 = vmatmul.mubr.f32.gmra.mrb[0].mxu0 %v8548
      %v9173 = vpop.f32.mrb[0].mxu0
      %v9174 = vadd.f32 %v8949, %v9173
      %v9175 = vpop.f32.mrb[0].mxu0
      %9176 = vmatprep.mubr.f32.mxu0 %v8554
      %9177 = vmatmul.mubr.f32.gmra.mrb[0].mxu0 %v8553
      %v9178 = vpop.f32.mrb[0].mxu0
      %v9179 = vadd.f32 %v8954, %v9178
      %v9180 = vpop.f32.mrb[0].mxu0
      %9181 = vmatprep.mubr.f32.mxu0 %v8559
      %9182 = vmatmul.mubr.f32.gmra.mrb[0].mxu0 %v8558
      %v9183 = vpop.f32.mrb[0].mxu0
      %v9184 = vadd.f32 %v8959, %v9183
      %v9185 = vpop.f32.mrb[0].mxu0
      %9186 = vmatprep.mubr.f32.mxu0 %v8564
      %9187 = vmatmul.mubr.f32.gmra.mrb[0].mxu0 %v8563
      %v9188 = vpop.f32.mrb[0].mxu0
      %v9189 = vadd.f32 %v8964, %v9188
      %v9190 = vpop.f32.mrb[0].mxu0
      %9191 = vmatprep.mubr.f32.mxu0 %v8569
      %9192 = vmatmul.mubr.f32.gmra.mrb[0].mxu0 %v8568
      %v9193 = vpop.f32.mrb[0].mxu0
      %v9194 = vadd.f32 %v8969, %v9193
      %v9195 = vpop.f32.mrb[0].mxu0
      %9196 = vmatprep.mubr.f32.mxu0 %v8574
      %9197 = vmatmul.mubr.f32.gmra.mrb[0].mxu0 %v8573
      %v9198 = vpop.f32.mrb[0].mxu0
      %v9199 = vadd.f32 %v8974, %v9198
      %v9200 = vpop.f32.mrb[0].mxu0
      %9201 = vmatprep.mubr.f32.mxu0 %v8579
      %9202 = vmatmul.mubr.f32.gmra.mrb[0].mxu0 %v8578
      %v9203 = vpop.f32.mrb[0].mxu0
      %v9204 = vadd.f32 %v8979, %v9203
      %v9205 = vpop.f32.mrb[0].mxu0
      %9206 = vmatprep.mubr.f32.mxu0 %v8584
      %9207 = vmatmul.mubr.f32.gmra.mrb[0].mxu0 %v8583
      %v9208 = vpop.f32.mrb[0].mxu0
      %v9209 = vadd.f32 %v8984, %v9208
      %v9210 = vpop.f32.mrb[0].mxu0
      %9211 = vmatprep.mubr.f32.mxu0 %v8589
      %9212 = vmatmul.mubr.f32.gmra.mrb[0].mxu0 %v8588
      %v9213 = vpop.f32.mrb[0].mxu0
      %v9214 = vadd.f32 %v8989, %v9213
      %v9215 = vpop.f32.mrb[0].mxu0
      %9216 = vmatprep.mubr.f32.mxu0 %v8594
      %9217 = vmatmul.mubr.f32.gmra.mrb[0].mxu0 %v8593
      %v9218 = vpop.f32.mrb[0].mxu0
      %v9219 = vadd.f32 %v8994, %v9218
      %v9220 = vpop.f32.mrb[0].mxu0
      %9221 = vmatprep.mubr.f32.mxu0 %v8599
      %9222 = vmatmul.mubr.f32.gmra.mrb[0].mxu0 %v8598
      %v9223 = vpop.f32.mrb[0].mxu0
      %v9224 = vadd.f32 %v8999, %v9223
      %v9225 = vpop.f32.mrb[0].mxu0
      %9226 = vmatprep.mubr.f32.mxu0 %v8604
      %9227 = vmatmul.mubr.f32.gmra.mrb[0].mxu0 %v8603
      %v9228 = vpop.f32.mrb[0].mxu0
      %v9229 = vadd.f32 %v9004, %v9228
      %v9230 = vpop.f32.mrb[0].mxu0
      %9231 = vmatprep.mubr.f32.mxu0 %v8609
      %9232 = vmatmul.mubr.f32.gmra.mrb[0].mxu0 %v8608
      %v9233 = vpop.f32.mrb[0].mxu0
      %v9234 = vadd.f32 %v9009, %v9233
      %v9235 = vpop.f32.mrb[0].mxu0
      %9236 = vmatprep.mubr.f32.mxu0 %v8614
      %9237 = vmatmul.mubr.f32.gmra.mrb[0].mxu0 %v8613
      %v9238 = vpop.f32.mrb[0].mxu0
      %v9239 = vadd.f32 %v9014, %v9238
      %v9240 = vpop.f32.mrb[0].mxu0
      %9241 = vmatprep.mubr.f32.mxu0 %v8619
      %9242 = vmatmul.mubr.f32.gmra.mrb[0].mxu0 %v8618
      %v9243 = vpop.f32.mrb[0].mxu0
      %v9244 = vadd.f32 %v9019, %v9243
      %v9245 = vpop.f32.mrb[0].mxu0
      %9246 = vmatprep.mubr.f32.mxu0 %v8624
      %9247 = vmatmul.mubr.f32.gmra.mrb[0].mxu0 %v8623
      %v9248 = vpop.f32.mrb[0].mxu0
      %v9249 = vadd.f32 %v9024, %v9248
      %v9250 = vpop.f32.mrb[0].mxu0
      %9251 = vmatprep.mubr.f32.mxu0 %v8629
      %9252 = vmatmul.mubr.f32.gmra.mrb[0].mxu0 %v8628
      %v9253 = vpop.f32.mrb[0].mxu0
      %v9254 = vadd.f32 %v9029, %v9253
      %v9255 = vpop.f32.mrb[0].mxu0
      %9256 = vmatprep.mubr.f32.mxu0 %v8634
      %9257 = vmatmul.mubr.f32.gmra.mrb[0].mxu0 %v8633
      %v9258 = vpop.f32.mrb[0].mxu0
      %v9259 = vadd.f32 %v9034, %v9258
      %v9260 = vpop.f32.mrb[0].mxu0
      %9261 = vmatprep.mubr.f32.mxu0 %v8639
      %9262 = vmatmul.mubr.f32.gmra.mrb[0].mxu0 %v8638
      %v9263 = vpop.f32.mrb[0].mxu0
      %v9264 = vadd.f32 %v9039, %v9263
      %v9265 = vpop.f32.mrb[0].mxu0
      %9266 = vmatprep.mubr.f32.mxu0 %v8644
      %9267 = vmatmul.mubr.f32.gmra.mrb[0].mxu0 %v8643
      %v9268 = vpop.f32.mrb[0].mxu0
      %v9269 = vadd.f32 %v9044, %v9268
      %v9270 = vpop.f32.mrb[0].mxu0
      %9271 = vmatprep.mubr.f32.mxu0 %v8649
      %9272 = vmatmul.mubr.f32.gmra.mrb[0].mxu0 %v8648
      %v9273 = vpop.f32.mrb[0].mxu0
      %v9274 = vadd.f32 %v9049, %v9273
      %v9275 = vpop.f32.mrb[0].mxu0
      %9276 = vdwg.mxu0
      %9277 = vmatprep.subr.mxu0 0.0
      %9278 = vmatpush1.msra.mxu0 %v8715
      %9279 = vmatprep.subr.mxu0 0.0
      %9280 = vmatpush1.msra.mxu0 %v8716
      %9281 = vmatprep.subr.mxu0 0.0
      %9282 = vmatpush1.msra.mxu0 %v8717
      %9283 = vmatprep.subr.mxu0 0.0
      %9284 = vmatpush1.msra.mxu0 %v8718
      %9285 = vmatprep.subr.mxu0 0.0
      %9286 = vmatpush1.msra.mxu0 %v8719
      %9287 = vmatprep.subr.mxu0 0.0
      %9288 = vmatpush1.msra.mxu0 %v8720
      %9289 = vmatprep.subr.mxu0 0.0
      %9290 = vmatpush1.msra.mxu0 %v8721
      %9291 = vmatprep.subr.mxu0 0.0
      %9292 = vmatpush1.msra.mxu0 %v8722
      %9293 = vmatprep.subr.mxu0 0.0
      %9294 = vmatpush1.msra.mxu0 0.0
      %9295 = vmatprep.subr.mxu0 0.0
      %9296 = vmatpush1.msra.mxu0 0.0
      %9297 = vmatprep.subr.mxu0 0.0
      %9298 = vmatpush1.msra.mxu0 0.0
      %9299 = vmatprep.subr.mxu0 0.0
      %9300 = vmatpush1.msra.mxu0 0.0
      %9301 = vmatprep.subr.mxu0 0.0
      %9302 = vmatpush1.msra.mxu0 0.0
      %9303 = vmatprep.subr.mxu0 0.0
      %9304 = vmatpush1.msra.mxu0 0.0
      %9305 = vmatprep.subr.mxu0 0.0
      %9306 = vmatpush1.msra.mxu0 0.0
      %9307 = vmatprep.subr.mxu0 0.0
      %9308 = vmatpush1.msra.mxu0 0.0
      %9309 = vmatprep.subr.mxu0 0.0
      %9310 = vmatpush1.msra.mxu0 0.0
      %9311 = vmatprep.subr.mxu0 0.0
      %9312 = vmatpush1.msra.mxu0 0.0
      %9313 = vmatprep.subr.mxu0 0.0
      %9314 = vmatpush1.msra.mxu0 0.0
      %9315 = vmatprep.subr.mxu0 0.0
      %9316 = vmatpush1.msra.mxu0 0.0
      %9317 = vmatprep.subr.mxu0 0.0
      %9318 = vmatpush1.msra.mxu0 0.0
      %9319 = vmatprep.subr.mxu0 0.0
      %9320 = vmatpush1.msra.mxu0 0.0
      %9321 = vmatprep.subr.mxu0 0.0
      %9322 = vmatpush1.msra.mxu0 0.0
      %9323 = vmatprep.subr.mxu0 0.0
      %9324 = vmatpush1.msra.mxu0 0.0
      %9325 = vmatprep.subr.mxu0 0.0
      %9326 = vmatpush1.msra.mxu0 0.0
      %9327 = vmatprep.subr.mxu0 0.0
      %9328 = vmatpush1.msra.mxu0 0.0
      %9329 = vmatprep.subr.mxu0 0.0
      %9330 = vmatpush1.msra.mxu0 0.0
      %9331 = vmatprep.subr.mxu0 0.0
      %9332 = vmatpush1.msra.mxu0 0.0
      %9333 = vmatprep.subr.mxu0 0.0
      %9334 = vmatpush1.msra.mxu0 0.0
      %9335 = vmatprep.subr.mxu0 0.0
      %9336 = vmatpush1.msra.mxu0 0.0
      %9337 = vmatprep.subr.mxu0 0.0
      %9338 = vmatpush1.msra.mxu0 0.0
      %9339 = vmatprep.subr.mxu0 0.0
      %9340 = vmatpush1.msra.mxu0 0.0
      %9341 = vmatprep.mubr.f32.mxu0 0.0
      %9342 = vmatmul.mubr.f32.gmra.mrb[0].mxu0 %v8732
      %v9343 = vpop.f32.mrb[0].mxu0
      %v9344 = vadd.f32 %v9119, %v9343
      %v9345 = vpop.f32.mrb[0].mxu0
      %9346 = vmatprep.mubr.f32.mxu0 0.0
      %9347 = vmatmul.mubr.f32.gmra.mrb[0].mxu0 %v8735
      %v9348 = vpop.f32.mrb[0].mxu0
      %v9349 = vadd.f32 %v9124, %v9348
      %v9350 = vpop.f32.mrb[0].mxu0
      %9351 = vmatprep.mubr.f32.mxu0 0.0
      %9352 = vmatmul.mubr.f32.gmra.mrb[0].mxu0 %v8738
      %v9353 = vpop.f32.mrb[0].mxu0
      %v9354 = vadd.f32 %v9129, %v9353
      %v9355 = vpop.f32.mrb[0].mxu0
      %9356 = vmatprep.mubr.f32.mxu0 0.0
      %9357 = vmatmul.mubr.f32.gmra.mrb[0].mxu0 %v8741
      %v9358 = vpop.f32.mrb[0].mxu0
      %v9359 = vadd.f32 %v9134, %v9358
      %v9360 = vpop.f32.mrb[0].mxu0
      %9361 = vmatprep.mubr.f32.mxu0 0.0
      %9362 = vmatmul.mubr.f32.gmra.mrb[0].mxu0 %v8744
      %v9363 = vpop.f32.mrb[0].mxu0
      %v9364 = vadd.f32 %v9139, %v9363
      %v9365 = vpop.f32.mrb[0].mxu0
      %9366 = vmatprep.mubr.f32.mxu0 0.0
      %9367 = vmatmul.mubr.f32.gmra.mrb[0].mxu0 %v8747
      %v9368 = vpop.f32.mrb[0].mxu0
      %v9369 = vadd.f32 %v9144, %v9368
      %v9370 = vpop.f32.mrb[0].mxu0
      %9371 = vmatprep.mubr.f32.mxu0 0.0
      %9372 = vmatmul.mubr.f32.gmra.mrb[0].mxu0 %v8750
      %v9373 = vpop.f32.mrb[0].mxu0
      %v9374 = vadd.f32 %v9149, %v9373
      %v9375 = vpop.f32.mrb[0].mxu0
      %9376 = vmatprep.mubr.f32.mxu0 0.0
      %9377 = vmatmul.mubr.f32.gmra.mrb[0].mxu0 %v8753
      %v9378 = vpop.f32.mrb[0].mxu0
      %v9379 = vadd.f32 %v9154, %v9378
      %v9380 = vpop.f32.mrb[0].mxu0
      %9381 = vmatprep.mubr.f32.mxu0 0.0
      %9382 = vmatmul.mubr.f32.gmra.mrb[0].mxu0 %v8756
      %v9383 = vpop.f32.mrb[0].mxu0
      %v9384 = vadd.f32 %v9159, %v9383
      %v9385 = vpop.f32.mrb[0].mxu0
      %9386 = vmatprep.mubr.f32.mxu0 0.0
      %9387 = vmatmul.mubr.f32.gmra.mrb[0].mxu0 %v8759
      %v9388 = vpop.f32.mrb[0].mxu0
      %v9389 = vadd.f32 %v9164, %v9388
      %v9390 = vpop.f32.mrb[0].mxu0
      %9391 = vmatprep.mubr.f32.mxu0 0.0
      %9392 = vmatmul.mubr.f32.gmra.mrb[0].mxu0 %v8762
      %v9393 = vpop.f32.mrb[0].mxu0
      %v9394 = vadd.f32 %v9169, %v9393
      %v9395 = vpop.f32.mrb[0].mxu0
      %9396 = vmatprep.mubr.f32.mxu0 0.0
      %9397 = vmatmul.mubr.f32.gmra.mrb[0].mxu0 %v8765
      %v9398 = vpop.f32.mrb[0].mxu0
      %v9399 = vadd.f32 %v9174, %v9398
      %v9400 = vpop.f32.mrb[0].mxu0
      %9401 = vmatprep.mubr.f32.mxu0 0.0
      %9402 = vmatmul.mubr.f32.gmra.mrb[0].mxu0 %v8768
      %v9403 = vpop.f32.mrb[0].mxu0
      %v9404 = vadd.f32 %v9179, %v9403
      %v9405 = vpop.f32.mrb[0].mxu0
      %9406 = vmatprep.mubr.f32.mxu0 0.0
      %9407 = vmatmul.mubr.f32.gmra.mrb[0].mxu0 %v8771
      %v9408 = vpop.f32.mrb[0].mxu0
      %v9409 = vadd.f32 %v9184, %v9408
      %v9410 = vpop.f32.mrb[0].mxu0
      %9411 = vmatprep.mubr.f32.mxu0 0.0
      %9412 = vmatmul.mubr.f32.gmra.mrb[0].mxu0 %v8774
      %v9413 = vpop.f32.mrb[0].mxu0
      %v9414 = vadd.f32 %v9189, %v9413
      %v9415 = vpop.f32.mrb[0].mxu0
      %9416 = vmatprep.mubr.f32.mxu0 0.0
      %9417 = vmatmul.mubr.f32.gmra.mrb[0].mxu0 %v8777
      %v9418 = vpop.f32.mrb[0].mxu0
      %v9419 = vadd.f32 %v9194, %v9418
      %v9420 = vpop.f32.mrb[0].mxu0
      %9421 = vmatprep.mubr.f32.mxu0 0.0
      %9422 = vmatmul.mubr.f32.gmra.mrb[0].mxu0 %v8780
      %v9423 = vpop.f32.mrb[0].mxu0
      %v9424 = vadd.f32 %v9199, %v9423
      %v9425 = vpop.f32.mrb[0].mxu0
      %9426 = vmatprep.mubr.f32.mxu0 0.0
      %9427 = vmatmul.mubr.f32.gmra.mrb[0].mxu0 %v8783
      %v9428 = vpop.f32.mrb[0].mxu0
      %v9429 = vadd.f32 %v9204, %v9428
      %v9430 = vpop.f32.mrb[0].mxu0
      %9431 = vmatprep.mubr.f32.mxu0 0.0
      %9432 = vmatmul.mubr.f32.gmra.mrb[0].mxu0 %v8786
      %v9433 = vpop.f32.mrb[0].mxu0
      %v9434 = vadd.f32 %v9209, %v9433
      %v9435 = vpop.f32.mrb[0].mxu0
      %9436 = vmatprep.mubr.f32.mxu0 0.0
      %9437 = vmatmul.mubr.f32.gmra.mrb[0].mxu0 %v8789
      %v9438 = vpop.f32.mrb[0].mxu0
      %v9439 = vadd.f32 %v9214, %v9438
      %v9440 = vpop.f32.mrb[0].mxu0
      %9441 = vmatprep.mubr.f32.mxu0 0.0
      %9442 = vmatmul.mubr.f32.gmra.mrb[0].mxu0 %v8792
      %v9443 = vpop.f32.mrb[0].mxu0
      %v9444 = vadd.f32 %v9219, %v9443
      %v9445 = vpop.f32.mrb[0].mxu0
      %9446 = vmatprep.mubr.f32.mxu0 0.0
      %9447 = vmatmul.mubr.f32.gmra.mrb[0].mxu0 %v8795
      %v9448 = vpop.f32.mrb[0].mxu0
      %v9449 = vadd.f32 %v9224, %v9448
      %v9450 = vpop.f32.mrb[0].mxu0
      %9451 = vmatprep.mubr.f32.mxu0 0.0
      %9452 = vmatmul.mubr.f32.gmra.mrb[0].mxu0 %v8798
      %v9453 = vpop.f32.mrb[0].mxu0
      %v9454 = vadd.f32 %v9229, %v9453
      %v9455 = vpop.f32.mrb[0].mxu0
      %9456 = vmatprep.mubr.f32.mxu0 0.0
      %9457 = vmatmul.mubr.f32.gmra.mrb[0].mxu0 %v8801
      %v9458 = vpop.f32.mrb[0].mxu0
      %v9459 = vadd.f32 %v9234, %v9458
      %v9460 = vpop.f32.mrb[0].mxu0
      %9461 = vmatprep.mubr.f32.mxu0 0.0
      %9462 = vmatmul.mubr.f32.gmra.mrb[0].mxu0 %v8804
      %v9463 = vpop.f32.mrb[0].mxu0
      %v9464 = vadd.f32 %v9239, %v9463
      %v9465 = vpop.f32.mrb[0].mxu0
      %9466 = vmatprep.mubr.f32.mxu0 0.0
      %9467 = vmatmul.mubr.f32.gmra.mrb[0].mxu0 %v8807
      %v9468 = vpop.f32.mrb[0].mxu0
      %v9469 = vadd.f32 %v9244, %v9468
      %v9470 = vpop.f32.mrb[0].mxu0
      %9471 = vmatprep.mubr.f32.mxu0 0.0
      %9472 = vmatmul.mubr.f32.gmra.mrb[0].mxu0 %v8810
      %v9473 = vpop.f32.mrb[0].mxu0
      %v9474 = vadd.f32 %v9249, %v9473
      %v9475 = vpop.f32.mrb[0].mxu0
      %9476 = vmatprep.mubr.f32.mxu0 0.0
      %9477 = vmatmul.mubr.f32.gmra.mrb[0].mxu0 %v8813
      %v9478 = vpop.f32.mrb[0].mxu0
      %v9479 = vadd.f32 %v9254, %v9478
      %v9480 = vpop.f32.mrb[0].mxu0
      %9481 = vmatprep.mubr.f32.mxu0 0.0
      %9482 = vmatmul.mubr.f32.gmra.mrb[0].mxu0 %v8816
      %v9483 = vpop.f32.mrb[0].mxu0
      %v9484 = vadd.f32 %v9259, %v9483
      %v9485 = vpop.f32.mrb[0].mxu0
      %9486 = vmatprep.mubr.f32.mxu0 0.0
      %9487 = vmatmul.mubr.f32.gmra.mrb[0].mxu0 %v8819
      %v9488 = vpop.f32.mrb[0].mxu0
      %v9489 = vadd.f32 %v9264, %v9488
      %v9490 = vpop.f32.mrb[0].mxu0
      %9491 = vmatprep.mubr.f32.mxu0 0.0
      %9492 = vmatmul.mubr.f32.gmra.mrb[0].mxu0 %v8822
      %v9493 = vpop.f32.mrb[0].mxu0
      %v9494 = vadd.f32 %v9269, %v9493
      %v9495 = vpop.f32.mrb[0].mxu0
      %9496 = vmatprep.mubr.f32.mxu0 0.0
      %9497 = vmatmul.mubr.f32.gmra.mrb[0].mxu0 %v8825
      %v9498 = vpop.f32.mrb[0].mxu0
      %v9499 = vadd.f32 %v9274, %v9498
      %v9500 = vpop.f32.mrb[0].mxu0
      %9501 = vdwg.mxu0
      %v9502 = vld [vmem:[%s13] sm:$0xff]
      %v9503 = vld [vmem:[%s13 + $0x8] sm:$0xff]
      %v9504 = vld [vmem:[%s13 + $0x10] sm:$0xff]
      %v9505 = vld [vmem:[%s556] sm:$0xff]
      %v9506 = vld [vmem:[%s556 + $0x8] sm:$0xff]
      %v9507 = vld [vmem:[%s556 + $0x10] sm:$0xff]
      %v9508 = vld [vmem:[%s556 + $0x18] sm:$0xff]
      %v9509 = vld [vmem:[%s556 + $0x20] sm:$0xff]
      %v9510 = vld [vmem:[%s556 + $0x28] sm:$0xff]
      %v9511 = vld [vmem:[%s556 + $0x30] sm:$0xff]
      %v9512 = vld [vmem:[%s556 + $0x38] sm:$0xff]
      %v9513 = vld [vmem:[%s556 + $0x40] sm:$0xff]
      %v9514 = vld [vmem:[%s556 + $0x48] sm:$0xff]
      %v9515 = vld [vmem:[%s556 + $0x50] sm:$0xff]
      %v9516 = vld [vmem:[%s556 + $0x58] sm:$0xff]
      %v9517 = vld [vmem:[%s556 + $0x60] sm:$0xff]
      %v9518 = vld [vmem:[%s556 + $0x68] sm:$0xff]
      %v9519 = vld [vmem:[%s556 + $0x70] sm:$0xff]
      %v9520 = vld [vmem:[%s556 + $0x78] sm:$0xff]
      %v9521 = vld [vmem:[%s556 + $0x80] sm:$0xff]
      %v9522 = vld [vmem:[%s556 + $0x88] sm:$0xff]
      %v9523 = vld [vmem:[%s556 + $0x90] sm:$0xff]
      %v9524 = vld [vmem:[%s556 + $0x98] sm:$0xff]
      %v9525 = vld [vmem:[%s556 + $0xa0] sm:$0xff]
      %v9526 = vld [vmem:[%s556 + $0xa8] sm:$0xff]
      %v9527 = vld [vmem:[%s556 + $0xb0] sm:$0xff]
      %v9528 = vld [vmem:[%s556 + $0xb8] sm:$0xff]
      %v9529 = vld [vmem:[%s556 + $0xc0] sm:$0xff]
      %v9530 = vld [vmem:[%s556 + $0xc8] sm:$0xff]
      %v9531 = vld [vmem:[%s556 + $0xd0] sm:$0xff]
      %v9532 = vld [vmem:[%s556 + $0xd8] sm:$0xff]
      %v9533 = vld [vmem:[%s556 + $0xe0] sm:$0xff]
      %v9534 = vld [vmem:[%s556 + $0xe8] sm:$0xff]
      %v9535 = vld [vmem:[%s556 + $0xf0] sm:$0xff]
      %v9536 = vld [vmem:[%s556 + $0xf8] sm:$0xff]
      %v9537 = vld [vmem:[%s14] sm:$0xff]
      %vm9538 = vcmask 64512
      %v9540 = vsel %vm9538, %v9505, 0
      %v9543 = vsel %vm9538, %v9506, 0
      %v9546 = vsel %vm9538, %v9507, 0
      %v9549 = vsel %vm9538, %v9508, 0
      %v9552 = vsel %vm9538, %v9509, 0
      %v9555 = vsel %vm9538, %v9510, 0
      %v9558 = vsel %vm9538, %v9511, 0
      %v9561 = vsel %vm9538, %v9512, 0
      %v9564 = vsel %vm9538, %v9513, 0
      %v9567 = vsel %vm9538, %v9514, 0
      %v9570 = vsel %vm9538, %v9515, 0
      %v9573 = vsel %vm9538, %v9516, 0
      %v9576 = vsel %vm9538, %v9517, 0
      %v9579 = vsel %vm9538, %v9518, 0
      %v9582 = vsel %vm9538, %v9519, 0
      %v9585 = vsel %vm9538, %v9520, 0
      %v9588 = vsel %vm9538, %v9521, 0
      %v9591 = vsel %vm9538, %v9522, 0
      %v9594 = vsel %vm9538, %v9523, 0
      %v9597 = vsel %vm9538, %v9524, 0
      %v9600 = vsel %vm9538, %v9525, 0
      %v9603 = vsel %vm9538, %v9526, 0
      %v9606 = vsel %vm9538, %v9527, 0
      %v9609 = vsel %vm9538, %v9528, 0
      %v9612 = vsel %vm9538, %v9529, 0
      %v9615 = vsel %vm9538, %v9530, 0
      %v9618 = vsel %vm9538, %v9531, 0
      %v9621 = vsel %vm9538, %v9532, 0
      %v9624 = vsel %vm9538, %v9533, 0
      %v9627 = vsel %vm9538, %v9534, 0
      %v9630 = vsel %vm9538, %v9535, 0
      %v9633 = vsel %vm9538, %v9536, 0
      %9635 = vmatprep.subr.mxu0 0.0
      %9636 = vmatpush1.msra.mxu0 %v9537
      %9637 = vmatprep.subr.mxu0 0.0
      %9638 = vmatpush1.msra.mxu0 0.0
      %9639 = vmatprep.subr.mxu0 0.0
      %9640 = vmatpush1.msra.mxu0 0.0
      %9641 = vmatprep.subr.mxu0 0.0
      %9642 = vmatpush1.msra.mxu0 0.0
      %9643 = vmatprep.subr.mxu0 0.0
      %9644 = vmatpush1.msra.mxu0 0.0
      %9645 = vmatprep.subr.mxu0 0.0
      %9646 = vmatpush1.msra.mxu0 0.0
      %9647 = vmatprep.subr.mxu0 0.0
      %9648 = vmatpush1.msra.mxu0 0.0
      %9649 = vmatprep.subr.mxu0 0.0
      %9650 = vmatpush1.msra.mxu0 0.0
      %9651 = vmatprep.subr.mxu0 0.0
      %9652 = vmatpush1.msra.mxu0 0.0
      %9653 = vmatprep.subr.mxu0 0.0
      %9654 = vmatpush1.msra.mxu0 0.0
      %9655 = vmatprep.subr.mxu0 0.0
      %9656 = vmatpush1.msra.mxu0 0.0
      %9657 = vmatprep.subr.mxu0 0.0
      %9658 = vmatpush1.msra.mxu0 0.0
      %9659 = vmatprep.subr.mxu0 0.0
      %9660 = vmatpush1.msra.mxu0 0.0
      %9661 = vmatprep.subr.mxu0 0.0
      %9662 = vmatpush1.msra.mxu0 0.0
      %9663 = vmatprep.subr.mxu0 0.0
      %9664 = vmatpush1.msra.mxu0 0.0
      %9665 = vmatprep.subr.mxu0 0.0
      %9666 = vmatpush1.msra.mxu0 0.0
      %9667 = vmatprep.subr.mxu0 0.0
      %9668 = vmatpush1.msra.mxu0 0.0
      %9669 = vmatprep.subr.mxu0 0.0
      %9670 = vmatpush1.msra.mxu0 0.0
      %9671 = vmatprep.subr.mxu0 0.0
      %9672 = vmatpush1.msra.mxu0 0.0
      %9673 = vmatprep.subr.mxu0 0.0
      %9674 = vmatpush1.msra.mxu0 0.0
      %9675 = vmatprep.subr.mxu0 0.0
      %9676 = vmatpush1.msra.mxu0 0.0
      %9677 = vmatprep.subr.mxu0 0.0
      %9678 = vmatpush1.msra.mxu0 0.0
      %9679 = vmatprep.subr.mxu0 0.0
      %9680 = vmatpush1.msra.mxu0 0.0
      %9681 = vmatprep.subr.mxu0 0.0
      %9682 = vmatpush1.msra.mxu0 0.0
      %9683 = vmatprep.subr.mxu0 0.0
      %9684 = vmatpush1.msra.mxu0 0.0
      %9685 = vmatprep.subr.mxu0 0.0
      %9686 = vmatpush1.msra.mxu0 0.0
      %9687 = vmatprep.subr.mxu0 0.0
      %9688 = vmatpush1.msra.mxu0 0.0
      %9689 = vmatprep.subr.mxu0 0.0
      %9690 = vmatpush1.msra.mxu0 0.0
      %9691 = vmatprep.subr.mxu0 0.0
      %9692 = vmatpush1.msra.mxu0 0.0
      %9693 = vmatprep.subr.mxu0 0.0
      %9694 = vmatpush1.msra.mxu0 0.0
      %9695 = vmatprep.subr.mxu0 0.0
      %9696 = vmatpush1.msra.mxu0 0.0
      %9697 = vmatprep.subr.mxu0 0.0
      %9698 = vmatpush1.msra.mxu0 0.0
      %9699 = vmatprep.mubr.f32.mxu0 0.0
      %9700 = vmatmul.mubr.f32.gmra.mrb[0].mxu0 %v9540
      %v9701 = vpop.f32.mrb[0].mxu0
      %v9702 = vadd.f32 0.0, %v9701
      %v9703 = vpop.f32.mrb[0].mxu0
      %9704 = vmatprep.mubr.f32.mxu0 0.0
      %9705 = vmatmul.mubr.f32.gmra.mrb[0].mxu0 %v9543
      %v9706 = vpop.f32.mrb[0].mxu0
      %v9707 = vadd.f32 0.0, %v9706
      %v9708 = vpop.f32.mrb[0].mxu0
      %9709 = vmatprep.mubr.f32.mxu0 0.0
      %9710 = vmatmul.mubr.f32.gmra.mrb[0].mxu0 %v9546
      %v9711 = vpop.f32.mrb[0].mxu0
      %v9712 = vadd.f32 0.0, %v9711
      %v9713 = vpop.f32.mrb[0].mxu0
      %9714 = vmatprep.mubr.f32.mxu0 0.0
      %9715 = vmatmul.mubr.f32.gmra.mrb[0].mxu0 %v9549
      %v9716 = vpop.f32.mrb[0].mxu0
      %v9717 = vadd.f32 0.0, %v9716
      %v9718 = vpop.f32.mrb[0].mxu0
      %9719 = vmatprep.mubr.f32.mxu0 0.0
      %9720 = vmatmul.mubr.f32.gmra.mrb[0].mxu0 %v9552
      %v9721 = vpop.f32.mrb[0].mxu0
      %v9722 = vadd.f32 0.0, %v9721
      %v9723 = vpop.f32.mrb[0].mxu0
      %9724 = vmatprep.mubr.f32.mxu0 0.0
      %9725 = vmatmul.mubr.f32.gmra.mrb[0].mxu0 %v9555
      %v9726 = vpop.f32.mrb[0].mxu0
      %v9727 = vadd.f32 0.0, %v9726
      %v9728 = vpop.f32.mrb[0].mxu0
      %9729 = vmatprep.mubr.f32.mxu0 0.0
      %9730 = vmatmul.mubr.f32.gmra.mrb[0].mxu0 %v9558
      %v9731 = vpop.f32.mrb[0].mxu0
      %v9732 = vadd.f32 0.0, %v9731
      %v9733 = vpop.f32.mrb[0].mxu0
      %9734 = vmatprep.mubr.f32.mxu0 0.0
      %9735 = vmatmul.mubr.f32.gmra.mrb[0].mxu0 %v9561
      %v9736 = vpop.f32.mrb[0].mxu0
      %v9737 = vadd.f32 0.0, %v9736
      %v9738 = vpop.f32.mrb[0].mxu0
      %9739 = vmatprep.mubr.f32.mxu0 0.0
      %9740 = vmatmul.mubr.f32.gmra.mrb[0].mxu0 %v9564
      %v9741 = vpop.f32.mrb[0].mxu0
      %v9742 = vadd.f32 0.0, %v9741
      %v9743 = vpop.f32.mrb[0].mxu0
      %9744 = vmatprep.mubr.f32.mxu0 0.0
      %9745 = vmatmul.mubr.f32.gmra.mrb[0].mxu0 %v9567
      %v9746 = vpop.f32.mrb[0].mxu0
      %v9747 = vadd.f32 0.0, %v9746
      %v9748 = vpop.f32.mrb[0].mxu0
      %9749 = vmatprep.mubr.f32.mxu0 0.0
      %9750 = vmatmul.mubr.f32.gmra.mrb[0].mxu0 %v9570
      %v9751 = vpop.f32.mrb[0].mxu0
      %v9752 = vadd.f32 0.0, %v9751
      %v9753 = vpop.f32.mrb[0].mxu0
      %9754 = vmatprep.mubr.f32.mxu0 0.0
      %9755 = vmatmul.mubr.f32.gmra.mrb[0].mxu0 %v9573
      %v9756 = vpop.f32.mrb[0].mxu0
      %v9757 = vadd.f32 0.0, %v9756
      %v9758 = vpop.f32.mrb[0].mxu0
      %9759 = vmatprep.mubr.f32.mxu0 0.0
      %9760 = vmatmul.mubr.f32.gmra.mrb[0].mxu0 %v9576
      %v9761 = vpop.f32.mrb[0].mxu0
      %v9762 = vadd.f32 0.0, %v9761
      %v9763 = vpop.f32.mrb[0].mxu0
      %9764 = vmatprep.mubr.f32.mxu0 0.0
      %9765 = vmatmul.mubr.f32.gmra.mrb[0].mxu0 %v9579
      %v9766 = vpop.f32.mrb[0].mxu0
      %v9767 = vadd.f32 0.0, %v9766
      %v9768 = vpop.f32.mrb[0].mxu0
      %9769 = vmatprep.mubr.f32.mxu0 0.0
      %9770 = vmatmul.mubr.f32.gmra.mrb[0].mxu0 %v9582
      %v9771 = vpop.f32.mrb[0].mxu0
      %v9772 = vadd.f32 0.0, %v9771
      %v9773 = vpop.f32.mrb[0].mxu0
      %9774 = vmatprep.mubr.f32.mxu0 0.0
      %9775 = vmatmul.mubr.f32.gmra.mrb[0].mxu0 %v9585
      %v9776 = vpop.f32.mrb[0].mxu0
      %v9777 = vadd.f32 0.0, %v9776
      %v9778 = vpop.f32.mrb[0].mxu0
      %9779 = vmatprep.mubr.f32.mxu0 0.0
      %9780 = vmatmul.mubr.f32.gmra.mrb[0].mxu0 %v9588
      %v9781 = vpop.f32.mrb[0].mxu0
      %v9782 = vadd.f32 0.0, %v9781
      %v9783 = vpop.f32.mrb[0].mxu0
      %9784 = vmatprep.mubr.f32.mxu0 0.0
      %9785 = vmatmul.mubr.f32.gmra.mrb[0].mxu0 %v9591
      %v9786 = vpop.f32.mrb[0].mxu0
      %v9787 = vadd.f32 0.0, %v9786
      %v9788 = vpop.f32.mrb[0].mxu0
      %9789 = vmatprep.mubr.f32.mxu0 0.0
      %9790 = vmatmul.mubr.f32.gmra.mrb[0].mxu0 %v9594
      %v9791 = vpop.f32.mrb[0].mxu0
      %v9792 = vadd.f32 0.0, %v9791
      %v9793 = vpop.f32.mrb[0].mxu0
      %9794 = vmatprep.mubr.f32.mxu0 0.0
      %9795 = vmatmul.mubr.f32.gmra.mrb[0].mxu0 %v9597
      %v9796 = vpop.f32.mrb[0].mxu0
      %v9797 = vadd.f32 0.0, %v9796
      %v9798 = vpop.f32.mrb[0].mxu0
      %9799 = vmatprep.mubr.f32.mxu0 0.0
      %9800 = vmatmul.mubr.f32.gmra.mrb[0].mxu0 %v9600
      %v9801 = vpop.f32.mrb[0].mxu0
      %v9802 = vadd.f32 0.0, %v9801
      %v9803 = vpop.f32.mrb[0].mxu0
      %9804 = vmatprep.mubr.f32.mxu0 0.0
      %9805 = vmatmul.mubr.f32.gmra.mrb[0].mxu0 %v9603
      %v9806 = vpop.f32.mrb[0].mxu0
      %v9807 = vadd.f32 0.0, %v9806
      %v9808 = vpop.f32.mrb[0].mxu0
      %9809 = vmatprep.mubr.f32.mxu0 0.0
      %9810 = vmatmul.mubr.f32.gmra.mrb[0].mxu0 %v9606
      %v9811 = vpop.f32.mrb[0].mxu0
      %v9812 = vadd.f32 0.0, %v9811
      %v9813 = vpop.f32.mrb[0].mxu0
      %9814 = vmatprep.mubr.f32.mxu0 0.0
      %9815 = vmatmul.mubr.f32.gmra.mrb[0].mxu0 %v9609
      %v9816 = vpop.f32.mrb[0].mxu0
      %v9817 = vadd.f32 0.0, %v9816
      %v9818 = vpop.f32.mrb[0].mxu0
      %9819 = vmatprep.mubr.f32.mxu0 0.0
      %9820 = vmatmul.mubr.f32.gmra.mrb[0].mxu0 %v9612
      %v9821 = vpop.f32.mrb[0].mxu0
      %v9822 = vadd.f32 0.0, %v9821
      %v9823 = vpop.f32.mrb[0].mxu0
      %9824 = vmatprep.mubr.f32.mxu0 0.0
      %9825 = vmatmul.mubr.f32.gmra.mrb[0].mxu0 %v9615
      %v9826 = vpop.f32.mrb[0].mxu0
      %v9827 = vadd.f32 0.0, %v9826
      %v9828 = vpop.f32.mrb[0].mxu0
      %9829 = vmatprep.mubr.f32.mxu0 0.0
      %9830 = vmatmul.mubr.f32.gmra.mrb[0].mxu0 %v9618
      %v9831 = vpop.f32.mrb[0].mxu0
      %v9832 = vadd.f32 0.0, %v9831
      %v9833 = vpop.f32.mrb[0].mxu0
      %9834 = vmatprep.mubr.f32.mxu0 0.0
      %9835 = vmatmul.mubr.f32.gmra.mrb[0].mxu0 %v9621
      %v9836 = vpop.f32.mrb[0].mxu0
      %v9837 = vadd.f32 0.0, %v9836
      %v9838 = vpop.f32.mrb[0].mxu0
      %9839 = vmatprep.mubr.f32.mxu0 0.0
      %9840 = vmatmul.mubr.f32.gmra.mrb[0].mxu0 %v9624
      %v9841 = vpop.f32.mrb[0].mxu0
      %v9842 = vadd.f32 0.0, %v9841
      %v9843 = vpop.f32.mrb[0].mxu0
      %9844 = vmatprep.mubr.f32.mxu0 0.0
      %9845 = vmatmul.mubr.f32.gmra.mrb[0].mxu0 %v9627
      %v9846 = vpop.f32.mrb[0].mxu0
      %v9847 = vadd.f32 0.0, %v9846
      %v9848 = vpop.f32.mrb[0].mxu0
      %9849 = vmatprep.mubr.f32.mxu0 0.0
      %9850 = vmatmul.mubr.f32.gmra.mrb[0].mxu0 %v9630
      %v9851 = vpop.f32.mrb[0].mxu0
      %v9852 = vadd.f32 0.0, %v9851
      %v9853 = vpop.f32.mrb[0].mxu0
      %9854 = vmatprep.mubr.f32.mxu0 0.0
      %9855 = vmatmul.mubr.f32.gmra.mrb[0].mxu0 %v9633
      %v9856 = vpop.f32.mrb[0].mxu0
      %v9857 = vadd.f32 0.0, %v9856
      %v9858 = vpop.f32.mrb[0].mxu0
      %9859 = vdwg.mxu0
      %vm9860 = vcmask 195584
      %v9862 = vsel %vm9860, %v9344, 0
      %v9865 = vsel %vm9860, %v9349, 0
      %v9868 = vsel %vm9860, %v9354, 0
      %v9871 = vsel %vm9860, %v9359, 0
      %v9874 = vsel %vm9860, %v9364, 0
      %v9877 = vsel %vm9860, %v9369, 0
      %v9880 = vsel %vm9860, %v9374, 0
      %v9883 = vsel %vm9860, %v9379, 0
      %v9886 = vsel %vm9860, %v9384, 0
      %v9889 = vsel %vm9860, %v9389, 0
      %v9892 = vsel %vm9860, %v9394, 0
      %v9895 = vsel %vm9860, %v9399, 0
      %v9898 = vsel %vm9860, %v9404, 0
      %v9901 = vsel %vm9860, %v9409, 0
      %v9904 = vsel %vm9860, %v9414, 0
      %v9907 = vsel %vm9860, %v9419, 0
      %v9910 = vsel %vm9860, %v9424, 0
      %v9913 = vsel %vm9860, %v9429, 0
      %v9916 = vsel %vm9860, %v9434, 0
      %v9919 = vsel %vm9860, %v9439, 0
      %v9922 = vsel %vm9860, %v9444, 0
      %v9925 = vsel %vm9860, %v9449, 0
      %v9928 = vsel %vm9860, %v9454, 0
      %v9931 = vsel %vm9860, %v9459, 0
      %v9934 = vsel %vm9860, %v9464, 0
      %v9937 = vsel %vm9860, %v9469, 0
      %v9940 = vsel %vm9860, %v9474, 0
      %v9943 = vsel %vm9860, %v9479, 0
      %v9946 = vsel %vm9860, %v9484, 0
      %v9949 = vsel %vm9860, %v9489, 0
      %v9952 = vsel %vm9860, %v9494, 0
      %v9955 = vsel %vm9860, %v9499, 0
      %9957 = vmatprep.subr.mxu0 0.0
      %9958 = vmatpush1.msra.mxu0 %v9502
      %9959 = vmatprep.subr.mxu0 0.0
      %9960 = vmatpush1.msra.mxu0 %v9503
      %9961 = vmatprep.subr.mxu0 0.0
      %9962 = vmatpush1.msra.mxu0 %v9504
      %9963 = vmatprep.subr.mxu0 0.0
      %9964 = vmatpush1.msra.mxu0 0.0
      %9965 = vmatprep.subr.mxu0 0.0
      %9966 = vmatpush1.msra.mxu0 0.0
      %9967 = vmatprep.subr.mxu0 0.0
      %9968 = vmatpush1.msra.mxu0 0.0
      %9969 = vmatprep.subr.mxu0 0.0
      %9970 = vmatpush1.msra.mxu0 0.0
      %9971 = vmatprep.subr.mxu0 0.0
      %9972 = vmatpush1.msra.mxu0 0.0
      %9973 = vmatprep.subr.mxu0 0.0
      %9974 = vmatpush1.msra.mxu0 0.0
      %9975 = vmatprep.subr.mxu0 0.0
      %9976 = vmatpush1.msra.mxu0 0.0
      %9977 = vmatprep.subr.mxu0 0.0
      %9978 = vmatpush1.msra.mxu0 0.0
      %9979 = vmatprep.subr.mxu0 0.0
      %9980 = vmatpush1.msra.mxu0 0.0
      %9981 = vmatprep.subr.mxu0 0.0
      %9982 = vmatpush1.msra.mxu0 0.0
      %9983 = vmatprep.subr.mxu0 0.0
      %9984 = vmatpush1.msra.mxu0 0.0
      %9985 = vmatprep.subr.mxu0 0.0
      %9986 = vmatpush1.msra.mxu0 0.0
      %9987 = vmatprep.subr.mxu0 0.0
      %9988 = vmatpush1.msra.mxu0 0.0
      %9989 = vmatprep.subr.mxu0 0.0
      %9990 = vmatpush1.msra.mxu0 0.0
      %9991 = vmatprep.subr.mxu0 0.0
      %9992 = vmatpush1.msra.mxu0 0.0
      %9993 = vmatprep.subr.mxu0 0.0
      %9994 = vmatpush1.msra.mxu0 0.0
      %9995 = vmatprep.subr.mxu0 0.0
      %9996 = vmatpush1.msra.mxu0 0.0
      %9997 = vmatprep.subr.mxu0 0.0
      %9998 = vmatpush1.msra.mxu0 0.0
      %9999 = vmatprep.subr.mxu0 0.0
      %10000 = vmatpush1.msra.mxu0 0.0
      %10001 = vmatprep.subr.mxu0 0.0
      %10002 = vmatpush1.msra.mxu0 0.0
      %10003 = vmatprep.subr.mxu0 0.0
      %10004 = vmatpush1.msra.mxu0 0.0
      %10005 = vmatprep.subr.mxu0 0.0
      %10006 = vmatpush1.msra.mxu0 0.0
      %10007 = vmatprep.subr.mxu0 0.0
      %10008 = vmatpush1.msra.mxu0 0.0
      %10009 = vmatprep.subr.mxu0 0.0
      %10010 = vmatpush1.msra.mxu0 0.0
      %10011 = vmatprep.subr.mxu0 0.0
      %10012 = vmatpush1.msra.mxu0 0.0
      %10013 = vmatprep.subr.mxu0 0.0
      %10014 = vmatpush1.msra.mxu0 0.0
      %10015 = vmatprep.subr.mxu0 0.0
      %10016 = vmatpush1.msra.mxu0 0.0
      %10017 = vmatprep.subr.mxu0 0.0
      %10018 = vmatpush1.msra.mxu0 0.0
      %10019 = vmatprep.subr.mxu0 0.0
      %10020 = vmatpush1.msra.mxu0 0.0
      %10021 = vmatprep.mubr.f32.mxu0 0.0
      %10022 = vmatmul.mubr.f32.gmra.mrb[0].mxu0 %v9862
      %v10023 = vpop.f32.mrb[0].mxu0
      %v10024 = vadd.f32 %v9702, %v10023
      %v10025 = vpop.f32.mrb[0].mxu0
      %10026 = vmatprep.mubr.f32.mxu0 0.0
      %10027 = vmatmul.mubr.f32.gmra.mrb[0].mxu0 %v9865
      %v10028 = vpop.f32.mrb[0].mxu0
      %v10029 = vadd.f32 %v9707, %v10028
      %v10030 = vpop.f32.mrb[0].mxu0
      %10031 = vmatprep.mubr.f32.mxu0 0.0
      %10032 = vmatmul.mubr.f32.gmra.mrb[0].mxu0 %v9868
      %v10033 = vpop.f32.mrb[0].mxu0
      %v10034 = vadd.f32 %v9712, %v10033
      %v10035 = vpop.f32.mrb[0].mxu0
      %10036 = vmatprep.mubr.f32.mxu0 0.0
      %10037 = vmatmul.mubr.f32.gmra.mrb[0].mxu0 %v9871
      %v10038 = vpop.f32.mrb[0].mxu0
      %v10039 = vadd.f32 %v9717, %v10038
      %v10040 = vpop.f32.mrb[0].mxu0
      %10041 = vmatprep.mubr.f32.mxu0 0.0
      %10042 = vmatmul.mubr.f32.gmra.mrb[0].mxu0 %v9874
      %v10043 = vpop.f32.mrb[0].mxu0
      %v10044 = vadd.f32 %v9722, %v10043
      %v10045 = vpop.f32.mrb[0].mxu0
      %10046 = vmatprep.mubr.f32.mxu0 0.0
      %10047 = vmatmul.mubr.f32.gmra.mrb[0].mxu0 %v9877
      %v10048 = vpop.f32.mrb[0].mxu0
      %v10049 = vadd.f32 %v9727, %v10048
      %v10050 = vpop.f32.mrb[0].mxu0
      %10051 = vmatprep.mubr.f32.mxu0 0.0
      %10052 = vmatmul.mubr.f32.gmra.mrb[0].mxu0 %v9880
      %v10053 = vpop.f32.mrb[0].mxu0
      %v10054 = vadd.f32 %v9732, %v10053
      %v10055 = vpop.f32.mrb[0].mxu0
      %10056 = vmatprep.mubr.f32.mxu0 0.0
      %10057 = vmatmul.mubr.f32.gmra.mrb[0].mxu0 %v9883
      %v10058 = vpop.f32.mrb[0].mxu0
      %v10059 = vadd.f32 %v9737, %v10058
      %v10060 = vpop.f32.mrb[0].mxu0
      %10061 = vmatprep.mubr.f32.mxu0 0.0
      %10062 = vmatmul.mubr.f32.gmra.mrb[0].mxu0 %v9886
      %v10063 = vpop.f32.mrb[0].mxu0
      %v10064 = vadd.f32 %v9742, %v10063
      %v10065 = vpop.f32.mrb[0].mxu0
      %10066 = vmatprep.mubr.f32.mxu0 0.0
      %10067 = vmatmul.mubr.f32.gmra.mrb[0].mxu0 %v9889
      %v10068 = vpop.f32.mrb[0].mxu0
      %v10069 = vadd.f32 %v9747, %v10068
      %v10070 = vpop.f32.mrb[0].mxu0
      %10071 = vmatprep.mubr.f32.mxu0 0.0
      %10072 = vmatmul.mubr.f32.gmra.mrb[0].mxu0 %v9892
      %v10073 = vpop.f32.mrb[0].mxu0
      %v10074 = vadd.f32 %v9752, %v10073
      %v10075 = vpop.f32.mrb[0].mxu0
      %10076 = vmatprep.mubr.f32.mxu0 0.0
      %10077 = vmatmul.mubr.f32.gmra.mrb[0].mxu0 %v9895
      %v10078 = vpop.f32.mrb[0].mxu0
      %v10079 = vadd.f32 %v9757, %v10078
      %v10080 = vpop.f32.mrb[0].mxu0
      %10081 = vmatprep.mubr.f32.mxu0 0.0
      %10082 = vmatmul.mubr.f32.gmra.mrb[0].mxu0 %v9898
      %v10083 = vpop.f32.mrb[0].mxu0
      %v10084 = vadd.f32 %v9762, %v10083
      %v10085 = vpop.f32.mrb[0].mxu0
      %10086 = vmatprep.mubr.f32.mxu0 0.0
      %10087 = vmatmul.mubr.f32.gmra.mrb[0].mxu0 %v9901
      %v10088 = vpop.f32.mrb[0].mxu0
      %v10089 = vadd.f32 %v9767, %v10088
      %v10090 = vpop.f32.mrb[0].mxu0
      %10091 = vmatprep.mubr.f32.mxu0 0.0
      %10092 = vmatmul.mubr.f32.gmra.mrb[0].mxu0 %v9904
      %v10093 = vpop.f32.mrb[0].mxu0
      %v10094 = vadd.f32 %v9772, %v10093
      %v10095 = vpop.f32.mrb[0].mxu0
      %10096 = vmatprep.mubr.f32.mxu0 0.0
      %10097 = vmatmul.mubr.f32.gmra.mrb[0].mxu0 %v9907
      %v10098 = vpop.f32.mrb[0].mxu0
      %v10099 = vadd.f32 %v9777, %v10098
      %v10100 = vpop.f32.mrb[0].mxu0
      %10101 = vmatprep.mubr.f32.mxu0 0.0
      %10102 = vmatmul.mubr.f32.gmra.mrb[0].mxu0 %v9910
      %v10103 = vpop.f32.mrb[0].mxu0
      %v10104 = vadd.f32 %v9782, %v10103
      %v10105 = vpop.f32.mrb[0].mxu0
      %10106 = vmatprep.mubr.f32.mxu0 0.0
      %10107 = vmatmul.mubr.f32.gmra.mrb[0].mxu0 %v9913
      %v10108 = vpop.f32.mrb[0].mxu0
      %v10109 = vadd.f32 %v9787, %v10108
      %v10110 = vpop.f32.mrb[0].mxu0
      %10111 = vmatprep.mubr.f32.mxu0 0.0
      %10112 = vmatmul.mubr.f32.gmra.mrb[0].mxu0 %v9916
      %v10113 = vpop.f32.mrb[0].mxu0
      %v10114 = vadd.f32 %v9792, %v10113
      %v10115 = vpop.f32.mrb[0].mxu0
      %10116 = vmatprep.mubr.f32.mxu0 0.0
      %10117 = vmatmul.mubr.f32.gmra.mrb[0].mxu0 %v9919
      %v10118 = vpop.f32.mrb[0].mxu0
      %v10119 = vadd.f32 %v9797, %v10118
      %v10120 = vpop.f32.mrb[0].mxu0
      %10121 = vmatprep.mubr.f32.mxu0 0.0
      %10122 = vmatmul.mubr.f32.gmra.mrb[0].mxu0 %v9922
      %v10123 = vpop.f32.mrb[0].mxu0
      %v10124 = vadd.f32 %v9802, %v10123
      %v10125 = vpop.f32.mrb[0].mxu0
      %10126 = vmatprep.mubr.f32.mxu0 0.0
      %10127 = vmatmul.mubr.f32.gmra.mrb[0].mxu0 %v9925
      %v10128 = vpop.f32.mrb[0].mxu0
      %v10129 = vadd.f32 %v9807, %v10128
      %v10130 = vpop.f32.mrb[0].mxu0
      %10131 = vmatprep.mubr.f32.mxu0 0.0
      %10132 = vmatmul.mubr.f32.gmra.mrb[0].mxu0 %v9928
      %v10133 = vpop.f32.mrb[0].mxu0
      %v10134 = vadd.f32 %v9812, %v10133
      %v10135 = vpop.f32.mrb[0].mxu0
      %10136 = vmatprep.mubr.f32.mxu0 0.0
      %10137 = vmatmul.mubr.f32.gmra.mrb[0].mxu0 %v9931
      %v10138 = vpop.f32.mrb[0].mxu0
      %v10139 = vadd.f32 %v9817, %v10138
      %v10140 = vpop.f32.mrb[0].mxu0
      %10141 = vmatprep.mubr.f32.mxu0 0.0
      %10142 = vmatmul.mubr.f32.gmra.mrb[0].mxu0 %v9934
      %v10143 = vpop.f32.mrb[0].mxu0
      %v10144 = vadd.f32 %v9822, %v10143
      %v10145 = vpop.f32.mrb[0].mxu0
      %10146 = vmatprep.mubr.f32.mxu0 0.0
      %10147 = vmatmul.mubr.f32.gmra.mrb[0].mxu0 %v9937
      %v10148 = vpop.f32.mrb[0].mxu0
      %v10149 = vadd.f32 %v9827, %v10148
      %v10150 = vpop.f32.mrb[0].mxu0
      %10151 = vmatprep.mubr.f32.mxu0 0.0
      %10152 = vmatmul.mubr.f32.gmra.mrb[0].mxu0 %v9940
      %v10153 = vpop.f32.mrb[0].mxu0
      %v10154 = vadd.f32 %v9832, %v10153
      %v10155 = vpop.f32.mrb[0].mxu0
      %10156 = vmatprep.mubr.f32.mxu0 0.0
      %10157 = vmatmul.mubr.f32.gmra.mrb[0].mxu0 %v9943
      %v10158 = vpop.f32.mrb[0].mxu0
      %v10159 = vadd.f32 %v9837, %v10158
      %v10160 = vpop.f32.mrb[0].mxu0
      %10161 = vmatprep.mubr.f32.mxu0 0.0
      %10162 = vmatmul.mubr.f32.gmra.mrb[0].mxu0 %v9946
      %v10163 = vpop.f32.mrb[0].mxu0
      %v10164 = vadd.f32 %v9842, %v10163
      %v10165 = vpop.f32.mrb[0].mxu0
      %10166 = vmatprep.mubr.f32.mxu0 0.0
      %10167 = vmatmul.mubr.f32.gmra.mrb[0].mxu0 %v9949
      %v10168 = vpop.f32.mrb[0].mxu0
      %v10169 = vadd.f32 %v9847, %v10168
      %v10170 = vpop.f32.mrb[0].mxu0
      %10171 = vmatprep.mubr.f32.mxu0 0.0
      %10172 = vmatmul.mubr.f32.gmra.mrb[0].mxu0 %v9952
      %v10173 = vpop.f32.mrb[0].mxu0
      %v10174 = vadd.f32 %v9852, %v10173
      %v10175 = vpop.f32.mrb[0].mxu0
      %10176 = vmatprep.mubr.f32.mxu0 0.0
      %10177 = vmatmul.mubr.f32.gmra.mrb[0].mxu0 %v9955
      %v10178 = vpop.f32.mrb[0].mxu0
      %v10179 = vadd.f32 %v9857, %v10178
      %v10180 = vpop.f32.mrb[0].mxu0
      %10181 = vdwg.mxu0
      %v10182 = vld [vmem:[%s15] sm:$0x1]
      %v10184 = vlaneseq
      %v10185 = vshrl.u32 %v10184, 7
      %v10186 = vsub.s32 0, %v10185
      %v10187 = vrot.slane %v10182, %v10186
      %v10189 = vadd.f32 %v10024, %v10187
      %v10190 = vadd.f32 %v10029, %v10187
      %v10191 = vadd.f32 %v10034, %v10187
      %v10192 = vadd.f32 %v10039, %v10187
      %v10193 = vadd.f32 %v10044, %v10187
      %v10194 = vadd.f32 %v10049, %v10187
      %v10195 = vadd.f32 %v10054, %v10187
      %v10196 = vadd.f32 %v10059, %v10187
      %v10197 = vadd.f32 %v10064, %v10187
      %v10198 = vadd.f32 %v10069, %v10187
      %v10199 = vadd.f32 %v10074, %v10187
      %v10200 = vadd.f32 %v10079, %v10187
      %v10201 = vadd.f32 %v10084, %v10187
      %v10202 = vadd.f32 %v10089, %v10187
      %v10203 = vadd.f32 %v10094, %v10187
      %v10204 = vadd.f32 %v10099, %v10187
      %v10205 = vadd.f32 %v10104, %v10187
      %v10206 = vadd.f32 %v10109, %v10187
      %v10207 = vadd.f32 %v10114, %v10187
      %v10208 = vadd.f32 %v10119, %v10187
      %v10209 = vadd.f32 %v10124, %v10187
      %v10210 = vadd.f32 %v10129, %v10187
      %v10211 = vadd.f32 %v10134, %v10187
      %v10212 = vadd.f32 %v10139, %v10187
      %v10213 = vadd.f32 %v10144, %v10187
      %v10214 = vadd.f32 %v10149, %v10187
      %v10215 = vadd.f32 %v10154, %v10187
      %v10216 = vadd.f32 %v10159, %v10187
      %v10217 = vadd.f32 %v10164, %v10187
      %v10218 = vadd.f32 %v10169, %v10187
      %v10219 = vadd.f32 %v10174, %v10187
      %v10220 = vadd.f32 %v10179, %v10187
      %v10221 = vmax.f32 %v10189, 0.0
      %v10222 = vmax.f32 %v10190, 0.0
      %v10223 = vmax.f32 %v10191, 0.0
      %v10224 = vmax.f32 %v10192, 0.0
      %v10225 = vmax.f32 %v10193, 0.0
      %v10226 = vmax.f32 %v10194, 0.0
      %v10227 = vmax.f32 %v10195, 0.0
      %v10228 = vmax.f32 %v10196, 0.0
      %v10229 = vmax.f32 %v10197, 0.0
      %v10230 = vmax.f32 %v10198, 0.0
      %v10231 = vmax.f32 %v10199, 0.0
      %v10232 = vmax.f32 %v10200, 0.0
      %v10233 = vmax.f32 %v10201, 0.0
      %v10234 = vmax.f32 %v10202, 0.0
      %v10235 = vmax.f32 %v10203, 0.0
      %v10236 = vmax.f32 %v10204, 0.0
      %v10237 = vmax.f32 %v10205, 0.0
      %v10238 = vmax.f32 %v10206, 0.0
      %v10239 = vmax.f32 %v10207, 0.0
      %v10240 = vmax.f32 %v10208, 0.0
      %v10241 = vmax.f32 %v10209, 0.0
      %v10242 = vmax.f32 %v10210, 0.0
      %v10243 = vmax.f32 %v10211, 0.0
      %v10244 = vmax.f32 %v10212, 0.0
      %v10245 = vmax.f32 %v10213, 0.0
      %v10246 = vmax.f32 %v10214, 0.0
      %v10247 = vmax.f32 %v10215, 0.0
      %v10248 = vmax.f32 %v10216, 0.0
      %v10249 = vmax.f32 %v10217, 0.0
      %v10250 = vmax.f32 %v10218, 0.0
      %v10251 = vmax.f32 %v10219, 0.0
      %v10252 = vmax.f32 %v10220, 0.0
      %10253 = vst.msk [vmem:[%s561] sm:$0xff] %vm562, %v10221
      %10254 = vst.msk [vmem:[%s561 + $0x8] sm:$0xff] %vm562, %v10222
      %10255 = vst.msk [vmem:[%s561 + $0x10] sm:$0xff] %vm562, %v10223
      %10256 = vst.msk [vmem:[%s561 + $0x18] sm:$0xff] %vm562, %v10224
      %10257 = vst.msk [vmem:[%s561 + $0x20] sm:$0xff] %vm562, %v10225
      %10258 = vst.msk [vmem:[%s561 + $0x28] sm:$0xff] %vm562, %v10226
      %10259 = vst.msk [vmem:[%s561 + $0x30] sm:$0xff] %vm562, %v10227
      %10260 = vst.msk [vmem:[%s561 + $0x38] sm:$0xff] %vm562, %v10228
      %10261 = vst.msk [vmem:[%s561 + $0x40] sm:$0xff] %vm562, %v10229
      %10262 = vst.msk [vmem:[%s561 + $0x48] sm:$0xff] %vm562, %v10230
      %10263 = vst.msk [vmem:[%s561 + $0x50] sm:$0xff] %vm562, %v10231
      %10264 = vst.msk [vmem:[%s561 + $0x58] sm:$0xff] %vm562, %v10232
      %10265 = vst.msk [vmem:[%s561 + $0x60] sm:$0xff] %vm562, %v10233
      %10266 = vst.msk [vmem:[%s561 + $0x68] sm:$0xff] %vm562, %v10234
      %10267 = vst.msk [vmem:[%s561 + $0x70] sm:$0xff] %vm562, %v10235
      %10268 = vst.msk [vmem:[%s561 + $0x78] sm:$0xff] %vm562, %v10236
      %10269 = vst.msk [vmem:[%s561 + $0x80] sm:$0xff] %vm562, %v10237
      %10270 = vst.msk [vmem:[%s561 + $0x88] sm:$0xff] %vm562, %v10238
      %10271 = vst.msk [vmem:[%s561 + $0x90] sm:$0xff] %vm562, %v10239
      %10272 = vst.msk [vmem:[%s561 + $0x98] sm:$0xff] %vm562, %v10240
      %10273 = vst.msk [vmem:[%s561 + $0xa0] sm:$0xff] %vm562, %v10241
      %10274 = vst.msk [vmem:[%s561 + $0xa8] sm:$0xff] %vm562, %v10242
      %10275 = vst.msk [vmem:[%s561 + $0xb0] sm:$0xff] %vm562, %v10243
      %10276 = vst.msk [vmem:[%s561 + $0xb8] sm:$0xff] %vm562, %v10244
      %10277 = vst.msk [vmem:[%s561 + $0xc0] sm:$0xff] %vm562, %v10245
      %10278 = vst.msk [vmem:[%s561 + $0xc8] sm:$0xff] %vm562, %v10246
      %10279 = vst.msk [vmem:[%s561 + $0xd0] sm:$0xff] %vm562, %v10247
      %10280 = vst.msk [vmem:[%s561 + $0xd8] sm:$0xff] %vm562, %v10248
      %10281 = vst.msk [vmem:[%s561 + $0xe0] sm:$0xff] %vm562, %v10249
      %10282 = vst.msk [vmem:[%s561 + $0xe8] sm:$0xff] %vm562, %v10250
      %10283 = vst.msk [vmem:[%s561 + $0xf0] sm:$0xff] %vm562, %v10251
      %10284 = vst.msk [vmem:[%s561 + $0xf8] sm:$0xff] %vm562, %v10252
      %p10285 = scmp.lt.s32.totalorder %s27, 1
      %s10286 = scalar_select %p10285, %s27, 1
      %s10287 = smul.addr %s10286, 32
      %s10288 = smul.addr %s10287, 8
      %s10289 = scalar_lea.vmem %s16, %s10288
      // Predicated region
      $region85: #{tpu_custom_call.1} parent=83 // pred_check
        %p10290 = pneg %p396
      $region86: #{tpu_custom_call.1} parent=83 // pred_check_branch
        %10292 = sbr.rel (%p10290) target = $region88
      $region87: #{tpu_custom_call.1} parent=83 // pred_region
        _
      $region88: #{tpu_custom_call.1} parent=83 // pred_fallthru
        _
    $region84: #{tpu_custom_call.1} parent=5 // pred_fallthru
      _
    %p10293 = scmp.le.s32.totalorder 2, %s22
    // Predicated region
    $region89: #{tpu_custom_call.1} parent=5 // pred_check
      %p10294 = pneg %p10293
    $region90: #{tpu_custom_call.1} parent=5 // pred_check_branch
      %10296 = sbr.rel (%p10294) target = $region92
    $region91: #{tpu_custom_call.1} parent=5 // pred_region
      %s10297 = ssub.s32 %s22, 2
      // Predicated region
      $region93: #{tpu_custom_call.1} parent=91 // pred_check
        %p10298 = pneg %p402
      $region94: #{tpu_custom_call.1} parent=91 // pred_check_branch
        %10300 = sbr.rel (%p10298) target = $region96
      $region95: #{tpu_custom_call.1} parent=91 // pred_region
        %p10301 = scmp.lt.s32.totalorder %s28, 1
        %s10302 = scalar_select %p10301, %s28, 1
        %s10303 = smul.addr %s10302, 32
        %s10304 = smul.addr %s10303, 8
        %s10305 = scalar_lea.vmem %s16, %s10304
      $region96: #{tpu_custom_call.1} parent=91 // pred_fallthru
        _
    $region92: #{tpu_custom_call.1} parent=5 // pred_fallthru
      _
  $region6: #{tpu_custom_call.1} parent=0 // loop_footer
    %s26 = sadd.s32 1, %s22
  $region7: #{tpu_custom_call.1} parent=0 // loop_footer_branch
    %21 = sbr.rel target = $region3
  $region8: #{tpu_custom_call.1} parent=0 // loop_exit
    _

</llo_original>
